<compile_context>
chip_gen: v5e
topology: v5e:2x2
jax: 0.10.0
libtpu: 0.0.40
codegen_flags: <defaults>
</compile_context>

<pallas_src>
from functools import partial

import jax
import jax.numpy as jnp
from jax.experimental import pallas as pl
from jax.experimental.pallas import tpu as pltpu

LANE = 128

# conv2 (handled by the fused conv1-affine + im2col matmul)
K2, CIN2, COUT2, S2, P2 = 15, 4, 16, 2, 7

# (name, Cout, Cin, K, stride, pad) -- conv3..conv8 (tap-matmul layers).
_CONV_CFG = [
    ("conv3", 64, 16, 15, 2, 7),
    ("conv4", 128, 64, 15, 2, 7),
    ("conv5", 256, 128, 15, 2, 7),
    ("conv7", 128, 256, 9, 1, 4),
    ("conv8", 64, 128, 9, 1, 4),
]


def _rup(x, m):
    return ((x + m - 1) // m) * m


def _layer_meta(l_in):
    """Static per-layer shape metadata for conv3..conv8, given conv2's Lout."""
    meta, L = [], l_in
    for name, cout, cin, k, s, p in _CONV_CFG:
        lout = (L + 2 * p - k) // s + 1
        meta.append(dict(name=name, K=k, stride=s, pad=p, Lin=L, Lout=lout,
                         Cin=cin, Cout=cout))
        L = lout
    return meta


# ---------------------------------------------------------------------------
# Fully-fused network kernel (b_tile batch elements per grid step)
# ---------------------------------------------------------------------------
def _make_kernel(meta, b_tile):
    n_conv = len(meta)

    def kernel(*refs):
        xrep_ref, s1t_ref, c1m_ref, w2_ref, b2_ref = refs[:5]
        conv_refs = refs[5:5 + 2 * n_conv]
        l1w_ref, l1b_ref, l2w_ref, l2b_ref = refs[5 + 2 * n_conv:9 + 2 * n_conv]
        o_ref = refs[9 + 2 * n_conv]
        bufs = refs[10 + 2 * n_conv:]

        # Zero ONLY the pad rows (+ sublane-rounding tail) of each line
        # buffer, once per grid step.  Interior rows [p, p+Lin) are fully
        # overwritten for every element, so the pads stay zero.
        for buf, m in zip(bufs, meta):
            p, lin, rows = m["pad"], m["Lin"], buf.shape[0]
            buf[pl.ds(0, p), :] = jnp.zeros((p, buf.shape[1]), jnp.float32)
            tail = rows - p - lin
            buf[pl.ds(p + lin, tail), :] = jnp.zeros((tail, buf.shape[1]),
                                                     jnp.float32)

        for bb in range(b_tile):
            # ---- conv1 (1x1 affine) + BN1 + ReLU fused with conv2 im2col --
            xk = xrep_ref[bb]                                     # (L2, 60) f32
            patch = jnp.maximum(xk * s1t_ref[...] + c1m_ref[...], 0.0)
            act = jnp.dot(patch.astype(jnp.bfloat16), w2_ref[...],
                          preferred_element_type=jnp.float32) + b2_ref[...]
            act = jnp.maximum(act, 0.0)                           # (L2, 16)

            # ---- conv3..conv8: K shifted/strided bf16 matmuls, f32 acc ----
            for i, m in enumerate(meta):
                w_ref, b_ref = conv_refs[2 * i], conv_refs[2 * i + 1]
                buf = bufs[i]
                K, s, p = m["K"], m["stride"], m["pad"]
                lin, lout = m["Lin"], m["Lout"]

                buf[pl.ds(p, lin), :] = act                       # interior only
                acc = jnp.zeros((lout, m["Cout"]), jnp.float32)
                for k in range(K):
                    rows = pl.ds(k, lout, s) if s > 1 else pl.ds(k, lout)
                    acc = acc + jnp.dot(buf[rows, :].astype(jnp.bfloat16),
                                        w_ref[k],
                                        preferred_element_type=jnp.float32)
                act = jnp.maximum(acc + b_ref[...], 0.0)          # (Lout, Cout)

            # ---- AdaptiveAvgPool1d(1) + Linear(64,16)+ReLU + Linear(16,NC)
            pooled = jnp.mean(act, axis=0, keepdims=True)         # (1, 64) f32
            h = jnp.dot(pooled.astype(jnp.bfloat16), l1w_ref[...],
                        preferred_element_type=jnp.float32) + l1b_ref[...]
            h = jnp.maximum(h, 0.0)
            logits = jnp.dot(h.astype(jnp.bfloat16), l2w_ref[...],
                             preferred_element_type=jnp.float32) + l2b_ref[...]
            o_ref[0, pl.ds(bb, 1), :] = logits                    # (1,128) lane-dense

    return kernel


def _const_spec(a):
    zeros = (0,) * a.ndim
    return pl.BlockSpec(a.shape, lambda i, _z=zeros: _z)


# ---------------------------------------------------------------------------
# One-time parameter preparation (BN folding, re-layout, bf16 cast)
# ---------------------------------------------------------------------------
def prepare_params(params, num_class, eps=1e-5):
    f32, bf16 = jnp.float32, jnp.bfloat16
    prep = {}

    # conv1 + bn1 folded to a per-channel affine, tiled across the 15 conv2
    # taps so it can be applied directly to the conv2 im2col patch.
    p = params["conv1"]
    sc = p["gamma"] / jnp.sqrt(p["var"] + eps)
    s1 = (p["w"][:, 0, 0] * sc).astype(f32)                       # (4,)
    c1 = (p["beta"] + sc * (p["b"] - p["mean"])).astype(f32)      # (4,)
    prep["s1t"] = jnp.tile(s1, K2).reshape(1, K2 * CIN2)          # (1, 60)
    prep["c1t"] = jnp.tile(c1, K2).reshape(1, K2 * CIN2)          # (1, 60)

    # conv2 + bn2 folded, repacked as an im2col weight (K*Cin, Cout), bf16.
    q = params["conv2"]
    sc = q["gamma"] / jnp.sqrt(q["var"] + eps)
    wk = jnp.transpose(q["w"], (2, 1, 0)) * sc[None, None, :]     # (K, Cin, Cout)
    prep["conv2_w"] = wk.reshape(K2 * CIN2, COUT2).astype(bf16)   # (60, 16)
    prep["conv2_b"] = (q["beta"] + sc * (q["b"] - q["mean"])
                       ).reshape(1, COUT2).astype(f32)

    # conv3..conv8: fold BN into (K, Cin, Cout) bf16 weights + f32 bias.
    # Channels are kept UNPADDED (real Cin/Cout).
    for name, cout, cin, k, s, pad in _CONV_CFG:
        q = params[name]
        sc = q["gamma"] / jnp.sqrt(q["var"] + eps)
        wk = jnp.transpose(q["w"], (2, 1, 0)) * sc[None, None, :]
        prep[name + "_w"] = wk.astype(bf16)                        # (K, Cin, Cout)
        prep[name + "_b"] = (q["beta"] + sc * (q["b"] - q["mean"])
                             ).reshape(1, cout).astype(f32)

    # classifier head; final weight/bias padded to a lane-dense 128 columns.
    assert num_class <= LANE
    l1, l2 = params["linear1"], params["linear2"]
    prep["l1_w"] = l1["w"].T.astype(bf16)                          # (64, 16)
    prep["l1_b"] = l1["b"].reshape(1, 16).astype(f32)
    prep["l2_w"] = jnp.pad(l2["w"].T, ((0, 0), (0, LANE - num_class))).astype(bf16)
    prep["l2_b"] = jnp.pad(l2["b"], (0, LANE - num_class)).reshape(1, LANE).astype(f32)
    return prep


# ---------------------------------------------------------------------------
# Forward pass (single fused pallas_call; mirrors Cnn.forward, inference BN)
# ---------------------------------------------------------------------------
@partial(jax.jit, static_argnames=("num_class", "b_tile"))
def cnn_forward(prep, x_ncl, *, num_class, b_tile=None):
    N, cin, L0 = x_ncl.shape
    assert cin == 1, "Cnn expects a single input channel"
    lout2 = (L0 + 2 * P2 - K2) // S2 + 1
    meta = _layer_meta(lout2)

    if b_tile is None:
        # keep the grid >= 2 steps when N >= 2 so both v7x TCs stay busy.
        b_tile = max(1, min(8, (N + 1) // 2))
    n_pad = pl.cdiv(N, b_tile) * b_tile
    grid_n = n_pad // b_tile

    # ---- host-side layout plumbing (tiny): im2col view of the raw input ---
    x2 = x_ncl.reshape(N, L0).astype(jnp.float32)
    xp = jnp.pad(x2, ((0, n_pad - N), (P2, P2)))                   # (n_pad, L0+2p)
    pos = jnp.arange(lout2)[:, None] * S2 + jnp.arange(K2)[None, :]  # (L2, K2)
    xcol = xp[:, pos]                                              # (n_pad, L2, K2)
    xrep = jnp.repeat(xcol, CIN2, axis=2)                          # (n_pad, L2, 60)
    valid = ((pos >= P2) & (pos < P2 + L0)).astype(jnp.float32)    # zero-pad mask
    c1m = jnp.repeat(valid, CIN2, axis=1) * prep["c1t"]            # (L2, 60)

    inputs = [xrep, prep["s1t"], c1m, prep["conv2_w"], prep["conv2_b"]]
    for m in meta:
        inputs += [prep[m["name"] + "_w"], prep[m["name"] + "_b"]]
    inputs += [prep["l1_w"], prep["l1_b"], prep["l2_w"], prep["l2_b"]]

    in_specs = [pl.BlockSpec((b_tile, lout2, K2 * CIN2), lambda i: (i, 0, 0))]
    in_specs += [_const_spec(a) for a in inputs[1:]]               # weights: DMA'd once
    out_specs = pl.BlockSpec((1, b_tile, LANE), lambda i: (i, 0, 0))

    # VMEM scratch: unpadded-channel line buffers (never touch HBM).
    scratch = [pltpu.VMEM((_rup(m["Lin"] + 2 * m["pad"], 8), m["Cin"]), jnp.float32)
               for m in meta]

    out = pl.pallas_call(
        _make_kernel(meta, b_tile),
        grid=(grid_n,),
        in_specs=in_specs,
        out_specs=out_specs,
        out_shape=jax.ShapeDtypeStruct((grid_n, b_tile, LANE), jnp.float32),
        scratch_shapes=scratch,
        compiler_params=pltpu.CompilerParams(
            dimension_semantics=("parallel",),
            vmem_limit_bytes=20 * 1024 * 1024,
        ),
    )(*inputs)
    return out.reshape(n_pad, LANE)[:N, :num_class]


# ---------------------------------------------------------------------------
# Parameter construction (deterministic, synthetic; mirrors the torch module)
# ---------------------------------------------------------------------------
def init_params(key, num_class):
    conv_specs = [
        ("conv1", 4, 1, 1),
        ("conv2", 16, 4, 15),
        ("conv3", 64, 16, 15),
        ("conv4", 128, 64, 15),
        ("conv5", 256, 128, 15),
        ("conv7", 128, 256, 9),
        ("conv8", 64, 128, 9),
    ]
    params = {}
    for name, cout, cin, k in conv_specs:
        key, k1, k2, k3, k4 = jax.random.split(key, 5)
        params[name] = dict(
            w=0.05 * jax.random.normal(k1, (cout, cin, k), jnp.float32),
            b=0.05 * jax.random.normal(k2, (cout,), jnp.float32),
            gamma=1.0 + 0.1 * jax.random.normal(k3, (cout,), jnp.float32),
            beta=0.1 * jax.random.normal(k4, (cout,), jnp.float32),
            mean=jnp.zeros((cout,), jnp.float32),
            var=jnp.ones((cout,), jnp.float32),
        )
    key, k1, k2, k3, k4 = jax.random.split(key, 5)
    params["linear1"] = dict(w=0.05 * jax.random.normal(k1, (16, 64), jnp.float32),
                             b=0.05 * jax.random.normal(k2, (16,), jnp.float32))
    params["linear2"] = dict(w=0.05 * jax.random.normal(k3, (num_class, 16), jnp.float32),
                             b=0.05 * jax.random.normal(k4, (num_class,), jnp.float32))
    return params


if __name__ == "__main__":
    num_class = 5
    key = jax.random.PRNGKey(0)
    key, pkey, xkey = jax.random.split(key, 3)

    params = init_params(pkey, num_class)
    prep = prepare_params(params, num_class)          # hoisted out of forward

    # input: (batch=2, in_channels=1, length=64)  -> logits (2, num_class)
    x = jax.random.normal(xkey, (2, 1, 64), jnp.float32)

    logits = cnn_forward(prep, x, num_class=num_class)
    jax.block_until_ready(logits)
    assert logits.shape == (2, num_class)
    assert bool(jnp.all(jnp.isfinite(logits)))
    print("KERNEL_OK")
</pallas_src>

<mosaic_0001>
module attributes {stable_mosaic.version = 11 : i64} {
  func.func @kernel(%arg0: i32, %arg1: memref<1x32x60xf32, #tpu.memory_space<vmem>>, %arg2: memref<1x60xf32, #tpu.memory_space<vmem>>, %arg3: memref<32x60xf32, #tpu.memory_space<vmem>>, %arg4: memref<60x16xbf16, #tpu.memory_space<vmem>>, %arg5: memref<1x16xf32, #tpu.memory_space<vmem>>, %arg6: memref<15x16x64xbf16, #tpu.memory_space<vmem>>, %arg7: memref<1x64xf32, #tpu.memory_space<vmem>>, %arg8: memref<15x64x128xbf16, #tpu.memory_space<vmem>>, %arg9: memref<1x128xf32, #tpu.memory_space<vmem>>, %arg10: memref<15x128x256xbf16, #tpu.memory_space<vmem>>, %arg11: memref<1x256xf32, #tpu.memory_space<vmem>>, %arg12: memref<9x256x128xbf16, #tpu.memory_space<vmem>>, %arg13: memref<1x128xf32, #tpu.memory_space<vmem>>, %arg14: memref<9x128x64xbf16, #tpu.memory_space<vmem>>, %arg15: memref<1x64xf32, #tpu.memory_space<vmem>>, %arg16: memref<64x16xbf16, #tpu.memory_space<vmem>>, %arg17: memref<1x16xf32, #tpu.memory_space<vmem>>, %arg18: memref<16x128xbf16, #tpu.memory_space<vmem>>, %arg19: memref<1x128xf32, #tpu.memory_space<vmem>>, %arg20: memref<1x1x128xf32, #tpu.memory_space<vmem>>, %arg21: memref<48x16xf32, #tpu.memory_space<vmem>>, %arg22: memref<32x64xf32, #tpu.memory_space<vmem>>, %arg23: memref<24x128xf32, #tpu.memory_space<vmem>>, %arg24: memref<16x256xf32, #tpu.memory_space<vmem>>, %arg25: memref<16x128xf32, #tpu.memory_space<vmem>>) attributes {dimension_semantics = [#tpu.dimension_semantics<parallel>], iteration_bounds = array<i64: 2>, scalar_prefetch = 0 : i64, scratch_operands = 5 : i64, tpu.core_type = #tpu.core_type<tc>, window_params = [{transform_indices = @transform_0, window_bounds = array<i64: 1, 32, 60>}, {pipeline_mode = #tpu.pipeline_mode<synchronous>, transform_indices = @transform_1, window_bounds = array<i64: 1, 60>}, {pipeline_mode = #tpu.pipeline_mode<synchronous>, transform_indices = @transform_2, window_bounds = array<i64: 32, 60>}, {pipeline_mode = #tpu.pipeline_mode<synchronous>, transform_indices = @transform_3, window_bounds = array<i64: 60, 16>}, {pipeline_mode = #tpu.pipeline_mode<synchronous>, transform_indices = @transform_4, window_bounds = array<i64: 1, 16>}, {pipeline_mode = #tpu.pipeline_mode<synchronous>, transform_indices = @transform_5, window_bounds = array<i64: 15, 16, 64>}, {pipeline_mode = #tpu.pipeline_mode<synchronous>, transform_indices = @transform_6, window_bounds = array<i64: 1, 64>}, {pipeline_mode = #tpu.pipeline_mode<synchronous>, transform_indices = @transform_7, window_bounds = array<i64: 15, 64, 128>}, {pipeline_mode = #tpu.pipeline_mode<synchronous>, transform_indices = @transform_8, window_bounds = array<i64: 1, 128>}, {pipeline_mode = #tpu.pipeline_mode<synchronous>, transform_indices = @transform_9, window_bounds = array<i64: 15, 128, 256>}, {pipeline_mode = #tpu.pipeline_mode<synchronous>, transform_indices = @transform_10, window_bounds = array<i64: 1, 256>}, {pipeline_mode = #tpu.pipeline_mode<synchronous>, transform_indices = @transform_11, window_bounds = array<i64: 9, 256, 128>}, {pipeline_mode = #tpu.pipeline_mode<synchronous>, transform_indices = @transform_12, window_bounds = array<i64: 1, 128>}, {pipeline_mode = #tpu.pipeline_mode<synchronous>, transform_indices = @transform_13, window_bounds = array<i64: 9, 128, 64>}, {pipeline_mode = #tpu.pipeline_mode<synchronous>, transform_indices = @transform_14, window_bounds = array<i64: 1, 64>}, {pipeline_mode = #tpu.pipeline_mode<synchronous>, transform_indices = @transform_15, window_bounds = array<i64: 64, 16>}, {pipeline_mode = #tpu.pipeline_mode<synchronous>, transform_indices = @transform_16, window_bounds = array<i64: 1, 16>}, {pipeline_mode = #tpu.pipeline_mode<synchronous>, transform_indices = @transform_17, window_bounds = array<i64: 16, 128>}, {pipeline_mode = #tpu.pipeline_mode<synchronous>, transform_indices = @transform_18, window_bounds = array<i64: 1, 128>}, {transform_indices = @transform_19, window_bounds = array<i64: 1, 1, 128>}]} {
    %cst = arith.constant 0.000000e+00 : f32
    %0 = vector.broadcast %cst : f32 to vector<7x16xf32>
    %c0 = arith.constant 0 : index
    %c0_0 = arith.constant 0 : index
    %1 = vector.load %arg21[%c0, %c0_0] : memref<48x16xf32, #tpu.memory_space<vmem>>, vector<7x16xf32>
    tpu.vector_store %arg21[%c0, %c0_0], %0 {strides = array<i32>} : memref<48x16xf32, #tpu.memory_space<vmem>>, vector<7x16xf32>,
    %cst_1 = arith.constant 0.000000e+00 : f32
    %2 = vector.broadcast %cst_1 : f32 to vector<9x16xf32>
    %c39 = arith.constant 39 : index
    %c0_2 = arith.constant 0 : index
    %3 = vector.load %arg21[%c39, %c0_2] : memref<48x16xf32, #tpu.memory_space<vmem>>, vector<9x16xf32>
    tpu.vector_store %arg21[%c39, %c0_2], %2 {strides = array<i32>} : memref<48x16xf32, #tpu.memory_space<vmem>>, vector<9x16xf32>,
    %cst_3 = arith.constant 0.000000e+00 : f32
    %4 = vector.broadcast %cst_3 : f32 to vector<7x64xf32>
    %c0_4 = arith.constant 0 : index
    %c0_5 = arith.constant 0 : index
    %5 = vector.load %arg22[%c0_4, %c0_5] : memref<32x64xf32, #tpu.memory_space<vmem>>, vector<7x64xf32>
    tpu.vector_store %arg22[%c0_4, %c0_5], %4 {strides = array<i32>} : memref<32x64xf32, #tpu.memory_space<vmem>>, vector<7x64xf32>,
    %cst_6 = arith.constant 0.000000e+00 : f32
    %6 = vector.broadcast %cst_6 : f32 to vector<9x64xf32>
    %c23 = arith.constant 23 : index
    %c0_7 = arith.constant 0 : index
    %7 = vector.load %arg22[%c23, %c0_7] : memref<32x64xf32, #tpu.memory_space<vmem>>, vector<9x64xf32>
    tpu.vector_store %arg22[%c23, %c0_7], %6 {strides = array<i32>} : memref<32x64xf32, #tpu.memory_space<vmem>>, vector<9x64xf32>,
    %cst_8 = arith.constant 0.000000e+00 : f32
    %8 = vector.broadcast %cst_8 : f32 to vector<7x128xf32>
    %c0_9 = arith.constant 0 : index
    %c0_10 = arith.constant 0 : index
    %9 = vector.load %arg23[%c0_9, %c0_10] : memref<24x128xf32, #tpu.memory_space<vmem>>, vector<7x128xf32>
    tpu.vector_store %arg23[%c0_9, %c0_10], %8 {strides = array<i32>} : memref<24x128xf32, #tpu.memory_space<vmem>>, vector<7x128xf32>,
    %cst_11 = arith.constant 0.000000e+00 : f32
    %10 = vector.broadcast %cst_11 : f32 to vector<9x128xf32>
    %c15 = arith.constant 15 : index
    %c0_12 = arith.constant 0 : index
    %11 = vector.load %arg23[%c15, %c0_12] : memref<24x128xf32, #tpu.memory_space<vmem>>, vector<9x128xf32>
    tpu.vector_store %arg23[%c15, %c0_12], %10 {strides = array<i32>} : memref<24x128xf32, #tpu.memory_space<vmem>>, vector<9x128xf32>,
    %cst_13 = arith.constant 0.000000e+00 : f32
    %12 = vector.broadcast %cst_13 : f32 to vector<4x256xf32>
    %c0_14 = arith.constant 0 : index
    %c0_15 = arith.constant 0 : index
    %13 = vector.load %arg24[%c0_14, %c0_15] : memref<16x256xf32, #tpu.memory_space<vmem>>, vector<4x256xf32>
    tpu.vector_store %arg24[%c0_14, %c0_15], %12 {strides = array<i32>} : memref<16x256xf32, #tpu.memory_space<vmem>>, vector<4x256xf32>,
    %cst_16 = arith.constant 0.000000e+00 : f32
    %14 = vector.broadcast %cst_16 : f32 to vector<8x256xf32>
    %c8 = arith.constant 8 : index
    %c0_17 = arith.constant 0 : index
    %15 = vector.load %arg24[%c8, %c0_17] : memref<16x256xf32, #tpu.memory_space<vmem>>, vector<8x256xf32>
    tpu.vector_store %arg24[%c8, %c0_17], %14 {strides = array<i32>} : memref<16x256xf32, #tpu.memory_space<vmem>>, vector<8x256xf32>,
    %cst_18 = arith.constant 0.000000e+00 : f32
    %16 = vector.broadcast %cst_18 : f32 to vector<4x128xf32>
    %c0_19 = arith.constant 0 : index
    %c0_20 = arith.constant 0 : index
    %17 = vector.load %arg25[%c0_19, %c0_20] : memref<16x128xf32, #tpu.memory_space<vmem>>, vector<4x128xf32>
    tpu.vector_store %arg25[%c0_19, %c0_20], %16 {strides = array<i32>} : memref<16x128xf32, #tpu.memory_space<vmem>>, vector<4x128xf32>,
    %cst_21 = arith.constant 0.000000e+00 : f32
    %18 = vector.broadcast %cst_21 : f32 to vector<8x128xf32>
    %c8_22 = arith.constant 8 : index
    %c0_23 = arith.constant 0 : index
    %19 = vector.load %arg25[%c8_22, %c0_23] : memref<16x128xf32, #tpu.memory_space<vmem>>, vector<8x128xf32>
    tpu.vector_store %arg25[%c8_22, %c0_23], %18 {strides = array<i32>} : memref<16x128xf32, #tpu.memory_space<vmem>>, vector<8x128xf32>,
    %c0_24 = arith.constant 0 : index
    %c0_25 = arith.constant 0 : index
    %c0_26 = arith.constant 0 : index
    %20 = vector.load %arg1[%c0_24, %c0_25, %c0_26] : memref<1x32x60xf32, #tpu.memory_space<vmem>>, vector<1x32x60xf32>
    %21 = vector.shape_cast %20 : vector<1x32x60xf32> to vector<32x60xf32>
    %c0_27 = arith.constant 0 : index
    %c0_28 = arith.constant 0 : index
    %22 = vector.load %arg2[%c0_27, %c0_28] : memref<1x60xf32, #tpu.memory_space<vmem>>, vector<1x60xf32>
    %23 = vector.broadcast %22 : vector<1x60xf32> to vector<32x60xf32>
    %24 = arith.mulf %21, %23 : vector<32x60xf32>
    %c0_29 = arith.constant 0 : index
    %c0_30 = arith.constant 0 : index
    %25 = vector.load %arg3[%c0_29, %c0_30] : memref<32x60xf32, #tpu.memory_space<vmem>>, vector<32x60xf32>
    %26 = arith.addf %24, %25 : vector<32x60xf32>
    %cst_31 = arith.constant 0.000000e+00 : f32
    %27 = vector.broadcast %cst_31 : f32 to vector<32x60xf32>
    %28 = arith.maximumf %26, %27 : vector<32x60xf32>
    %29 = arith.truncf %28 : vector<32x60xf32> to vector<32x60xbf16>
    %c0_32 = arith.constant 0 : index
    %c0_33 = arith.constant 0 : index
    %30 = vector.load %arg4[%c0_32, %c0_33] : memref<60x16xbf16, #tpu.memory_space<vmem>>, vector<60x16xbf16>
    %cst_34 = arith.constant dense<0.000000e+00> : vector<32x16xf32>
    %31 = tpu.matmul %29, %30, %cst_34 {dimension_numbers = #tpu.dot_dimension_numbers<[1], [0], [0], [1], [0, 0, 1, 1], [], []>} : vector<32x60xbf16>, vector<60x16xbf16>, vector<32x16xf32> -> vector<32x16xf32>
    %c0_35 = arith.constant 0 : index
    %c0_36 = arith.constant 0 : index
    %32 = vector.load %arg5[%c0_35, %c0_36] : memref<1x16xf32, #tpu.memory_space<vmem>>, vector<1x16xf32>
    %33 = vector.broadcast %32 : vector<1x16xf32> to vector<32x16xf32>
    %34 = arith.addf %31, %33 : vector<32x16xf32>
    %cst_37 = arith.constant 0.000000e+00 : f32
    %35 = vector.broadcast %cst_37 : f32 to vector<32x16xf32>
    %36 = arith.maximumf %34, %35 : vector<32x16xf32>
    %c7 = arith.constant 7 : index
    %c0_38 = arith.constant 0 : index
    %37 = vector.load %arg21[%c7, %c0_38] : memref<48x16xf32, #tpu.memory_space<vmem>>, vector<32x16xf32>
    tpu.vector_store %arg21[%c7, %c0_38], %36 {strides = array<i32>} : memref<48x16xf32, #tpu.memory_space<vmem>>, vector<32x16xf32>,
    %cst_39 = arith.constant 0.000000e+00 : f32
    %38 = vector.broadcast %cst_39 : f32 to vector<16x64xf32>
    %c0_40 = arith.constant 0 : index
    %c0_41 = arith.constant 0 : index
    %39 = tpu.strided_load %arg21[%c0_40, %c0_41] {strides = array<i32: 2, 1>} : memref<48x16xf32, #tpu.memory_space<vmem>>, vector<16x16xf32>
    %40 = arith.truncf %39 : vector<16x16xf32> to vector<16x16xbf16>
    %c0_42 = arith.constant 0 : index
    %c0_43 = arith.constant 0 : index
    %c0_44 = arith.constant 0 : index
    %41 = vector.load %arg6[%c0_42, %c0_43, %c0_44] : memref<15x16x64xbf16, #tpu.memory_space<vmem>>, vector<1x16x64xbf16>
    %42 = vector.shape_cast %41 : vector<1x16x64xbf16> to vector<16x64xbf16>
    %cst_45 = arith.constant dense<0.000000e+00> : vector<16x64xf32>
    %43 = tpu.matmul %40, %42, %cst_45 {dimension_numbers = #tpu.dot_dimension_numbers<[1], [0], [0], [1], [0, 0, 1, 1], [], []>} : vector<16x16xbf16>, vector<16x64xbf16>, vector<16x64xf32> -> vector<16x64xf32>
    %44 = arith.addf %38, %43 : vector<16x64xf32>
    %c1 = arith.constant 1 : index
    %c0_46 = arith.constant 0 : index
    %45 = tpu.strided_load %arg21[%c1, %c0_46] {strides = array<i32: 2, 1>} : memref<48x16xf32, #tpu.memory_space<vmem>>, vector<16x16xf32>
    %46 = arith.truncf %45 : vector<16x16xf32> to vector<16x16xbf16>
    %c1_47 = arith.constant 1 : index
    %c0_48 = arith.constant 0 : index
    %c0_49 = arith.constant 0 : index
    %47 = vector.load %arg6[%c1_47, %c0_48, %c0_49] : memref<15x16x64xbf16, #tpu.memory_space<vmem>>, vector<1x16x64xbf16>
    %48 = vector.shape_cast %47 : vector<1x16x64xbf16> to vector<16x64xbf16>
    %cst_50 = arith.constant dense<0.000000e+00> : vector<16x64xf32>
    %49 = tpu.matmul %46, %48, %cst_50 {dimension_numbers = #tpu.dot_dimension_numbers<[1], [0], [0], [1], [0, 0, 1, 1], [], []>} : vector<16x16xbf16>, vector<16x64xbf16>, vector<16x64xf32> -> vector<16x64xf32>
    %50 = arith.addf %44, %49 : vector<16x64xf32>
    %c2 = arith.constant 2 : index
    %c0_51 = arith.constant 0 : index
    %51 = tpu.strided_load %arg21[%c2, %c0_51] {strides = array<i32: 2, 1>} : memref<48x16xf32, #tpu.memory_space<vmem>>, vector<16x16xf32>
    %52 = arith.truncf %51 : vector<16x16xf32> to vector<16x16xbf16>
    %c2_52 = arith.constant 2 : index
    %c0_53 = arith.constant 0 : index
    %c0_54 = arith.constant 0 : index
    %53 = vector.load %arg6[%c2_52, %c0_53, %c0_54] : memref<15x16x64xbf16, #tpu.memory_space<vmem>>, vector<1x16x64xbf16>
    %54 = vector.shape_cast %53 : vector<1x16x64xbf16> to vector<16x64xbf16>
    %cst_55 = arith.constant dense<0.000000e+00> : vector<16x64xf32>
    %55 = tpu.matmul %52, %54, %cst_55 {dimension_numbers = #tpu.dot_dimension_numbers<[1], [0], [0], [1], [0, 0, 1, 1], [], []>} : vector<16x16xbf16>, vector<16x64xbf16>, vector<16x64xf32> -> vector<16x64xf32>
    %56 = arith.addf %50, %55 : vector<16x64xf32>
    %c3 = arith.constant 3 : index
    %c0_56 = arith.constant 0 : index
    %57 = tpu.strided_load %arg21[%c3, %c0_56] {strides = array<i32: 2, 1>} : memref<48x16xf32, #tpu.memory_space<vmem>>, vector<16x16xf32>
    %58 = arith.truncf %57 : vector<16x16xf32> to vector<16x16xbf16>
    %c3_57 = arith.constant 3 : index
    %c0_58 = arith.constant 0 : index
    %c0_59 = arith.constant 0 : index
    %59 = vector.load %arg6[%c3_57, %c0_58, %c0_59] : memref<15x16x64xbf16, #tpu.memory_space<vmem>>, vector<1x16x64xbf16>
    %60 = vector.shape_cast %59 : vector<1x16x64xbf16> to vector<16x64xbf16>
    %cst_60 = arith.constant dense<0.000000e+00> : vector<16x64xf32>
    %61 = tpu.matmul %58, %60, %cst_60 {dimension_numbers = #tpu.dot_dimension_numbers<[1], [0], [0], [1], [0, 0, 1, 1], [], []>} : vector<16x16xbf16>, vector<16x64xbf16>, vector<16x64xf32> -> vector<16x64xf32>
    %62 = arith.addf %56, %61 : vector<16x64xf32>
    %c4 = arith.constant 4 : index
    %c0_61 = arith.constant 0 : index
    %63 = tpu.strided_load %arg21[%c4, %c0_61] {strides = array<i32: 2, 1>} : memref<48x16xf32, #tpu.memory_space<vmem>>, vector<16x16xf32>
    %64 = arith.truncf %63 : vector<16x16xf32> to vector<16x16xbf16>
    %c4_62 = arith.constant 4 : index
    %c0_63 = arith.constant 0 : index
    %c0_64 = arith.constant 0 : index
    %65 = vector.load %arg6[%c4_62, %c0_63, %c0_64] : memref<15x16x64xbf16, #tpu.memory_space<vmem>>, vector<1x16x64xbf16>
    %66 = vector.shape_cast %65 : vector<1x16x64xbf16> to vector<16x64xbf16>
    %cst_65 = arith.constant dense<0.000000e+00> : vector<16x64xf32>
    %67 = tpu.matmul %64, %66, %cst_65 {dimension_numbers = #tpu.dot_dimension_numbers<[1], [0], [0], [1], [0, 0, 1, 1], [], []>} : vector<16x16xbf16>, vector<16x64xbf16>, vector<16x64xf32> -> vector<16x64xf32>
    %68 = arith.addf %62, %67 : vector<16x64xf32>
    %c5 = arith.constant 5 : index
    %c0_66 = arith.constant 0 : index
    %69 = tpu.strided_load %arg21[%c5, %c0_66] {strides = array<i32: 2, 1>} : memref<48x16xf32, #tpu.memory_space<vmem>>, vector<16x16xf32>
    %70 = arith.truncf %69 : vector<16x16xf32> to vector<16x16xbf16>
    %c5_67 = arith.constant 5 : index
    %c0_68 = arith.constant 0 : index
    %c0_69 = arith.constant 0 : index
    %71 = vector.load %arg6[%c5_67, %c0_68, %c0_69] : memref<15x16x64xbf16, #tpu.memory_space<vmem>>, vector<1x16x64xbf16>
    %72 = vector.shape_cast %71 : vector<1x16x64xbf16> to vector<16x64xbf16>
    %cst_70 = arith.constant dense<0.000000e+00> : vector<16x64xf32>
    %73 = tpu.matmul %70, %72, %cst_70 {dimension_numbers = #tpu.dot_dimension_numbers<[1], [0], [0], [1], [0, 0, 1, 1], [], []>} : vector<16x16xbf16>, vector<16x64xbf16>, vector<16x64xf32> -> vector<16x64xf32>
    %74 = arith.addf %68, %73 : vector<16x64xf32>
    %c6 = arith.constant 6 : index
    %c0_71 = arith.constant 0 : index
    %75 = tpu.strided_load %arg21[%c6, %c0_71] {strides = array<i32: 2, 1>} : memref<48x16xf32, #tpu.memory_space<vmem>>, vector<16x16xf32>
    %76 = arith.truncf %75 : vector<16x16xf32> to vector<16x16xbf16>
    %c6_72 = arith.constant 6 : index
    %c0_73 = arith.constant 0 : index
    %c0_74 = arith.constant 0 : index
    %77 = vector.load %arg6[%c6_72, %c0_73, %c0_74] : memref<15x16x64xbf16, #tpu.memory_space<vmem>>, vector<1x16x64xbf16>
    %78 = vector.shape_cast %77 : vector<1x16x64xbf16> to vector<16x64xbf16>
    %cst_75 = arith.constant dense<0.000000e+00> : vector<16x64xf32>
    %79 = tpu.matmul %76, %78, %cst_75 {dimension_numbers = #tpu.dot_dimension_numbers<[1], [0], [0], [1], [0, 0, 1, 1], [], []>} : vector<16x16xbf16>, vector<16x64xbf16>, vector<16x64xf32> -> vector<16x64xf32>
    %80 = arith.addf %74, %79 : vector<16x64xf32>
    %c7_76 = arith.constant 7 : index
    %c0_77 = arith.constant 0 : index
    %81 = tpu.strided_load %arg21[%c7_76, %c0_77] {strides = array<i32: 2, 1>} : memref<48x16xf32, #tpu.memory_space<vmem>>, vector<16x16xf32>
    %82 = arith.truncf %81 : vector<16x16xf32> to vector<16x16xbf16>
    %c7_78 = arith.constant 7 : index
    %c0_79 = arith.constant 0 : index
    %c0_80 = arith.constant 0 : index
    %83 = vector.load %arg6[%c7_78, %c0_79, %c0_80] : memref<15x16x64xbf16, #tpu.memory_space<vmem>>, vector<1x16x64xbf16>
    %84 = vector.shape_cast %83 : vector<1x16x64xbf16> to vector<16x64xbf16>
    %cst_81 = arith.constant dense<0.000000e+00> : vector<16x64xf32>
    %85 = tpu.matmul %82, %84, %cst_81 {dimension_numbers = #tpu.dot_dimension_numbers<[1], [0], [0], [1], [0, 0, 1, 1], [], []>} : vector<16x16xbf16>, vector<16x64xbf16>, vector<16x64xf32> -> vector<16x64xf32>
    %86 = arith.addf %80, %85 : vector<16x64xf32>
    %c8_82 = arith.constant 8 : index
    %c0_83 = arith.constant 0 : index
    %87 = tpu.strided_load %arg21[%c8_82, %c0_83] {strides = array<i32: 2, 1>} : memref<48x16xf32, #tpu.memory_space<vmem>>, vector<16x16xf32>
    %88 = arith.truncf %87 : vector<16x16xf32> to vector<16x16xbf16>
    %c8_84 = arith.constant 8 : index
    %c0_85 = arith.constant 0 : index
    %c0_86 = arith.constant 0 : index
    %89 = vector.load %arg6[%c8_84, %c0_85, %c0_86] : memref<15x16x64xbf16, #tpu.memory_space<vmem>>, vector<1x16x64xbf16>
    %90 = vector.shape_cast %89 : vector<1x16x64xbf16> to vector<16x64xbf16>
    %cst_87 = arith.constant dense<0.000000e+00> : vector<16x64xf32>
    %91 = tpu.matmul %88, %90, %cst_87 {dimension_numbers = #tpu.dot_dimension_numbers<[1], [0], [0], [1], [0, 0, 1, 1], [], []>} : vector<16x16xbf16>, vector<16x64xbf16>, vector<16x64xf32> -> vector<16x64xf32>
    %92 = arith.addf %86, %91 : vector<16x64xf32>
    %c9 = arith.constant 9 : index
    %c0_88 = arith.constant 0 : index
    %93 = tpu.strided_load %arg21[%c9, %c0_88] {strides = array<i32: 2, 1>} : memref<48x16xf32, #tpu.memory_space<vmem>>, vector<16x16xf32>
    %94 = arith.truncf %93 : vector<16x16xf32> to vector<16x16xbf16>
    %c9_89 = arith.constant 9 : index
    %c0_90 = arith.constant 0 : index
    %c0_91 = arith.constant 0 : index
    %95 = vector.load %arg6[%c9_89, %c0_90, %c0_91] : memref<15x16x64xbf16, #tpu.memory_space<vmem>>, vector<1x16x64xbf16>
    %96 = vector.shape_cast %95 : vector<1x16x64xbf16> to vector<16x64xbf16>
    %cst_92 = arith.constant dense<0.000000e+00> : vector<16x64xf32>
    %97 = tpu.matmul %94, %96, %cst_92 {dimension_numbers = #tpu.dot_dimension_numbers<[1], [0], [0], [1], [0, 0, 1, 1], [], []>} : vector<16x16xbf16>, vector<16x64xbf16>, vector<16x64xf32> -> vector<16x64xf32>
    %98 = arith.addf %92, %97 : vector<16x64xf32>
    %c10 = arith.constant 10 : index
    %c0_93 = arith.constant 0 : index
    %99 = tpu.strided_load %arg21[%c10, %c0_93] {strides = array<i32: 2, 1>} : memref<48x16xf32, #tpu.memory_space<vmem>>, vector<16x16xf32>
    %100 = arith.truncf %99 : vector<16x16xf32> to vector<16x16xbf16>
    %c10_94 = arith.constant 10 : index
    %c0_95 = arith.constant 0 : index
    %c0_96 = arith.constant 0 : index
    %101 = vector.load %arg6[%c10_94, %c0_95, %c0_96] : memref<15x16x64xbf16, #tpu.memory_space<vmem>>, vector<1x16x64xbf16>
    %102 = vector.shape_cast %101 : vector<1x16x64xbf16> to vector<16x64xbf16>
    %cst_97 = arith.constant dense<0.000000e+00> : vector<16x64xf32>
    %103 = tpu.matmul %100, %102, %cst_97 {dimension_numbers = #tpu.dot_dimension_numbers<[1], [0], [0], [1], [0, 0, 1, 1], [], []>} : vector<16x16xbf16>, vector<16x64xbf16>, vector<16x64xf32> -> vector<16x64xf32>
    %104 = arith.addf %98, %103 : vector<16x64xf32>
    %c11 = arith.constant 11 : index
    %c0_98 = arith.constant 0 : index
    %105 = tpu.strided_load %arg21[%c11, %c0_98] {strides = array<i32: 2, 1>} : memref<48x16xf32, #tpu.memory_space<vmem>>, vector<16x16xf32>
    %106 = arith.truncf %105 : vector<16x16xf32> to vector<16x16xbf16>
    %c11_99 = arith.constant 11 : index
    %c0_100 = arith.constant 0 : index
    %c0_101 = arith.constant 0 : index
    %107 = vector.load %arg6[%c11_99, %c0_100, %c0_101] : memref<15x16x64xbf16, #tpu.memory_space<vmem>>, vector<1x16x64xbf16>
    %108 = vector.shape_cast %107 : vector<1x16x64xbf16> to vector<16x64xbf16>
    %cst_102 = arith.constant dense<0.000000e+00> : vector<16x64xf32>
    %109 = tpu.matmul %106, %108, %cst_102 {dimension_numbers = #tpu.dot_dimension_numbers<[1], [0], [0], [1], [0, 0, 1, 1], [], []>} : vector<16x16xbf16>, vector<16x64xbf16>, vector<16x64xf32> -> vector<16x64xf32>
    %110 = arith.addf %104, %109 : vector<16x64xf32>
    %c12 = arith.constant 12 : index
    %c0_103 = arith.constant 0 : index
    %111 = tpu.strided_load %arg21[%c12, %c0_103] {strides = array<i32: 2, 1>} : memref<48x16xf32, #tpu.memory_space<vmem>>, vector<16x16xf32>
    %112 = arith.truncf %111 : vector<16x16xf32> to vector<16x16xbf16>
    %c12_104 = arith.constant 12 : index
    %c0_105 = arith.constant 0 : index
    %c0_106 = arith.constant 0 : index
    %113 = vector.load %arg6[%c12_104, %c0_105, %c0_106] : memref<15x16x64xbf16, #tpu.memory_space<vmem>>, vector<1x16x64xbf16>
    %114 = vector.shape_cast %113 : vector<1x16x64xbf16> to vector<16x64xbf16>
    %cst_107 = arith.constant dense<0.000000e+00> : vector<16x64xf32>
    %115 = tpu.matmul %112, %114, %cst_107 {dimension_numbers = #tpu.dot_dimension_numbers<[1], [0], [0], [1], [0, 0, 1, 1], [], []>} : vector<16x16xbf16>, vector<16x64xbf16>, vector<16x64xf32> -> vector<16x64xf32>
    %116 = arith.addf %110, %115 : vector<16x64xf32>
    %c13 = arith.constant 13 : index
    %c0_108 = arith.constant 0 : index
    %117 = tpu.strided_load %arg21[%c13, %c0_108] {strides = array<i32: 2, 1>} : memref<48x16xf32, #tpu.memory_space<vmem>>, vector<16x16xf32>
    %118 = arith.truncf %117 : vector<16x16xf32> to vector<16x16xbf16>
    %c13_109 = arith.constant 13 : index
    %c0_110 = arith.constant 0 : index
    %c0_111 = arith.constant 0 : index
    %119 = vector.load %arg6[%c13_109, %c0_110, %c0_111] : memref<15x16x64xbf16, #tpu.memory_space<vmem>>, vector<1x16x64xbf16>
    %120 = vector.shape_cast %119 : vector<1x16x64xbf16> to vector<16x64xbf16>
    %cst_112 = arith.constant dense<0.000000e+00> : vector<16x64xf32>
    %121 = tpu.matmul %118, %120, %cst_112 {dimension_numbers = #tpu.dot_dimension_numbers<[1], [0], [0], [1], [0, 0, 1, 1], [], []>} : vector<16x16xbf16>, vector<16x64xbf16>, vector<16x64xf32> -> vector<16x64xf32>
    %122 = arith.addf %116, %121 : vector<16x64xf32>
    %c14 = arith.constant 14 : index
    %c0_113 = arith.constant 0 : index
    %123 = tpu.strided_load %arg21[%c14, %c0_113] {strides = array<i32: 2, 1>} : memref<48x16xf32, #tpu.memory_space<vmem>>, vector<16x16xf32>
    %124 = arith.truncf %123 : vector<16x16xf32> to vector<16x16xbf16>
    %c14_114 = arith.constant 14 : index
    %c0_115 = arith.constant 0 : index
    %c0_116 = arith.constant 0 : index
    %125 = vector.load %arg6[%c14_114, %c0_115, %c0_116] : memref<15x16x64xbf16, #tpu.memory_space<vmem>>, vector<1x16x64xbf16>
    %126 = vector.shape_cast %125 : vector<1x16x64xbf16> to vector<16x64xbf16>
    %cst_117 = arith.constant dense<0.000000e+00> : vector<16x64xf32>
    %127 = tpu.matmul %124, %126, %cst_117 {dimension_numbers = #tpu.dot_dimension_numbers<[1], [0], [0], [1], [0, 0, 1, 1], [], []>} : vector<16x16xbf16>, vector<16x64xbf16>, vector<16x64xf32> -> vector<16x64xf32>
    %128 = arith.addf %122, %127 : vector<16x64xf32>
    %c0_118 = arith.constant 0 : index
    %c0_119 = arith.constant 0 : index
    %129 = vector.load %arg7[%c0_118, %c0_119] : memref<1x64xf32, #tpu.memory_space<vmem>>, vector<1x64xf32>
    %130 = vector.broadcast %129 : vector<1x64xf32> to vector<16x64xf32>
    %131 = arith.addf %128, %130 : vector<16x64xf32>
    %cst_120 = arith.constant 0.000000e+00 : f32
    %132 = vector.broadcast %cst_120 : f32 to vector<16x64xf32>
    %133 = arith.maximumf %131, %132 : vector<16x64xf32>
    %c7_121 = arith.constant 7 : index
    %c0_122 = arith.constant 0 : index
    %134 = vector.load %arg22[%c7_121, %c0_122] : memref<32x64xf32, #tpu.memory_space<vmem>>, vector<16x64xf32>
    tpu.vector_store %arg22[%c7_121, %c0_122], %133 {strides = array<i32>} : memref<32x64xf32, #tpu.memory_space<vmem>>, vector<16x64xf32>,
    %cst_123 = arith.constant 0.000000e+00 : f32
    %135 = vector.broadcast %cst_123 : f32 to vector<8x128xf32>
    %c0_124 = arith.constant 0 : index
    %c0_125 = arith.constant 0 : index
    %136 = tpu.strided_load %arg22[%c0_124, %c0_125] {strides = array<i32: 2, 1>} : memref<32x64xf32, #tpu.memory_space<vmem>>, vector<8x64xf32>
    %137 = arith.truncf %136 : vector<8x64xf32> to vector<8x64xbf16>
    %c0_126 = arith.constant 0 : index
    %c0_127 = arith.constant 0 : index
    %c0_128 = arith.constant 0 : index
    %138 = vector.load %arg8[%c0_126, %c0_127, %c0_128] : memref<15x64x128xbf16, #tpu.memory_space<vmem>>, vector<1x64x128xbf16>
    %139 = vector.shape_cast %138 : vector<1x64x128xbf16> to vector<64x128xbf16>
    %cst_129 = arith.constant dense<0.000000e+00> : vector<8x128xf32>
    %140 = tpu.matmul %137, %139, %cst_129 {dimension_numbers = #tpu.dot_dimension_numbers<[1], [0], [0], [1], [0, 0, 1, 1], [], []>} : vector<8x64xbf16>, vector<64x128xbf16>, vector<8x128xf32> -> vector<8x128xf32>
    %141 = arith.addf %135, %140 : vector<8x128xf32>
    %c1_130 = arith.constant 1 : index
    %c0_131 = arith.constant 0 : index
    %142 = tpu.strided_load %arg22[%c1_130, %c0_131] {strides = array<i32: 2, 1>} : memref<32x64xf32, #tpu.memory_space<vmem>>, vector<8x64xf32>
    %143 = arith.truncf %142 : vector<8x64xf32> to vector<8x64xbf16>
    %c1_132 = arith.constant 1 : index
    %c0_133 = arith.constant 0 : index
    %c0_134 = arith.constant 0 : index
    %144 = vector.load %arg8[%c1_132, %c0_133, %c0_134] : memref<15x64x128xbf16, #tpu.memory_space<vmem>>, vector<1x64x128xbf16>
    %145 = vector.shape_cast %144 : vector<1x64x128xbf16> to vector<64x128xbf16>
    %cst_135 = arith.constant dense<0.000000e+00> : vector<8x128xf32>
    %146 = tpu.matmul %143, %145, %cst_135 {dimension_numbers = #tpu.dot_dimension_numbers<[1], [0], [0], [1], [0, 0, 1, 1], [], []>} : vector<8x64xbf16>, vector<64x128xbf16>, vector<8x128xf32> -> vector<8x128xf32>
    %147 = arith.addf %141, %146 : vector<8x128xf32>
    %c2_136 = arith.constant 2 : index
    %c0_137 = arith.constant 0 : index
    %148 = tpu.strided_load %arg22[%c2_136, %c0_137] {strides = array<i32: 2, 1>} : memref<32x64xf32, #tpu.memory_space<vmem>>, vector<8x64xf32>
    %149 = arith.truncf %148 : vector<8x64xf32> to vector<8x64xbf16>
    %c2_138 = arith.constant 2 : index
    %c0_139 = arith.constant 0 : index
    %c0_140 = arith.constant 0 : index
    %150 = vector.load %arg8[%c2_138, %c0_139, %c0_140] : memref<15x64x128xbf16, #tpu.memory_space<vmem>>, vector<1x64x128xbf16>
    %151 = vector.shape_cast %150 : vector<1x64x128xbf16> to vector<64x128xbf16>
    %cst_141 = arith.constant dense<0.000000e+00> : vector<8x128xf32>
    %152 = tpu.matmul %149, %151, %cst_141 {dimension_numbers = #tpu.dot_dimension_numbers<[1], [0], [0], [1], [0, 0, 1, 1], [], []>} : vector<8x64xbf16>, vector<64x128xbf16>, vector<8x128xf32> -> vector<8x128xf32>
    %153 = arith.addf %147, %152 : vector<8x128xf32>
    %c3_142 = arith.constant 3 : index
    %c0_143 = arith.constant 0 : index
    %154 = tpu.strided_load %arg22[%c3_142, %c0_143] {strides = array<i32: 2, 1>} : memref<32x64xf32, #tpu.memory_space<vmem>>, vector<8x64xf32>
    %155 = arith.truncf %154 : vector<8x64xf32> to vector<8x64xbf16>
    %c3_144 = arith.constant 3 : index
    %c0_145 = arith.constant 0 : index
    %c0_146 = arith.constant 0 : index
    %156 = vector.load %arg8[%c3_144, %c0_145, %c0_146] : memref<15x64x128xbf16, #tpu.memory_space<vmem>>, vector<1x64x128xbf16>
    %157 = vector.shape_cast %156 : vector<1x64x128xbf16> to vector<64x128xbf16>
    %cst_147 = arith.constant dense<0.000000e+00> : vector<8x128xf32>
    %158 = tpu.matmul %155, %157, %cst_147 {dimension_numbers = #tpu.dot_dimension_numbers<[1], [0], [0], [1], [0, 0, 1, 1], [], []>} : vector<8x64xbf16>, vector<64x128xbf16>, vector<8x128xf32> -> vector<8x128xf32>
    %159 = arith.addf %153, %158 : vector<8x128xf32>
    %c4_148 = arith.constant 4 : index
    %c0_149 = arith.constant 0 : index
    %160 = tpu.strided_load %arg22[%c4_148, %c0_149] {strides = array<i32: 2, 1>} : memref<32x64xf32, #tpu.memory_space<vmem>>, vector<8x64xf32>
    %161 = arith.truncf %160 : vector<8x64xf32> to vector<8x64xbf16>
    %c4_150 = arith.constant 4 : index
    %c0_151 = arith.constant 0 : index
    %c0_152 = arith.constant 0 : index
    %162 = vector.load %arg8[%c4_150, %c0_151, %c0_152] : memref<15x64x128xbf16, #tpu.memory_space<vmem>>, vector<1x64x128xbf16>
    %163 = vector.shape_cast %162 : vector<1x64x128xbf16> to vector<64x128xbf16>
    %cst_153 = arith.constant dense<0.000000e+00> : vector<8x128xf32>
    %164 = tpu.matmul %161, %163, %cst_153 {dimension_numbers = #tpu.dot_dimension_numbers<[1], [0], [0], [1], [0, 0, 1, 1], [], []>} : vector<8x64xbf16>, vector<64x128xbf16>, vector<8x128xf32> -> vector<8x128xf32>
    %165 = arith.addf %159, %164 : vector<8x128xf32>
    %c5_154 = arith.constant 5 : index
    %c0_155 = arith.constant 0 : index
    %166 = tpu.strided_load %arg22[%c5_154, %c0_155] {strides = array<i32: 2, 1>} : memref<32x64xf32, #tpu.memory_space<vmem>>, vector<8x64xf32>
    %167 = arith.truncf %166 : vector<8x64xf32> to vector<8x64xbf16>
    %c5_156 = arith.constant 5 : index
    %c0_157 = arith.constant 0 : index
    %c0_158 = arith.constant 0 : index
    %168 = vector.load %arg8[%c5_156, %c0_157, %c0_158] : memref<15x64x128xbf16, #tpu.memory_space<vmem>>, vector<1x64x128xbf16>
    %169 = vector.shape_cast %168 : vector<1x64x128xbf16> to vector<64x128xbf16>
    %cst_159 = arith.constant dense<0.000000e+00> : vector<8x128xf32>
    %170 = tpu.matmul %167, %169, %cst_159 {dimension_numbers = #tpu.dot_dimension_numbers<[1], [0], [0], [1], [0, 0, 1, 1], [], []>} : vector<8x64xbf16>, vector<64x128xbf16>, vector<8x128xf32> -> vector<8x128xf32>
    %171 = arith.addf %165, %170 : vector<8x128xf32>
    %c6_160 = arith.constant 6 : index
    %c0_161 = arith.constant 0 : index
    %172 = tpu.strided_load %arg22[%c6_160, %c0_161] {strides = array<i32: 2, 1>} : memref<32x64xf32, #tpu.memory_space<vmem>>, vector<8x64xf32>
    %173 = arith.truncf %172 : vector<8x64xf32> to vector<8x64xbf16>
    %c6_162 = arith.constant 6 : index
    %c0_163 = arith.constant 0 : index
    %c0_164 = arith.constant 0 : index
    %174 = vector.load %arg8[%c6_162, %c0_163, %c0_164] : memref<15x64x128xbf16, #tpu.memory_space<vmem>>, vector<1x64x128xbf16>
    %175 = vector.shape_cast %174 : vector<1x64x128xbf16> to vector<64x128xbf16>
    %cst_165 = arith.constant dense<0.000000e+00> : vector<8x128xf32>
    %176 = tpu.matmul %173, %175, %cst_165 {dimension_numbers = #tpu.dot_dimension_numbers<[1], [0], [0], [1], [0, 0, 1, 1], [], []>} : vector<8x64xbf16>, vector<64x128xbf16>, vector<8x128xf32> -> vector<8x128xf32>
    %177 = arith.addf %171, %176 : vector<8x128xf32>
    %c7_166 = arith.constant 7 : index
    %c0_167 = arith.constant 0 : index
    %178 = tpu.strided_load %arg22[%c7_166, %c0_167] {strides = array<i32: 2, 1>} : memref<32x64xf32, #tpu.memory_space<vmem>>, vector<8x64xf32>
    %179 = arith.truncf %178 : vector<8x64xf32> to vector<8x64xbf16>
    %c7_168 = arith.constant 7 : index
    %c0_169 = arith.constant 0 : index
    %c0_170 = arith.constant 0 : index
    %180 = vector.load %arg8[%c7_168, %c0_169, %c0_170] : memref<15x64x128xbf16, #tpu.memory_space<vmem>>, vector<1x64x128xbf16>
    %181 = vector.shape_cast %180 : vector<1x64x128xbf16> to vector<64x128xbf16>
    %cst_171 = arith.constant dense<0.000000e+00> : vector<8x128xf32>
    %182 = tpu.matmul %179, %181, %cst_171 {dimension_numbers = #tpu.dot_dimension_numbers<[1], [0], [0], [1], [0, 0, 1, 1], [], []>} : vector<8x64xbf16>, vector<64x128xbf16>, vector<8x128xf32> -> vector<8x128xf32>
    %183 = arith.addf %177, %182 : vector<8x128xf32>
    %c8_172 = arith.constant 8 : index
    %c0_173 = arith.constant 0 : index
    %184 = tpu.strided_load %arg22[%c8_172, %c0_173] {strides = array<i32: 2, 1>} : memref<32x64xf32, #tpu.memory_space<vmem>>, vector<8x64xf32>
    %185 = arith.truncf %184 : vector<8x64xf32> to vector<8x64xbf16>
    %c8_174 = arith.constant 8 : index
    %c0_175 = arith.constant 0 : index
    %c0_176 = arith.constant 0 : index
    %186 = vector.load %arg8[%c8_174, %c0_175, %c0_176] : memref<15x64x128xbf16, #tpu.memory_space<vmem>>, vector<1x64x128xbf16>
    %187 = vector.shape_cast %186 : vector<1x64x128xbf16> to vector<64x128xbf16>
    %cst_177 = arith.constant dense<0.000000e+00> : vector<8x128xf32>
    %188 = tpu.matmul %185, %187, %cst_177 {dimension_numbers = #tpu.dot_dimension_numbers<[1], [0], [0], [1], [0, 0, 1, 1], [], []>} : vector<8x64xbf16>, vector<64x128xbf16>, vector<8x128xf32> -> vector<8x128xf32>
    %189 = arith.addf %183, %188 : vector<8x128xf32>
    %c9_178 = arith.constant 9 : index
    %c0_179 = arith.constant 0 : index
    %190 = tpu.strided_load %arg22[%c9_178, %c0_179] {strides = array<i32: 2, 1>} : memref<32x64xf32, #tpu.memory_space<vmem>>, vector<8x64xf32>
    %191 = arith.truncf %190 : vector<8x64xf32> to vector<8x64xbf16>
    %c9_180 = arith.constant 9 : index
    %c0_181 = arith.constant 0 : index
    %c0_182 = arith.constant 0 : index
    %192 = vector.load %arg8[%c9_180, %c0_181, %c0_182] : memref<15x64x128xbf16, #tpu.memory_space<vmem>>, vector<1x64x128xbf16>
    %193 = vector.shape_cast %192 : vector<1x64x128xbf16> to vector<64x128xbf16>
    %cst_183 = arith.constant dense<0.000000e+00> : vector<8x128xf32>
    %194 = tpu.matmul %191, %193, %cst_183 {dimension_numbers = #tpu.dot_dimension_numbers<[1], [0], [0], [1], [0, 0, 1, 1], [], []>} : vector<8x64xbf16>, vector<64x128xbf16>, vector<8x128xf32> -> vector<8x128xf32>
    %195 = arith.addf %189, %194 : vector<8x128xf32>
    %c10_184 = arith.constant 10 : index
    %c0_185 = arith.constant 0 : index
    %196 = tpu.strided_load %arg22[%c10_184, %c0_185] {strides = array<i32: 2, 1>} : memref<32x64xf32, #tpu.memory_space<vmem>>, vector<8x64xf32>
    %197 = arith.truncf %196 : vector<8x64xf32> to vector<8x64xbf16>
    %c10_186 = arith.constant 10 : index
    %c0_187 = arith.constant 0 : index
    %c0_188 = arith.constant 0 : index
    %198 = vector.load %arg8[%c10_186, %c0_187, %c0_188] : memref<15x64x128xbf16, #tpu.memory_space<vmem>>, vector<1x64x128xbf16>
    %199 = vector.shape_cast %198 : vector<1x64x128xbf16> to vector<64x128xbf16>
    %cst_189 = arith.constant dense<0.000000e+00> : vector<8x128xf32>
    %200 = tpu.matmul %197, %199, %cst_189 {dimension_numbers = #tpu.dot_dimension_numbers<[1], [0], [0], [1], [0, 0, 1, 1], [], []>} : vector<8x64xbf16>, vector<64x128xbf16>, vector<8x128xf32> -> vector<8x128xf32>
    %201 = arith.addf %195, %200 : vector<8x128xf32>
    %c11_190 = arith.constant 11 : index
    %c0_191 = arith.constant 0 : index
    %202 = tpu.strided_load %arg22[%c11_190, %c0_191] {strides = array<i32: 2, 1>} : memref<32x64xf32, #tpu.memory_space<vmem>>, vector<8x64xf32>
    %203 = arith.truncf %202 : vector<8x64xf32> to vector<8x64xbf16>
    %c11_192 = arith.constant 11 : index
    %c0_193 = arith.constant 0 : index
    %c0_194 = arith.constant 0 : index
    %204 = vector.load %arg8[%c11_192, %c0_193, %c0_194] : memref<15x64x128xbf16, #tpu.memory_space<vmem>>, vector<1x64x128xbf16>
    %205 = vector.shape_cast %204 : vector<1x64x128xbf16> to vector<64x128xbf16>
    %cst_195 = arith.constant dense<0.000000e+00> : vector<8x128xf32>
    %206 = tpu.matmul %203, %205, %cst_195 {dimension_numbers = #tpu.dot_dimension_numbers<[1], [0], [0], [1], [0, 0, 1, 1], [], []>} : vector<8x64xbf16>, vector<64x128xbf16>, vector<8x128xf32> -> vector<8x128xf32>
    %207 = arith.addf %201, %206 : vector<8x128xf32>
    %c12_196 = arith.constant 12 : index
    %c0_197 = arith.constant 0 : index
    %208 = tpu.strided_load %arg22[%c12_196, %c0_197] {strides = array<i32: 2, 1>} : memref<32x64xf32, #tpu.memory_space<vmem>>, vector<8x64xf32>
    %209 = arith.truncf %208 : vector<8x64xf32> to vector<8x64xbf16>
    %c12_198 = arith.constant 12 : index
    %c0_199 = arith.constant 0 : index
    %c0_200 = arith.constant 0 : index
    %210 = vector.load %arg8[%c12_198, %c0_199, %c0_200] : memref<15x64x128xbf16, #tpu.memory_space<vmem>>, vector<1x64x128xbf16>
    %211 = vector.shape_cast %210 : vector<1x64x128xbf16> to vector<64x128xbf16>
    %cst_201 = arith.constant dense<0.000000e+00> : vector<8x128xf32>
    %212 = tpu.matmul %209, %211, %cst_201 {dimension_numbers = #tpu.dot_dimension_numbers<[1], [0], [0], [1], [0, 0, 1, 1], [], []>} : vector<8x64xbf16>, vector<64x128xbf16>, vector<8x128xf32> -> vector<8x128xf32>
    %213 = arith.addf %207, %212 : vector<8x128xf32>
    %c13_202 = arith.constant 13 : index
    %c0_203 = arith.constant 0 : index
    %214 = tpu.strided_load %arg22[%c13_202, %c0_203] {strides = array<i32: 2, 1>} : memref<32x64xf32, #tpu.memory_space<vmem>>, vector<8x64xf32>
    %215 = arith.truncf %214 : vector<8x64xf32> to vector<8x64xbf16>
    %c13_204 = arith.constant 13 : index
    %c0_205 = arith.constant 0 : index
    %c0_206 = arith.constant 0 : index
    %216 = vector.load %arg8[%c13_204, %c0_205, %c0_206] : memref<15x64x128xbf16, #tpu.memory_space<vmem>>, vector<1x64x128xbf16>
    %217 = vector.shape_cast %216 : vector<1x64x128xbf16> to vector<64x128xbf16>
    %cst_207 = arith.constant dense<0.000000e+00> : vector<8x128xf32>
    %218 = tpu.matmul %215, %217, %cst_207 {dimension_numbers = #tpu.dot_dimension_numbers<[1], [0], [0], [1], [0, 0, 1, 1], [], []>} : vector<8x64xbf16>, vector<64x128xbf16>, vector<8x128xf32> -> vector<8x128xf32>
    %219 = arith.addf %213, %218 : vector<8x128xf32>
    %c14_208 = arith.constant 14 : index
    %c0_209 = arith.constant 0 : index
    %220 = tpu.strided_load %arg22[%c14_208, %c0_209] {strides = array<i32: 2, 1>} : memref<32x64xf32, #tpu.memory_space<vmem>>, vector<8x64xf32>
    %221 = arith.truncf %220 : vector<8x64xf32> to vector<8x64xbf16>
    %c14_210 = arith.constant 14 : index
    %c0_211 = arith.constant 0 : index
    %c0_212 = arith.constant 0 : index
    %222 = vector.load %arg8[%c14_210, %c0_211, %c0_212] : memref<15x64x128xbf16, #tpu.memory_space<vmem>>, vector<1x64x128xbf16>
    %223 = vector.shape_cast %222 : vector<1x64x128xbf16> to vector<64x128xbf16>
    %cst_213 = arith.constant dense<0.000000e+00> : vector<8x128xf32>
    %224 = tpu.matmul %221, %223, %cst_213 {dimension_numbers = #tpu.dot_dimension_numbers<[1], [0], [0], [1], [0, 0, 1, 1], [], []>} : vector<8x64xbf16>, vector<64x128xbf16>, vector<8x128xf32> -> vector<8x128xf32>
    %225 = arith.addf %219, %224 : vector<8x128xf32>
    %c0_214 = arith.constant 0 : index
    %c0_215 = arith.constant 0 : index
    %226 = vector.load %arg9[%c0_214, %c0_215] : memref<1x128xf32, #tpu.memory_space<vmem>>, vector<1x128xf32>
    %227 = vector.broadcast %226 : vector<1x128xf32> to vector<8x128xf32>
    %228 = arith.addf %225, %227 : vector<8x128xf32>
    %cst_216 = arith.constant 0.000000e+00 : f32
    %229 = vector.broadcast %cst_216 : f32 to vector<8x128xf32>
    %230 = arith.maximumf %228, %229 : vector<8x128xf32>
    %c7_217 = arith.constant 7 : index
    %c0_218 = arith.constant 0 : index
    %231 = vector.load %arg23[%c7_217, %c0_218] : memref<24x128xf32, #tpu.memory_space<vmem>>, vector<8x128xf32>
    tpu.vector_store %arg23[%c7_217, %c0_218], %230 {strides = array<i32>} : memref<24x128xf32, #tpu.memory_space<vmem>>, vector<8x128xf32>,
    %cst_219 = arith.constant 0.000000e+00 : f32
    %232 = vector.broadcast %cst_219 : f32 to vector<4x256xf32>
    %c0_220 = arith.constant 0 : index
    %c0_221 = arith.constant 0 : index
    %233 = tpu.strided_load %arg23[%c0_220, %c0_221] {strides = array<i32: 2, 1>} : memref<24x128xf32, #tpu.memory_space<vmem>>, vector<4x128xf32>
    %234 = arith.truncf %233 : vector<4x128xf32> to vector<4x128xbf16>
    %c0_222 = arith.constant 0 : index
    %c0_223 = arith.constant 0 : index
    %c0_224 = arith.constant 0 : index
    %235 = vector.load %arg10[%c0_222, %c0_223, %c0_224] : memref<15x128x256xbf16, #tpu.memory_space<vmem>>, vector<1x128x256xbf16>
    %236 = vector.shape_cast %235 : vector<1x128x256xbf16> to vector<128x256xbf16>
    %cst_225 = arith.constant dense<0.000000e+00> : vector<4x256xf32>
    %237 = tpu.matmul %234, %236, %cst_225 {dimension_numbers = #tpu.dot_dimension_numbers<[1], [0], [0], [1], [0, 0, 1, 1], [], []>} : vector<4x128xbf16>, vector<128x256xbf16>, vector<4x256xf32> -> vector<4x256xf32>
    %238 = arith.addf %232, %237 : vector<4x256xf32>
    %c1_226 = arith.constant 1 : index
    %c0_227 = arith.constant 0 : index
    %239 = tpu.strided_load %arg23[%c1_226, %c0_227] {strides = array<i32: 2, 1>} : memref<24x128xf32, #tpu.memory_space<vmem>>, vector<4x128xf32>
    %240 = arith.truncf %239 : vector<4x128xf32> to vector<4x128xbf16>
    %c1_228 = arith.constant 1 : index
    %c0_229 = arith.constant 0 : index
    %c0_230 = arith.constant 0 : index
    %241 = vector.load %arg10[%c1_228, %c0_229, %c0_230] : memref<15x128x256xbf16, #tpu.memory_space<vmem>>, vector<1x128x256xbf16>
    %242 = vector.shape_cast %241 : vector<1x128x256xbf16> to vector<128x256xbf16>
    %cst_231 = arith.constant dense<0.000000e+00> : vector<4x256xf32>
    %243 = tpu.matmul %240, %242, %cst_231 {dimension_numbers = #tpu.dot_dimension_numbers<[1], [0], [0], [1], [0, 0, 1, 1], [], []>} : vector<4x128xbf16>, vector<128x256xbf16>, vector<4x256xf32> -> vector<4x256xf32>
    %244 = arith.addf %238, %243 : vector<4x256xf32>
    %c2_232 = arith.constant 2 : index
    %c0_233 = arith.constant 0 : index
    %245 = tpu.strided_load %arg23[%c2_232, %c0_233] {strides = array<i32: 2, 1>} : memref<24x128xf32, #tpu.memory_space<vmem>>, vector<4x128xf32>
    %246 = arith.truncf %245 : vector<4x128xf32> to vector<4x128xbf16>
    %c2_234 = arith.constant 2 : index
    %c0_235 = arith.constant 0 : index
    %c0_236 = arith.constant 0 : index
    %247 = vector.load %arg10[%c2_234, %c0_235, %c0_236] : memref<15x128x256xbf16, #tpu.memory_space<vmem>>, vector<1x128x256xbf16>
    %248 = vector.shape_cast %247 : vector<1x128x256xbf16> to vector<128x256xbf16>
    %cst_237 = arith.constant dense<0.000000e+00> : vector<4x256xf32>
    %249 = tpu.matmul %246, %248, %cst_237 {dimension_numbers = #tpu.dot_dimension_numbers<[1], [0], [0], [1], [0, 0, 1, 1], [], []>} : vector<4x128xbf16>, vector<128x256xbf16>, vector<4x256xf32> -> vector<4x256xf32>
    %250 = arith.addf %244, %249 : vector<4x256xf32>
    %c3_238 = arith.constant 3 : index
    %c0_239 = arith.constant 0 : index
    %251 = tpu.strided_load %arg23[%c3_238, %c0_239] {strides = array<i32: 2, 1>} : memref<24x128xf32, #tpu.memory_space<vmem>>, vector<4x128xf32>
    %252 = arith.truncf %251 : vector<4x128xf32> to vector<4x128xbf16>
    %c3_240 = arith.constant 3 : index
    %c0_241 = arith.constant 0 : index
    %c0_242 = arith.constant 0 : index
    %253 = vector.load %arg10[%c3_240, %c0_241, %c0_242] : memref<15x128x256xbf16, #tpu.memory_space<vmem>>, vector<1x128x256xbf16>
    %254 = vector.shape_cast %253 : vector<1x128x256xbf16> to vector<128x256xbf16>
    %cst_243 = arith.constant dense<0.000000e+00> : vector<4x256xf32>
    %255 = tpu.matmul %252, %254, %cst_243 {dimension_numbers = #tpu.dot_dimension_numbers<[1], [0], [0], [1], [0, 0, 1, 1], [], []>} : vector<4x128xbf16>, vector<128x256xbf16>, vector<4x256xf32> -> vector<4x256xf32>
    %256 = arith.addf %250, %255 : vector<4x256xf32>
    %c4_244 = arith.constant 4 : index
    %c0_245 = arith.constant 0 : index
    %257 = tpu.strided_load %arg23[%c4_244, %c0_245] {strides = array<i32: 2, 1>} : memref<24x128xf32, #tpu.memory_space<vmem>>, vector<4x128xf32>
    %258 = arith.truncf %257 : vector<4x128xf32> to vector<4x128xbf16>
    %c4_246 = arith.constant 4 : index
    %c0_247 = arith.constant 0 : index
    %c0_248 = arith.constant 0 : index
    %259 = vector.load %arg10[%c4_246, %c0_247, %c0_248] : memref<15x128x256xbf16, #tpu.memory_space<vmem>>, vector<1x128x256xbf16>
    %260 = vector.shape_cast %259 : vector<1x128x256xbf16> to vector<128x256xbf16>
    %cst_249 = arith.constant dense<0.000000e+00> : vector<4x256xf32>
    %261 = tpu.matmul %258, %260, %cst_249 {dimension_numbers = #tpu.dot_dimension_numbers<[1], [0], [0], [1], [0, 0, 1, 1], [], []>} : vector<4x128xbf16>, vector<128x256xbf16>, vector<4x256xf32> -> vector<4x256xf32>
    %262 = arith.addf %256, %261 : vector<4x256xf32>
    %c5_250 = arith.constant 5 : index
    %c0_251 = arith.constant 0 : index
    %263 = tpu.strided_load %arg23[%c5_250, %c0_251] {strides = array<i32: 2, 1>} : memref<24x128xf32, #tpu.memory_space<vmem>>, vector<4x128xf32>
    %264 = arith.truncf %263 : vector<4x128xf32> to vector<4x128xbf16>
    %c5_252 = arith.constant 5 : index
    %c0_253 = arith.constant 0 : index
    %c0_254 = arith.constant 0 : index
    %265 = vector.load %arg10[%c5_252, %c0_253, %c0_254] : memref<15x128x256xbf16, #tpu.memory_space<vmem>>, vector<1x128x256xbf16>
    %266 = vector.shape_cast %265 : vector<1x128x256xbf16> to vector<128x256xbf16>
    %cst_255 = arith.constant dense<0.000000e+00> : vector<4x256xf32>
    %267 = tpu.matmul %264, %266, %cst_255 {dimension_numbers = #tpu.dot_dimension_numbers<[1], [0], [0], [1], [0, 0, 1, 1], [], []>} : vector<4x128xbf16>, vector<128x256xbf16>, vector<4x256xf32> -> vector<4x256xf32>
    %268 = arith.addf %262, %267 : vector<4x256xf32>
    %c6_256 = arith.constant 6 : index
    %c0_257 = arith.constant 0 : index
    %269 = tpu.strided_load %arg23[%c6_256, %c0_257] {strides = array<i32: 2, 1>} : memref<24x128xf32, #tpu.memory_space<vmem>>, vector<4x128xf32>
    %270 = arith.truncf %269 : vector<4x128xf32> to vector<4x128xbf16>
    %c6_258 = arith.constant 6 : index
    %c0_259 = arith.constant 0 : index
    %c0_260 = arith.constant 0 : index
    %271 = vector.load %arg10[%c6_258, %c0_259, %c0_260] : memref<15x128x256xbf16, #tpu.memory_space<vmem>>, vector<1x128x256xbf16>
    %272 = vector.shape_cast %271 : vector<1x128x256xbf16> to vector<128x256xbf16>
    %cst_261 = arith.constant dense<0.000000e+00> : vector<4x256xf32>
    %273 = tpu.matmul %270, %272, %cst_261 {dimension_numbers = #tpu.dot_dimension_numbers<[1], [0], [0], [1], [0, 0, 1, 1], [], []>} : vector<4x128xbf16>, vector<128x256xbf16>, vector<4x256xf32> -> vector<4x256xf32>
    %274 = arith.addf %268, %273 : vector<4x256xf32>
    %c7_262 = arith.constant 7 : index
    %c0_263 = arith.constant 0 : index
    %275 = tpu.strided_load %arg23[%c7_262, %c0_263] {strides = array<i32: 2, 1>} : memref<24x128xf32, #tpu.memory_space<vmem>>, vector<4x128xf32>
    %276 = arith.truncf %275 : vector<4x128xf32> to vector<4x128xbf16>
    %c7_264 = arith.constant 7 : index
    %c0_265 = arith.constant 0 : index
    %c0_266 = arith.constant 0 : index
    %277 = vector.load %arg10[%c7_264, %c0_265, %c0_266] : memref<15x128x256xbf16, #tpu.memory_space<vmem>>, vector<1x128x256xbf16>
    %278 = vector.shape_cast %277 : vector<1x128x256xbf16> to vector<128x256xbf16>
    %cst_267 = arith.constant dense<0.000000e+00> : vector<4x256xf32>
    %279 = tpu.matmul %276, %278, %cst_267 {dimension_numbers = #tpu.dot_dimension_numbers<[1], [0], [0], [1], [0, 0, 1, 1], [], []>} : vector<4x128xbf16>, vector<128x256xbf16>, vector<4x256xf32> -> vector<4x256xf32>
    %280 = arith.addf %274, %279 : vector<4x256xf32>
    %c8_268 = arith.constant 8 : index
    %c0_269 = arith.constant 0 : index
    %281 = tpu.strided_load %arg23[%c8_268, %c0_269] {strides = array<i32: 2, 1>} : memref<24x128xf32, #tpu.memory_space<vmem>>, vector<4x128xf32>
    %282 = arith.truncf %281 : vector<4x128xf32> to vector<4x128xbf16>
    %c8_270 = arith.constant 8 : index
    %c0_271 = arith.constant 0 : index
    %c0_272 = arith.constant 0 : index
    %283 = vector.load %arg10[%c8_270, %c0_271, %c0_272] : memref<15x128x256xbf16, #tpu.memory_space<vmem>>, vector<1x128x256xbf16>
    %284 = vector.shape_cast %283 : vector<1x128x256xbf16> to vector<128x256xbf16>
    %cst_273 = arith.constant dense<0.000000e+00> : vector<4x256xf32>
    %285 = tpu.matmul %282, %284, %cst_273 {dimension_numbers = #tpu.dot_dimension_numbers<[1], [0], [0], [1], [0, 0, 1, 1], [], []>} : vector<4x128xbf16>, vector<128x256xbf16>, vector<4x256xf32> -> vector<4x256xf32>
    %286 = arith.addf %280, %285 : vector<4x256xf32>
    %c9_274 = arith.constant 9 : index
    %c0_275 = arith.constant 0 : index
    %287 = tpu.strided_load %arg23[%c9_274, %c0_275] {strides = array<i32: 2, 1>} : memref<24x128xf32, #tpu.memory_space<vmem>>, vector<4x128xf32>
    %288 = arith.truncf %287 : vector<4x128xf32> to vector<4x128xbf16>
    %c9_276 = arith.constant 9 : index
    %c0_277 = arith.constant 0 : index
    %c0_278 = arith.constant 0 : index
    %289 = vector.load %arg10[%c9_276, %c0_277, %c0_278] : memref<15x128x256xbf16, #tpu.memory_space<vmem>>, vector<1x128x256xbf16>
    %290 = vector.shape_cast %289 : vector<1x128x256xbf16> to vector<128x256xbf16>
    %cst_279 = arith.constant dense<0.000000e+00> : vector<4x256xf32>
    %291 = tpu.matmul %288, %290, %cst_279 {dimension_numbers = #tpu.dot_dimension_numbers<[1], [0], [0], [1], [0, 0, 1, 1], [], []>} : vector<4x128xbf16>, vector<128x256xbf16>, vector<4x256xf32> -> vector<4x256xf32>
    %292 = arith.addf %286, %291 : vector<4x256xf32>
    %c10_280 = arith.constant 10 : index
    %c0_281 = arith.constant 0 : index
    %293 = tpu.strided_load %arg23[%c10_280, %c0_281] {strides = array<i32: 2, 1>} : memref<24x128xf32, #tpu.memory_space<vmem>>, vector<4x128xf32>
    %294 = arith.truncf %293 : vector<4x128xf32> to vector<4x128xbf16>
    %c10_282 = arith.constant 10 : index
    %c0_283 = arith.constant 0 : index
    %c0_284 = arith.constant 0 : index
    %295 = vector.load %arg10[%c10_282, %c0_283, %c0_284] : memref<15x128x256xbf16, #tpu.memory_space<vmem>>, vector<1x128x256xbf16>
    %296 = vector.shape_cast %295 : vector<1x128x256xbf16> to vector<128x256xbf16>
    %cst_285 = arith.constant dense<0.000000e+00> : vector<4x256xf32>
    %297 = tpu.matmul %294, %296, %cst_285 {dimension_numbers = #tpu.dot_dimension_numbers<[1], [0], [0], [1], [0, 0, 1, 1], [], []>} : vector<4x128xbf16>, vector<128x256xbf16>, vector<4x256xf32> -> vector<4x256xf32>
    %298 = arith.addf %292, %297 : vector<4x256xf32>
    %c11_286 = arith.constant 11 : index
    %c0_287 = arith.constant 0 : index
    %299 = tpu.strided_load %arg23[%c11_286, %c0_287] {strides = array<i32: 2, 1>} : memref<24x128xf32, #tpu.memory_space<vmem>>, vector<4x128xf32>
    %300 = arith.truncf %299 : vector<4x128xf32> to vector<4x128xbf16>
    %c11_288 = arith.constant 11 : index
    %c0_289 = arith.constant 0 : index
    %c0_290 = arith.constant 0 : index
    %301 = vector.load %arg10[%c11_288, %c0_289, %c0_290] : memref<15x128x256xbf16, #tpu.memory_space<vmem>>, vector<1x128x256xbf16>
    %302 = vector.shape_cast %301 : vector<1x128x256xbf16> to vector<128x256xbf16>
    %cst_291 = arith.constant dense<0.000000e+00> : vector<4x256xf32>
    %303 = tpu.matmul %300, %302, %cst_291 {dimension_numbers = #tpu.dot_dimension_numbers<[1], [0], [0], [1], [0, 0, 1, 1], [], []>} : vector<4x128xbf16>, vector<128x256xbf16>, vector<4x256xf32> -> vector<4x256xf32>
    %304 = arith.addf %298, %303 : vector<4x256xf32>
    %c12_292 = arith.constant 12 : index
    %c0_293 = arith.constant 0 : index
    %305 = tpu.strided_load %arg23[%c12_292, %c0_293] {strides = array<i32: 2, 1>} : memref<24x128xf32, #tpu.memory_space<vmem>>, vector<4x128xf32>
    %306 = arith.truncf %305 : vector<4x128xf32> to vector<4x128xbf16>
    %c12_294 = arith.constant 12 : index
    %c0_295 = arith.constant 0 : index
    %c0_296 = arith.constant 0 : index
    %307 = vector.load %arg10[%c12_294, %c0_295, %c0_296] : memref<15x128x256xbf16, #tpu.memory_space<vmem>>, vector<1x128x256xbf16>
    %308 = vector.shape_cast %307 : vector<1x128x256xbf16> to vector<128x256xbf16>
    %cst_297 = arith.constant dense<0.000000e+00> : vector<4x256xf32>
    %309 = tpu.matmul %306, %308, %cst_297 {dimension_numbers = #tpu.dot_dimension_numbers<[1], [0], [0], [1], [0, 0, 1, 1], [], []>} : vector<4x128xbf16>, vector<128x256xbf16>, vector<4x256xf32> -> vector<4x256xf32>
    %310 = arith.addf %304, %309 : vector<4x256xf32>
    %c13_298 = arith.constant 13 : index
    %c0_299 = arith.constant 0 : index
    %311 = tpu.strided_load %arg23[%c13_298, %c0_299] {strides = array<i32: 2, 1>} : memref<24x128xf32, #tpu.memory_space<vmem>>, vector<4x128xf32>
    %312 = arith.truncf %311 : vector<4x128xf32> to vector<4x128xbf16>
    %c13_300 = arith.constant 13 : index
    %c0_301 = arith.constant 0 : index
    %c0_302 = arith.constant 0 : index
    %313 = vector.load %arg10[%c13_300, %c0_301, %c0_302] : memref<15x128x256xbf16, #tpu.memory_space<vmem>>, vector<1x128x256xbf16>
    %314 = vector.shape_cast %313 : vector<1x128x256xbf16> to vector<128x256xbf16>
    %cst_303 = arith.constant dense<0.000000e+00> : vector<4x256xf32>
    %315 = tpu.matmul %312, %314, %cst_303 {dimension_numbers = #tpu.dot_dimension_numbers<[1], [0], [0], [1], [0, 0, 1, 1], [], []>} : vector<4x128xbf16>, vector<128x256xbf16>, vector<4x256xf32> -> vector<4x256xf32>
    %316 = arith.addf %310, %315 : vector<4x256xf32>
    %c14_304 = arith.constant 14 : index
    %c0_305 = arith.constant 0 : index
    %317 = tpu.strided_load %arg23[%c14_304, %c0_305] {strides = array<i32: 2, 1>} : memref<24x128xf32, #tpu.memory_space<vmem>>, vector<4x128xf32>
    %318 = arith.truncf %317 : vector<4x128xf32> to vector<4x128xbf16>
    %c14_306 = arith.constant 14 : index
    %c0_307 = arith.constant 0 : index
    %c0_308 = arith.constant 0 : index
    %319 = vector.load %arg10[%c14_306, %c0_307, %c0_308] : memref<15x128x256xbf16, #tpu.memory_space<vmem>>, vector<1x128x256xbf16>
    %320 = vector.shape_cast %319 : vector<1x128x256xbf16> to vector<128x256xbf16>
    %cst_309 = arith.constant dense<0.000000e+00> : vector<4x256xf32>
    %321 = tpu.matmul %318, %320, %cst_309 {dimension_numbers = #tpu.dot_dimension_numbers<[1], [0], [0], [1], [0, 0, 1, 1], [], []>} : vector<4x128xbf16>, vector<128x256xbf16>, vector<4x256xf32> -> vector<4x256xf32>
    %322 = arith.addf %316, %321 : vector<4x256xf32>
    %c0_310 = arith.constant 0 : index
    %c0_311 = arith.constant 0 : index
    %323 = vector.load %arg11[%c0_310, %c0_311] : memref<1x256xf32, #tpu.memory_space<vmem>>, vector<1x256xf32>
    %324 = vector.broadcast %323 : vector<1x256xf32> to vector<4x256xf32>
    %325 = arith.addf %322, %324 : vector<4x256xf32>
    %cst_312 = arith.constant 0.000000e+00 : f32
    %326 = vector.broadcast %cst_312 : f32 to vector<4x256xf32>
    %327 = arith.maximumf %325, %326 : vector<4x256xf32>
    %c4_313 = arith.constant 4 : index
    %c0_314 = arith.constant 0 : index
    %328 = vector.load %arg24[%c4_313, %c0_314] : memref<16x256xf32, #tpu.memory_space<vmem>>, vector<4x256xf32>
    tpu.vector_store %arg24[%c4_313, %c0_314], %327 {strides = array<i32>} : memref<16x256xf32, #tpu.memory_space<vmem>>, vector<4x256xf32>,
    %cst_315 = arith.constant 0.000000e+00 : f32
    %329 = vector.broadcast %cst_315 : f32 to vector<4x128xf32>
    %c0_316 = arith.constant 0 : index
    %c0_317 = arith.constant 0 : index
    %330 = vector.load %arg24[%c0_316, %c0_317] : memref<16x256xf32, #tpu.memory_space<vmem>>, vector<4x256xf32>
    %331 = arith.truncf %330 : vector<4x256xf32> to vector<4x256xbf16>
    %c0_318 = arith.constant 0 : index
    %c0_319 = arith.constant 0 : index
    %c0_320 = arith.constant 0 : index
    %332 = vector.load %arg12[%c0_318, %c0_319, %c0_320] : memref<9x256x128xbf16, #tpu.memory_space<vmem>>, vector<1x256x128xbf16>
    %333 = vector.shape_cast %332 : vector<1x256x128xbf16> to vector<256x128xbf16>
    %cst_321 = arith.constant dense<0.000000e+00> : vector<4x128xf32>
    %334 = tpu.matmul %331, %333, %cst_321 {dimension_numbers = #tpu.dot_dimension_numbers<[1], [0], [0], [1], [0, 0, 1, 1], [], []>} : vector<4x256xbf16>, vector<256x128xbf16>, vector<4x128xf32> -> vector<4x128xf32>
    %335 = arith.addf %329, %334 : vector<4x128xf32>
    %c1_322 = arith.constant 1 : index
    %c0_323 = arith.constant 0 : index
    %336 = vector.load %arg24[%c1_322, %c0_323] : memref<16x256xf32, #tpu.memory_space<vmem>>, vector<4x256xf32>
    %337 = arith.truncf %336 : vector<4x256xf32> to vector<4x256xbf16>
    %c1_324 = arith.constant 1 : index
    %c0_325 = arith.constant 0 : index
    %c0_326 = arith.constant 0 : index
    %338 = vector.load %arg12[%c1_324, %c0_325, %c0_326] : memref<9x256x128xbf16, #tpu.memory_space<vmem>>, vector<1x256x128xbf16>
    %339 = vector.shape_cast %338 : vector<1x256x128xbf16> to vector<256x128xbf16>
    %cst_327 = arith.constant dense<0.000000e+00> : vector<4x128xf32>
    %340 = tpu.matmul %337, %339, %cst_327 {dimension_numbers = #tpu.dot_dimension_numbers<[1], [0], [0], [1], [0, 0, 1, 1], [], []>} : vector<4x256xbf16>, vector<256x128xbf16>, vector<4x128xf32> -> vector<4x128xf32>
    %341 = arith.addf %335, %340 : vector<4x128xf32>
    %c2_328 = arith.constant 2 : index
    %c0_329 = arith.constant 0 : index
    %342 = vector.load %arg24[%c2_328, %c0_329] : memref<16x256xf32, #tpu.memory_space<vmem>>, vector<4x256xf32>
    %343 = arith.truncf %342 : vector<4x256xf32> to vector<4x256xbf16>
    %c2_330 = arith.constant 2 : index
    %c0_331 = arith.constant 0 : index
    %c0_332 = arith.constant 0 : index
    %344 = vector.load %arg12[%c2_330, %c0_331, %c0_332] : memref<9x256x128xbf16, #tpu.memory_space<vmem>>, vector<1x256x128xbf16>
    %345 = vector.shape_cast %344 : vector<1x256x128xbf16> to vector<256x128xbf16>
    %cst_333 = arith.constant dense<0.000000e+00> : vector<4x128xf32>
    %346 = tpu.matmul %343, %345, %cst_333 {dimension_numbers = #tpu.dot_dimension_numbers<[1], [0], [0], [1], [0, 0, 1, 1], [], []>} : vector<4x256xbf16>, vector<256x128xbf16>, vector<4x128xf32> -> vector<4x128xf32>
    %347 = arith.addf %341, %346 : vector<4x128xf32>
    %c3_334 = arith.constant 3 : index
    %c0_335 = arith.constant 0 : index
    %348 = vector.load %arg24[%c3_334, %c0_335] : memref<16x256xf32, #tpu.memory_space<vmem>>, vector<4x256xf32>
    %349 = arith.truncf %348 : vector<4x256xf32> to vector<4x256xbf16>
    %c3_336 = arith.constant 3 : index
    %c0_337 = arith.constant 0 : index
    %c0_338 = arith.constant 0 : index
    %350 = vector.load %arg12[%c3_336, %c0_337, %c0_338] : memref<9x256x128xbf16, #tpu.memory_space<vmem>>, vector<1x256x128xbf16>
    %351 = vector.shape_cast %350 : vector<1x256x128xbf16> to vector<256x128xbf16>
    %cst_339 = arith.constant dense<0.000000e+00> : vector<4x128xf32>
    %352 = tpu.matmul %349, %351, %cst_339 {dimension_numbers = #tpu.dot_dimension_numbers<[1], [0], [0], [1], [0, 0, 1, 1], [], []>} : vector<4x256xbf16>, vector<256x128xbf16>, vector<4x128xf32> -> vector<4x128xf32>
    %353 = arith.addf %347, %352 : vector<4x128xf32>
    %c4_340 = arith.constant 4 : index
    %c0_341 = arith.constant 0 : index
    %354 = vector.load %arg24[%c4_340, %c0_341] : memref<16x256xf32, #tpu.memory_space<vmem>>, vector<4x256xf32>
    %355 = arith.truncf %354 : vector<4x256xf32> to vector<4x256xbf16>
    %c4_342 = arith.constant 4 : index
    %c0_343 = arith.constant 0 : index
    %c0_344 = arith.constant 0 : index
    %356 = vector.load %arg12[%c4_342, %c0_343, %c0_344] : memref<9x256x128xbf16, #tpu.memory_space<vmem>>, vector<1x256x128xbf16>
    %357 = vector.shape_cast %356 : vector<1x256x128xbf16> to vector<256x128xbf16>
    %cst_345 = arith.constant dense<0.000000e+00> : vector<4x128xf32>
    %358 = tpu.matmul %355, %357, %cst_345 {dimension_numbers = #tpu.dot_dimension_numbers<[1], [0], [0], [1], [0, 0, 1, 1], [], []>} : vector<4x256xbf16>, vector<256x128xbf16>, vector<4x128xf32> -> vector<4x128xf32>
    %359 = arith.addf %353, %358 : vector<4x128xf32>
    %c5_346 = arith.constant 5 : index
    %c0_347 = arith.constant 0 : index
    %360 = vector.load %arg24[%c5_346, %c0_347] : memref<16x256xf32, #tpu.memory_space<vmem>>, vector<4x256xf32>
    %361 = arith.truncf %360 : vector<4x256xf32> to vector<4x256xbf16>
    %c5_348 = arith.constant 5 : index
    %c0_349 = arith.constant 0 : index
    %c0_350 = arith.constant 0 : index
    %362 = vector.load %arg12[%c5_348, %c0_349, %c0_350] : memref<9x256x128xbf16, #tpu.memory_space<vmem>>, vector<1x256x128xbf16>
    %363 = vector.shape_cast %362 : vector<1x256x128xbf16> to vector<256x128xbf16>
    %cst_351 = arith.constant dense<0.000000e+00> : vector<4x128xf32>
    %364 = tpu.matmul %361, %363, %cst_351 {dimension_numbers = #tpu.dot_dimension_numbers<[1], [0], [0], [1], [0, 0, 1, 1], [], []>} : vector<4x256xbf16>, vector<256x128xbf16>, vector<4x128xf32> -> vector<4x128xf32>
    %365 = arith.addf %359, %364 : vector<4x128xf32>
    %c6_352 = arith.constant 6 : index
    %c0_353 = arith.constant 0 : index
    %366 = vector.load %arg24[%c6_352, %c0_353] : memref<16x256xf32, #tpu.memory_space<vmem>>, vector<4x256xf32>
    %367 = arith.truncf %366 : vector<4x256xf32> to vector<4x256xbf16>
    %c6_354 = arith.constant 6 : index
    %c0_355 = arith.constant 0 : index
    %c0_356 = arith.constant 0 : index
    %368 = vector.load %arg12[%c6_354, %c0_355, %c0_356] : memref<9x256x128xbf16, #tpu.memory_space<vmem>>, vector<1x256x128xbf16>
    %369 = vector.shape_cast %368 : vector<1x256x128xbf16> to vector<256x128xbf16>
    %cst_357 = arith.constant dense<0.000000e+00> : vector<4x128xf32>
    %370 = tpu.matmul %367, %369, %cst_357 {dimension_numbers = #tpu.dot_dimension_numbers<[1], [0], [0], [1], [0, 0, 1, 1], [], []>} : vector<4x256xbf16>, vector<256x128xbf16>, vector<4x128xf32> -> vector<4x128xf32>
    %371 = arith.addf %365, %370 : vector<4x128xf32>
    %c7_358 = arith.constant 7 : index
    %c0_359 = arith.constant 0 : index
    %372 = vector.load %arg24[%c7_358, %c0_359] : memref<16x256xf32, #tpu.memory_space<vmem>>, vector<4x256xf32>
    %373 = arith.truncf %372 : vector<4x256xf32> to vector<4x256xbf16>
    %c7_360 = arith.constant 7 : index
    %c0_361 = arith.constant 0 : index
    %c0_362 = arith.constant 0 : index
    %374 = vector.load %arg12[%c7_360, %c0_361, %c0_362] : memref<9x256x128xbf16, #tpu.memory_space<vmem>>, vector<1x256x128xbf16>
    %375 = vector.shape_cast %374 : vector<1x256x128xbf16> to vector<256x128xbf16>
    %cst_363 = arith.constant dense<0.000000e+00> : vector<4x128xf32>
    %376 = tpu.matmul %373, %375, %cst_363 {dimension_numbers = #tpu.dot_dimension_numbers<[1], [0], [0], [1], [0, 0, 1, 1], [], []>} : vector<4x256xbf16>, vector<256x128xbf16>, vector<4x128xf32> -> vector<4x128xf32>
    %377 = arith.addf %371, %376 : vector<4x128xf32>
    %c8_364 = arith.constant 8 : index
    %c0_365 = arith.constant 0 : index
    %378 = vector.load %arg24[%c8_364, %c0_365] : memref<16x256xf32, #tpu.memory_space<vmem>>, vector<4x256xf32>
    %379 = arith.truncf %378 : vector<4x256xf32> to vector<4x256xbf16>
    %c8_366 = arith.constant 8 : index
    %c0_367 = arith.constant 0 : index
    %c0_368 = arith.constant 0 : index
    %380 = vector.load %arg12[%c8_366, %c0_367, %c0_368] : memref<9x256x128xbf16, #tpu.memory_space<vmem>>, vector<1x256x128xbf16>
    %381 = vector.shape_cast %380 : vector<1x256x128xbf16> to vector<256x128xbf16>
    %cst_369 = arith.constant dense<0.000000e+00> : vector<4x128xf32>
    %382 = tpu.matmul %379, %381, %cst_369 {dimension_numbers = #tpu.dot_dimension_numbers<[1], [0], [0], [1], [0, 0, 1, 1], [], []>} : vector<4x256xbf16>, vector<256x128xbf16>, vector<4x128xf32> -> vector<4x128xf32>
    %383 = arith.addf %377, %382 : vector<4x128xf32>
    %c0_370 = arith.constant 0 : index
    %c0_371 = arith.constant 0 : index
    %384 = vector.load %arg13[%c0_370, %c0_371] : memref<1x128xf32, #tpu.memory_space<vmem>>, vector<1x128xf32>
    %385 = vector.broadcast %384 : vector<1x128xf32> to vector<4x128xf32>
    %386 = arith.addf %383, %385 : vector<4x128xf32>
    %cst_372 = arith.constant 0.000000e+00 : f32
    %387 = vector.broadcast %cst_372 : f32 to vector<4x128xf32>
    %388 = arith.maximumf %386, %387 : vector<4x128xf32>
    %c4_373 = arith.constant 4 : index
    %c0_374 = arith.constant 0 : index
    %389 = vector.load %arg25[%c4_373, %c0_374] : memref<16x128xf32, #tpu.memory_space<vmem>>, vector<4x128xf32>
    tpu.vector_store %arg25[%c4_373, %c0_374], %388 {strides = array<i32>} : memref<16x128xf32, #tpu.memory_space<vmem>>, vector<4x128xf32>,
    %cst_375 = arith.constant 0.000000e+00 : f32
    %390 = vector.broadcast %cst_375 : f32 to vector<4x64xf32>
    %c0_376 = arith.constant 0 : index
    %c0_377 = arith.constant 0 : index
    %391 = vector.load %arg25[%c0_376, %c0_377] : memref<16x128xf32, #tpu.memory_space<vmem>>, vector<4x128xf32>
    %392 = arith.truncf %391 : vector<4x128xf32> to vector<4x128xbf16>
    %c0_378 = arith.constant 0 : index
    %c0_379 = arith.constant 0 : index
    %c0_380 = arith.constant 0 : index
    %393 = vector.load %arg14[%c0_378, %c0_379, %c0_380] : memref<9x128x64xbf16, #tpu.memory_space<vmem>>, vector<1x128x64xbf16>
    %394 = vector.shape_cast %393 : vector<1x128x64xbf16> to vector<128x64xbf16>
    %cst_381 = arith.constant dense<0.000000e+00> : vector<4x64xf32>
    %395 = tpu.matmul %392, %394, %cst_381 {dimension_numbers = #tpu.dot_dimension_numbers<[1], [0], [0], [1], [0, 0, 1, 1], [], []>} : vector<4x128xbf16>, vector<128x64xbf16>, vector<4x64xf32> -> vector<4x64xf32>
    %396 = arith.addf %390, %395 : vector<4x64xf32>
    %c1_382 = arith.constant 1 : index
    %c0_383 = arith.constant 0 : index
    %397 = vector.load %arg25[%c1_382, %c0_383] : memref<16x128xf32, #tpu.memory_space<vmem>>, vector<4x128xf32>
    %398 = arith.truncf %397 : vector<4x128xf32> to vector<4x128xbf16>
    %c1_384 = arith.constant 1 : index
    %c0_385 = arith.constant 0 : index
    %c0_386 = arith.constant 0 : index
    %399 = vector.load %arg14[%c1_384, %c0_385, %c0_386] : memref<9x128x64xbf16, #tpu.memory_space<vmem>>, vector<1x128x64xbf16>
    %400 = vector.shape_cast %399 : vector<1x128x64xbf16> to vector<128x64xbf16>
    %cst_387 = arith.constant dense<0.000000e+00> : vector<4x64xf32>
    %401 = tpu.matmul %398, %400, %cst_387 {dimension_numbers = #tpu.dot_dimension_numbers<[1], [0], [0], [1], [0, 0, 1, 1], [], []>} : vector<4x128xbf16>, vector<128x64xbf16>, vector<4x64xf32> -> vector<4x64xf32>
    %402 = arith.addf %396, %401 : vector<4x64xf32>
    %c2_388 = arith.constant 2 : index
    %c0_389 = arith.constant 0 : index
    %403 = vector.load %arg25[%c2_388, %c0_389] : memref<16x128xf32, #tpu.memory_space<vmem>>, vector<4x128xf32>
    %404 = arith.truncf %403 : vector<4x128xf32> to vector<4x128xbf16>
    %c2_390 = arith.constant 2 : index
    %c0_391 = arith.constant 0 : index
    %c0_392 = arith.constant 0 : index
    %405 = vector.load %arg14[%c2_390, %c0_391, %c0_392] : memref<9x128x64xbf16, #tpu.memory_space<vmem>>, vector<1x128x64xbf16>
    %406 = vector.shape_cast %405 : vector<1x128x64xbf16> to vector<128x64xbf16>
    %cst_393 = arith.constant dense<0.000000e+00> : vector<4x64xf32>
    %407 = tpu.matmul %404, %406, %cst_393 {dimension_numbers = #tpu.dot_dimension_numbers<[1], [0], [0], [1], [0, 0, 1, 1], [], []>} : vector<4x128xbf16>, vector<128x64xbf16>, vector<4x64xf32> -> vector<4x64xf32>
    %408 = arith.addf %402, %407 : vector<4x64xf32>
    %c3_394 = arith.constant 3 : index
    %c0_395 = arith.constant 0 : index
    %409 = vector.load %arg25[%c3_394, %c0_395] : memref<16x128xf32, #tpu.memory_space<vmem>>, vector<4x128xf32>
    %410 = arith.truncf %409 : vector<4x128xf32> to vector<4x128xbf16>
    %c3_396 = arith.constant 3 : index
    %c0_397 = arith.constant 0 : index
    %c0_398 = arith.constant 0 : index
    %411 = vector.load %arg14[%c3_396, %c0_397, %c0_398] : memref<9x128x64xbf16, #tpu.memory_space<vmem>>, vector<1x128x64xbf16>
    %412 = vector.shape_cast %411 : vector<1x128x64xbf16> to vector<128x64xbf16>
    %cst_399 = arith.constant dense<0.000000e+00> : vector<4x64xf32>
    %413 = tpu.matmul %410, %412, %cst_399 {dimension_numbers = #tpu.dot_dimension_numbers<[1], [0], [0], [1], [0, 0, 1, 1], [], []>} : vector<4x128xbf16>, vector<128x64xbf16>, vector<4x64xf32> -> vector<4x64xf32>
    %414 = arith.addf %408, %413 : vector<4x64xf32>
    %c4_400 = arith.constant 4 : index
    %c0_401 = arith.constant 0 : index
    %415 = vector.load %arg25[%c4_400, %c0_401] : memref<16x128xf32, #tpu.memory_space<vmem>>, vector<4x128xf32>
    %416 = arith.truncf %415 : vector<4x128xf32> to vector<4x128xbf16>
    %c4_402 = arith.constant 4 : index
    %c0_403 = arith.constant 0 : index
    %c0_404 = arith.constant 0 : index
    %417 = vector.load %arg14[%c4_402, %c0_403, %c0_404] : memref<9x128x64xbf16, #tpu.memory_space<vmem>>, vector<1x128x64xbf16>
    %418 = vector.shape_cast %417 : vector<1x128x64xbf16> to vector<128x64xbf16>
    %cst_405 = arith.constant dense<0.000000e+00> : vector<4x64xf32>
    %419 = tpu.matmul %416, %418, %cst_405 {dimension_numbers = #tpu.dot_dimension_numbers<[1], [0], [0], [1], [0, 0, 1, 1], [], []>} : vector<4x128xbf16>, vector<128x64xbf16>, vector<4x64xf32> -> vector<4x64xf32>
    %420 = arith.addf %414, %419 : vector<4x64xf32>
    %c5_406 = arith.constant 5 : index
    %c0_407 = arith.constant 0 : index
    %421 = vector.load %arg25[%c5_406, %c0_407] : memref<16x128xf32, #tpu.memory_space<vmem>>, vector<4x128xf32>
    %422 = arith.truncf %421 : vector<4x128xf32> to vector<4x128xbf16>
    %c5_408 = arith.constant 5 : index
    %c0_409 = arith.constant 0 : index
    %c0_410 = arith.constant 0 : index
    %423 = vector.load %arg14[%c5_408, %c0_409, %c0_410] : memref<9x128x64xbf16, #tpu.memory_space<vmem>>, vector<1x128x64xbf16>
    %424 = vector.shape_cast %423 : vector<1x128x64xbf16> to vector<128x64xbf16>
    %cst_411 = arith.constant dense<0.000000e+00> : vector<4x64xf32>
    %425 = tpu.matmul %422, %424, %cst_411 {dimension_numbers = #tpu.dot_dimension_numbers<[1], [0], [0], [1], [0, 0, 1, 1], [], []>} : vector<4x128xbf16>, vector<128x64xbf16>, vector<4x64xf32> -> vector<4x64xf32>
    %426 = arith.addf %420, %425 : vector<4x64xf32>
    %c6_412 = arith.constant 6 : index
    %c0_413 = arith.constant 0 : index
    %427 = vector.load %arg25[%c6_412, %c0_413] : memref<16x128xf32, #tpu.memory_space<vmem>>, vector<4x128xf32>
    %428 = arith.truncf %427 : vector<4x128xf32> to vector<4x128xbf16>
    %c6_414 = arith.constant 6 : index
    %c0_415 = arith.constant 0 : index
    %c0_416 = arith.constant 0 : index
    %429 = vector.load %arg14[%c6_414, %c0_415, %c0_416] : memref<9x128x64xbf16, #tpu.memory_space<vmem>>, vector<1x128x64xbf16>
    %430 = vector.shape_cast %429 : vector<1x128x64xbf16> to vector<128x64xbf16>
    %cst_417 = arith.constant dense<0.000000e+00> : vector<4x64xf32>
    %431 = tpu.matmul %428, %430, %cst_417 {dimension_numbers = #tpu.dot_dimension_numbers<[1], [0], [0], [1], [0, 0, 1, 1], [], []>} : vector<4x128xbf16>, vector<128x64xbf16>, vector<4x64xf32> -> vector<4x64xf32>
    %432 = arith.addf %426, %431 : vector<4x64xf32>
    %c7_418 = arith.constant 7 : index
    %c0_419 = arith.constant 0 : index
    %433 = vector.load %arg25[%c7_418, %c0_419] : memref<16x128xf32, #tpu.memory_space<vmem>>, vector<4x128xf32>
    %434 = arith.truncf %433 : vector<4x128xf32> to vector<4x128xbf16>
    %c7_420 = arith.constant 7 : index
    %c0_421 = arith.constant 0 : index
    %c0_422 = arith.constant 0 : index
    %435 = vector.load %arg14[%c7_420, %c0_421, %c0_422] : memref<9x128x64xbf16, #tpu.memory_space<vmem>>, vector<1x128x64xbf16>
    %436 = vector.shape_cast %435 : vector<1x128x64xbf16> to vector<128x64xbf16>
    %cst_423 = arith.constant dense<0.000000e+00> : vector<4x64xf32>
    %437 = tpu.matmul %434, %436, %cst_423 {dimension_numbers = #tpu.dot_dimension_numbers<[1], [0], [0], [1], [0, 0, 1, 1], [], []>} : vector<4x128xbf16>, vector<128x64xbf16>, vector<4x64xf32> -> vector<4x64xf32>
    %438 = arith.addf %432, %437 : vector<4x64xf32>
    %c8_424 = arith.constant 8 : index
    %c0_425 = arith.constant 0 : index
    %439 = vector.load %arg25[%c8_424, %c0_425] : memref<16x128xf32, #tpu.memory_space<vmem>>, vector<4x128xf32>
    %440 = arith.truncf %439 : vector<4x128xf32> to vector<4x128xbf16>
    %c8_426 = arith.constant 8 : index
    %c0_427 = arith.constant 0 : index
    %c0_428 = arith.constant 0 : index
    %441 = vector.load %arg14[%c8_426, %c0_427, %c0_428] : memref<9x128x64xbf16, #tpu.memory_space<vmem>>, vector<1x128x64xbf16>
    %442 = vector.shape_cast %441 : vector<1x128x64xbf16> to vector<128x64xbf16>
    %cst_429 = arith.constant dense<0.000000e+00> : vector<4x64xf32>
    %443 = tpu.matmul %440, %442, %cst_429 {dimension_numbers = #tpu.dot_dimension_numbers<[1], [0], [0], [1], [0, 0, 1, 1], [], []>} : vector<4x128xbf16>, vector<128x64xbf16>, vector<4x64xf32> -> vector<4x64xf32>
    %444 = arith.addf %438, %443 : vector<4x64xf32>
    %c0_430 = arith.constant 0 : index
    %c0_431 = arith.constant 0 : index
    %445 = vector.load %arg15[%c0_430, %c0_431] : memref<1x64xf32, #tpu.memory_space<vmem>>, vector<1x64xf32>
    %446 = vector.broadcast %445 : vector<1x64xf32> to vector<4x64xf32>
    %447 = arith.addf %444, %446 : vector<4x64xf32>
    %cst_432 = arith.constant 0.000000e+00 : f32
    %448 = vector.broadcast %cst_432 : f32 to vector<4x64xf32>
    %449 = arith.maximumf %447, %448 : vector<4x64xf32>
    %cst_433 = arith.constant dense<0.000000e+00> : vector<64xf32>
    %450 = vector.multi_reduction <add>, %449, %cst_433 [0] : vector<4x64xf32> to vector<64xf32>
    %451 = vector.shape_cast %450 : vector<64xf32> to vector<1x64xf32>
    %cst_434 = arith.constant 4.000000e+00 : f32
    %452 = vector.broadcast %cst_434 : f32 to vector<1x64xf32>
    %453 = arith.divf %451, %452 : vector<1x64xf32>
    %454 = arith.truncf %453 : vector<1x64xf32> to vector<1x64xbf16>
    %c0_435 = arith.constant 0 : index
    %c0_436 = arith.constant 0 : index
    %455 = vector.load %arg16[%c0_435, %c0_436] : memref<64x16xbf16, #tpu.memory_space<vmem>>, vector<64x16xbf16>
    %cst_437 = arith.constant dense<0.000000e+00> : vector<1x16xf32>
    %456 = tpu.matmul %454, %455, %cst_437 {dimension_numbers = #tpu.dot_dimension_numbers<[1], [0], [0], [1], [0, 0, 1, 1], [], []>} : vector<1x64xbf16>, vector<64x16xbf16>, vector<1x16xf32> -> vector<1x16xf32>
    %c0_438 = arith.constant 0 : index
    %c0_439 = arith.constant 0 : index
    %457 = vector.load %arg17[%c0_438, %c0_439] : memref<1x16xf32, #tpu.memory_space<vmem>>, vector<1x16xf32>
    %458 = arith.addf %456, %457 : vector<1x16xf32>
    %cst_440 = arith.constant 0.000000e+00 : f32
    %459 = vector.broadcast %cst_440 : f32 to vector<1x16xf32>
    %460 = arith.maximumf %458, %459 : vector<1x16xf32>
    %461 = arith.truncf %460 : vector<1x16xf32> to vector<1x16xbf16>
    %c0_441 = arith.constant 0 : index
    %c0_442 = arith.constant 0 : index
    %462 = vector.load %arg18[%c0_441, %c0_442] : memref<16x128xbf16, #tpu.memory_space<vmem>>, vector<16x128xbf16>
    %cst_443 = arith.constant dense<0.000000e+00> : vector<1x128xf32>
    %463 = tpu.matmul %461, %462, %cst_443 {dimension_numbers = #tpu.dot_dimension_numbers<[1], [0], [0], [1], [0, 0, 1, 1], [], []>} : vector<1x16xbf16>, vector<16x128xbf16>, vector<1x128xf32> -> vector<1x128xf32>
    %c0_444 = arith.constant 0 : index
    %c0_445 = arith.constant 0 : index
    %464 = vector.load %arg19[%c0_444, %c0_445] : memref<1x128xf32, #tpu.memory_space<vmem>>, vector<1x128xf32>
    %465 = arith.addf %463, %464 : vector<1x128xf32>
    %c0_446 = arith.constant 0 : index
    %c0_447 = arith.constant 0 : index
    %c0_448 = arith.constant 0 : index
    %466 = vector.load %arg20[%c0_446, %c0_447, %c0_448] : memref<1x1x128xf32, #tpu.memory_space<vmem>>, vector<1x1x128xf32>
    %467 = vector.shape_cast %466 : vector<1x1x128xf32> to vector<1x128xf32>
    %468 = vector.shape_cast %465 : vector<1x128xf32> to vector<1x1x128xf32>
    tpu.vector_store %arg20[%c0_446, %c0_447, %c0_448], %468 {strides = array<i32>} : memref<1x1x128xf32, #tpu.memory_space<vmem>>, vector<1x1x128xf32>,
    return
  }
  func.func @transform_0(%arg0: i32) -> (i32, i32, i32) {
    %c0_i32 = arith.constant 0 : i32
    %c0_i32_0 = arith.constant 0 : i32
    %c0_i32_1 = arith.constant 0 : i32
    return %arg0, %c0_i32, %c0_i32_0 : i32, i32, i32
  }
  func.func @transform_1(%arg0: i32) -> (i32, i32) {
    %c0_i32 = arith.constant 0 : i32
    %c0_i32_0 = arith.constant 0 : i32
    %c0_i32_1 = arith.constant 0 : i32
    return %c0_i32, %c0_i32_0 : i32, i32
  }
  func.func @transform_2(%arg0: i32) -> (i32, i32) {
    %c0_i32 = arith.constant 0 : i32
    %c0_i32_0 = arith.constant 0 : i32
    %c0_i32_1 = arith.constant 0 : i32
    return %c0_i32, %c0_i32_0 : i32, i32
  }
  func.func @transform_3(%arg0: i32) -> (i32, i32) {
    %c0_i32 = arith.constant 0 : i32
    %c0_i32_0 = arith.constant 0 : i32
    %c0_i32_1 = arith.constant 0 : i32
    return %c0_i32, %c0_i32_0 : i32, i32
  }
  func.func @transform_4(%arg0: i32) -> (i32, i32) {
    %c0_i32 = arith.constant 0 : i32
    %c0_i32_0 = arith.constant 0 : i32
    %c0_i32_1 = arith.constant 0 : i32
    return %c0_i32, %c0_i32_0 : i32, i32
  }
  func.func @transform_5(%arg0: i32) -> (i32, i32, i32) {
    %c0_i32 = arith.constant 0 : i32
    %c0_i32_0 = arith.constant 0 : i32
    %c0_i32_1 = arith.constant 0 : i32
    %c0_i32_2 = arith.constant 0 : i32
    return %c0_i32, %c0_i32_0, %c0_i32_1 : i32, i32, i32
  }
  func.func @transform_6(%arg0: i32) -> (i32, i32) {
    %c0_i32 = arith.constant 0 : i32
    %c0_i32_0 = arith.constant 0 : i32
    %c0_i32_1 = arith.constant 0 : i32
    return %c0_i32, %c0_i32_0 : i32, i32
  }
  func.func @transform_7(%arg0: i32) -> (i32, i32, i32) {
    %c0_i32 = arith.constant 0 : i32
    %c0_i32_0 = arith.constant 0 : i32
    %c0_i32_1 = arith.constant 0 : i32
    %c0_i32_2 = arith.constant 0 : i32
    return %c0_i32, %c0_i32_0, %c0_i32_1 : i32, i32, i32
  }
  func.func @transform_8(%arg0: i32) -> (i32, i32) {
    %c0_i32 = arith.constant 0 : i32
    %c0_i32_0 = arith.constant 0 : i32
    %c0_i32_1 = arith.constant 0 : i32
    return %c0_i32, %c0_i32_0 : i32, i32
  }
  func.func @transform_9(%arg0: i32) -> (i32, i32, i32) {
    %c0_i32 = arith.constant 0 : i32
    %c0_i32_0 = arith.constant 0 : i32
    %c0_i32_1 = arith.constant 0 : i32
    %c0_i32_2 = arith.constant 0 : i32
    return %c0_i32, %c0_i32_0, %c0_i32_1 : i32, i32, i32
  }
  func.func @transform_10(%arg0: i32) -> (i32, i32) {
    %c0_i32 = arith.constant 0 : i32
    %c0_i32_0 = arith.constant 0 : i32
    %c0_i32_1 = arith.constant 0 : i32
    return %c0_i32, %c0_i32_0 : i32, i32
  }
  func.func @transform_11(%arg0: i32) -> (i32, i32, i32) {
    %c0_i32 = arith.constant 0 : i32
    %c0_i32_0 = arith.constant 0 : i32
    %c0_i32_1 = arith.constant 0 : i32
    %c0_i32_2 = arith.constant 0 : i32
    return %c0_i32, %c0_i32_0, %c0_i32_1 : i32, i32, i32
  }
  func.func @transform_12(%arg0: i32) -> (i32, i32) {
    %c0_i32 = arith.constant 0 : i32
    %c0_i32_0 = arith.constant 0 : i32
    %c0_i32_1 = arith.constant 0 : i32
    return %c0_i32, %c0_i32_0 : i32, i32
  }
  func.func @transform_13(%arg0: i32) -> (i32, i32, i32) {
    %c0_i32 = arith.constant 0 : i32
    %c0_i32_0 = arith.constant 0 : i32
    %c0_i32_1 = arith.constant 0 : i32
    %c0_i32_2 = arith.constant 0 : i32
    return %c0_i32, %c0_i32_0, %c0_i32_1 : i32, i32, i32
  }
  func.func @transform_14(%arg0: i32) -> (i32, i32) {
    %c0_i32 = arith.constant 0 : i32
    %c0_i32_0 = arith.constant 0 : i32
    %c0_i32_1 = arith.constant 0 : i32
    return %c0_i32, %c0_i32_0 : i32, i32
  }
  func.func @transform_15(%arg0: i32) -> (i32, i32) {
    %c0_i32 = arith.constant 0 : i32
    %c0_i32_0 = arith.constant 0 : i32
    %c0_i32_1 = arith.constant 0 : i32
    return %c0_i32, %c0_i32_0 : i32, i32
  }
  func.func @transform_16(%arg0: i32) -> (i32, i32) {
    %c0_i32 = arith.constant 0 : i32
    %c0_i32_0 = arith.constant 0 : i32
    %c0_i32_1 = arith.constant 0 : i32
    return %c0_i32, %c0_i32_0 : i32, i32
  }
  func.func @transform_17(%arg0: i32) -> (i32, i32) {
    %c0_i32 = arith.constant 0 : i32
    %c0_i32_0 = arith.constant 0 : i32
    %c0_i32_1 = arith.constant 0 : i32
    return %c0_i32, %c0_i32_0 : i32, i32
  }
  func.func @transform_18(%arg0: i32) -> (i32, i32) {
    %c0_i32 = arith.constant 0 : i32
    %c0_i32_0 = arith.constant 0 : i32
    %c0_i32_1 = arith.constant 0 : i32
    return %c0_i32, %c0_i32_0 : i32, i32
  }
  func.func @transform_19(%arg0: i32) -> (i32, i32, i32) {
    %c0_i32 = arith.constant 0 : i32
    %c0_i32_0 = arith.constant 0 : i32
    %c0_i32_1 = arith.constant 0 : i32
    return %arg0, %c0_i32, %c0_i32_0 : i32, i32, i32
  }
}

</mosaic_0001>

<llo_original>
// kernel: cnn_forward.1
$region0: #{cnn_forward.1}
  #allocation0 [shape = 'u32[]', space=smem, size = 0x4, offset = 0x4, fixed_abs, tag = 'smem constant byte address 0x4 - core index']
  #allocation1 [shape = 'u32[72,128]{1,0:T(1,128)}', space=vmem, size = 0x9000, scoped, tag = 'internal scratch']
  #allocation2 [shape = 'f32[48,16]{1,0:T(8,128)}', space=vmem, size = 0x6000, scoped, tag = 'scratch operand']
  #allocation3 [shape = 'f32[32,64]{1,0:T(8,128)}', space=vmem, size = 0x4000, scoped, tag = 'scratch operand']
  #allocation4 [shape = 'f32[24,128]{1,0:T(8,128)}', space=vmem, size = 0x3000, scoped, tag = 'scratch operand']
  #allocation5 [shape = 'f32[16,256]{1,0:T(8,128)}', space=vmem, size = 0x4000, scoped, tag = 'scratch operand']
  #allocation6 [shape = 'f32[16,128]{1,0:T(8,128)}', space=vmem, size = 0x2000, scoped, tag = 'scratch operand']
  %s0 = inlined_call_operand.vmem [shape: f32[2,32,60], index: 0, kind: input, shape index: {}]
  %s1 = inlined_call_operand.vmem [shape: f32[1,60], index: 1, kind: input, shape index: {}]
  %s2 = inlined_call_operand.vmem [shape: f32[32,60], index: 2, kind: input, shape index: {}]
  %s3 = inlined_call_operand.vmem [shape: bf16[60,16], index: 3, kind: input, shape index: {}]
  %s4 = inlined_call_operand.vmem [shape: f32[1,16], index: 4, kind: input, shape index: {}]
  %s5 = inlined_call_operand.vmem [shape: bf16[15,16,64], index: 5, kind: input, shape index: {}]
  %s6 = inlined_call_operand.vmem [shape: f32[1,64], index: 6, kind: input, shape index: {}]
  %s7 = inlined_call_operand.vmem [shape: bf16[15,64,128], index: 7, kind: input, shape index: {}]
  %s8 = inlined_call_operand.vmem [shape: f32[1,128], index: 8, kind: input, shape index: {}]
  %s9 = inlined_call_operand.hbm [shape: bf16[15,128,256], index: 9, kind: input, shape index: {}]
  %s10 = inlined_call_operand.vmem [shape: f32[1,256], index: 10, kind: input, shape index: {}]
  %s11 = inlined_call_operand.vmem [shape: bf16[9,256,128], index: 11, kind: input, shape index: {}]
  %s12 = inlined_call_operand.vmem [shape: f32[1,128], index: 12, kind: input, shape index: {}]
  %s13 = inlined_call_operand.vmem [shape: bf16[9,128,64], index: 13, kind: input, shape index: {}]
  %s14 = inlined_call_operand.vmem [shape: f32[1,64], index: 14, kind: input, shape index: {}]
  %s15 = inlined_call_operand.vmem [shape: bf16[64,16], index: 15, kind: input, shape index: {}]
  %s16 = inlined_call_operand.vmem [shape: f32[1,16], index: 16, kind: input, shape index: {}]
  %s17 = inlined_call_operand.vmem [shape: bf16[16,128], index: 17, kind: input, shape index: {}]
  %s18 = inlined_call_operand.vmem [shape: f32[1,128], index: 18, kind: input, shape index: {}]
  %s19 = inlined_call_operand.hbm [shape: f32[2,1,128], index: 19, kind: output, shape index: {}]
  %s20 = sld [smem:[#allocation0]]
  $region113: #{cnn_forward.1} parent=0
    _
  %s22 = ssub.s32 1, %s20
  %s23 = scalar_select 0, %s22, %s20
  $region1: #{cnn_forward.1} parent=0
    #allocation7 [shape = 'u8[983040]{0}', space=vmem, size = 0xf0000, scoped, tag = 'input window, operand 9, single buffered']
    #allocation8 [shape = 's32[2]{0}', space=sflag, size = 0x8, scoped, tag = 'scoped memory for cnn_forward.1']
    #allocation9 [shape = 's32[2]{0}', space=sflag, size = 0x8, scoped, tag = 'scoped memory for cnn_forward.1']
    #allocation10 [shape = 'u8[1024]{0}', space=vmem, size = 0x400, scoped, tag = 'output window, operand 0']
    %24 = vsyncpa [#allocation8], 0
    %25 = vsyncpa [#allocation9], 0
    %s26 = scalar_lea.sflag [#allocation9], 1
    %27 = vsyncpa %s26, 0
    loop: start=0, step=1, limit=4
    $region2: #{cnn_forward.1} parent=1 // loop_pre_header
      _
    $region3: #{cnn_forward.1} parent=1 // loop_header
      %s29 = sphi 0, %s33
      %p30 = scmp.ge.s32.totalorder %s29, 4
      %s39 = sphi 0, %s41
      %s42 = sphi 0, %s39
      %s43 = sphi 0, %s42
      %s59 = sphi 0, %s43
      %s63 = sphi 0, %s63
      %s65 = sphi 0, %s63
      %s66 = sphi 0, %s65
      %s80 = sphi 0, %s66
      %s84 = sphi 0, %s84
      %s86 = sphi 0, %s84
      %s87 = sphi 0, %s86
      %s101 = sphi 0, %s87
      %s105 = sphi 0, %s105
      %s107 = sphi 0, %s105
      %s108 = sphi 0, %s107
      %s122 = sphi 0, %s108
      %s126 = sphi 0, %s126
      %s128 = sphi 0, %s126
      %s129 = sphi 0, %s128
      %s143 = sphi 0, %s129
      %s147 = sphi 0, %s147
      %s149 = sphi 0, %s147
      %s150 = sphi 0, %s149
      %s164 = sphi 0, %s150
      %s168 = sphi 0, %s168
      %s170 = sphi 0, %s168
      %s171 = sphi 0, %s170
      %s185 = sphi 0, %s171
      %s189 = sphi 0, %s189
      %s191 = sphi 0, %s189
      %s192 = sphi 0, %s191
      %s206 = sphi 0, %s192
      %s210 = sphi 0, %s210
      %s212 = sphi 0, %s210
      %s213 = sphi 0, %s212
      %s227 = sphi 0, %s213
      %s231 = sphi 0, %s231
      %s233 = sphi 0, %s231
      %s234 = sphi 0, %s233
      %s248 = sphi 0, %s234
      %s252 = sphi 0, %s252
      %s254 = sphi 0, %s252
      %s255 = sphi 0, %s254
      %s269 = sphi 0, %s255
      %s273 = sphi 0, %s273
      %s275 = sphi 0, %s273
      %s276 = sphi 0, %s275
      %s290 = sphi 0, %s276
      %s294 = sphi 0, %s294
      %s296 = sphi 0, %s294
      %s297 = sphi 0, %s296
      %s311 = sphi 0, %s297
      %s315 = sphi 0, %s315
      %s317 = sphi 0, %s315
      %s318 = sphi 0, %s317
      %s332 = sphi 0, %s318
      %s336 = sphi 0, %s336
      %s338 = sphi 0, %s336
      %s339 = sphi 0, %s338
      %s353 = sphi 0, %s339
      %s357 = sphi 0, %s357
      %s359 = sphi 0, %s357
      %s360 = sphi 0, %s359
      %s374 = sphi 0, %s360
      %s378 = sphi 0, %s378
      %s380 = sphi 0, %s378
      %s381 = sphi 0, %s380
      %s395 = sphi 0, %s381
      %s399 = sphi 0, %s399
      %s401 = sphi 0, %s399
      %s402 = sphi 0, %s401
      %s416 = sphi 0, %s402
      %s420 = sphi 0, %s420
      %s422 = sphi 0, %s420
      %s423 = sphi 0, %s422
      %s437 = sphi 0, %s423
      %s443 = sphi 0, %s445
      %s446 = sphi 0, %s443
      %s447 = sphi 0, %s446
      %s463 = sphi 0, %s447
    $region4: #{cnn_forward.1} parent=1 // loop_header_branch
      %32 = sbr.rel (%p30) target = $region8
    $region5: #{cnn_forward.1} parent=1 // loop_body
      %s34 = ssub.s32 %s29, 1
      %s35 = ssub.s32 %s29, 2
      %s36 = sadd.s32 %s29, 1
      %s37 = ssub.s32 %s29, %s36
      %p38 = scmp.eq.s32.totalorder %s37, 0
      %s40 = sadd.s32 %s39, 1
      %s41 = scalar_select %p38, %s39, %s40
      %p44 = pneg %p38
      %p45 = scmp.eq.s32.totalorder %s29, 1
      %p46 = por %p44, %p45
      %p47 = scmp.ne.s32.totalorder %s39, %s42
      %p48 = scmp.eq.s32.totalorder %s29, 0
      %p49 = por %p47, %p48
      %p50 = scmp.ne.s32.totalorder %s39, %s42
      %p51 = scmp.eq.s32.totalorder %s34, 1
      %p52 = por %p50, %p51
      %p53 = scmp.ne.s32.totalorder %s42, %s43
      %p54 = scmp.eq.s32.totalorder %s34, 0
      %p55 = por %p53, %p54
      %p56 = scmp.ne.s32.totalorder %s42, %s43
      %p57 = scmp.eq.s32.totalorder %s35, 1
      %p58 = por %p56, %p57
      %p60 = scmp.ne.s32.totalorder %s43, %s59
      %p61 = scmp.eq.s32.totalorder %s35, 0
      %p62 = por %p60, %p61
      %s64 = sadd.s32 %s63, 1
      %p67 = scmp.eq.s32.totalorder %s29, 1
      %p68 = scmp.ne.s32.totalorder %s63, %s65
      %p69 = scmp.eq.s32.totalorder %s29, 0
      %p70 = por %p68, %p69
      %p71 = scmp.ne.s32.totalorder %s63, %s65
      %p72 = scmp.eq.s32.totalorder %s34, 1
      %p73 = por %p71, %p72
      %p74 = scmp.ne.s32.totalorder %s65, %s66
      %p75 = scmp.eq.s32.totalorder %s34, 0
      %p76 = por %p74, %p75
      %p77 = scmp.ne.s32.totalorder %s65, %s66
      %p78 = scmp.eq.s32.totalorder %s35, 1
      %p79 = por %p77, %p78
      %p81 = scmp.ne.s32.totalorder %s66, %s80
      %p82 = scmp.eq.s32.totalorder %s35, 0
      %p83 = por %p81, %p82
      %s85 = sadd.s32 %s84, 1
      %p88 = scmp.eq.s32.totalorder %s29, 1
      %p89 = scmp.ne.s32.totalorder %s84, %s86
      %p90 = scmp.eq.s32.totalorder %s29, 0
      %p91 = por %p89, %p90
      %p92 = scmp.ne.s32.totalorder %s84, %s86
      %p93 = scmp.eq.s32.totalorder %s34, 1
      %p94 = por %p92, %p93
      %p95 = scmp.ne.s32.totalorder %s86, %s87
      %p96 = scmp.eq.s32.totalorder %s34, 0
      %p97 = por %p95, %p96
      %p98 = scmp.ne.s32.totalorder %s86, %s87
      %p99 = scmp.eq.s32.totalorder %s35, 1
      %p100 = por %p98, %p99
      %p102 = scmp.ne.s32.totalorder %s87, %s101
      %p103 = scmp.eq.s32.totalorder %s35, 0
      %p104 = por %p102, %p103
      %s106 = sadd.s32 %s105, 1
      %p109 = scmp.eq.s32.totalorder %s29, 1
      %p110 = scmp.ne.s32.totalorder %s105, %s107
      %p111 = scmp.eq.s32.totalorder %s29, 0
      %p112 = por %p110, %p111
      %p113 = scmp.ne.s32.totalorder %s105, %s107
      %p114 = scmp.eq.s32.totalorder %s34, 1
      %p115 = por %p113, %p114
      %p116 = scmp.ne.s32.totalorder %s107, %s108
      %p117 = scmp.eq.s32.totalorder %s34, 0
      %p118 = por %p116, %p117
      %p119 = scmp.ne.s32.totalorder %s107, %s108
      %p120 = scmp.eq.s32.totalorder %s35, 1
      %p121 = por %p119, %p120
      %p123 = scmp.ne.s32.totalorder %s108, %s122
      %p124 = scmp.eq.s32.totalorder %s35, 0
      %p125 = por %p123, %p124
      %s127 = sadd.s32 %s126, 1
      %p130 = scmp.eq.s32.totalorder %s29, 1
      %p131 = scmp.ne.s32.totalorder %s126, %s128
      %p132 = scmp.eq.s32.totalorder %s29, 0
      %p133 = por %p131, %p132
      %p134 = scmp.ne.s32.totalorder %s126, %s128
      %p135 = scmp.eq.s32.totalorder %s34, 1
      %p136 = por %p134, %p135
      %p137 = scmp.ne.s32.totalorder %s128, %s129
      %p138 = scmp.eq.s32.totalorder %s34, 0
      %p139 = por %p137, %p138
      %p140 = scmp.ne.s32.totalorder %s128, %s129
      %p141 = scmp.eq.s32.totalorder %s35, 1
      %p142 = por %p140, %p141
      %p144 = scmp.ne.s32.totalorder %s129, %s143
      %p145 = scmp.eq.s32.totalorder %s35, 0
      %p146 = por %p144, %p145
      %s148 = sadd.s32 %s147, 1
      %p151 = scmp.eq.s32.totalorder %s29, 1
      %p152 = scmp.ne.s32.totalorder %s147, %s149
      %p153 = scmp.eq.s32.totalorder %s29, 0
      %p154 = por %p152, %p153
      %p155 = scmp.ne.s32.totalorder %s147, %s149
      %p156 = scmp.eq.s32.totalorder %s34, 1
      %p157 = por %p155, %p156
      %p158 = scmp.ne.s32.totalorder %s149, %s150
      %p159 = scmp.eq.s32.totalorder %s34, 0
      %p160 = por %p158, %p159
      %p161 = scmp.ne.s32.totalorder %s149, %s150
      %p162 = scmp.eq.s32.totalorder %s35, 1
      %p163 = por %p161, %p162
      %p165 = scmp.ne.s32.totalorder %s150, %s164
      %p166 = scmp.eq.s32.totalorder %s35, 0
      %p167 = por %p165, %p166
      %s169 = sadd.s32 %s168, 1
      %p172 = scmp.eq.s32.totalorder %s29, 1
      %p173 = scmp.ne.s32.totalorder %s168, %s170
      %p174 = scmp.eq.s32.totalorder %s29, 0
      %p175 = por %p173, %p174
      %p176 = scmp.ne.s32.totalorder %s168, %s170
      %p177 = scmp.eq.s32.totalorder %s34, 1
      %p178 = por %p176, %p177
      %p179 = scmp.ne.s32.totalorder %s170, %s171
      %p180 = scmp.eq.s32.totalorder %s34, 0
      %p181 = por %p179, %p180
      %p182 = scmp.ne.s32.totalorder %s170, %s171
      %p183 = scmp.eq.s32.totalorder %s35, 1
      %p184 = por %p182, %p183
      %p186 = scmp.ne.s32.totalorder %s171, %s185
      %p187 = scmp.eq.s32.totalorder %s35, 0
      %p188 = por %p186, %p187
      %s190 = sadd.s32 %s189, 1
      %p193 = scmp.eq.s32.totalorder %s29, 1
      %p194 = scmp.ne.s32.totalorder %s189, %s191
      %p195 = scmp.eq.s32.totalorder %s29, 0
      %p196 = por %p194, %p195
      %p197 = scmp.ne.s32.totalorder %s189, %s191
      %p198 = scmp.eq.s32.totalorder %s34, 1
      %p199 = por %p197, %p198
      %p200 = scmp.ne.s32.totalorder %s191, %s192
      %p201 = scmp.eq.s32.totalorder %s34, 0
      %p202 = por %p200, %p201
      %p203 = scmp.ne.s32.totalorder %s191, %s192
      %p204 = scmp.eq.s32.totalorder %s35, 1
      %p205 = por %p203, %p204
      %p207 = scmp.ne.s32.totalorder %s192, %s206
      %p208 = scmp.eq.s32.totalorder %s35, 0
      %p209 = por %p207, %p208
      %s211 = sadd.s32 %s210, 1
      %p214 = scmp.eq.s32.totalorder %s29, 1
      %p215 = scmp.ne.s32.totalorder %s210, %s212
      %p216 = scmp.eq.s32.totalorder %s29, 0
      %p217 = por %p215, %p216
      %p218 = scmp.ne.s32.totalorder %s210, %s212
      %p219 = scmp.eq.s32.totalorder %s34, 1
      %p220 = por %p218, %p219
      %p221 = scmp.ne.s32.totalorder %s212, %s213
      %p222 = scmp.eq.s32.totalorder %s34, 0
      %p223 = por %p221, %p222
      %p224 = scmp.ne.s32.totalorder %s212, %s213
      %p225 = scmp.eq.s32.totalorder %s35, 1
      %p226 = por %p224, %p225
      %p228 = scmp.ne.s32.totalorder %s213, %s227
      %p229 = scmp.eq.s32.totalorder %s35, 0
      %p230 = por %p228, %p229
      %s232 = sadd.s32 %s231, 1
      %p235 = scmp.eq.s32.totalorder %s29, 1
      %p236 = scmp.ne.s32.totalorder %s231, %s233
      %p237 = scmp.eq.s32.totalorder %s29, 0
      %p238 = por %p236, %p237
      %p239 = scmp.ne.s32.totalorder %s231, %s233
      %p240 = scmp.eq.s32.totalorder %s34, 1
      %p241 = por %p239, %p240
      %p242 = scmp.ne.s32.totalorder %s233, %s234
      %p243 = scmp.eq.s32.totalorder %s34, 0
      %p244 = por %p242, %p243
      %p245 = scmp.ne.s32.totalorder %s233, %s234
      %p246 = scmp.eq.s32.totalorder %s35, 1
      %p247 = por %p245, %p246
      %p249 = scmp.ne.s32.totalorder %s234, %s248
      %p250 = scmp.eq.s32.totalorder %s35, 0
      %p251 = por %p249, %p250
      %s253 = sadd.s32 %s252, 1
      %p256 = scmp.eq.s32.totalorder %s29, 1
      %p257 = scmp.ne.s32.totalorder %s252, %s254
      %p258 = scmp.eq.s32.totalorder %s29, 0
      %p259 = por %p257, %p258
      %p260 = scmp.ne.s32.totalorder %s252, %s254
      %p261 = scmp.eq.s32.totalorder %s34, 1
      %p262 = por %p260, %p261
      %p263 = scmp.ne.s32.totalorder %s254, %s255
      %p264 = scmp.eq.s32.totalorder %s34, 0
      %p265 = por %p263, %p264
      %p266 = scmp.ne.s32.totalorder %s254, %s255
      %p267 = scmp.eq.s32.totalorder %s35, 1
      %p268 = por %p266, %p267
      %p270 = scmp.ne.s32.totalorder %s255, %s269
      %p271 = scmp.eq.s32.totalorder %s35, 0
      %p272 = por %p270, %p271
      %s274 = sadd.s32 %s273, 1
      %p277 = scmp.eq.s32.totalorder %s29, 1
      %p278 = scmp.ne.s32.totalorder %s273, %s275
      %p279 = scmp.eq.s32.totalorder %s29, 0
      %p280 = por %p278, %p279
      %p281 = scmp.ne.s32.totalorder %s273, %s275
      %p282 = scmp.eq.s32.totalorder %s34, 1
      %p283 = por %p281, %p282
      %p284 = scmp.ne.s32.totalorder %s275, %s276
      %p285 = scmp.eq.s32.totalorder %s34, 0
      %p286 = por %p284, %p285
      %p287 = scmp.ne.s32.totalorder %s275, %s276
      %p288 = scmp.eq.s32.totalorder %s35, 1
      %p289 = por %p287, %p288
      %p291 = scmp.ne.s32.totalorder %s276, %s290
      %p292 = scmp.eq.s32.totalorder %s35, 0
      %p293 = por %p291, %p292
      %s295 = sadd.s32 %s294, 1
      %p298 = scmp.eq.s32.totalorder %s29, 1
      %p299 = scmp.ne.s32.totalorder %s294, %s296
      %p300 = scmp.eq.s32.totalorder %s29, 0
      %p301 = por %p299, %p300
      %p302 = scmp.ne.s32.totalorder %s294, %s296
      %p303 = scmp.eq.s32.totalorder %s34, 1
      %p304 = por %p302, %p303
      %p305 = scmp.ne.s32.totalorder %s296, %s297
      %p306 = scmp.eq.s32.totalorder %s34, 0
      %p307 = por %p305, %p306
      %p308 = scmp.ne.s32.totalorder %s296, %s297
      %p309 = scmp.eq.s32.totalorder %s35, 1
      %p310 = por %p308, %p309
      %p312 = scmp.ne.s32.totalorder %s297, %s311
      %p313 = scmp.eq.s32.totalorder %s35, 0
      %p314 = por %p312, %p313
      %s316 = sadd.s32 %s315, 1
      %p319 = scmp.eq.s32.totalorder %s29, 1
      %p320 = scmp.ne.s32.totalorder %s315, %s317
      %p321 = scmp.eq.s32.totalorder %s29, 0
      %p322 = por %p320, %p321
      %p323 = scmp.ne.s32.totalorder %s315, %s317
      %p324 = scmp.eq.s32.totalorder %s34, 1
      %p325 = por %p323, %p324
      %p326 = scmp.ne.s32.totalorder %s317, %s318
      %p327 = scmp.eq.s32.totalorder %s34, 0
      %p328 = por %p326, %p327
      %p329 = scmp.ne.s32.totalorder %s317, %s318
      %p330 = scmp.eq.s32.totalorder %s35, 1
      %p331 = por %p329, %p330
      %p333 = scmp.ne.s32.totalorder %s318, %s332
      %p334 = scmp.eq.s32.totalorder %s35, 0
      %p335 = por %p333, %p334
      %s337 = sadd.s32 %s336, 1
      %p340 = scmp.eq.s32.totalorder %s29, 1
      %p341 = scmp.ne.s32.totalorder %s336, %s338
      %p342 = scmp.eq.s32.totalorder %s29, 0
      %p343 = por %p341, %p342
      %p344 = scmp.ne.s32.totalorder %s336, %s338
      %p345 = scmp.eq.s32.totalorder %s34, 1
      %p346 = por %p344, %p345
      %p347 = scmp.ne.s32.totalorder %s338, %s339
      %p348 = scmp.eq.s32.totalorder %s34, 0
      %p349 = por %p347, %p348
      %p350 = scmp.ne.s32.totalorder %s338, %s339
      %p351 = scmp.eq.s32.totalorder %s35, 1
      %p352 = por %p350, %p351
      %p354 = scmp.ne.s32.totalorder %s339, %s353
      %p355 = scmp.eq.s32.totalorder %s35, 0
      %p356 = por %p354, %p355
      %s358 = sadd.s32 %s357, 1
      %p361 = scmp.eq.s32.totalorder %s29, 1
      %p362 = scmp.ne.s32.totalorder %s357, %s359
      %p363 = scmp.eq.s32.totalorder %s29, 0
      %p364 = por %p362, %p363
      %p365 = scmp.ne.s32.totalorder %s357, %s359
      %p366 = scmp.eq.s32.totalorder %s34, 1
      %p367 = por %p365, %p366
      %p368 = scmp.ne.s32.totalorder %s359, %s360
      %p369 = scmp.eq.s32.totalorder %s34, 0
      %p370 = por %p368, %p369
      %p371 = scmp.ne.s32.totalorder %s359, %s360
      %p372 = scmp.eq.s32.totalorder %s35, 1
      %p373 = por %p371, %p372
      %p375 = scmp.ne.s32.totalorder %s360, %s374
      %p376 = scmp.eq.s32.totalorder %s35, 0
      %p377 = por %p375, %p376
      %s379 = sadd.s32 %s378, 1
      %p382 = scmp.eq.s32.totalorder %s29, 1
      %p383 = scmp.ne.s32.totalorder %s378, %s380
      %p384 = scmp.eq.s32.totalorder %s29, 0
      %p385 = por %p383, %p384
      %p386 = scmp.ne.s32.totalorder %s378, %s380
      %p387 = scmp.eq.s32.totalorder %s34, 1
      %p388 = por %p386, %p387
      %p389 = scmp.ne.s32.totalorder %s380, %s381
      %p390 = scmp.eq.s32.totalorder %s34, 0
      %p391 = por %p389, %p390
      %p392 = scmp.ne.s32.totalorder %s380, %s381
      %p393 = scmp.eq.s32.totalorder %s35, 1
      %p394 = por %p392, %p393
      %p396 = scmp.ne.s32.totalorder %s381, %s395
      %p397 = scmp.eq.s32.totalorder %s35, 0
      %p398 = por %p396, %p397
      %s400 = sadd.s32 %s399, 1
      %p403 = scmp.eq.s32.totalorder %s29, 1
      %p404 = scmp.ne.s32.totalorder %s399, %s401
      %p405 = scmp.eq.s32.totalorder %s29, 0
      %p406 = por %p404, %p405
      %p407 = scmp.ne.s32.totalorder %s399, %s401
      %p408 = scmp.eq.s32.totalorder %s34, 1
      %p409 = por %p407, %p408
      %p410 = scmp.ne.s32.totalorder %s401, %s402
      %p411 = scmp.eq.s32.totalorder %s34, 0
      %p412 = por %p410, %p411
      %p413 = scmp.ne.s32.totalorder %s401, %s402
      %p414 = scmp.eq.s32.totalorder %s35, 1
      %p415 = por %p413, %p414
      %p417 = scmp.ne.s32.totalorder %s402, %s416
      %p418 = scmp.eq.s32.totalorder %s35, 0
      %p419 = por %p417, %p418
      %s421 = sadd.s32 %s420, 1
      %p424 = scmp.eq.s32.totalorder %s29, 1
      %p425 = scmp.ne.s32.totalorder %s420, %s422
      %p426 = scmp.eq.s32.totalorder %s29, 0
      %p427 = por %p425, %p426
      %p428 = scmp.ne.s32.totalorder %s420, %s422
      %p429 = scmp.eq.s32.totalorder %s34, 1
      %p430 = por %p428, %p429
      %p431 = scmp.ne.s32.totalorder %s422, %s423
      %p432 = scmp.eq.s32.totalorder %s34, 0
      %p433 = por %p431, %p432
      %p434 = scmp.ne.s32.totalorder %s422, %s423
      %p435 = scmp.eq.s32.totalorder %s35, 1
      %p436 = por %p434, %p435
      %p438 = scmp.ne.s32.totalorder %s423, %s437
      %p439 = scmp.eq.s32.totalorder %s35, 0
      %p440 = por %p438, %p439
      %s441 = ssub.s32 %s29, %s36
      %p442 = scmp.eq.s32.totalorder %s441, 0
      %s444 = sadd.s32 %s443, 1
      %s445 = scalar_select %p442, %s443, %s444
      %p448 = pneg %p442
      %p449 = scmp.eq.s32.totalorder %s29, 1
      %p450 = por %p448, %p449
      %p451 = scmp.ne.s32.totalorder %s443, %s446
      %p452 = scmp.eq.s32.totalorder %s29, 0
      %p453 = por %p451, %p452
      %p454 = scmp.ne.s32.totalorder %s443, %s446
      %p455 = scmp.eq.s32.totalorder %s34, 1
      %p456 = por %p454, %p455
      %p457 = scmp.ne.s32.totalorder %s446, %s447
      %p458 = scmp.eq.s32.totalorder %s34, 0
      %p459 = por %p457, %p458
      %p460 = scmp.ne.s32.totalorder %s446, %s447
      %p461 = scmp.eq.s32.totalorder %s35, 1
      %p462 = por %p460, %p461
      %p464 = scmp.ne.s32.totalorder %s447, %s463
      %p465 = scmp.eq.s32.totalorder %s35, 0
      %p466 = por %p464, %p465
      %p467 = scmp.le.s32.totalorder 1, %s29
      %p468 = scmp.lt.s32.totalorder %s29, 3
      %p469 = pnand %p467, %p468
      %p470 = pneg %p469
      // Predicated region
      $region9: #{cnn_forward.1} parent=5 // pred_check
        _
      $region10: #{cnn_forward.1} parent=5 // pred_check_branch
        %472 = sbr.rel (%p469) target = $region12
      $region11: #{cnn_forward.1} parent=5 // pred_region
        %s473 = ssub.s32 %s29, 1
        // Predicated region
        $region13: #{cnn_forward.1} parent=11 // pred_check
          %p474 = pneg %p76
        $region14: #{cnn_forward.1} parent=11 // pred_check_branch
          %476 = sbr.rel (%p474) target = $region16
        $region15: #{cnn_forward.1} parent=11 // pred_region
          _
        $region16: #{cnn_forward.1} parent=11 // pred_fallthru
          _
        // Predicated region
        $region17: #{cnn_forward.1} parent=11 // pred_check
          %p477 = pneg %p97
        $region18: #{cnn_forward.1} parent=11 // pred_check_branch
          %479 = sbr.rel (%p477) target = $region20
        $region19: #{cnn_forward.1} parent=11 // pred_region
          _
        $region20: #{cnn_forward.1} parent=11 // pred_fallthru
          _
        // Predicated region
        $region21: #{cnn_forward.1} parent=11 // pred_check
          %p480 = pneg %p118
        $region22: #{cnn_forward.1} parent=11 // pred_check_branch
          %482 = sbr.rel (%p480) target = $region24
        $region23: #{cnn_forward.1} parent=11 // pred_region
          _
        $region24: #{cnn_forward.1} parent=11 // pred_fallthru
          _
        // Predicated region
        $region25: #{cnn_forward.1} parent=11 // pred_check
          %p483 = pneg %p139
        $region26: #{cnn_forward.1} parent=11 // pred_check_branch
          %485 = sbr.rel (%p483) target = $region28
        $region27: #{cnn_forward.1} parent=11 // pred_region
          _
        $region28: #{cnn_forward.1} parent=11 // pred_fallthru
          _
        // Predicated region
        $region29: #{cnn_forward.1} parent=11 // pred_check
          %p486 = pneg %p160
        $region30: #{cnn_forward.1} parent=11 // pred_check_branch
          %488 = sbr.rel (%p486) target = $region32
        $region31: #{cnn_forward.1} parent=11 // pred_region
          _
        $region32: #{cnn_forward.1} parent=11 // pred_fallthru
          _
        // Predicated region
        $region33: #{cnn_forward.1} parent=11 // pred_check
          %p489 = pneg %p181
        $region34: #{cnn_forward.1} parent=11 // pred_check_branch
          %491 = sbr.rel (%p489) target = $region36
        $region35: #{cnn_forward.1} parent=11 // pred_region
          _
        $region36: #{cnn_forward.1} parent=11 // pred_fallthru
          _
        // Predicated region
        $region37: #{cnn_forward.1} parent=11 // pred_check
          %p492 = pneg %p202
        $region38: #{cnn_forward.1} parent=11 // pred_check_branch
          %494 = sbr.rel (%p492) target = $region40
        $region39: #{cnn_forward.1} parent=11 // pred_region
          _
        $region40: #{cnn_forward.1} parent=11 // pred_fallthru
          _
        // Predicated region
        $region41: #{cnn_forward.1} parent=11 // pred_check
          %p495 = pneg %p223
        $region42: #{cnn_forward.1} parent=11 // pred_check_branch
          %497 = sbr.rel (%p495) target = $region44
        $region43: #{cnn_forward.1} parent=11 // pred_region
          _
        $region44: #{cnn_forward.1} parent=11 // pred_fallthru
          _
        // Predicated region
        $region45: #{cnn_forward.1} parent=11 // pred_check
          %p498 = pneg %p244
        $region46: #{cnn_forward.1} parent=11 // pred_check_branch
          %500 = sbr.rel (%p498) target = $region48
        $region47: #{cnn_forward.1} parent=11 // pred_region
          %502 = vsyncadd [#allocation8], 0
          %s503 = sshll.u32 %s9, 4
          %s504 = int_to_ptr.hbm [resolvable:$true] %s503
          %s505 = sshll.u32 [#allocation7], 4
          %s506 = int_to_ptr.vmem [resolvable:$true] %s505
          %511 = dma.hbm_to_vmem [thread:$0]  %s504, 30720, %s506, [#allocation8], 128, 128, 8
        $region48: #{cnn_forward.1} parent=11 // pred_fallthru
          _
        // Predicated region
        $region49: #{cnn_forward.1} parent=11 // pred_check
          %p512 = pneg %p265
        $region50: #{cnn_forward.1} parent=11 // pred_check_branch
          %514 = sbr.rel (%p512) target = $region52
        $region51: #{cnn_forward.1} parent=11 // pred_region
          _
        $region52: #{cnn_forward.1} parent=11 // pred_fallthru
          _
        // Predicated region
        $region53: #{cnn_forward.1} parent=11 // pred_check
          %p515 = pneg %p286
        $region54: #{cnn_forward.1} parent=11 // pred_check_branch
          %517 = sbr.rel (%p515) target = $region56
        $region55: #{cnn_forward.1} parent=11 // pred_region
          _
        $region56: #{cnn_forward.1} parent=11 // pred_fallthru
          _
        // Predicated region
        $region57: #{cnn_forward.1} parent=11 // pred_check
          %p518 = pneg %p307
        $region58: #{cnn_forward.1} parent=11 // pred_check_branch
          %520 = sbr.rel (%p518) target = $region60
        $region59: #{cnn_forward.1} parent=11 // pred_region
          _
        $region60: #{cnn_forward.1} parent=11 // pred_fallthru
          _
        // Predicated region
        $region61: #{cnn_forward.1} parent=11 // pred_check
          %p521 = pneg %p328
        $region62: #{cnn_forward.1} parent=11 // pred_check_branch
          %523 = sbr.rel (%p521) target = $region64
        $region63: #{cnn_forward.1} parent=11 // pred_region
          _
        $region64: #{cnn_forward.1} parent=11 // pred_fallthru
          _
        // Predicated region
        $region65: #{cnn_forward.1} parent=11 // pred_check
          %p524 = pneg %p349
        $region66: #{cnn_forward.1} parent=11 // pred_check_branch
          %526 = sbr.rel (%p524) target = $region68
        $region67: #{cnn_forward.1} parent=11 // pred_region
          _
        $region68: #{cnn_forward.1} parent=11 // pred_fallthru
          _
        // Predicated region
        $region69: #{cnn_forward.1} parent=11 // pred_check
          %p527 = pneg %p370
        $region70: #{cnn_forward.1} parent=11 // pred_check_branch
          %529 = sbr.rel (%p527) target = $region72
        $region71: #{cnn_forward.1} parent=11 // pred_region
          _
        $region72: #{cnn_forward.1} parent=11 // pred_fallthru
          _
        // Predicated region
        $region73: #{cnn_forward.1} parent=11 // pred_check
          %p530 = pneg %p391
        $region74: #{cnn_forward.1} parent=11 // pred_check_branch
          %532 = sbr.rel (%p530) target = $region76
        $region75: #{cnn_forward.1} parent=11 // pred_region
          _
        $region76: #{cnn_forward.1} parent=11 // pred_fallthru
          _
        // Predicated region
        $region77: #{cnn_forward.1} parent=11 // pred_check
          %p533 = pneg %p412
        $region78: #{cnn_forward.1} parent=11 // pred_check_branch
          %535 = sbr.rel (%p533) target = $region80
        $region79: #{cnn_forward.1} parent=11 // pred_region
          _
        $region80: #{cnn_forward.1} parent=11 // pred_fallthru
          _
        // Predicated region
        $region81: #{cnn_forward.1} parent=11 // pred_check
          %p536 = pneg %p433
        $region82: #{cnn_forward.1} parent=11 // pred_check_branch
          %538 = sbr.rel (%p536) target = $region84
        $region83: #{cnn_forward.1} parent=11 // pred_region
          _
        $region84: #{cnn_forward.1} parent=11 // pred_fallthru
          _
      $region12: #{cnn_forward.1} parent=5 // pred_fallthru
        _
      %p539 = scmp.lt.s32.totalorder %s29, 2
      // Predicated region
      $region85: #{cnn_forward.1} parent=5 // pred_check
        %p540 = pneg %p539
      $region86: #{cnn_forward.1} parent=5 // pred_check_branch
        %542 = sbr.rel (%p540) target = $region88
      $region87: #{cnn_forward.1} parent=5 // pred_region
        // Predicated region
        $region89: #{cnn_forward.1} parent=87 // pred_check
          %p543 = pneg %p49
        $region90: #{cnn_forward.1} parent=87 // pred_check_branch
          %545 = sbr.rel (%p543) target = $region92
        $region91: #{cnn_forward.1} parent=87 // pred_region
          %p546 = scmp.lt.s32.totalorder %s29, 1
          %s547 = scalar_select %p546, %s29, 1
          %s548 = smul.addr %s547, 4
          %s549 = smul.addr %s548, 8
          %s550 = scalar_lea.vmem %s0, %s549
        $region92: #{cnn_forward.1} parent=87 // pred_fallthru
          _
      $region88: #{cnn_forward.1} parent=5 // pred_fallthru
        _
      %p551 = scmp.le.s32.totalorder 1, %s29
      %p552 = scmp.lt.s32.totalorder %s29, 3
      %p553 = pnand %p551, %p552
      %p554 = pneg %p553
      // Predicated region
      $region93: #{cnn_forward.1} parent=5 // pred_check
        _
      $region94: #{cnn_forward.1} parent=5 // pred_check_branch
        %556 = sbr.rel (%p553) target = $region96
      $region95: #{cnn_forward.1} parent=5 // pred_region
        %s557 = ssub.s32 %s29, 1
        // Predicated region
        $region97: #{cnn_forward.1} parent=95 // pred_check
          %p558 = pneg %p244
        $region98: #{cnn_forward.1} parent=95 // pred_check_branch
          %560 = sbr.rel (%p558) target = $region100
        $region99: #{cnn_forward.1} parent=95 // pred_region
          %562 = dma.done [#allocation8], 30720
        $region100: #{cnn_forward.1} parent=95 // pred_fallthru
          _
        %p563 = scmp.lt.s32.totalorder %s34, 1
        %s564 = scalar_select %p563, %s34, 1
        %s565 = smul.addr %s564, 4
        %s566 = smul.addr %s565, 8
        %s567 = scalar_lea.vmem %s0, %s566
        %p568 = pneg %p55
        %p569 = pneg %p52
        %p570 = pneg %p76
        %p571 = pneg %p73
        %p572 = pneg %p97
        %p573 = pneg %p94
        %p574 = pneg %p118
        %p575 = pneg %p115
        %p576 = pneg %p139
        %p577 = pneg %p136
        %p578 = pneg %p160
        %p579 = pneg %p157
        %p580 = pneg %p181
        %p581 = pneg %p178
        %p582 = pneg %p202
        %p583 = pneg %p199
        %p584 = pneg %p223
        %p585 = pneg %p220
        %p586 = pneg %p244
        %p587 = pneg %p241
        %p588 = pneg %p265
        %p589 = pneg %p262
        %p590 = pneg %p286
        %p591 = pneg %p283
        %p592 = pneg %p307
        %p593 = pneg %p304
        %p594 = pneg %p328
        %p595 = pneg %p325
        %p596 = pneg %p349
        %p597 = pneg %p346
        %p598 = pneg %p370
        %p599 = pneg %p367
        %p600 = pneg %p391
        %p601 = pneg %p388
        %p602 = pneg %p412
        %p603 = pneg %p409
        %p604 = pneg %p433
        %p605 = pneg %p430
        %p606 = pneg %p459
        %p607 = pneg %p456
        %s608 = sand.u32 %s446, 1
        %s609 = scalar_lea.sflag [#allocation9], %s608
        %s610 = sand.u32 %s446, 1
        %s611 = scalar_lea.vmem [#allocation10], %s610
        %p612 = scmp.lt.s32.totalorder %s34, 1
        %s613 = scalar_select %p612, %s34, 1
        %s614 = smul.addr %s613, 4
        %s615 = smul.addr %s614, 8
        %s616 = scalar_lea.vmem %s0, %s615
        %vm618 = vcmask 129024
        %619 = vst.msk [vmem:[#allocation2] sm:$0x7f] %vm618, 0.0
        %vm620 = vcmask 130048
        %621 = vst.msk [vmem:[#allocation2 + $0x27] sm:$0xff] %vm620, 0.0
        %vm622 = vcmask 122880
        %623 = vst.msk [vmem:[#allocation2 + $0x2f] sm:$0x1] %vm622, 0.0
        %vm624 = vcmask 522240
        %625 = vst.msk [vmem:[#allocation3] sm:$0x7f] %vm624, 0.0
        %vm626 = vcmask 523264
        %627 = vst.msk [vmem:[#allocation3 + $0x17] sm:$0xff] %vm626, 0.0
        %vm628 = vcmask 516096
        %629 = vst.msk [vmem:[#allocation3 + $0x1f] sm:$0x1] %vm628, 0.0
        %630 = vst [vmem:[#allocation4] sm:$0x7f] 0.0
        %631 = vst [vmem:[#allocation4 + $0xf] sm:$0xff] 0.0
        %632 = vst [vmem:[#allocation4 + $0x17] sm:$0x1] 0.0
        %633 = vst [vmem:[#allocation5] sm:$0xf] 0.0
        %634 = vst [vmem:[#allocation5 + $0x8] sm:$0xf] 0.0
        %635 = vst [vmem:[#allocation5 + $0x10] sm:$0xff] 0.0
        %636 = vst [vmem:[#allocation5 + $0x18] sm:$0xff] 0.0
        %637 = vst [vmem:[#allocation6] sm:$0xf] 0.0
        %638 = vst [vmem:[#allocation6 + $0x8] sm:$0xff] 0.0
        %v639 = vld [vmem:[%s616] sm:$0xff]
        %v640 = vld [vmem:[%s616 + $0x8] sm:$0xff]
        %v641 = vld [vmem:[%s616 + $0x10] sm:$0xff]
        %v642 = vld [vmem:[%s616 + $0x18] sm:$0xff]
        %v643 = vld [vmem:[%s1] sm:$0x1]
        %v645 = vperm.slane %v643, 0
        %v647 = vmul.f32 %v639, %v645
        %v648 = vmul.f32 %v640, %v645
        %v649 = vmul.f32 %v641, %v645
        %v650 = vmul.f32 %v642, %v645
        %v651 = vld [vmem:[%s2] sm:$0xff]
        %v652 = vld [vmem:[%s2 + $0x8] sm:$0xff]
        %v653 = vld [vmem:[%s2 + $0x10] sm:$0xff]
        %v654 = vld [vmem:[%s2 + $0x18] sm:$0xff]
        %v655 = vadd.f32 %v647, %v651
        %v656 = vadd.f32 %v648, %v652
        %v657 = vadd.f32 %v649, %v653
        %v658 = vadd.f32 %v650, %v654
        %v659 = vmax.f32 %v655, 0.0
        %v660 = vmax.f32 %v656, 0.0
        %v661 = vmax.f32 %v657, 0.0
        %v662 = vmax.f32 %v658, 0.0
        %v663 = vpack.c.bf16 %v660, %v659
        %v664 = vpack.c.bf16 %v662, %v661
        %v665 = vld [vmem:[%s3] sm:$0xf]
        %v666 = vld [vmem:[%s3 + $0x4] sm:$0xf]
        %v667 = vld [vmem:[%s3 + $0x8] sm:$0xf]
        %v668 = vld [vmem:[%s3 + $0xc] sm:$0xf]
        %v669 = vld [vmem:[%s3 + $0x10] sm:$0xf]
        %v670 = vld [vmem:[%s3 + $0x14] sm:$0xf]
        %v671 = vld [vmem:[%s3 + $0x18] sm:$0xf]
        %v672 = vld [vmem:[%s3 + $0x1c] sm:$0x3]
        %v673 = vld [vmem:[%s4] sm:$0x1]
        %v675 = vperm.slane %v673, 0
        %v685 = vunpack.c.l.b16 %v665
        %v686 = vunpack.c.l.b16 %v666
        %v687 = vunpack.c.l.b16 %v667
        %v688 = vunpack.c.l.b16 %v668
        %v689 = vunpack.c.l.b16 %v669
        %v690 = vunpack.c.l.b16 %v670
        %v691 = vunpack.c.l.b16 %v671
        %v692 = vunpack.c.l.b16 %v672
        %v693 = vpack.c.b16 %v686, %v685
        %v694 = vpack.c.b16 %v688, %v687
        %v695 = vpack.c.b16 %v690, %v689
        %v696 = vpack.c.b16 %v692, %v691
        %vm700 = vcmask 490496
        %v702 = vsel %vm700, %v663, 0
        %v705 = vsel %vm700, %v664, 0
        %vm707 = vcmask 1045504
        %v709 = vsel %vm707, %v696, 0
        %711 = vmatpush.bf16.msra.mxu0 0
        %712 = vmatpush.bf16.msra.mxu0 0
        %713 = vmatpush.bf16.msra.mxu0 0
        %714 = vmatpush.bf16.msra.mxu0 0
        %715 = vmatpush.bf16.msra.mxu0 %v709
        %716 = vmatpush.bf16.msra.mxu0 %v695
        %717 = vmatpush.bf16.msra.mxu0 %v694
        %718 = vmatpush.bf16.msra.mxu0 %v693
        %719 = vmatmul.bf16.gmra.mxu0 %v702
        %v720 = vpop.f32.mrf.mxu0
        %v721 = vadd.f32 %v675, %v720
        %v722 = vpop.f32.mrf.mxu0
        %v723 = vadd.f32 %v675, %v722
        %724 = vmatmul.bf16.gmra.mxu0 %v705
        %v725 = vpop.f32.mrf.mxu0
        %v726 = vadd.f32 %v675, %v725
        %v727 = vpop.f32.mrf.mxu0
        %v728 = vadd.f32 %v675, %v727
        %729 = vdwg.mxu0
        %v730 = vmax.f32 %v721, 0.0
        %v731 = vmax.f32 %v723, 0.0
        %v732 = vmax.f32 %v726, 0.0
        %v733 = vmax.f32 %v728, 0.0
        %734 = vst.msk [vmem:[#allocation2 + $0x7] sm:$0xff] %vm620, %v730
        %735 = vst.msk [vmem:[#allocation2 + $0xf] sm:$0xff] %vm620, %v731
        %736 = vst.msk [vmem:[#allocation2 + $0x17] sm:$0xff] %vm620, %v732
        %737 = vst.msk [vmem:[#allocation2 + $0x1f] sm:$0xff] %vm620, %v733
        %v738 = vld [vmem:[#allocation2] ss:$2 sm:$0xff]
        %s739 = scalar_lea.vmem [#allocation2], 16
        %v740 = vld [vmem:[%s739] ss:$2 sm:$0xff]
        %v741 = vpack.c.bf16 %v740, %v738
        %v742 = vld [vmem:[%s5] sm:$0xf]
        %v743 = vld [vmem:[%s5 + $0x4] sm:$0xf]
        %s744 = scalar_lea.vmem [#allocation2], 1
        %v745 = vld [vmem:[%s744] ss:$2 sm:$0xff]
        %s746 = scalar_lea.vmem [#allocation2], 17
        %v747 = vld [vmem:[%s746] ss:$2 sm:$0xff]
        %v748 = vpack.c.bf16 %v747, %v745
        %s749 = scalar_lea.vmem %s5, 8
        %v750 = vld [vmem:[%s749] sm:$0xf]
        %v751 = vld [vmem:[%s749 + $0x4] sm:$0xf]
        %v754 = vunpack.c.l.b16 %v750
        %v755 = vunpack.c.l.b16 %v751
        %v756 = vpack.c.b16 %v755, %v754
        %v759 = vsel %vm620, %v748, 0
        %761 = vmatpush.bf16.msra.mxu0 0
        %762 = vmatpush.bf16.msra.mxu0 0
        %763 = vmatpush.bf16.msra.mxu0 0
        %764 = vmatpush.bf16.msra.mxu0 0
        %765 = vmatpush.bf16.msra.mxu0 0
        %766 = vmatpush.bf16.msra.mxu0 0
        %767 = vmatpush.bf16.msra.mxu0 0
        %768 = vmatpush.bf16.msra.mxu0 %v756
        %769 = vmatmul.bf16.gmra.mxu0 %v759
        %v770 = vpop.f32.mrf.mxu0
        %v771 = vadd.f32 0.0, %v770
        %v772 = vpop.f32.mrf.mxu0
        %v773 = vadd.f32 0.0, %v772
        %774 = vdwg.mxu0
        %v777 = vunpack.c.l.b16 %v742
        %v778 = vunpack.c.l.b16 %v743
        %v779 = vpack.c.b16 %v778, %v777
        %v782 = vsel %vm620, %v741, 0
        %784 = vmatpush.bf16.msra.mxu0 0
        %785 = vmatpush.bf16.msra.mxu0 0
        %786 = vmatpush.bf16.msra.mxu0 0
        %787 = vmatpush.bf16.msra.mxu0 0
        %788 = vmatpush.bf16.msra.mxu0 0
        %789 = vmatpush.bf16.msra.mxu0 0
        %790 = vmatpush.bf16.msra.mxu0 0
        %791 = vmatpush.bf16.msra.mxu0 %v779
        %792 = vmatmul.bf16.gmra.mxu0 %v782
        %v793 = vpop.f32.mrf.mxu0
        %v794 = vadd.f32 %v771, %v793
        %v795 = vpop.f32.mrf.mxu0
        %v796 = vadd.f32 %v773, %v795
        %797 = vdwg.mxu0
        %s798 = scalar_lea.vmem [#allocation2], 2
        %v799 = vld [vmem:[%s798] ss:$2 sm:$0xff]
        %s800 = scalar_lea.vmem [#allocation2], 18
        %v801 = vld [vmem:[%s800] ss:$2 sm:$0xff]
        %v802 = vpack.c.bf16 %v801, %v799
        %s803 = scalar_lea.vmem %s5, 16
        %v804 = vld [vmem:[%s803] sm:$0xf]
        %v805 = vld [vmem:[%s803 + $0x4] sm:$0xf]
        %v808 = vunpack.c.l.b16 %v804
        %v809 = vunpack.c.l.b16 %v805
        %v810 = vpack.c.b16 %v809, %v808
        %v813 = vsel %vm620, %v802, 0
        %815 = vmatpush.bf16.msra.mxu0 0
        %816 = vmatpush.bf16.msra.mxu0 0
        %817 = vmatpush.bf16.msra.mxu0 0
        %818 = vmatpush.bf16.msra.mxu0 0
        %819 = vmatpush.bf16.msra.mxu0 0
        %820 = vmatpush.bf16.msra.mxu0 0
        %821 = vmatpush.bf16.msra.mxu0 0
        %822 = vmatpush.bf16.msra.mxu0 %v810
        %823 = vmatmul.bf16.gmra.mxu0 %v813
        %v824 = vpop.f32.mrf.mxu0
        %v825 = vadd.f32 0.0, %v824
        %v826 = vpop.f32.mrf.mxu0
        %v827 = vadd.f32 0.0, %v826
        %828 = vdwg.mxu0
        %v829 = vadd.f32 %v794, %v825
        %v830 = vadd.f32 %v796, %v827
        %s831 = scalar_lea.vmem [#allocation2], 3
        %v832 = vld [vmem:[%s831] ss:$2 sm:$0xff]
        %s833 = scalar_lea.vmem [#allocation2], 19
        %v834 = vld [vmem:[%s833] ss:$2 sm:$0xff]
        %v835 = vpack.c.bf16 %v834, %v832
        %s836 = scalar_lea.vmem %s5, 24
        %v837 = vld [vmem:[%s836] sm:$0xf]
        %v838 = vld [vmem:[%s836 + $0x4] sm:$0xf]
        %v841 = vunpack.c.l.b16 %v837
        %v842 = vunpack.c.l.b16 %v838
        %v843 = vpack.c.b16 %v842, %v841
        %v846 = vsel %vm620, %v835, 0
        %848 = vmatpush.bf16.msra.mxu0 0
        %849 = vmatpush.bf16.msra.mxu0 0
        %850 = vmatpush.bf16.msra.mxu0 0
        %851 = vmatpush.bf16.msra.mxu0 0
        %852 = vmatpush.bf16.msra.mxu0 0
        %853 = vmatpush.bf16.msra.mxu0 0
        %854 = vmatpush.bf16.msra.mxu0 0
        %855 = vmatpush.bf16.msra.mxu0 %v843
        %856 = vmatmul.bf16.gmra.mxu0 %v846
        %v857 = vpop.f32.mrf.mxu0
        %v858 = vadd.f32 0.0, %v857
        %v859 = vpop.f32.mrf.mxu0
        %v860 = vadd.f32 0.0, %v859
        %861 = vdwg.mxu0
        %v862 = vadd.f32 %v829, %v858
        %v863 = vadd.f32 %v830, %v860
        %s864 = scalar_lea.vmem [#allocation2], 4
        %v865 = vld [vmem:[%s864] ss:$2 sm:$0xff]
        %s866 = scalar_lea.vmem [#allocation2], 20
        %v867 = vld [vmem:[%s866] ss:$2 sm:$0xff]
        %v868 = vpack.c.bf16 %v867, %v865
        %s869 = scalar_lea.vmem %s5, 32
        %v870 = vld [vmem:[%s869] sm:$0xf]
        %v871 = vld [vmem:[%s869 + $0x4] sm:$0xf]
        %v874 = vunpack.c.l.b16 %v870
        %v875 = vunpack.c.l.b16 %v871
        %v876 = vpack.c.b16 %v875, %v874
        %v879 = vsel %vm620, %v868, 0
        %881 = vmatpush.bf16.msra.mxu0 0
        %882 = vmatpush.bf16.msra.mxu0 0
        %883 = vmatpush.bf16.msra.mxu0 0
        %884 = vmatpush.bf16.msra.mxu0 0
        %885 = vmatpush.bf16.msra.mxu0 0
        %886 = vmatpush.bf16.msra.mxu0 0
        %887 = vmatpush.bf16.msra.mxu0 0
        %888 = vmatpush.bf16.msra.mxu0 %v876
        %889 = vmatmul.bf16.gmra.mxu0 %v879
        %v890 = vpop.f32.mrf.mxu0
        %v891 = vadd.f32 0.0, %v890
        %v892 = vpop.f32.mrf.mxu0
        %v893 = vadd.f32 0.0, %v892
        %894 = vdwg.mxu0
        %v895 = vadd.f32 %v862, %v891
        %v896 = vadd.f32 %v863, %v893
        %s897 = scalar_lea.vmem [#allocation2], 5
        %v898 = vld [vmem:[%s897] ss:$2 sm:$0xff]
        %s899 = scalar_lea.vmem [#allocation2], 21
        %v900 = vld [vmem:[%s899] ss:$2 sm:$0xff]
        %v901 = vpack.c.bf16 %v900, %v898
        %s902 = scalar_lea.vmem %s5, 40
        %v903 = vld [vmem:[%s902] sm:$0xf]
        %v904 = vld [vmem:[%s902 + $0x4] sm:$0xf]
        %v907 = vunpack.c.l.b16 %v903
        %v908 = vunpack.c.l.b16 %v904
        %v909 = vpack.c.b16 %v908, %v907
        %v912 = vsel %vm620, %v901, 0
        %914 = vmatpush.bf16.msra.mxu0 0
        %915 = vmatpush.bf16.msra.mxu0 0
        %916 = vmatpush.bf16.msra.mxu0 0
        %917 = vmatpush.bf16.msra.mxu0 0
        %918 = vmatpush.bf16.msra.mxu0 0
        %919 = vmatpush.bf16.msra.mxu0 0
        %920 = vmatpush.bf16.msra.mxu0 0
        %921 = vmatpush.bf16.msra.mxu0 %v909
        %922 = vmatmul.bf16.gmra.mxu0 %v912
        %v923 = vpop.f32.mrf.mxu0
        %v924 = vadd.f32 0.0, %v923
        %v925 = vpop.f32.mrf.mxu0
        %v926 = vadd.f32 0.0, %v925
        %927 = vdwg.mxu0
        %v928 = vadd.f32 %v895, %v924
        %v929 = vadd.f32 %v896, %v926
        %s930 = scalar_lea.vmem [#allocation2], 6
        %v931 = vld [vmem:[%s930] ss:$2 sm:$0xff]
        %s932 = scalar_lea.vmem [#allocation2], 22
        %v933 = vld [vmem:[%s932] ss:$2 sm:$0xff]
        %v934 = vpack.c.bf16 %v933, %v931
        %s935 = scalar_lea.vmem %s5, 48
        %v936 = vld [vmem:[%s935] sm:$0xf]
        %v937 = vld [vmem:[%s935 + $0x4] sm:$0xf]
        %v940 = vunpack.c.l.b16 %v936
        %v941 = vunpack.c.l.b16 %v937
        %v942 = vpack.c.b16 %v941, %v940
        %v945 = vsel %vm620, %v934, 0
        %947 = vmatpush.bf16.msra.mxu0 0
        %948 = vmatpush.bf16.msra.mxu0 0
        %949 = vmatpush.bf16.msra.mxu0 0
        %950 = vmatpush.bf16.msra.mxu0 0
        %951 = vmatpush.bf16.msra.mxu0 0
        %952 = vmatpush.bf16.msra.mxu0 0
        %953 = vmatpush.bf16.msra.mxu0 0
        %954 = vmatpush.bf16.msra.mxu0 %v942
        %955 = vmatmul.bf16.gmra.mxu0 %v945
        %v956 = vpop.f32.mrf.mxu0
        %v957 = vadd.f32 0.0, %v956
        %v958 = vpop.f32.mrf.mxu0
        %v959 = vadd.f32 0.0, %v958
        %960 = vdwg.mxu0
        %v961 = vadd.f32 %v928, %v957
        %v962 = vadd.f32 %v929, %v959
        %s963 = scalar_lea.vmem [#allocation2], 7
        %v964 = vld [vmem:[%s963] ss:$2 sm:$0xff]
        %s965 = scalar_lea.vmem [#allocation2], 23
        %v966 = vld [vmem:[%s965] ss:$2 sm:$0xff]
        %v967 = vpack.c.bf16 %v966, %v964
        %s968 = scalar_lea.vmem %s5, 56
        %v969 = vld [vmem:[%s968] sm:$0xf]
        %v970 = vld [vmem:[%s968 + $0x4] sm:$0xf]
        %v973 = vunpack.c.l.b16 %v969
        %v974 = vunpack.c.l.b16 %v970
        %v975 = vpack.c.b16 %v974, %v973
        %v978 = vsel %vm620, %v967, 0
        %980 = vmatpush.bf16.msra.mxu0 0
        %981 = vmatpush.bf16.msra.mxu0 0
        %982 = vmatpush.bf16.msra.mxu0 0
        %983 = vmatpush.bf16.msra.mxu0 0
        %984 = vmatpush.bf16.msra.mxu0 0
        %985 = vmatpush.bf16.msra.mxu0 0
        %986 = vmatpush.bf16.msra.mxu0 0
        %987 = vmatpush.bf16.msra.mxu0 %v975
        %988 = vmatmul.bf16.gmra.mxu0 %v978
        %v989 = vpop.f32.mrf.mxu0
        %v990 = vadd.f32 0.0, %v989
        %v991 = vpop.f32.mrf.mxu0
        %v992 = vadd.f32 0.0, %v991
        %993 = vdwg.mxu0
        %v994 = vadd.f32 %v961, %v990
        %v995 = vadd.f32 %v962, %v992
        %s996 = scalar_lea.vmem [#allocation2], 8
        %v997 = vld [vmem:[%s996] ss:$2 sm:$0xff]
        %s998 = scalar_lea.vmem [#allocation2], 24
        %v999 = vld [vmem:[%s998] ss:$2 sm:$0xff]
        %v1000 = vpack.c.bf16 %v999, %v997
        %s1001 = scalar_lea.vmem %s5, 64
        %v1002 = vld [vmem:[%s1001] sm:$0xf]
        %v1003 = vld [vmem:[%s1001 + $0x4] sm:$0xf]
        %v1006 = vunpack.c.l.b16 %v1002
        %v1007 = vunpack.c.l.b16 %v1003
        %v1008 = vpack.c.b16 %v1007, %v1006
        %v1011 = vsel %vm620, %v1000, 0
        %1013 = vmatpush.bf16.msra.mxu0 0
        %1014 = vmatpush.bf16.msra.mxu0 0
        %1015 = vmatpush.bf16.msra.mxu0 0
        %1016 = vmatpush.bf16.msra.mxu0 0
        %1017 = vmatpush.bf16.msra.mxu0 0
        %1018 = vmatpush.bf16.msra.mxu0 0
        %1019 = vmatpush.bf16.msra.mxu0 0
        %1020 = vmatpush.bf16.msra.mxu0 %v1008
        %1021 = vmatmul.bf16.gmra.mxu0 %v1011
        %v1022 = vpop.f32.mrf.mxu0
        %v1023 = vadd.f32 0.0, %v1022
        %v1024 = vpop.f32.mrf.mxu0
        %v1025 = vadd.f32 0.0, %v1024
        %1026 = vdwg.mxu0
        %v1027 = vadd.f32 %v994, %v1023
        %v1028 = vadd.f32 %v995, %v1025
        %s1029 = scalar_lea.vmem [#allocation2], 9
        %v1030 = vld [vmem:[%s1029] ss:$2 sm:$0xff]
        %s1031 = scalar_lea.vmem [#allocation2], 25
        %v1032 = vld [vmem:[%s1031] ss:$2 sm:$0xff]
        %v1033 = vpack.c.bf16 %v1032, %v1030
        %s1034 = scalar_lea.vmem %s5, 72
        %v1035 = vld [vmem:[%s1034] sm:$0xf]
        %v1036 = vld [vmem:[%s1034 + $0x4] sm:$0xf]
        %v1039 = vunpack.c.l.b16 %v1035
        %v1040 = vunpack.c.l.b16 %v1036
        %v1041 = vpack.c.b16 %v1040, %v1039
        %v1044 = vsel %vm620, %v1033, 0
        %1046 = vmatpush.bf16.msra.mxu0 0
        %1047 = vmatpush.bf16.msra.mxu0 0
        %1048 = vmatpush.bf16.msra.mxu0 0
        %1049 = vmatpush.bf16.msra.mxu0 0
        %1050 = vmatpush.bf16.msra.mxu0 0
        %1051 = vmatpush.bf16.msra.mxu0 0
        %1052 = vmatpush.bf16.msra.mxu0 0
        %1053 = vmatpush.bf16.msra.mxu0 %v1041
        %1054 = vmatmul.bf16.gmra.mxu0 %v1044
        %v1055 = vpop.f32.mrf.mxu0
        %v1056 = vadd.f32 0.0, %v1055
        %v1057 = vpop.f32.mrf.mxu0
        %v1058 = vadd.f32 0.0, %v1057
        %1059 = vdwg.mxu0
        %v1060 = vadd.f32 %v1027, %v1056
        %v1061 = vadd.f32 %v1028, %v1058
        %s1062 = scalar_lea.vmem [#allocation2], 10
        %v1063 = vld [vmem:[%s1062] ss:$2 sm:$0xff]
        %s1064 = scalar_lea.vmem [#allocation2], 26
        %v1065 = vld [vmem:[%s1064] ss:$2 sm:$0xff]
        %v1066 = vpack.c.bf16 %v1065, %v1063
        %s1067 = scalar_lea.vmem %s5, 80
        %v1068 = vld [vmem:[%s1067] sm:$0xf]
        %v1069 = vld [vmem:[%s1067 + $0x4] sm:$0xf]
        %v1072 = vunpack.c.l.b16 %v1068
        %v1073 = vunpack.c.l.b16 %v1069
        %v1074 = vpack.c.b16 %v1073, %v1072
        %v1077 = vsel %vm620, %v1066, 0
        %1079 = vmatpush.bf16.msra.mxu0 0
        %1080 = vmatpush.bf16.msra.mxu0 0
        %1081 = vmatpush.bf16.msra.mxu0 0
        %1082 = vmatpush.bf16.msra.mxu0 0
        %1083 = vmatpush.bf16.msra.mxu0 0
        %1084 = vmatpush.bf16.msra.mxu0 0
        %1085 = vmatpush.bf16.msra.mxu0 0
        %1086 = vmatpush.bf16.msra.mxu0 %v1074
        %1087 = vmatmul.bf16.gmra.mxu0 %v1077
        %v1088 = vpop.f32.mrf.mxu0
        %v1089 = vadd.f32 0.0, %v1088
        %v1090 = vpop.f32.mrf.mxu0
        %v1091 = vadd.f32 0.0, %v1090
        %1092 = vdwg.mxu0
        %v1093 = vadd.f32 %v1060, %v1089
        %v1094 = vadd.f32 %v1061, %v1091
        %s1095 = scalar_lea.vmem [#allocation2], 11
        %v1096 = vld [vmem:[%s1095] ss:$2 sm:$0xff]
        %s1097 = scalar_lea.vmem [#allocation2], 27
        %v1098 = vld [vmem:[%s1097] ss:$2 sm:$0xff]
        %v1099 = vpack.c.bf16 %v1098, %v1096
        %s1100 = scalar_lea.vmem %s5, 88
        %v1101 = vld [vmem:[%s1100] sm:$0xf]
        %v1102 = vld [vmem:[%s1100 + $0x4] sm:$0xf]
        %v1105 = vunpack.c.l.b16 %v1101
        %v1106 = vunpack.c.l.b16 %v1102
        %v1107 = vpack.c.b16 %v1106, %v1105
        %v1110 = vsel %vm620, %v1099, 0
        %1112 = vmatpush.bf16.msra.mxu0 0
        %1113 = vmatpush.bf16.msra.mxu0 0
        %1114 = vmatpush.bf16.msra.mxu0 0
        %1115 = vmatpush.bf16.msra.mxu0 0
        %1116 = vmatpush.bf16.msra.mxu0 0
        %1117 = vmatpush.bf16.msra.mxu0 0
        %1118 = vmatpush.bf16.msra.mxu0 0
        %1119 = vmatpush.bf16.msra.mxu0 %v1107
        %1120 = vmatmul.bf16.gmra.mxu0 %v1110
        %v1121 = vpop.f32.mrf.mxu0
        %v1122 = vadd.f32 0.0, %v1121
        %v1123 = vpop.f32.mrf.mxu0
        %v1124 = vadd.f32 0.0, %v1123
        %1125 = vdwg.mxu0
        %v1126 = vadd.f32 %v1093, %v1122
        %v1127 = vadd.f32 %v1094, %v1124
        %s1128 = scalar_lea.vmem [#allocation2], 12
        %v1129 = vld [vmem:[%s1128] ss:$2 sm:$0xff]
        %s1130 = scalar_lea.vmem [#allocation2], 28
        %v1131 = vld [vmem:[%s1130] ss:$2 sm:$0xff]
        %v1132 = vpack.c.bf16 %v1131, %v1129
        %s1133 = scalar_lea.vmem %s5, 96
        %v1134 = vld [vmem:[%s1133] sm:$0xf]
        %v1135 = vld [vmem:[%s1133 + $0x4] sm:$0xf]
        %v1138 = vunpack.c.l.b16 %v1134
        %v1139 = vunpack.c.l.b16 %v1135
        %v1140 = vpack.c.b16 %v1139, %v1138
        %v1143 = vsel %vm620, %v1132, 0
        %1145 = vmatpush.bf16.msra.mxu0 0
        %1146 = vmatpush.bf16.msra.mxu0 0
        %1147 = vmatpush.bf16.msra.mxu0 0
        %1148 = vmatpush.bf16.msra.mxu0 0
        %1149 = vmatpush.bf16.msra.mxu0 0
        %1150 = vmatpush.bf16.msra.mxu0 0
        %1151 = vmatpush.bf16.msra.mxu0 0
        %1152 = vmatpush.bf16.msra.mxu0 %v1140
        %1153 = vmatmul.bf16.gmra.mxu0 %v1143
        %v1154 = vpop.f32.mrf.mxu0
        %v1155 = vadd.f32 0.0, %v1154
        %v1156 = vpop.f32.mrf.mxu0
        %v1157 = vadd.f32 0.0, %v1156
        %1158 = vdwg.mxu0
        %v1159 = vadd.f32 %v1126, %v1155
        %v1160 = vadd.f32 %v1127, %v1157
        %s1161 = scalar_lea.vmem [#allocation2], 13
        %v1162 = vld [vmem:[%s1161] ss:$2 sm:$0xff]
        %s1163 = scalar_lea.vmem [#allocation2], 29
        %v1164 = vld [vmem:[%s1163] ss:$2 sm:$0xff]
        %v1165 = vpack.c.bf16 %v1164, %v1162
        %s1166 = scalar_lea.vmem %s5, 104
        %v1167 = vld [vmem:[%s1166] sm:$0xf]
        %v1168 = vld [vmem:[%s1166 + $0x4] sm:$0xf]
        %v1171 = vunpack.c.l.b16 %v1167
        %v1172 = vunpack.c.l.b16 %v1168
        %v1173 = vpack.c.b16 %v1172, %v1171
        %v1176 = vsel %vm620, %v1165, 0
        %1178 = vmatpush.bf16.msra.mxu0 0
        %1179 = vmatpush.bf16.msra.mxu0 0
        %1180 = vmatpush.bf16.msra.mxu0 0
        %1181 = vmatpush.bf16.msra.mxu0 0
        %1182 = vmatpush.bf16.msra.mxu0 0
        %1183 = vmatpush.bf16.msra.mxu0 0
        %1184 = vmatpush.bf16.msra.mxu0 0
        %1185 = vmatpush.bf16.msra.mxu0 %v1173
        %1186 = vmatmul.bf16.gmra.mxu0 %v1176
        %v1187 = vpop.f32.mrf.mxu0
        %v1188 = vadd.f32 0.0, %v1187
        %v1189 = vpop.f32.mrf.mxu0
        %v1190 = vadd.f32 0.0, %v1189
        %1191 = vdwg.mxu0
        %v1192 = vadd.f32 %v1159, %v1188
        %v1193 = vadd.f32 %v1160, %v1190
        %s1194 = scalar_lea.vmem [#allocation2], 14
        %v1195 = vld [vmem:[%s1194] ss:$2 sm:$0xff]
        %s1196 = scalar_lea.vmem [#allocation2], 30
        %v1197 = vld [vmem:[%s1196] ss:$2 sm:$0xff]
        %v1198 = vpack.c.bf16 %v1197, %v1195
        %s1199 = scalar_lea.vmem %s5, 112
        %v1200 = vld [vmem:[%s1199] sm:$0xf]
        %v1201 = vld [vmem:[%s1199 + $0x4] sm:$0xf]
        %v1204 = vunpack.c.l.b16 %v1200
        %v1205 = vunpack.c.l.b16 %v1201
        %v1206 = vpack.c.b16 %v1205, %v1204
        %v1209 = vsel %vm620, %v1198, 0
        %1211 = vmatpush.bf16.msra.mxu0 0
        %1212 = vmatpush.bf16.msra.mxu0 0
        %1213 = vmatpush.bf16.msra.mxu0 0
        %1214 = vmatpush.bf16.msra.mxu0 0
        %1215 = vmatpush.bf16.msra.mxu0 0
        %1216 = vmatpush.bf16.msra.mxu0 0
        %1217 = vmatpush.bf16.msra.mxu0 0
        %1218 = vmatpush.bf16.msra.mxu0 %v1206
        %1219 = vmatmul.bf16.gmra.mxu0 %v1209
        %v1220 = vpop.f32.mrf.mxu0
        %v1221 = vadd.f32 0.0, %v1220
        %v1222 = vpop.f32.mrf.mxu0
        %v1223 = vadd.f32 0.0, %v1222
        %1224 = vdwg.mxu0
        %v1225 = vadd.f32 %v1192, %v1221
        %v1226 = vadd.f32 %v1193, %v1223
        %v1227 = vld [vmem:[%s6] sm:$0x1]
        %v1229 = vperm.slane %v1227, 0
        %v1231 = vadd.f32 %v1225, %v1229
        %v1232 = vadd.f32 %v1226, %v1229
        %v1233 = vmax.f32 %v1231, 0.0
        %v1234 = vmax.f32 %v1232, 0.0
        %1235 = vst.msk [vmem:[#allocation3 + $0x7] sm:$0xff] %vm626, %v1233
        %1236 = vst.msk [vmem:[#allocation3 + $0xf] sm:$0xff] %vm626, %v1234
        %v1237 = vld [vmem:[#allocation3] ss:$2 sm:$0xff]
        %v1238 = vpack.c.bf16 %v1237, %v1237
        %v1239 = vld [vmem:[%s7] sm:$0xf]
        %v1240 = vld [vmem:[%s7 + $0x4] sm:$0xf]
        %v1241 = vld [vmem:[%s7 + $0x8] sm:$0xf]
        %v1242 = vld [vmem:[%s7 + $0xc] sm:$0xf]
        %v1243 = vld [vmem:[%s7 + $0x10] sm:$0xf]
        %v1244 = vld [vmem:[%s7 + $0x14] sm:$0xf]
        %v1245 = vld [vmem:[%s7 + $0x18] sm:$0xf]
        %v1246 = vld [vmem:[%s7 + $0x1c] sm:$0xf]
        %s1247 = scalar_lea.vmem [#allocation3], 1
        %v1248 = vld [vmem:[%s1247] ss:$2 sm:$0xff]
        %v1249 = vpack.c.bf16 %v1248, %v1248
        %s1250 = scalar_lea.vmem %s7, 32
        %v1251 = vld [vmem:[%s1250] sm:$0xf]
        %v1252 = vld [vmem:[%s1250 + $0x4] sm:$0xf]
        %v1253 = vld [vmem:[%s1250 + $0x8] sm:$0xf]
        %v1254 = vld [vmem:[%s1250 + $0xc] sm:$0xf]
        %v1255 = vld [vmem:[%s1250 + $0x10] sm:$0xf]
        %v1256 = vld [vmem:[%s1250 + $0x14] sm:$0xf]
        %v1257 = vld [vmem:[%s1250 + $0x18] sm:$0xf]
        %v1258 = vld [vmem:[%s1250 + $0x1c] sm:$0xf]
        %v1267 = vunpack.c.l.b16 %v1251
        %v1268 = vunpack.c.l.b16 %v1252
        %v1269 = vunpack.c.l.b16 %v1253
        %v1270 = vunpack.c.l.b16 %v1254
        %v1271 = vunpack.c.l.b16 %v1255
        %v1272 = vunpack.c.l.b16 %v1256
        %v1273 = vunpack.c.l.b16 %v1257
        %v1274 = vunpack.c.l.b16 %v1258
        %v1275 = vpack.c.b16 %v1268, %v1267
        %v1276 = vpack.c.b16 %v1270, %v1269
        %v1277 = vpack.c.b16 %v1272, %v1271
        %v1278 = vpack.c.b16 %v1274, %v1273
        %v1284 = vsel %vm626, %v1249, 0
        %1286 = vmatpush.bf16.msra.mxu0 0
        %1287 = vmatpush.bf16.msra.mxu0 0
        %1288 = vmatpush.bf16.msra.mxu0 0
        %1289 = vmatpush.bf16.msra.mxu0 0
        %1290 = vmatpush.bf16.msra.mxu0 %v1278
        %1291 = vmatpush.bf16.msra.mxu0 %v1277
        %1292 = vmatpush.bf16.msra.mxu0 %v1276
        %1293 = vmatpush.bf16.msra.mxu0 %v1275
        %1294 = vmatmul.bf16.gmra.mxu0 %v1284
        %v1295 = vpop.f32.mrf.mxu0
        %v1296 = vadd.f32 0.0, %v1295
        %v1297 = vpop.f32.mrf.mxu0
        %1298 = vdwg.mxu0
        %v1307 = vunpack.c.l.b16 %v1239
        %v1308 = vunpack.c.l.b16 %v1240
        %v1309 = vunpack.c.l.b16 %v1241
        %v1310 = vunpack.c.l.b16 %v1242
        %v1311 = vunpack.c.l.b16 %v1243
        %v1312 = vunpack.c.l.b16 %v1244
        %v1313 = vunpack.c.l.b16 %v1245
        %v1314 = vunpack.c.l.b16 %v1246
        %v1315 = vpack.c.b16 %v1308, %v1307
        %v1316 = vpack.c.b16 %v1310, %v1309
        %v1317 = vpack.c.b16 %v1312, %v1311
        %v1318 = vpack.c.b16 %v1314, %v1313
        %v1324 = vsel %vm626, %v1238, 0
        %1326 = vmatpush.bf16.msra.mxu0 0
        %1327 = vmatpush.bf16.msra.mxu0 0
        %1328 = vmatpush.bf16.msra.mxu0 0
        %1329 = vmatpush.bf16.msra.mxu0 0
        %1330 = vmatpush.bf16.msra.mxu0 %v1318
        %1331 = vmatpush.bf16.msra.mxu0 %v1317
        %1332 = vmatpush.bf16.msra.mxu0 %v1316
        %1333 = vmatpush.bf16.msra.mxu0 %v1315
        %1334 = vmatmul.bf16.gmra.mxu0 %v1324
        %v1335 = vpop.f32.mrf.mxu0
        %v1336 = vadd.f32 %v1296, %v1335
        %v1337 = vpop.f32.mrf.mxu0
        %1338 = vdwg.mxu0
        %s1339 = scalar_lea.vmem [#allocation3], 2
        %v1340 = vld [vmem:[%s1339] ss:$2 sm:$0xff]
        %v1341 = vpack.c.bf16 %v1340, %v1340
        %s1342 = scalar_lea.vmem %s7, 64
        %v1343 = vld [vmem:[%s1342] sm:$0xf]
        %v1344 = vld [vmem:[%s1342 + $0x4] sm:$0xf]
        %v1345 = vld [vmem:[%s1342 + $0x8] sm:$0xf]
        %v1346 = vld [vmem:[%s1342 + $0xc] sm:$0xf]
        %v1347 = vld [vmem:[%s1342 + $0x10] sm:$0xf]
        %v1348 = vld [vmem:[%s1342 + $0x14] sm:$0xf]
        %v1349 = vld [vmem:[%s1342 + $0x18] sm:$0xf]
        %v1350 = vld [vmem:[%s1342 + $0x1c] sm:$0xf]
        %v1359 = vunpack.c.l.b16 %v1343
        %v1360 = vunpack.c.l.b16 %v1344
        %v1361 = vunpack.c.l.b16 %v1345
        %v1362 = vunpack.c.l.b16 %v1346
        %v1363 = vunpack.c.l.b16 %v1347
        %v1364 = vunpack.c.l.b16 %v1348
        %v1365 = vunpack.c.l.b16 %v1349
        %v1366 = vunpack.c.l.b16 %v1350
        %v1367 = vpack.c.b16 %v1360, %v1359
        %v1368 = vpack.c.b16 %v1362, %v1361
        %v1369 = vpack.c.b16 %v1364, %v1363
        %v1370 = vpack.c.b16 %v1366, %v1365
        %v1376 = vsel %vm626, %v1341, 0
        %1378 = vmatpush.bf16.msra.mxu0 0
        %1379 = vmatpush.bf16.msra.mxu0 0
        %1380 = vmatpush.bf16.msra.mxu0 0
        %1381 = vmatpush.bf16.msra.mxu0 0
        %1382 = vmatpush.bf16.msra.mxu0 %v1370
        %1383 = vmatpush.bf16.msra.mxu0 %v1369
        %1384 = vmatpush.bf16.msra.mxu0 %v1368
        %1385 = vmatpush.bf16.msra.mxu0 %v1367
        %1386 = vmatmul.bf16.gmra.mxu0 %v1376
        %v1387 = vpop.f32.mrf.mxu0
        %v1388 = vadd.f32 0.0, %v1387
        %v1389 = vpop.f32.mrf.mxu0
        %1390 = vdwg.mxu0
        %v1391 = vadd.f32 %v1336, %v1388
        %s1392 = scalar_lea.vmem [#allocation3], 3
        %v1393 = vld [vmem:[%s1392] ss:$2 sm:$0xff]
        %v1394 = vpack.c.bf16 %v1393, %v1393
        %s1395 = scalar_lea.vmem %s7, 96
        %v1396 = vld [vmem:[%s1395] sm:$0xf]
        %v1397 = vld [vmem:[%s1395 + $0x4] sm:$0xf]
        %v1398 = vld [vmem:[%s1395 + $0x8] sm:$0xf]
        %v1399 = vld [vmem:[%s1395 + $0xc] sm:$0xf]
        %v1400 = vld [vmem:[%s1395 + $0x10] sm:$0xf]
        %v1401 = vld [vmem:[%s1395 + $0x14] sm:$0xf]
        %v1402 = vld [vmem:[%s1395 + $0x18] sm:$0xf]
        %v1403 = vld [vmem:[%s1395 + $0x1c] sm:$0xf]
        %v1412 = vunpack.c.l.b16 %v1396
        %v1413 = vunpack.c.l.b16 %v1397
        %v1414 = vunpack.c.l.b16 %v1398
        %v1415 = vunpack.c.l.b16 %v1399
        %v1416 = vunpack.c.l.b16 %v1400
        %v1417 = vunpack.c.l.b16 %v1401
        %v1418 = vunpack.c.l.b16 %v1402
        %v1419 = vunpack.c.l.b16 %v1403
        %v1420 = vpack.c.b16 %v1413, %v1412
        %v1421 = vpack.c.b16 %v1415, %v1414
        %v1422 = vpack.c.b16 %v1417, %v1416
        %v1423 = vpack.c.b16 %v1419, %v1418
        %v1429 = vsel %vm626, %v1394, 0
        %1431 = vmatpush.bf16.msra.mxu0 0
        %1432 = vmatpush.bf16.msra.mxu0 0
        %1433 = vmatpush.bf16.msra.mxu0 0
        %1434 = vmatpush.bf16.msra.mxu0 0
        %1435 = vmatpush.bf16.msra.mxu0 %v1423
        %1436 = vmatpush.bf16.msra.mxu0 %v1422
        %1437 = vmatpush.bf16.msra.mxu0 %v1421
        %1438 = vmatpush.bf16.msra.mxu0 %v1420
        %1439 = vmatmul.bf16.gmra.mxu0 %v1429
        %v1440 = vpop.f32.mrf.mxu0
        %v1441 = vadd.f32 0.0, %v1440
        %v1442 = vpop.f32.mrf.mxu0
        %1443 = vdwg.mxu0
        %v1444 = vadd.f32 %v1391, %v1441
        %s1445 = scalar_lea.vmem [#allocation3], 4
        %v1446 = vld [vmem:[%s1445] ss:$2 sm:$0xff]
        %v1447 = vpack.c.bf16 %v1446, %v1446
        %s1448 = scalar_lea.vmem %s7, 128
        %v1449 = vld [vmem:[%s1448] sm:$0xf]
        %v1450 = vld [vmem:[%s1448 + $0x4] sm:$0xf]
        %v1451 = vld [vmem:[%s1448 + $0x8] sm:$0xf]
        %v1452 = vld [vmem:[%s1448 + $0xc] sm:$0xf]
        %v1453 = vld [vmem:[%s1448 + $0x10] sm:$0xf]
        %v1454 = vld [vmem:[%s1448 + $0x14] sm:$0xf]
        %v1455 = vld [vmem:[%s1448 + $0x18] sm:$0xf]
        %v1456 = vld [vmem:[%s1448 + $0x1c] sm:$0xf]
        %v1465 = vunpack.c.l.b16 %v1449
        %v1466 = vunpack.c.l.b16 %v1450
        %v1467 = vunpack.c.l.b16 %v1451
        %v1468 = vunpack.c.l.b16 %v1452
        %v1469 = vunpack.c.l.b16 %v1453
        %v1470 = vunpack.c.l.b16 %v1454
        %v1471 = vunpack.c.l.b16 %v1455
        %v1472 = vunpack.c.l.b16 %v1456
        %v1473 = vpack.c.b16 %v1466, %v1465
        %v1474 = vpack.c.b16 %v1468, %v1467
        %v1475 = vpack.c.b16 %v1470, %v1469
        %v1476 = vpack.c.b16 %v1472, %v1471
        %v1482 = vsel %vm626, %v1447, 0
        %1484 = vmatpush.bf16.msra.mxu0 0
        %1485 = vmatpush.bf16.msra.mxu0 0
        %1486 = vmatpush.bf16.msra.mxu0 0
        %1487 = vmatpush.bf16.msra.mxu0 0
        %1488 = vmatpush.bf16.msra.mxu0 %v1476
        %1489 = vmatpush.bf16.msra.mxu0 %v1475
        %1490 = vmatpush.bf16.msra.mxu0 %v1474
        %1491 = vmatpush.bf16.msra.mxu0 %v1473
        %1492 = vmatmul.bf16.gmra.mxu0 %v1482
        %v1493 = vpop.f32.mrf.mxu0
        %v1494 = vadd.f32 0.0, %v1493
        %v1495 = vpop.f32.mrf.mxu0
        %1496 = vdwg.mxu0
        %v1497 = vadd.f32 %v1444, %v1494
        %s1498 = scalar_lea.vmem [#allocation3], 5
        %v1499 = vld [vmem:[%s1498] ss:$2 sm:$0xff]
        %v1500 = vpack.c.bf16 %v1499, %v1499
        %s1501 = scalar_lea.vmem %s7, 160
        %v1502 = vld [vmem:[%s1501] sm:$0xf]
        %v1503 = vld [vmem:[%s1501 + $0x4] sm:$0xf]
        %v1504 = vld [vmem:[%s1501 + $0x8] sm:$0xf]
        %v1505 = vld [vmem:[%s1501 + $0xc] sm:$0xf]
        %v1506 = vld [vmem:[%s1501 + $0x10] sm:$0xf]
        %v1507 = vld [vmem:[%s1501 + $0x14] sm:$0xf]
        %v1508 = vld [vmem:[%s1501 + $0x18] sm:$0xf]
        %v1509 = vld [vmem:[%s1501 + $0x1c] sm:$0xf]
        %v1518 = vunpack.c.l.b16 %v1502
        %v1519 = vunpack.c.l.b16 %v1503
        %v1520 = vunpack.c.l.b16 %v1504
        %v1521 = vunpack.c.l.b16 %v1505
        %v1522 = vunpack.c.l.b16 %v1506
        %v1523 = vunpack.c.l.b16 %v1507
        %v1524 = vunpack.c.l.b16 %v1508
        %v1525 = vunpack.c.l.b16 %v1509
        %v1526 = vpack.c.b16 %v1519, %v1518
        %v1527 = vpack.c.b16 %v1521, %v1520
        %v1528 = vpack.c.b16 %v1523, %v1522
        %v1529 = vpack.c.b16 %v1525, %v1524
        %v1535 = vsel %vm626, %v1500, 0
        %1537 = vmatpush.bf16.msra.mxu0 0
        %1538 = vmatpush.bf16.msra.mxu0 0
        %1539 = vmatpush.bf16.msra.mxu0 0
        %1540 = vmatpush.bf16.msra.mxu0 0
        %1541 = vmatpush.bf16.msra.mxu0 %v1529
        %1542 = vmatpush.bf16.msra.mxu0 %v1528
        %1543 = vmatpush.bf16.msra.mxu0 %v1527
        %1544 = vmatpush.bf16.msra.mxu0 %v1526
        %1545 = vmatmul.bf16.gmra.mxu0 %v1535
        %v1546 = vpop.f32.mrf.mxu0
        %v1547 = vadd.f32 0.0, %v1546
        %v1548 = vpop.f32.mrf.mxu0
        %1549 = vdwg.mxu0
        %v1550 = vadd.f32 %v1497, %v1547
        %s1551 = scalar_lea.vmem [#allocation3], 6
        %v1552 = vld [vmem:[%s1551] ss:$2 sm:$0xff]
        %v1553 = vpack.c.bf16 %v1552, %v1552
        %s1554 = scalar_lea.vmem %s7, 192
        %v1555 = vld [vmem:[%s1554] sm:$0xf]
        %v1556 = vld [vmem:[%s1554 + $0x4] sm:$0xf]
        %v1557 = vld [vmem:[%s1554 + $0x8] sm:$0xf]
        %v1558 = vld [vmem:[%s1554 + $0xc] sm:$0xf]
        %v1559 = vld [vmem:[%s1554 + $0x10] sm:$0xf]
        %v1560 = vld [vmem:[%s1554 + $0x14] sm:$0xf]
        %v1561 = vld [vmem:[%s1554 + $0x18] sm:$0xf]
        %v1562 = vld [vmem:[%s1554 + $0x1c] sm:$0xf]
        %v1571 = vunpack.c.l.b16 %v1555
        %v1572 = vunpack.c.l.b16 %v1556
        %v1573 = vunpack.c.l.b16 %v1557
        %v1574 = vunpack.c.l.b16 %v1558
        %v1575 = vunpack.c.l.b16 %v1559
        %v1576 = vunpack.c.l.b16 %v1560
        %v1577 = vunpack.c.l.b16 %v1561
        %v1578 = vunpack.c.l.b16 %v1562
        %v1579 = vpack.c.b16 %v1572, %v1571
        %v1580 = vpack.c.b16 %v1574, %v1573
        %v1581 = vpack.c.b16 %v1576, %v1575
        %v1582 = vpack.c.b16 %v1578, %v1577
        %v1588 = vsel %vm626, %v1553, 0
        %1590 = vmatpush.bf16.msra.mxu0 0
        %1591 = vmatpush.bf16.msra.mxu0 0
        %1592 = vmatpush.bf16.msra.mxu0 0
        %1593 = vmatpush.bf16.msra.mxu0 0
        %1594 = vmatpush.bf16.msra.mxu0 %v1582
        %1595 = vmatpush.bf16.msra.mxu0 %v1581
        %1596 = vmatpush.bf16.msra.mxu0 %v1580
        %1597 = vmatpush.bf16.msra.mxu0 %v1579
        %1598 = vmatmul.bf16.gmra.mxu0 %v1588
        %v1599 = vpop.f32.mrf.mxu0
        %v1600 = vadd.f32 0.0, %v1599
        %v1601 = vpop.f32.mrf.mxu0
        %1602 = vdwg.mxu0
        %v1603 = vadd.f32 %v1550, %v1600
        %s1604 = scalar_lea.vmem [#allocation3], 7
        %v1605 = vld [vmem:[%s1604] ss:$2 sm:$0xff]
        %v1606 = vpack.c.bf16 %v1605, %v1605
        %s1607 = scalar_lea.vmem %s7, 224
        %v1608 = vld [vmem:[%s1607] sm:$0xf]
        %v1609 = vld [vmem:[%s1607 + $0x4] sm:$0xf]
        %v1610 = vld [vmem:[%s1607 + $0x8] sm:$0xf]
        %v1611 = vld [vmem:[%s1607 + $0xc] sm:$0xf]
        %v1612 = vld [vmem:[%s1607 + $0x10] sm:$0xf]
        %v1613 = vld [vmem:[%s1607 + $0x14] sm:$0xf]
        %v1614 = vld [vmem:[%s1607 + $0x18] sm:$0xf]
        %v1615 = vld [vmem:[%s1607 + $0x1c] sm:$0xf]
        %v1624 = vunpack.c.l.b16 %v1608
        %v1625 = vunpack.c.l.b16 %v1609
        %v1626 = vunpack.c.l.b16 %v1610
        %v1627 = vunpack.c.l.b16 %v1611
        %v1628 = vunpack.c.l.b16 %v1612
        %v1629 = vunpack.c.l.b16 %v1613
        %v1630 = vunpack.c.l.b16 %v1614
        %v1631 = vunpack.c.l.b16 %v1615
        %v1632 = vpack.c.b16 %v1625, %v1624
        %v1633 = vpack.c.b16 %v1627, %v1626
        %v1634 = vpack.c.b16 %v1629, %v1628
        %v1635 = vpack.c.b16 %v1631, %v1630
        %v1641 = vsel %vm626, %v1606, 0
        %1643 = vmatpush.bf16.msra.mxu0 0
        %1644 = vmatpush.bf16.msra.mxu0 0
        %1645 = vmatpush.bf16.msra.mxu0 0
        %1646 = vmatpush.bf16.msra.mxu0 0
        %1647 = vmatpush.bf16.msra.mxu0 %v1635
        %1648 = vmatpush.bf16.msra.mxu0 %v1634
        %1649 = vmatpush.bf16.msra.mxu0 %v1633
        %1650 = vmatpush.bf16.msra.mxu0 %v1632
        %1651 = vmatmul.bf16.gmra.mxu0 %v1641
        %v1652 = vpop.f32.mrf.mxu0
        %v1653 = vadd.f32 0.0, %v1652
        %v1654 = vpop.f32.mrf.mxu0
        %1655 = vdwg.mxu0
        %v1656 = vadd.f32 %v1603, %v1653
        %s1657 = scalar_lea.vmem [#allocation3], 8
        %v1658 = vld [vmem:[%s1657] ss:$2 sm:$0xff]
        %v1659 = vpack.c.bf16 %v1658, %v1658
        %s1660 = scalar_lea.vmem %s7, 256
        %v1661 = vld [vmem:[%s1660] sm:$0xf]
        %v1662 = vld [vmem:[%s1660 + $0x4] sm:$0xf]
        %v1663 = vld [vmem:[%s1660 + $0x8] sm:$0xf]
        %v1664 = vld [vmem:[%s1660 + $0xc] sm:$0xf]
        %v1665 = vld [vmem:[%s1660 + $0x10] sm:$0xf]
        %v1666 = vld [vmem:[%s1660 + $0x14] sm:$0xf]
        %v1667 = vld [vmem:[%s1660 + $0x18] sm:$0xf]
        %v1668 = vld [vmem:[%s1660 + $0x1c] sm:$0xf]
        %v1677 = vunpack.c.l.b16 %v1661
        %v1678 = vunpack.c.l.b16 %v1662
        %v1679 = vunpack.c.l.b16 %v1663
        %v1680 = vunpack.c.l.b16 %v1664
        %v1681 = vunpack.c.l.b16 %v1665
        %v1682 = vunpack.c.l.b16 %v1666
        %v1683 = vunpack.c.l.b16 %v1667
        %v1684 = vunpack.c.l.b16 %v1668
        %v1685 = vpack.c.b16 %v1678, %v1677
        %v1686 = vpack.c.b16 %v1680, %v1679
        %v1687 = vpack.c.b16 %v1682, %v1681
        %v1688 = vpack.c.b16 %v1684, %v1683
        %v1694 = vsel %vm626, %v1659, 0
        %1696 = vmatpush.bf16.msra.mxu0 0
        %1697 = vmatpush.bf16.msra.mxu0 0
        %1698 = vmatpush.bf16.msra.mxu0 0
        %1699 = vmatpush.bf16.msra.mxu0 0
        %1700 = vmatpush.bf16.msra.mxu0 %v1688
        %1701 = vmatpush.bf16.msra.mxu0 %v1687
        %1702 = vmatpush.bf16.msra.mxu0 %v1686
        %1703 = vmatpush.bf16.msra.mxu0 %v1685
        %1704 = vmatmul.bf16.gmra.mxu0 %v1694
        %v1705 = vpop.f32.mrf.mxu0
        %v1706 = vadd.f32 0.0, %v1705
        %v1707 = vpop.f32.mrf.mxu0
        %1708 = vdwg.mxu0
        %v1709 = vadd.f32 %v1656, %v1706
        %s1710 = scalar_lea.vmem [#allocation3], 9
        %v1711 = vld [vmem:[%s1710] ss:$2 sm:$0xff]
        %v1712 = vpack.c.bf16 %v1711, %v1711
        %s1713 = scalar_lea.vmem %s7, 288
        %v1714 = vld [vmem:[%s1713] sm:$0xf]
        %v1715 = vld [vmem:[%s1713 + $0x4] sm:$0xf]
        %v1716 = vld [vmem:[%s1713 + $0x8] sm:$0xf]
        %v1717 = vld [vmem:[%s1713 + $0xc] sm:$0xf]
        %v1718 = vld [vmem:[%s1713 + $0x10] sm:$0xf]
        %v1719 = vld [vmem:[%s1713 + $0x14] sm:$0xf]
        %v1720 = vld [vmem:[%s1713 + $0x18] sm:$0xf]
        %v1721 = vld [vmem:[%s1713 + $0x1c] sm:$0xf]
        %v1730 = vunpack.c.l.b16 %v1714
        %v1731 = vunpack.c.l.b16 %v1715
        %v1732 = vunpack.c.l.b16 %v1716
        %v1733 = vunpack.c.l.b16 %v1717
        %v1734 = vunpack.c.l.b16 %v1718
        %v1735 = vunpack.c.l.b16 %v1719
        %v1736 = vunpack.c.l.b16 %v1720
        %v1737 = vunpack.c.l.b16 %v1721
        %v1738 = vpack.c.b16 %v1731, %v1730
        %v1739 = vpack.c.b16 %v1733, %v1732
        %v1740 = vpack.c.b16 %v1735, %v1734
        %v1741 = vpack.c.b16 %v1737, %v1736
        %v1747 = vsel %vm626, %v1712, 0
        %1749 = vmatpush.bf16.msra.mxu0 0
        %1750 = vmatpush.bf16.msra.mxu0 0
        %1751 = vmatpush.bf16.msra.mxu0 0
        %1752 = vmatpush.bf16.msra.mxu0 0
        %1753 = vmatpush.bf16.msra.mxu0 %v1741
        %1754 = vmatpush.bf16.msra.mxu0 %v1740
        %1755 = vmatpush.bf16.msra.mxu0 %v1739
        %1756 = vmatpush.bf16.msra.mxu0 %v1738
        %1757 = vmatmul.bf16.gmra.mxu0 %v1747
        %v1758 = vpop.f32.mrf.mxu0
        %v1759 = vadd.f32 0.0, %v1758
        %v1760 = vpop.f32.mrf.mxu0
        %1761 = vdwg.mxu0
        %v1762 = vadd.f32 %v1709, %v1759
        %s1763 = scalar_lea.vmem [#allocation3], 10
        %v1764 = vld [vmem:[%s1763] ss:$2 sm:$0xff]
        %v1765 = vpack.c.bf16 %v1764, %v1764
        %s1766 = scalar_lea.vmem %s7, 320
        %v1767 = vld [vmem:[%s1766] sm:$0xf]
        %v1768 = vld [vmem:[%s1766 + $0x4] sm:$0xf]
        %v1769 = vld [vmem:[%s1766 + $0x8] sm:$0xf]
        %v1770 = vld [vmem:[%s1766 + $0xc] sm:$0xf]
        %v1771 = vld [vmem:[%s1766 + $0x10] sm:$0xf]
        %v1772 = vld [vmem:[%s1766 + $0x14] sm:$0xf]
        %v1773 = vld [vmem:[%s1766 + $0x18] sm:$0xf]
        %v1774 = vld [vmem:[%s1766 + $0x1c] sm:$0xf]
        %v1783 = vunpack.c.l.b16 %v1767
        %v1784 = vunpack.c.l.b16 %v1768
        %v1785 = vunpack.c.l.b16 %v1769
        %v1786 = vunpack.c.l.b16 %v1770
        %v1787 = vunpack.c.l.b16 %v1771
        %v1788 = vunpack.c.l.b16 %v1772
        %v1789 = vunpack.c.l.b16 %v1773
        %v1790 = vunpack.c.l.b16 %v1774
        %v1791 = vpack.c.b16 %v1784, %v1783
        %v1792 = vpack.c.b16 %v1786, %v1785
        %v1793 = vpack.c.b16 %v1788, %v1787
        %v1794 = vpack.c.b16 %v1790, %v1789
        %v1800 = vsel %vm626, %v1765, 0
        %1802 = vmatpush.bf16.msra.mxu0 0
        %1803 = vmatpush.bf16.msra.mxu0 0
        %1804 = vmatpush.bf16.msra.mxu0 0
        %1805 = vmatpush.bf16.msra.mxu0 0
        %1806 = vmatpush.bf16.msra.mxu0 %v1794
        %1807 = vmatpush.bf16.msra.mxu0 %v1793
        %1808 = vmatpush.bf16.msra.mxu0 %v1792
        %1809 = vmatpush.bf16.msra.mxu0 %v1791
        %1810 = vmatmul.bf16.gmra.mxu0 %v1800
        %v1811 = vpop.f32.mrf.mxu0
        %v1812 = vadd.f32 0.0, %v1811
        %v1813 = vpop.f32.mrf.mxu0
        %1814 = vdwg.mxu0
        %v1815 = vadd.f32 %v1762, %v1812
        %s1816 = scalar_lea.vmem [#allocation3], 11
        %v1817 = vld [vmem:[%s1816] ss:$2 sm:$0xff]
        %v1818 = vpack.c.bf16 %v1817, %v1817
        %s1819 = scalar_lea.vmem %s7, 352
        %v1820 = vld [vmem:[%s1819] sm:$0xf]
        %v1821 = vld [vmem:[%s1819 + $0x4] sm:$0xf]
        %v1822 = vld [vmem:[%s1819 + $0x8] sm:$0xf]
        %v1823 = vld [vmem:[%s1819 + $0xc] sm:$0xf]
        %v1824 = vld [vmem:[%s1819 + $0x10] sm:$0xf]
        %v1825 = vld [vmem:[%s1819 + $0x14] sm:$0xf]
        %v1826 = vld [vmem:[%s1819 + $0x18] sm:$0xf]
        %v1827 = vld [vmem:[%s1819 + $0x1c] sm:$0xf]
        %v1836 = vunpack.c.l.b16 %v1820
        %v1837 = vunpack.c.l.b16 %v1821
        %v1838 = vunpack.c.l.b16 %v1822
        %v1839 = vunpack.c.l.b16 %v1823
        %v1840 = vunpack.c.l.b16 %v1824
        %v1841 = vunpack.c.l.b16 %v1825
        %v1842 = vunpack.c.l.b16 %v1826
        %v1843 = vunpack.c.l.b16 %v1827
        %v1844 = vpack.c.b16 %v1837, %v1836
        %v1845 = vpack.c.b16 %v1839, %v1838
        %v1846 = vpack.c.b16 %v1841, %v1840
        %v1847 = vpack.c.b16 %v1843, %v1842
        %v1853 = vsel %vm626, %v1818, 0
        %1855 = vmatpush.bf16.msra.mxu0 0
        %1856 = vmatpush.bf16.msra.mxu0 0
        %1857 = vmatpush.bf16.msra.mxu0 0
        %1858 = vmatpush.bf16.msra.mxu0 0
        %1859 = vmatpush.bf16.msra.mxu0 %v1847
        %1860 = vmatpush.bf16.msra.mxu0 %v1846
        %1861 = vmatpush.bf16.msra.mxu0 %v1845
        %1862 = vmatpush.bf16.msra.mxu0 %v1844
        %1863 = vmatmul.bf16.gmra.mxu0 %v1853
        %v1864 = vpop.f32.mrf.mxu0
        %v1865 = vadd.f32 0.0, %v1864
        %v1866 = vpop.f32.mrf.mxu0
        %1867 = vdwg.mxu0
        %v1868 = vadd.f32 %v1815, %v1865
        %s1869 = scalar_lea.vmem [#allocation3], 12
        %v1870 = vld [vmem:[%s1869] ss:$2 sm:$0xff]
        %v1871 = vpack.c.bf16 %v1870, %v1870
        %s1872 = scalar_lea.vmem %s7, 384
        %v1873 = vld [vmem:[%s1872] sm:$0xf]
        %v1874 = vld [vmem:[%s1872 + $0x4] sm:$0xf]
        %v1875 = vld [vmem:[%s1872 + $0x8] sm:$0xf]
        %v1876 = vld [vmem:[%s1872 + $0xc] sm:$0xf]
        %v1877 = vld [vmem:[%s1872 + $0x10] sm:$0xf]
        %v1878 = vld [vmem:[%s1872 + $0x14] sm:$0xf]
        %v1879 = vld [vmem:[%s1872 + $0x18] sm:$0xf]
        %v1880 = vld [vmem:[%s1872 + $0x1c] sm:$0xf]
        %v1889 = vunpack.c.l.b16 %v1873
        %v1890 = vunpack.c.l.b16 %v1874
        %v1891 = vunpack.c.l.b16 %v1875
        %v1892 = vunpack.c.l.b16 %v1876
        %v1893 = vunpack.c.l.b16 %v1877
        %v1894 = vunpack.c.l.b16 %v1878
        %v1895 = vunpack.c.l.b16 %v1879
        %v1896 = vunpack.c.l.b16 %v1880
        %v1897 = vpack.c.b16 %v1890, %v1889
        %v1898 = vpack.c.b16 %v1892, %v1891
        %v1899 = vpack.c.b16 %v1894, %v1893
        %v1900 = vpack.c.b16 %v1896, %v1895
        %v1906 = vsel %vm626, %v1871, 0
        %1908 = vmatpush.bf16.msra.mxu0 0
        %1909 = vmatpush.bf16.msra.mxu0 0
        %1910 = vmatpush.bf16.msra.mxu0 0
        %1911 = vmatpush.bf16.msra.mxu0 0
        %1912 = vmatpush.bf16.msra.mxu0 %v1900
        %1913 = vmatpush.bf16.msra.mxu0 %v1899
        %1914 = vmatpush.bf16.msra.mxu0 %v1898
        %1915 = vmatpush.bf16.msra.mxu0 %v1897
        %1916 = vmatmul.bf16.gmra.mxu0 %v1906
        %v1917 = vpop.f32.mrf.mxu0
        %v1918 = vadd.f32 0.0, %v1917
        %v1919 = vpop.f32.mrf.mxu0
        %1920 = vdwg.mxu0
        %v1921 = vadd.f32 %v1868, %v1918
        %s1922 = scalar_lea.vmem [#allocation3], 13
        %v1923 = vld [vmem:[%s1922] ss:$2 sm:$0xff]
        %v1924 = vpack.c.bf16 %v1923, %v1923
        %s1925 = scalar_lea.vmem %s7, 416
        %v1926 = vld [vmem:[%s1925] sm:$0xf]
        %v1927 = vld [vmem:[%s1925 + $0x4] sm:$0xf]
        %v1928 = vld [vmem:[%s1925 + $0x8] sm:$0xf]
        %v1929 = vld [vmem:[%s1925 + $0xc] sm:$0xf]
        %v1930 = vld [vmem:[%s1925 + $0x10] sm:$0xf]
        %v1931 = vld [vmem:[%s1925 + $0x14] sm:$0xf]
        %v1932 = vld [vmem:[%s1925 + $0x18] sm:$0xf]
        %v1933 = vld [vmem:[%s1925 + $0x1c] sm:$0xf]
        %v1942 = vunpack.c.l.b16 %v1926
        %v1943 = vunpack.c.l.b16 %v1927
        %v1944 = vunpack.c.l.b16 %v1928
        %v1945 = vunpack.c.l.b16 %v1929
        %v1946 = vunpack.c.l.b16 %v1930
        %v1947 = vunpack.c.l.b16 %v1931
        %v1948 = vunpack.c.l.b16 %v1932
        %v1949 = vunpack.c.l.b16 %v1933
        %v1950 = vpack.c.b16 %v1943, %v1942
        %v1951 = vpack.c.b16 %v1945, %v1944
        %v1952 = vpack.c.b16 %v1947, %v1946
        %v1953 = vpack.c.b16 %v1949, %v1948
        %v1959 = vsel %vm626, %v1924, 0
        %1961 = vmatpush.bf16.msra.mxu0 0
        %1962 = vmatpush.bf16.msra.mxu0 0
        %1963 = vmatpush.bf16.msra.mxu0 0
        %1964 = vmatpush.bf16.msra.mxu0 0
        %1965 = vmatpush.bf16.msra.mxu0 %v1953
        %1966 = vmatpush.bf16.msra.mxu0 %v1952
        %1967 = vmatpush.bf16.msra.mxu0 %v1951
        %1968 = vmatpush.bf16.msra.mxu0 %v1950
        %1969 = vmatmul.bf16.gmra.mxu0 %v1959
        %v1970 = vpop.f32.mrf.mxu0
        %v1971 = vadd.f32 0.0, %v1970
        %v1972 = vpop.f32.mrf.mxu0
        %1973 = vdwg.mxu0
        %v1974 = vadd.f32 %v1921, %v1971
        %s1975 = scalar_lea.vmem [#allocation3], 14
        %v1976 = vld [vmem:[%s1975] ss:$2 sm:$0xff]
        %v1977 = vpack.c.bf16 %v1976, %v1976
        %s1978 = scalar_lea.vmem %s7, 448
        %v1979 = vld [vmem:[%s1978] sm:$0xf]
        %v1980 = vld [vmem:[%s1978 + $0x4] sm:$0xf]
        %v1981 = vld [vmem:[%s1978 + $0x8] sm:$0xf]
        %v1982 = vld [vmem:[%s1978 + $0xc] sm:$0xf]
        %v1983 = vld [vmem:[%s1978 + $0x10] sm:$0xf]
        %v1984 = vld [vmem:[%s1978 + $0x14] sm:$0xf]
        %v1985 = vld [vmem:[%s1978 + $0x18] sm:$0xf]
        %v1986 = vld [vmem:[%s1978 + $0x1c] sm:$0xf]
        %v1995 = vunpack.c.l.b16 %v1979
        %v1996 = vunpack.c.l.b16 %v1980
        %v1997 = vunpack.c.l.b16 %v1981
        %v1998 = vunpack.c.l.b16 %v1982
        %v1999 = vunpack.c.l.b16 %v1983
        %v2000 = vunpack.c.l.b16 %v1984
        %v2001 = vunpack.c.l.b16 %v1985
        %v2002 = vunpack.c.l.b16 %v1986
        %v2003 = vpack.c.b16 %v1996, %v1995
        %v2004 = vpack.c.b16 %v1998, %v1997
        %v2005 = vpack.c.b16 %v2000, %v1999
        %v2006 = vpack.c.b16 %v2002, %v2001
        %v2012 = vsel %vm626, %v1977, 0
        %2014 = vmatpush.bf16.msra.mxu0 0
        %2015 = vmatpush.bf16.msra.mxu0 0
        %2016 = vmatpush.bf16.msra.mxu0 0
        %2017 = vmatpush.bf16.msra.mxu0 0
        %2018 = vmatpush.bf16.msra.mxu0 %v2006
        %2019 = vmatpush.bf16.msra.mxu0 %v2005
        %2020 = vmatpush.bf16.msra.mxu0 %v2004
        %2021 = vmatpush.bf16.msra.mxu0 %v2003
        %2022 = vmatmul.bf16.gmra.mxu0 %v2012
        %v2023 = vpop.f32.mrf.mxu0
        %v2024 = vadd.f32 0.0, %v2023
        %v2025 = vpop.f32.mrf.mxu0
        %2026 = vdwg.mxu0
        %v2027 = vadd.f32 %v1974, %v2024
        %v2028 = vld [vmem:[%s8] sm:$0x1]
        %v2030 = vperm.slane %v2028, 0
        %v2032 = vadd.f32 %v2027, %v2030
        %v2033 = vmax.f32 %v2032, 0.0
        %2034 = vst [vmem:[#allocation4 + $0x7] sm:$0xff] %v2033
        %v2035 = vld [vmem:[#allocation4] ss:$2 sm:$0xf]
        %v2036 = vpack.c.bf16 %v2035, %v2035
        %v2037 = vld [vmem:[#allocation7] sm:$0xff]
        %v2038 = vld [vmem:[#allocation7 + $0x8] sm:$0xff]
        %v2039 = vld [vmem:[#allocation7 + $0x10] sm:$0xff]
        %v2040 = vld [vmem:[#allocation7 + $0x18] sm:$0xff]
        %v2041 = vld [vmem:[#allocation7 + $0x20] sm:$0xff]
        %v2042 = vld [vmem:[#allocation7 + $0x28] sm:$0xff]
        %v2043 = vld [vmem:[#allocation7 + $0x30] sm:$0xff]
        %v2044 = vld [vmem:[#allocation7 + $0x38] sm:$0xff]
        %v2045 = vld [vmem:[#allocation7 + $0x40] sm:$0xff]
        %v2046 = vld [vmem:[#allocation7 + $0x48] sm:$0xff]
        %v2047 = vld [vmem:[#allocation7 + $0x50] sm:$0xff]
        %v2048 = vld [vmem:[#allocation7 + $0x58] sm:$0xff]
        %v2049 = vld [vmem:[#allocation7 + $0x60] sm:$0xff]
        %v2050 = vld [vmem:[#allocation7 + $0x68] sm:$0xff]
        %v2051 = vld [vmem:[#allocation7 + $0x70] sm:$0xff]
        %v2052 = vld [vmem:[#allocation7 + $0x78] sm:$0xff]
        %s2053 = scalar_lea.vmem [#allocation4], 1
        %v2054 = vld [vmem:[%s2053] ss:$2 sm:$0xf]
        %v2055 = vpack.c.bf16 %v2054, %v2054
        %s2056 = scalar_lea.vmem [#allocation7], 128
        %v2057 = vld [vmem:[%s2056] sm:$0xff]
        %v2058 = vld [vmem:[%s2056 + $0x8] sm:$0xff]
        %v2059 = vld [vmem:[%s2056 + $0x10] sm:$0xff]
        %v2060 = vld [vmem:[%s2056 + $0x18] sm:$0xff]
        %v2061 = vld [vmem:[%s2056 + $0x20] sm:$0xff]
        %v2062 = vld [vmem:[%s2056 + $0x28] sm:$0xff]
        %v2063 = vld [vmem:[%s2056 + $0x30] sm:$0xff]
        %v2064 = vld [vmem:[%s2056 + $0x38] sm:$0xff]
        %v2065 = vld [vmem:[%s2056 + $0x40] sm:$0xff]
        %v2066 = vld [vmem:[%s2056 + $0x48] sm:$0xff]
        %v2067 = vld [vmem:[%s2056 + $0x50] sm:$0xff]
        %v2068 = vld [vmem:[%s2056 + $0x58] sm:$0xff]
        %v2069 = vld [vmem:[%s2056 + $0x60] sm:$0xff]
        %v2070 = vld [vmem:[%s2056 + $0x68] sm:$0xff]
        %v2071 = vld [vmem:[%s2056 + $0x70] sm:$0xff]
        %v2072 = vld [vmem:[%s2056 + $0x78] sm:$0xff]
        %v2089 = vunpack.c.l.b16 %v2057
        %v2090 = vunpack.c.h.b16 %v2057
        %v2091 = vunpack.c.l.b16 %v2058
        %v2092 = vunpack.c.h.b16 %v2058
        %v2093 = vunpack.c.l.b16 %v2059
        %v2094 = vunpack.c.h.b16 %v2059
        %v2095 = vunpack.c.l.b16 %v2060
        %v2096 = vunpack.c.h.b16 %v2060
        %v2097 = vunpack.c.l.b16 %v2061
        %v2098 = vunpack.c.h.b16 %v2061
        %v2099 = vunpack.c.l.b16 %v2062
        %v2100 = vunpack.c.h.b16 %v2062
        %v2101 = vunpack.c.l.b16 %v2063
        %v2102 = vunpack.c.h.b16 %v2063
        %v2103 = vunpack.c.l.b16 %v2064
        %v2104 = vunpack.c.h.b16 %v2064
        %v2105 = vunpack.c.l.b16 %v2065
        %v2106 = vunpack.c.h.b16 %v2065
        %v2107 = vunpack.c.l.b16 %v2066
        %v2108 = vunpack.c.h.b16 %v2066
        %v2109 = vunpack.c.l.b16 %v2067
        %v2110 = vunpack.c.h.b16 %v2067
        %v2111 = vunpack.c.l.b16 %v2068
        %v2112 = vunpack.c.h.b16 %v2068
        %v2113 = vunpack.c.l.b16 %v2069
        %v2114 = vunpack.c.h.b16 %v2069
        %v2115 = vunpack.c.l.b16 %v2070
        %v2116 = vunpack.c.h.b16 %v2070
        %v2117 = vunpack.c.l.b16 %v2071
        %v2118 = vunpack.c.h.b16 %v2071
        %v2119 = vunpack.c.l.b16 %v2072
        %v2120 = vunpack.c.h.b16 %v2072
        %v2121 = vpack.c.b16 %v2091, %v2089
        %v2122 = vpack.c.b16 %v2092, %v2090
        %v2123 = vpack.c.b16 %v2095, %v2093
        %v2124 = vpack.c.b16 %v2096, %v2094
        %v2125 = vpack.c.b16 %v2099, %v2097
        %v2126 = vpack.c.b16 %v2100, %v2098
        %v2127 = vpack.c.b16 %v2103, %v2101
        %v2128 = vpack.c.b16 %v2104, %v2102
        %v2129 = vpack.c.b16 %v2107, %v2105
        %v2130 = vpack.c.b16 %v2108, %v2106
        %v2131 = vpack.c.b16 %v2111, %v2109
        %v2132 = vpack.c.b16 %v2112, %v2110
        %v2133 = vpack.c.b16 %v2115, %v2113
        %v2134 = vpack.c.b16 %v2116, %v2114
        %v2135 = vpack.c.b16 %v2119, %v2117
        %v2136 = vpack.c.b16 %v2120, %v2118
        %2153 = vmatpush.bf16.msra.mxu0 %v2135
        %2154 = vmatpush.bf16.msra.mxu0 %v2133
        %2155 = vmatpush.bf16.msra.mxu0 %v2131
        %2156 = vmatpush.bf16.msra.mxu0 %v2129
        %2157 = vmatpush.bf16.msra.mxu0 %v2127
        %2158 = vmatpush.bf16.msra.mxu0 %v2125
        %2159 = vmatpush.bf16.msra.mxu0 %v2123
        %2160 = vmatpush.bf16.msra.mxu0 %v2121
        %2161 = vmatmul.bf16.gmra.mxu0 %v2055
        %v2162 = vpop.f32.mrf.mxu0
        %v2163 = vadd.f32 0.0, %v2162
        %v2164 = vpop.f32.mrf.mxu0
        %2165 = vdwg.mxu0
        %2166 = vmatpush.bf16.msra.mxu0 %v2136
        %2167 = vmatpush.bf16.msra.mxu0 %v2134
        %2168 = vmatpush.bf16.msra.mxu0 %v2132
        %2169 = vmatpush.bf16.msra.mxu0 %v2130
        %2170 = vmatpush.bf16.msra.mxu0 %v2128
        %2171 = vmatpush.bf16.msra.mxu0 %v2126
        %2172 = vmatpush.bf16.msra.mxu0 %v2124
        %2173 = vmatpush.bf16.msra.mxu0 %v2122
        %2174 = vmatmul.bf16.gmra.mxu0 %v2055
        %v2175 = vpop.f32.mrf.mxu0
        %v2176 = vadd.f32 0.0, %v2175
        %v2177 = vpop.f32.mrf.mxu0
        %2178 = vdwg.mxu0
        %v2195 = vunpack.c.l.b16 %v2037
        %v2196 = vunpack.c.h.b16 %v2037
        %v2197 = vunpack.c.l.b16 %v2038
        %v2198 = vunpack.c.h.b16 %v2038
        %v2199 = vunpack.c.l.b16 %v2039
        %v2200 = vunpack.c.h.b16 %v2039
        %v2201 = vunpack.c.l.b16 %v2040
        %v2202 = vunpack.c.h.b16 %v2040
        %v2203 = vunpack.c.l.b16 %v2041
        %v2204 = vunpack.c.h.b16 %v2041
        %v2205 = vunpack.c.l.b16 %v2042
        %v2206 = vunpack.c.h.b16 %v2042
        %v2207 = vunpack.c.l.b16 %v2043
        %v2208 = vunpack.c.h.b16 %v2043
        %v2209 = vunpack.c.l.b16 %v2044
        %v2210 = vunpack.c.h.b16 %v2044
        %v2211 = vunpack.c.l.b16 %v2045
        %v2212 = vunpack.c.h.b16 %v2045
        %v2213 = vunpack.c.l.b16 %v2046
        %v2214 = vunpack.c.h.b16 %v2046
        %v2215 = vunpack.c.l.b16 %v2047
        %v2216 = vunpack.c.h.b16 %v2047
        %v2217 = vunpack.c.l.b16 %v2048
        %v2218 = vunpack.c.h.b16 %v2048
        %v2219 = vunpack.c.l.b16 %v2049
        %v2220 = vunpack.c.h.b16 %v2049
        %v2221 = vunpack.c.l.b16 %v2050
        %v2222 = vunpack.c.h.b16 %v2050
        %v2223 = vunpack.c.l.b16 %v2051
        %v2224 = vunpack.c.h.b16 %v2051
        %v2225 = vunpack.c.l.b16 %v2052
        %v2226 = vunpack.c.h.b16 %v2052
        %v2227 = vpack.c.b16 %v2197, %v2195
        %v2228 = vpack.c.b16 %v2198, %v2196
        %v2229 = vpack.c.b16 %v2201, %v2199
        %v2230 = vpack.c.b16 %v2202, %v2200
        %v2231 = vpack.c.b16 %v2205, %v2203
        %v2232 = vpack.c.b16 %v2206, %v2204
        %v2233 = vpack.c.b16 %v2209, %v2207
        %v2234 = vpack.c.b16 %v2210, %v2208
        %v2235 = vpack.c.b16 %v2213, %v2211
        %v2236 = vpack.c.b16 %v2214, %v2212
        %v2237 = vpack.c.b16 %v2217, %v2215
        %v2238 = vpack.c.b16 %v2218, %v2216
        %v2239 = vpack.c.b16 %v2221, %v2219
        %v2240 = vpack.c.b16 %v2222, %v2220
        %v2241 = vpack.c.b16 %v2225, %v2223
        %v2242 = vpack.c.b16 %v2226, %v2224
        %2259 = vmatpush.bf16.msra.mxu0 %v2241
        %2260 = vmatpush.bf16.msra.mxu0 %v2239
        %2261 = vmatpush.bf16.msra.mxu0 %v2237
        %2262 = vmatpush.bf16.msra.mxu0 %v2235
        %2263 = vmatpush.bf16.msra.mxu0 %v2233
        %2264 = vmatpush.bf16.msra.mxu0 %v2231
        %2265 = vmatpush.bf16.msra.mxu0 %v2229
        %2266 = vmatpush.bf16.msra.mxu0 %v2227
        %2267 = vmatmul.bf16.gmra.mxu0 %v2036
        %v2268 = vpop.f32.mrf.mxu0
        %v2269 = vadd.f32 %v2163, %v2268
        %v2270 = vpop.f32.mrf.mxu0
        %2271 = vdwg.mxu0
        %2272 = vmatpush.bf16.msra.mxu0 %v2242
        %2273 = vmatpush.bf16.msra.mxu0 %v2240
        %2274 = vmatpush.bf16.msra.mxu0 %v2238
        %2275 = vmatpush.bf16.msra.mxu0 %v2236
        %2276 = vmatpush.bf16.msra.mxu0 %v2234
        %2277 = vmatpush.bf16.msra.mxu0 %v2232
        %2278 = vmatpush.bf16.msra.mxu0 %v2230
        %2279 = vmatpush.bf16.msra.mxu0 %v2228
        %2280 = vmatmul.bf16.gmra.mxu0 %v2036
        %v2281 = vpop.f32.mrf.mxu0
        %v2282 = vadd.f32 %v2176, %v2281
        %v2283 = vpop.f32.mrf.mxu0
        %2284 = vdwg.mxu0
        %s2285 = scalar_lea.vmem [#allocation4], 2
        %v2286 = vld [vmem:[%s2285] ss:$2 sm:$0xf]
        %v2287 = vpack.c.bf16 %v2286, %v2286
        %s2288 = scalar_lea.vmem [#allocation7], 256
        %v2289 = vld [vmem:[%s2288] sm:$0xff]
        %v2290 = vld [vmem:[%s2288 + $0x8] sm:$0xff]
        %v2291 = vld [vmem:[%s2288 + $0x10] sm:$0xff]
        %v2292 = vld [vmem:[%s2288 + $0x18] sm:$0xff]
        %v2293 = vld [vmem:[%s2288 + $0x20] sm:$0xff]
        %v2294 = vld [vmem:[%s2288 + $0x28] sm:$0xff]
        %v2295 = vld [vmem:[%s2288 + $0x30] sm:$0xff]
        %v2296 = vld [vmem:[%s2288 + $0x38] sm:$0xff]
        %v2297 = vld [vmem:[%s2288 + $0x40] sm:$0xff]
        %v2298 = vld [vmem:[%s2288 + $0x48] sm:$0xff]
        %v2299 = vld [vmem:[%s2288 + $0x50] sm:$0xff]
        %v2300 = vld [vmem:[%s2288 + $0x58] sm:$0xff]
        %v2301 = vld [vmem:[%s2288 + $0x60] sm:$0xff]
        %v2302 = vld [vmem:[%s2288 + $0x68] sm:$0xff]
        %v2303 = vld [vmem:[%s2288 + $0x70] sm:$0xff]
        %v2304 = vld [vmem:[%s2288 + $0x78] sm:$0xff]
        %v2321 = vunpack.c.l.b16 %v2289
        %v2322 = vunpack.c.h.b16 %v2289
        %v2323 = vunpack.c.l.b16 %v2290
        %v2324 = vunpack.c.h.b16 %v2290
        %v2325 = vunpack.c.l.b16 %v2291
        %v2326 = vunpack.c.h.b16 %v2291
        %v2327 = vunpack.c.l.b16 %v2292
        %v2328 = vunpack.c.h.b16 %v2292
        %v2329 = vunpack.c.l.b16 %v2293
        %v2330 = vunpack.c.h.b16 %v2293
        %v2331 = vunpack.c.l.b16 %v2294
        %v2332 = vunpack.c.h.b16 %v2294
        %v2333 = vunpack.c.l.b16 %v2295
        %v2334 = vunpack.c.h.b16 %v2295
        %v2335 = vunpack.c.l.b16 %v2296
        %v2336 = vunpack.c.h.b16 %v2296
        %v2337 = vunpack.c.l.b16 %v2297
        %v2338 = vunpack.c.h.b16 %v2297
        %v2339 = vunpack.c.l.b16 %v2298
        %v2340 = vunpack.c.h.b16 %v2298
        %v2341 = vunpack.c.l.b16 %v2299
        %v2342 = vunpack.c.h.b16 %v2299
        %v2343 = vunpack.c.l.b16 %v2300
        %v2344 = vunpack.c.h.b16 %v2300
        %v2345 = vunpack.c.l.b16 %v2301
        %v2346 = vunpack.c.h.b16 %v2301
        %v2347 = vunpack.c.l.b16 %v2302
        %v2348 = vunpack.c.h.b16 %v2302
        %v2349 = vunpack.c.l.b16 %v2303
        %v2350 = vunpack.c.h.b16 %v2303
        %v2351 = vunpack.c.l.b16 %v2304
        %v2352 = vunpack.c.h.b16 %v2304
        %v2353 = vpack.c.b16 %v2323, %v2321
        %v2354 = vpack.c.b16 %v2324, %v2322
        %v2355 = vpack.c.b16 %v2327, %v2325
        %v2356 = vpack.c.b16 %v2328, %v2326
        %v2357 = vpack.c.b16 %v2331, %v2329
        %v2358 = vpack.c.b16 %v2332, %v2330
        %v2359 = vpack.c.b16 %v2335, %v2333
        %v2360 = vpack.c.b16 %v2336, %v2334
        %v2361 = vpack.c.b16 %v2339, %v2337
        %v2362 = vpack.c.b16 %v2340, %v2338
        %v2363 = vpack.c.b16 %v2343, %v2341
        %v2364 = vpack.c.b16 %v2344, %v2342
        %v2365 = vpack.c.b16 %v2347, %v2345
        %v2366 = vpack.c.b16 %v2348, %v2346
        %v2367 = vpack.c.b16 %v2351, %v2349
        %v2368 = vpack.c.b16 %v2352, %v2350
        %2385 = vmatpush.bf16.msra.mxu0 %v2367
        %2386 = vmatpush.bf16.msra.mxu0 %v2365
        %2387 = vmatpush.bf16.msra.mxu0 %v2363
        %2388 = vmatpush.bf16.msra.mxu0 %v2361
        %2389 = vmatpush.bf16.msra.mxu0 %v2359
        %2390 = vmatpush.bf16.msra.mxu0 %v2357
        %2391 = vmatpush.bf16.msra.mxu0 %v2355
        %2392 = vmatpush.bf16.msra.mxu0 %v2353
        %2393 = vmatmul.bf16.gmra.mxu0 %v2287
        %v2394 = vpop.f32.mrf.mxu0
        %v2395 = vadd.f32 0.0, %v2394
        %v2396 = vpop.f32.mrf.mxu0
        %2397 = vdwg.mxu0
        %2398 = vmatpush.bf16.msra.mxu0 %v2368
        %2399 = vmatpush.bf16.msra.mxu0 %v2366
        %2400 = vmatpush.bf16.msra.mxu0 %v2364
        %2401 = vmatpush.bf16.msra.mxu0 %v2362
        %2402 = vmatpush.bf16.msra.mxu0 %v2360
        %2403 = vmatpush.bf16.msra.mxu0 %v2358
        %2404 = vmatpush.bf16.msra.mxu0 %v2356
        %2405 = vmatpush.bf16.msra.mxu0 %v2354
        %2406 = vmatmul.bf16.gmra.mxu0 %v2287
        %v2407 = vpop.f32.mrf.mxu0
        %v2408 = vadd.f32 0.0, %v2407
        %v2409 = vpop.f32.mrf.mxu0
        %2410 = vdwg.mxu0
        %v2411 = vadd.f32 %v2269, %v2395
        %v2412 = vadd.f32 %v2282, %v2408
        %s2413 = scalar_lea.vmem [#allocation4], 3
        %v2414 = vld [vmem:[%s2413] ss:$2 sm:$0xf]
        %v2415 = vpack.c.bf16 %v2414, %v2414
        %s2416 = scalar_lea.vmem [#allocation7], 384
        %v2417 = vld [vmem:[%s2416] sm:$0xff]
        %v2418 = vld [vmem:[%s2416 + $0x8] sm:$0xff]
        %v2419 = vld [vmem:[%s2416 + $0x10] sm:$0xff]
        %v2420 = vld [vmem:[%s2416 + $0x18] sm:$0xff]
        %v2421 = vld [vmem:[%s2416 + $0x20] sm:$0xff]
        %v2422 = vld [vmem:[%s2416 + $0x28] sm:$0xff]
        %v2423 = vld [vmem:[%s2416 + $0x30] sm:$0xff]
        %v2424 = vld [vmem:[%s2416 + $0x38] sm:$0xff]
        %v2425 = vld [vmem:[%s2416 + $0x40] sm:$0xff]
        %v2426 = vld [vmem:[%s2416 + $0x48] sm:$0xff]
        %v2427 = vld [vmem:[%s2416 + $0x50] sm:$0xff]
        %v2428 = vld [vmem:[%s2416 + $0x58] sm:$0xff]
        %v2429 = vld [vmem:[%s2416 + $0x60] sm:$0xff]
        %v2430 = vld [vmem:[%s2416 + $0x68] sm:$0xff]
        %v2431 = vld [vmem:[%s2416 + $0x70] sm:$0xff]
        %v2432 = vld [vmem:[%s2416 + $0x78] sm:$0xff]
        %v2449 = vunpack.c.l.b16 %v2417
        %v2450 = vunpack.c.h.b16 %v2417
        %v2451 = vunpack.c.l.b16 %v2418
        %v2452 = vunpack.c.h.b16 %v2418
        %v2453 = vunpack.c.l.b16 %v2419
        %v2454 = vunpack.c.h.b16 %v2419
        %v2455 = vunpack.c.l.b16 %v2420
        %v2456 = vunpack.c.h.b16 %v2420
        %v2457 = vunpack.c.l.b16 %v2421
        %v2458 = vunpack.c.h.b16 %v2421
        %v2459 = vunpack.c.l.b16 %v2422
        %v2460 = vunpack.c.h.b16 %v2422
        %v2461 = vunpack.c.l.b16 %v2423
        %v2462 = vunpack.c.h.b16 %v2423
        %v2463 = vunpack.c.l.b16 %v2424
        %v2464 = vunpack.c.h.b16 %v2424
        %v2465 = vunpack.c.l.b16 %v2425
        %v2466 = vunpack.c.h.b16 %v2425
        %v2467 = vunpack.c.l.b16 %v2426
        %v2468 = vunpack.c.h.b16 %v2426
        %v2469 = vunpack.c.l.b16 %v2427
        %v2470 = vunpack.c.h.b16 %v2427
        %v2471 = vunpack.c.l.b16 %v2428
        %v2472 = vunpack.c.h.b16 %v2428
        %v2473 = vunpack.c.l.b16 %v2429
        %v2474 = vunpack.c.h.b16 %v2429
        %v2475 = vunpack.c.l.b16 %v2430
        %v2476 = vunpack.c.h.b16 %v2430
        %v2477 = vunpack.c.l.b16 %v2431
        %v2478 = vunpack.c.h.b16 %v2431
        %v2479 = vunpack.c.l.b16 %v2432
        %v2480 = vunpack.c.h.b16 %v2432
        %v2481 = vpack.c.b16 %v2451, %v2449
        %v2482 = vpack.c.b16 %v2452, %v2450
        %v2483 = vpack.c.b16 %v2455, %v2453
        %v2484 = vpack.c.b16 %v2456, %v2454
        %v2485 = vpack.c.b16 %v2459, %v2457
        %v2486 = vpack.c.b16 %v2460, %v2458
        %v2487 = vpack.c.b16 %v2463, %v2461
        %v2488 = vpack.c.b16 %v2464, %v2462
        %v2489 = vpack.c.b16 %v2467, %v2465
        %v2490 = vpack.c.b16 %v2468, %v2466
        %v2491 = vpack.c.b16 %v2471, %v2469
        %v2492 = vpack.c.b16 %v2472, %v2470
        %v2493 = vpack.c.b16 %v2475, %v2473
        %v2494 = vpack.c.b16 %v2476, %v2474
        %v2495 = vpack.c.b16 %v2479, %v2477
        %v2496 = vpack.c.b16 %v2480, %v2478
        %2513 = vmatpush.bf16.msra.mxu0 %v2495
        %2514 = vmatpush.bf16.msra.mxu0 %v2493
        %2515 = vmatpush.bf16.msra.mxu0 %v2491
        %2516 = vmatpush.bf16.msra.mxu0 %v2489
        %2517 = vmatpush.bf16.msra.mxu0 %v2487
        %2518 = vmatpush.bf16.msra.mxu0 %v2485
        %2519 = vmatpush.bf16.msra.mxu0 %v2483
        %2520 = vmatpush.bf16.msra.mxu0 %v2481
        %2521 = vmatmul.bf16.gmra.mxu0 %v2415
        %v2522 = vpop.f32.mrf.mxu0
        %v2523 = vadd.f32 0.0, %v2522
        %v2524 = vpop.f32.mrf.mxu0
        %2525 = vdwg.mxu0
        %2526 = vmatpush.bf16.msra.mxu0 %v2496
        %2527 = vmatpush.bf16.msra.mxu0 %v2494
        %2528 = vmatpush.bf16.msra.mxu0 %v2492
        %2529 = vmatpush.bf16.msra.mxu0 %v2490
        %2530 = vmatpush.bf16.msra.mxu0 %v2488
        %2531 = vmatpush.bf16.msra.mxu0 %v2486
        %2532 = vmatpush.bf16.msra.mxu0 %v2484
        %2533 = vmatpush.bf16.msra.mxu0 %v2482
        %2534 = vmatmul.bf16.gmra.mxu0 %v2415
        %v2535 = vpop.f32.mrf.mxu0
        %v2536 = vadd.f32 0.0, %v2535
        %v2537 = vpop.f32.mrf.mxu0
        %2538 = vdwg.mxu0
        %v2539 = vadd.f32 %v2411, %v2523
        %v2540 = vadd.f32 %v2412, %v2536
        %s2541 = scalar_lea.vmem [#allocation4], 4
        %v2542 = vld [vmem:[%s2541] ss:$2 sm:$0xf]
        %v2543 = vpack.c.bf16 %v2542, %v2542
        %s2544 = scalar_lea.vmem [#allocation7], 512
        %v2545 = vld [vmem:[%s2544] sm:$0xff]
        %v2546 = vld [vmem:[%s2544 + $0x8] sm:$0xff]
        %v2547 = vld [vmem:[%s2544 + $0x10] sm:$0xff]
        %v2548 = vld [vmem:[%s2544 + $0x18] sm:$0xff]
        %v2549 = vld [vmem:[%s2544 + $0x20] sm:$0xff]
        %v2550 = vld [vmem:[%s2544 + $0x28] sm:$0xff]
        %v2551 = vld [vmem:[%s2544 + $0x30] sm:$0xff]
        %v2552 = vld [vmem:[%s2544 + $0x38] sm:$0xff]
        %v2553 = vld [vmem:[%s2544 + $0x40] sm:$0xff]
        %v2554 = vld [vmem:[%s2544 + $0x48] sm:$0xff]
        %v2555 = vld [vmem:[%s2544 + $0x50] sm:$0xff]
        %v2556 = vld [vmem:[%s2544 + $0x58] sm:$0xff]
        %v2557 = vld [vmem:[%s2544 + $0x60] sm:$0xff]
        %v2558 = vld [vmem:[%s2544 + $0x68] sm:$0xff]
        %v2559 = vld [vmem:[%s2544 + $0x70] sm:$0xff]
        %v2560 = vld [vmem:[%s2544 + $0x78] sm:$0xff]
        %v2577 = vunpack.c.l.b16 %v2545
        %v2578 = vunpack.c.h.b16 %v2545
        %v2579 = vunpack.c.l.b16 %v2546
        %v2580 = vunpack.c.h.b16 %v2546
        %v2581 = vunpack.c.l.b16 %v2547
        %v2582 = vunpack.c.h.b16 %v2547
        %v2583 = vunpack.c.l.b16 %v2548
        %v2584 = vunpack.c.h.b16 %v2548
        %v2585 = vunpack.c.l.b16 %v2549
        %v2586 = vunpack.c.h.b16 %v2549
        %v2587 = vunpack.c.l.b16 %v2550
        %v2588 = vunpack.c.h.b16 %v2550
        %v2589 = vunpack.c.l.b16 %v2551
        %v2590 = vunpack.c.h.b16 %v2551
        %v2591 = vunpack.c.l.b16 %v2552
        %v2592 = vunpack.c.h.b16 %v2552
        %v2593 = vunpack.c.l.b16 %v2553
        %v2594 = vunpack.c.h.b16 %v2553
        %v2595 = vunpack.c.l.b16 %v2554
        %v2596 = vunpack.c.h.b16 %v2554
        %v2597 = vunpack.c.l.b16 %v2555
        %v2598 = vunpack.c.h.b16 %v2555
        %v2599 = vunpack.c.l.b16 %v2556
        %v2600 = vunpack.c.h.b16 %v2556
        %v2601 = vunpack.c.l.b16 %v2557
        %v2602 = vunpack.c.h.b16 %v2557
        %v2603 = vunpack.c.l.b16 %v2558
        %v2604 = vunpack.c.h.b16 %v2558
        %v2605 = vunpack.c.l.b16 %v2559
        %v2606 = vunpack.c.h.b16 %v2559
        %v2607 = vunpack.c.l.b16 %v2560
        %v2608 = vunpack.c.h.b16 %v2560
        %v2609 = vpack.c.b16 %v2579, %v2577
        %v2610 = vpack.c.b16 %v2580, %v2578
        %v2611 = vpack.c.b16 %v2583, %v2581
        %v2612 = vpack.c.b16 %v2584, %v2582
        %v2613 = vpack.c.b16 %v2587, %v2585
        %v2614 = vpack.c.b16 %v2588, %v2586
        %v2615 = vpack.c.b16 %v2591, %v2589
        %v2616 = vpack.c.b16 %v2592, %v2590
        %v2617 = vpack.c.b16 %v2595, %v2593
        %v2618 = vpack.c.b16 %v2596, %v2594
        %v2619 = vpack.c.b16 %v2599, %v2597
        %v2620 = vpack.c.b16 %v2600, %v2598
        %v2621 = vpack.c.b16 %v2603, %v2601
        %v2622 = vpack.c.b16 %v2604, %v2602
        %v2623 = vpack.c.b16 %v2607, %v2605
        %v2624 = vpack.c.b16 %v2608, %v2606
        %2641 = vmatpush.bf16.msra.mxu0 %v2623
        %2642 = vmatpush.bf16.msra.mxu0 %v2621
        %2643 = vmatpush.bf16.msra.mxu0 %v2619
        %2644 = vmatpush.bf16.msra.mxu0 %v2617
        %2645 = vmatpush.bf16.msra.mxu0 %v2615
        %2646 = vmatpush.bf16.msra.mxu0 %v2613
        %2647 = vmatpush.bf16.msra.mxu0 %v2611
        %2648 = vmatpush.bf16.msra.mxu0 %v2609
        %2649 = vmatmul.bf16.gmra.mxu0 %v2543
        %v2650 = vpop.f32.mrf.mxu0
        %v2651 = vadd.f32 0.0, %v2650
        %v2652 = vpop.f32.mrf.mxu0
        %2653 = vdwg.mxu0
        %2654 = vmatpush.bf16.msra.mxu0 %v2624
        %2655 = vmatpush.bf16.msra.mxu0 %v2622
        %2656 = vmatpush.bf16.msra.mxu0 %v2620
        %2657 = vmatpush.bf16.msra.mxu0 %v2618
        %2658 = vmatpush.bf16.msra.mxu0 %v2616
        %2659 = vmatpush.bf16.msra.mxu0 %v2614
        %2660 = vmatpush.bf16.msra.mxu0 %v2612
        %2661 = vmatpush.bf16.msra.mxu0 %v2610
        %2662 = vmatmul.bf16.gmra.mxu0 %v2543
        %v2663 = vpop.f32.mrf.mxu0
        %v2664 = vadd.f32 0.0, %v2663
        %v2665 = vpop.f32.mrf.mxu0
        %2666 = vdwg.mxu0
        %v2667 = vadd.f32 %v2539, %v2651
        %v2668 = vadd.f32 %v2540, %v2664
        %s2669 = scalar_lea.vmem [#allocation4], 5
        %v2670 = vld [vmem:[%s2669] ss:$2 sm:$0xf]
        %v2671 = vpack.c.bf16 %v2670, %v2670
        %s2672 = scalar_lea.vmem [#allocation7], 640
        %v2673 = vld [vmem:[%s2672] sm:$0xff]
        %v2674 = vld [vmem:[%s2672 + $0x8] sm:$0xff]
        %v2675 = vld [vmem:[%s2672 + $0x10] sm:$0xff]
        %v2676 = vld [vmem:[%s2672 + $0x18] sm:$0xff]
        %v2677 = vld [vmem:[%s2672 + $0x20] sm:$0xff]
        %v2678 = vld [vmem:[%s2672 + $0x28] sm:$0xff]
        %v2679 = vld [vmem:[%s2672 + $0x30] sm:$0xff]
        %v2680 = vld [vmem:[%s2672 + $0x38] sm:$0xff]
        %v2681 = vld [vmem:[%s2672 + $0x40] sm:$0xff]
        %v2682 = vld [vmem:[%s2672 + $0x48] sm:$0xff]
        %v2683 = vld [vmem:[%s2672 + $0x50] sm:$0xff]
        %v2684 = vld [vmem:[%s2672 + $0x58] sm:$0xff]
        %v2685 = vld [vmem:[%s2672 + $0x60] sm:$0xff]
        %v2686 = vld [vmem:[%s2672 + $0x68] sm:$0xff]
        %v2687 = vld [vmem:[%s2672 + $0x70] sm:$0xff]
        %v2688 = vld [vmem:[%s2672 + $0x78] sm:$0xff]
        %v2705 = vunpack.c.l.b16 %v2673
        %v2706 = vunpack.c.h.b16 %v2673
        %v2707 = vunpack.c.l.b16 %v2674
        %v2708 = vunpack.c.h.b16 %v2674
        %v2709 = vunpack.c.l.b16 %v2675
        %v2710 = vunpack.c.h.b16 %v2675
        %v2711 = vunpack.c.l.b16 %v2676
        %v2712 = vunpack.c.h.b16 %v2676
        %v2713 = vunpack.c.l.b16 %v2677
        %v2714 = vunpack.c.h.b16 %v2677
        %v2715 = vunpack.c.l.b16 %v2678
        %v2716 = vunpack.c.h.b16 %v2678
        %v2717 = vunpack.c.l.b16 %v2679
        %v2718 = vunpack.c.h.b16 %v2679
        %v2719 = vunpack.c.l.b16 %v2680
        %v2720 = vunpack.c.h.b16 %v2680
        %v2721 = vunpack.c.l.b16 %v2681
        %v2722 = vunpack.c.h.b16 %v2681
        %v2723 = vunpack.c.l.b16 %v2682
        %v2724 = vunpack.c.h.b16 %v2682
        %v2725 = vunpack.c.l.b16 %v2683
        %v2726 = vunpack.c.h.b16 %v2683
        %v2727 = vunpack.c.l.b16 %v2684
        %v2728 = vunpack.c.h.b16 %v2684
        %v2729 = vunpack.c.l.b16 %v2685
        %v2730 = vunpack.c.h.b16 %v2685
        %v2731 = vunpack.c.l.b16 %v2686
        %v2732 = vunpack.c.h.b16 %v2686
        %v2733 = vunpack.c.l.b16 %v2687
        %v2734 = vunpack.c.h.b16 %v2687
        %v2735 = vunpack.c.l.b16 %v2688
        %v2736 = vunpack.c.h.b16 %v2688
        %v2737 = vpack.c.b16 %v2707, %v2705
        %v2738 = vpack.c.b16 %v2708, %v2706
        %v2739 = vpack.c.b16 %v2711, %v2709
        %v2740 = vpack.c.b16 %v2712, %v2710
        %v2741 = vpack.c.b16 %v2715, %v2713
        %v2742 = vpack.c.b16 %v2716, %v2714
        %v2743 = vpack.c.b16 %v2719, %v2717
        %v2744 = vpack.c.b16 %v2720, %v2718
        %v2745 = vpack.c.b16 %v2723, %v2721
        %v2746 = vpack.c.b16 %v2724, %v2722
        %v2747 = vpack.c.b16 %v2727, %v2725
        %v2748 = vpack.c.b16 %v2728, %v2726
        %v2749 = vpack.c.b16 %v2731, %v2729
        %v2750 = vpack.c.b16 %v2732, %v2730
        %v2751 = vpack.c.b16 %v2735, %v2733
        %v2752 = vpack.c.b16 %v2736, %v2734
        %2769 = vmatpush.bf16.msra.mxu0 %v2751
        %2770 = vmatpush.bf16.msra.mxu0 %v2749
        %2771 = vmatpush.bf16.msra.mxu0 %v2747
        %2772 = vmatpush.bf16.msra.mxu0 %v2745
        %2773 = vmatpush.bf16.msra.mxu0 %v2743
        %2774 = vmatpush.bf16.msra.mxu0 %v2741
        %2775 = vmatpush.bf16.msra.mxu0 %v2739
        %2776 = vmatpush.bf16.msra.mxu0 %v2737
        %2777 = vmatmul.bf16.gmra.mxu0 %v2671
        %v2778 = vpop.f32.mrf.mxu0
        %v2779 = vadd.f32 0.0, %v2778
        %v2780 = vpop.f32.mrf.mxu0
        %2781 = vdwg.mxu0
        %2782 = vmatpush.bf16.msra.mxu0 %v2752
        %2783 = vmatpush.bf16.msra.mxu0 %v2750
        %2784 = vmatpush.bf16.msra.mxu0 %v2748
        %2785 = vmatpush.bf16.msra.mxu0 %v2746
        %2786 = vmatpush.bf16.msra.mxu0 %v2744
        %2787 = vmatpush.bf16.msra.mxu0 %v2742
        %2788 = vmatpush.bf16.msra.mxu0 %v2740
        %2789 = vmatpush.bf16.msra.mxu0 %v2738
        %2790 = vmatmul.bf16.gmra.mxu0 %v2671
        %v2791 = vpop.f32.mrf.mxu0
        %v2792 = vadd.f32 0.0, %v2791
        %v2793 = vpop.f32.mrf.mxu0
        %2794 = vdwg.mxu0
        %v2795 = vadd.f32 %v2667, %v2779
        %v2796 = vadd.f32 %v2668, %v2792
        %s2797 = scalar_lea.vmem [#allocation4], 6
        %v2798 = vld [vmem:[%s2797] ss:$2 sm:$0xf]
        %v2799 = vpack.c.bf16 %v2798, %v2798
        %s2800 = scalar_lea.vmem [#allocation7], 768
        %v2801 = vld [vmem:[%s2800] sm:$0xff]
        %v2802 = vld [vmem:[%s2800 + $0x8] sm:$0xff]
        %v2803 = vld [vmem:[%s2800 + $0x10] sm:$0xff]
        %v2804 = vld [vmem:[%s2800 + $0x18] sm:$0xff]
        %v2805 = vld [vmem:[%s2800 + $0x20] sm:$0xff]
        %v2806 = vld [vmem:[%s2800 + $0x28] sm:$0xff]
        %v2807 = vld [vmem:[%s2800 + $0x30] sm:$0xff]
        %v2808 = vld [vmem:[%s2800 + $0x38] sm:$0xff]
        %v2809 = vld [vmem:[%s2800 + $0x40] sm:$0xff]
        %v2810 = vld [vmem:[%s2800 + $0x48] sm:$0xff]
        %v2811 = vld [vmem:[%s2800 + $0x50] sm:$0xff]
        %v2812 = vld [vmem:[%s2800 + $0x58] sm:$0xff]
        %v2813 = vld [vmem:[%s2800 + $0x60] sm:$0xff]
        %v2814 = vld [vmem:[%s2800 + $0x68] sm:$0xff]
        %v2815 = vld [vmem:[%s2800 + $0x70] sm:$0xff]
        %v2816 = vld [vmem:[%s2800 + $0x78] sm:$0xff]
        %v2833 = vunpack.c.l.b16 %v2801
        %v2834 = vunpack.c.h.b16 %v2801
        %v2835 = vunpack.c.l.b16 %v2802
        %v2836 = vunpack.c.h.b16 %v2802
        %v2837 = vunpack.c.l.b16 %v2803
        %v2838 = vunpack.c.h.b16 %v2803
        %v2839 = vunpack.c.l.b16 %v2804
        %v2840 = vunpack.c.h.b16 %v2804
        %v2841 = vunpack.c.l.b16 %v2805
        %v2842 = vunpack.c.h.b16 %v2805
        %v2843 = vunpack.c.l.b16 %v2806
        %v2844 = vunpack.c.h.b16 %v2806
        %v2845 = vunpack.c.l.b16 %v2807
        %v2846 = vunpack.c.h.b16 %v2807
        %v2847 = vunpack.c.l.b16 %v2808
        %v2848 = vunpack.c.h.b16 %v2808
        %v2849 = vunpack.c.l.b16 %v2809
        %v2850 = vunpack.c.h.b16 %v2809
        %v2851 = vunpack.c.l.b16 %v2810
        %v2852 = vunpack.c.h.b16 %v2810
        %v2853 = vunpack.c.l.b16 %v2811
        %v2854 = vunpack.c.h.b16 %v2811
        %v2855 = vunpack.c.l.b16 %v2812
        %v2856 = vunpack.c.h.b16 %v2812
        %v2857 = vunpack.c.l.b16 %v2813
        %v2858 = vunpack.c.h.b16 %v2813
        %v2859 = vunpack.c.l.b16 %v2814
        %v2860 = vunpack.c.h.b16 %v2814
        %v2861 = vunpack.c.l.b16 %v2815
        %v2862 = vunpack.c.h.b16 %v2815
        %v2863 = vunpack.c.l.b16 %v2816
        %v2864 = vunpack.c.h.b16 %v2816
        %v2865 = vpack.c.b16 %v2835, %v2833
        %v2866 = vpack.c.b16 %v2836, %v2834
        %v2867 = vpack.c.b16 %v2839, %v2837
        %v2868 = vpack.c.b16 %v2840, %v2838
        %v2869 = vpack.c.b16 %v2843, %v2841
        %v2870 = vpack.c.b16 %v2844, %v2842
        %v2871 = vpack.c.b16 %v2847, %v2845
        %v2872 = vpack.c.b16 %v2848, %v2846
        %v2873 = vpack.c.b16 %v2851, %v2849
        %v2874 = vpack.c.b16 %v2852, %v2850
        %v2875 = vpack.c.b16 %v2855, %v2853
        %v2876 = vpack.c.b16 %v2856, %v2854
        %v2877 = vpack.c.b16 %v2859, %v2857
        %v2878 = vpack.c.b16 %v2860, %v2858
        %v2879 = vpack.c.b16 %v2863, %v2861
        %v2880 = vpack.c.b16 %v2864, %v2862
        %2897 = vmatpush.bf16.msra.mxu0 %v2879
        %2898 = vmatpush.bf16.msra.mxu0 %v2877
        %2899 = vmatpush.bf16.msra.mxu0 %v2875
        %2900 = vmatpush.bf16.msra.mxu0 %v2873
        %2901 = vmatpush.bf16.msra.mxu0 %v2871
        %2902 = vmatpush.bf16.msra.mxu0 %v2869
        %2903 = vmatpush.bf16.msra.mxu0 %v2867
        %2904 = vmatpush.bf16.msra.mxu0 %v2865
        %2905 = vmatmul.bf16.gmra.mxu0 %v2799
        %v2906 = vpop.f32.mrf.mxu0
        %v2907 = vadd.f32 0.0, %v2906
        %v2908 = vpop.f32.mrf.mxu0
        %2909 = vdwg.mxu0
        %2910 = vmatpush.bf16.msra.mxu0 %v2880
        %2911 = vmatpush.bf16.msra.mxu0 %v2878
        %2912 = vmatpush.bf16.msra.mxu0 %v2876
        %2913 = vmatpush.bf16.msra.mxu0 %v2874
        %2914 = vmatpush.bf16.msra.mxu0 %v2872
        %2915 = vmatpush.bf16.msra.mxu0 %v2870
        %2916 = vmatpush.bf16.msra.mxu0 %v2868
        %2917 = vmatpush.bf16.msra.mxu0 %v2866
        %2918 = vmatmul.bf16.gmra.mxu0 %v2799
        %v2919 = vpop.f32.mrf.mxu0
        %v2920 = vadd.f32 0.0, %v2919
        %v2921 = vpop.f32.mrf.mxu0
        %2922 = vdwg.mxu0
        %v2923 = vadd.f32 %v2795, %v2907
        %v2924 = vadd.f32 %v2796, %v2920
        %s2925 = scalar_lea.vmem [#allocation4], 7
        %v2926 = vld [vmem:[%s2925] ss:$2 sm:$0xf]
        %v2927 = vpack.c.bf16 %v2926, %v2926
        %s2928 = scalar_lea.vmem [#allocation7], 896
        %v2929 = vld [vmem:[%s2928] sm:$0xff]
        %v2930 = vld [vmem:[%s2928 + $0x8] sm:$0xff]
        %v2931 = vld [vmem:[%s2928 + $0x10] sm:$0xff]
        %v2932 = vld [vmem:[%s2928 + $0x18] sm:$0xff]
        %v2933 = vld [vmem:[%s2928 + $0x20] sm:$0xff]
        %v2934 = vld [vmem:[%s2928 + $0x28] sm:$0xff]
        %v2935 = vld [vmem:[%s2928 + $0x30] sm:$0xff]
        %v2936 = vld [vmem:[%s2928 + $0x38] sm:$0xff]
        %v2937 = vld [vmem:[%s2928 + $0x40] sm:$0xff]
        %v2938 = vld [vmem:[%s2928 + $0x48] sm:$0xff]
        %v2939 = vld [vmem:[%s2928 + $0x50] sm:$0xff]
        %v2940 = vld [vmem:[%s2928 + $0x58] sm:$0xff]
        %v2941 = vld [vmem:[%s2928 + $0x60] sm:$0xff]
        %v2942 = vld [vmem:[%s2928 + $0x68] sm:$0xff]
        %v2943 = vld [vmem:[%s2928 + $0x70] sm:$0xff]
        %v2944 = vld [vmem:[%s2928 + $0x78] sm:$0xff]
        %v2961 = vunpack.c.l.b16 %v2929
        %v2962 = vunpack.c.h.b16 %v2929
        %v2963 = vunpack.c.l.b16 %v2930
        %v2964 = vunpack.c.h.b16 %v2930
        %v2965 = vunpack.c.l.b16 %v2931
        %v2966 = vunpack.c.h.b16 %v2931
        %v2967 = vunpack.c.l.b16 %v2932
        %v2968 = vunpack.c.h.b16 %v2932
        %v2969 = vunpack.c.l.b16 %v2933
        %v2970 = vunpack.c.h.b16 %v2933
        %v2971 = vunpack.c.l.b16 %v2934
        %v2972 = vunpack.c.h.b16 %v2934
        %v2973 = vunpack.c.l.b16 %v2935
        %v2974 = vunpack.c.h.b16 %v2935
        %v2975 = vunpack.c.l.b16 %v2936
        %v2976 = vunpack.c.h.b16 %v2936
        %v2977 = vunpack.c.l.b16 %v2937
        %v2978 = vunpack.c.h.b16 %v2937
        %v2979 = vunpack.c.l.b16 %v2938
        %v2980 = vunpack.c.h.b16 %v2938
        %v2981 = vunpack.c.l.b16 %v2939
        %v2982 = vunpack.c.h.b16 %v2939
        %v2983 = vunpack.c.l.b16 %v2940
        %v2984 = vunpack.c.h.b16 %v2940
        %v2985 = vunpack.c.l.b16 %v2941
        %v2986 = vunpack.c.h.b16 %v2941
        %v2987 = vunpack.c.l.b16 %v2942
        %v2988 = vunpack.c.h.b16 %v2942
        %v2989 = vunpack.c.l.b16 %v2943
        %v2990 = vunpack.c.h.b16 %v2943
        %v2991 = vunpack.c.l.b16 %v2944
        %v2992 = vunpack.c.h.b16 %v2944
        %v2993 = vpack.c.b16 %v2963, %v2961
        %v2994 = vpack.c.b16 %v2964, %v2962
        %v2995 = vpack.c.b16 %v2967, %v2965
        %v2996 = vpack.c.b16 %v2968, %v2966
        %v2997 = vpack.c.b16 %v2971, %v2969
        %v2998 = vpack.c.b16 %v2972, %v2970
        %v2999 = vpack.c.b16 %v2975, %v2973
        %v3000 = vpack.c.b16 %v2976, %v2974
        %v3001 = vpack.c.b16 %v2979, %v2977
        %v3002 = vpack.c.b16 %v2980, %v2978
        %v3003 = vpack.c.b16 %v2983, %v2981
        %v3004 = vpack.c.b16 %v2984, %v2982
        %v3005 = vpack.c.b16 %v2987, %v2985
        %v3006 = vpack.c.b16 %v2988, %v2986
        %v3007 = vpack.c.b16 %v2991, %v2989
        %v3008 = vpack.c.b16 %v2992, %v2990
        %3025 = vmatpush.bf16.msra.mxu0 %v3007
        %3026 = vmatpush.bf16.msra.mxu0 %v3005
        %3027 = vmatpush.bf16.msra.mxu0 %v3003
        %3028 = vmatpush.bf16.msra.mxu0 %v3001
        %3029 = vmatpush.bf16.msra.mxu0 %v2999
        %3030 = vmatpush.bf16.msra.mxu0 %v2997
        %3031 = vmatpush.bf16.msra.mxu0 %v2995
        %3032 = vmatpush.bf16.msra.mxu0 %v2993
        %3033 = vmatmul.bf16.gmra.mxu0 %v2927
        %v3034 = vpop.f32.mrf.mxu0
        %v3035 = vadd.f32 0.0, %v3034
        %v3036 = vpop.f32.mrf.mxu0
        %3037 = vdwg.mxu0
        %3038 = vmatpush.bf16.msra.mxu0 %v3008
        %3039 = vmatpush.bf16.msra.mxu0 %v3006
        %3040 = vmatpush.bf16.msra.mxu0 %v3004
        %3041 = vmatpush.bf16.msra.mxu0 %v3002
        %3042 = vmatpush.bf16.msra.mxu0 %v3000
        %3043 = vmatpush.bf16.msra.mxu0 %v2998
        %3044 = vmatpush.bf16.msra.mxu0 %v2996
        %3045 = vmatpush.bf16.msra.mxu0 %v2994
        %3046 = vmatmul.bf16.gmra.mxu0 %v2927
        %v3047 = vpop.f32.mrf.mxu0
        %v3048 = vadd.f32 0.0, %v3047
        %v3049 = vpop.f32.mrf.mxu0
        %3050 = vdwg.mxu0
        %v3051 = vadd.f32 %v2923, %v3035
        %v3052 = vadd.f32 %v2924, %v3048
        %s3053 = scalar_lea.vmem [#allocation4], 8
        %v3054 = vld [vmem:[%s3053] ss:$2 sm:$0xf]
        %v3055 = vpack.c.bf16 %v3054, %v3054
        %s3056 = scalar_lea.vmem [#allocation7], 1024
        %v3057 = vld [vmem:[%s3056] sm:$0xff]
        %v3058 = vld [vmem:[%s3056 + $0x8] sm:$0xff]
        %v3059 = vld [vmem:[%s3056 + $0x10] sm:$0xff]
        %v3060 = vld [vmem:[%s3056 + $0x18] sm:$0xff]
        %v3061 = vld [vmem:[%s3056 + $0x20] sm:$0xff]
        %v3062 = vld [vmem:[%s3056 + $0x28] sm:$0xff]
        %v3063 = vld [vmem:[%s3056 + $0x30] sm:$0xff]
        %v3064 = vld [vmem:[%s3056 + $0x38] sm:$0xff]
        %v3065 = vld [vmem:[%s3056 + $0x40] sm:$0xff]
        %v3066 = vld [vmem:[%s3056 + $0x48] sm:$0xff]
        %v3067 = vld [vmem:[%s3056 + $0x50] sm:$0xff]
        %v3068 = vld [vmem:[%s3056 + $0x58] sm:$0xff]
        %v3069 = vld [vmem:[%s3056 + $0x60] sm:$0xff]
        %v3070 = vld [vmem:[%s3056 + $0x68] sm:$0xff]
        %v3071 = vld [vmem:[%s3056 + $0x70] sm:$0xff]
        %v3072 = vld [vmem:[%s3056 + $0x78] sm:$0xff]
        %v3089 = vunpack.c.l.b16 %v3057
        %v3090 = vunpack.c.h.b16 %v3057
        %v3091 = vunpack.c.l.b16 %v3058
        %v3092 = vunpack.c.h.b16 %v3058
        %v3093 = vunpack.c.l.b16 %v3059
        %v3094 = vunpack.c.h.b16 %v3059
        %v3095 = vunpack.c.l.b16 %v3060
        %v3096 = vunpack.c.h.b16 %v3060
        %v3097 = vunpack.c.l.b16 %v3061
        %v3098 = vunpack.c.h.b16 %v3061
        %v3099 = vunpack.c.l.b16 %v3062
        %v3100 = vunpack.c.h.b16 %v3062
        %v3101 = vunpack.c.l.b16 %v3063
        %v3102 = vunpack.c.h.b16 %v3063
        %v3103 = vunpack.c.l.b16 %v3064
        %v3104 = vunpack.c.h.b16 %v3064
        %v3105 = vunpack.c.l.b16 %v3065
        %v3106 = vunpack.c.h.b16 %v3065
        %v3107 = vunpack.c.l.b16 %v3066
        %v3108 = vunpack.c.h.b16 %v3066
        %v3109 = vunpack.c.l.b16 %v3067
        %v3110 = vunpack.c.h.b16 %v3067
        %v3111 = vunpack.c.l.b16 %v3068
        %v3112 = vunpack.c.h.b16 %v3068
        %v3113 = vunpack.c.l.b16 %v3069
        %v3114 = vunpack.c.h.b16 %v3069
        %v3115 = vunpack.c.l.b16 %v3070
        %v3116 = vunpack.c.h.b16 %v3070
        %v3117 = vunpack.c.l.b16 %v3071
        %v3118 = vunpack.c.h.b16 %v3071
        %v3119 = vunpack.c.l.b16 %v3072
        %v3120 = vunpack.c.h.b16 %v3072
        %v3121 = vpack.c.b16 %v3091, %v3089
        %v3122 = vpack.c.b16 %v3092, %v3090
        %v3123 = vpack.c.b16 %v3095, %v3093
        %v3124 = vpack.c.b16 %v3096, %v3094
        %v3125 = vpack.c.b16 %v3099, %v3097
        %v3126 = vpack.c.b16 %v3100, %v3098
        %v3127 = vpack.c.b16 %v3103, %v3101
        %v3128 = vpack.c.b16 %v3104, %v3102
        %v3129 = vpack.c.b16 %v3107, %v3105
        %v3130 = vpack.c.b16 %v3108, %v3106
        %v3131 = vpack.c.b16 %v3111, %v3109
        %v3132 = vpack.c.b16 %v3112, %v3110
        %v3133 = vpack.c.b16 %v3115, %v3113
        %v3134 = vpack.c.b16 %v3116, %v3114
        %v3135 = vpack.c.b16 %v3119, %v3117
        %v3136 = vpack.c.b16 %v3120, %v3118
        %3153 = vmatpush.bf16.msra.mxu0 %v3135
        %3154 = vmatpush.bf16.msra.mxu0 %v3133
        %3155 = vmatpush.bf16.msra.mxu0 %v3131
        %3156 = vmatpush.bf16.msra.mxu0 %v3129
        %3157 = vmatpush.bf16.msra.mxu0 %v3127
        %3158 = vmatpush.bf16.msra.mxu0 %v3125
        %3159 = vmatpush.bf16.msra.mxu0 %v3123
        %3160 = vmatpush.bf16.msra.mxu0 %v3121
        %3161 = vmatmul.bf16.gmra.mxu0 %v3055
        %v3162 = vpop.f32.mrf.mxu0
        %v3163 = vadd.f32 0.0, %v3162
        %v3164 = vpop.f32.mrf.mxu0
        %3165 = vdwg.mxu0
        %3166 = vmatpush.bf16.msra.mxu0 %v3136
        %3167 = vmatpush.bf16.msra.mxu0 %v3134
        %3168 = vmatpush.bf16.msra.mxu0 %v3132
        %3169 = vmatpush.bf16.msra.mxu0 %v3130
        %3170 = vmatpush.bf16.msra.mxu0 %v3128
        %3171 = vmatpush.bf16.msra.mxu0 %v3126
        %3172 = vmatpush.bf16.msra.mxu0 %v3124
        %3173 = vmatpush.bf16.msra.mxu0 %v3122
        %3174 = vmatmul.bf16.gmra.mxu0 %v3055
        %v3175 = vpop.f32.mrf.mxu0
        %v3176 = vadd.f32 0.0, %v3175
        %v3177 = vpop.f32.mrf.mxu0
        %3178 = vdwg.mxu0
        %v3179 = vadd.f32 %v3051, %v3163
        %v3180 = vadd.f32 %v3052, %v3176
        %s3181 = scalar_lea.vmem [#allocation4], 9
        %v3182 = vld [vmem:[%s3181] ss:$2 sm:$0xf]
        %v3183 = vpack.c.bf16 %v3182, %v3182
        %s3184 = scalar_lea.vmem [#allocation7], 1152
        %v3185 = vld [vmem:[%s3184] sm:$0xff]
        %v3186 = vld [vmem:[%s3184 + $0x8] sm:$0xff]
        %v3187 = vld [vmem:[%s3184 + $0x10] sm:$0xff]
        %v3188 = vld [vmem:[%s3184 + $0x18] sm:$0xff]
        %v3189 = vld [vmem:[%s3184 + $0x20] sm:$0xff]
        %v3190 = vld [vmem:[%s3184 + $0x28] sm:$0xff]
        %v3191 = vld [vmem:[%s3184 + $0x30] sm:$0xff]
        %v3192 = vld [vmem:[%s3184 + $0x38] sm:$0xff]
        %v3193 = vld [vmem:[%s3184 + $0x40] sm:$0xff]
        %v3194 = vld [vmem:[%s3184 + $0x48] sm:$0xff]
        %v3195 = vld [vmem:[%s3184 + $0x50] sm:$0xff]
        %v3196 = vld [vmem:[%s3184 + $0x58] sm:$0xff]
        %v3197 = vld [vmem:[%s3184 + $0x60] sm:$0xff]
        %v3198 = vld [vmem:[%s3184 + $0x68] sm:$0xff]
        %v3199 = vld [vmem:[%s3184 + $0x70] sm:$0xff]
        %v3200 = vld [vmem:[%s3184 + $0x78] sm:$0xff]
        %v3217 = vunpack.c.l.b16 %v3185
        %v3218 = vunpack.c.h.b16 %v3185
        %v3219 = vunpack.c.l.b16 %v3186
        %v3220 = vunpack.c.h.b16 %v3186
        %v3221 = vunpack.c.l.b16 %v3187
        %v3222 = vunpack.c.h.b16 %v3187
        %v3223 = vunpack.c.l.b16 %v3188
        %v3224 = vunpack.c.h.b16 %v3188
        %v3225 = vunpack.c.l.b16 %v3189
        %v3226 = vunpack.c.h.b16 %v3189
        %v3227 = vunpack.c.l.b16 %v3190
        %v3228 = vunpack.c.h.b16 %v3190
        %v3229 = vunpack.c.l.b16 %v3191
        %v3230 = vunpack.c.h.b16 %v3191
        %v3231 = vunpack.c.l.b16 %v3192
        %v3232 = vunpack.c.h.b16 %v3192
        %v3233 = vunpack.c.l.b16 %v3193
        %v3234 = vunpack.c.h.b16 %v3193
        %v3235 = vunpack.c.l.b16 %v3194
        %v3236 = vunpack.c.h.b16 %v3194
        %v3237 = vunpack.c.l.b16 %v3195
        %v3238 = vunpack.c.h.b16 %v3195
        %v3239 = vunpack.c.l.b16 %v3196
        %v3240 = vunpack.c.h.b16 %v3196
        %v3241 = vunpack.c.l.b16 %v3197
        %v3242 = vunpack.c.h.b16 %v3197
        %v3243 = vunpack.c.l.b16 %v3198
        %v3244 = vunpack.c.h.b16 %v3198
        %v3245 = vunpack.c.l.b16 %v3199
        %v3246 = vunpack.c.h.b16 %v3199
        %v3247 = vunpack.c.l.b16 %v3200
        %v3248 = vunpack.c.h.b16 %v3200
        %v3249 = vpack.c.b16 %v3219, %v3217
        %v3250 = vpack.c.b16 %v3220, %v3218
        %v3251 = vpack.c.b16 %v3223, %v3221
        %v3252 = vpack.c.b16 %v3224, %v3222
        %v3253 = vpack.c.b16 %v3227, %v3225
        %v3254 = vpack.c.b16 %v3228, %v3226
        %v3255 = vpack.c.b16 %v3231, %v3229
        %v3256 = vpack.c.b16 %v3232, %v3230
        %v3257 = vpack.c.b16 %v3235, %v3233
        %v3258 = vpack.c.b16 %v3236, %v3234
        %v3259 = vpack.c.b16 %v3239, %v3237
        %v3260 = vpack.c.b16 %v3240, %v3238
        %v3261 = vpack.c.b16 %v3243, %v3241
        %v3262 = vpack.c.b16 %v3244, %v3242
        %v3263 = vpack.c.b16 %v3247, %v3245
        %v3264 = vpack.c.b16 %v3248, %v3246
        %3281 = vmatpush.bf16.msra.mxu0 %v3263
        %3282 = vmatpush.bf16.msra.mxu0 %v3261
        %3283 = vmatpush.bf16.msra.mxu0 %v3259
        %3284 = vmatpush.bf16.msra.mxu0 %v3257
        %3285 = vmatpush.bf16.msra.mxu0 %v3255
        %3286 = vmatpush.bf16.msra.mxu0 %v3253
        %3287 = vmatpush.bf16.msra.mxu0 %v3251
        %3288 = vmatpush.bf16.msra.mxu0 %v3249
        %3289 = vmatmul.bf16.gmra.mxu0 %v3183
        %v3290 = vpop.f32.mrf.mxu0
        %v3291 = vadd.f32 0.0, %v3290
        %v3292 = vpop.f32.mrf.mxu0
        %3293 = vdwg.mxu0
        %3294 = vmatpush.bf16.msra.mxu0 %v3264
        %3295 = vmatpush.bf16.msra.mxu0 %v3262
        %3296 = vmatpush.bf16.msra.mxu0 %v3260
        %3297 = vmatpush.bf16.msra.mxu0 %v3258
        %3298 = vmatpush.bf16.msra.mxu0 %v3256
        %3299 = vmatpush.bf16.msra.mxu0 %v3254
        %3300 = vmatpush.bf16.msra.mxu0 %v3252
        %3301 = vmatpush.bf16.msra.mxu0 %v3250
        %3302 = vmatmul.bf16.gmra.mxu0 %v3183
        %v3303 = vpop.f32.mrf.mxu0
        %v3304 = vadd.f32 0.0, %v3303
        %v3305 = vpop.f32.mrf.mxu0
        %3306 = vdwg.mxu0
        %v3307 = vadd.f32 %v3179, %v3291
        %v3308 = vadd.f32 %v3180, %v3304
        %s3309 = scalar_lea.vmem [#allocation4], 10
        %v3310 = vld [vmem:[%s3309] ss:$2 sm:$0xf]
        %v3311 = vpack.c.bf16 %v3310, %v3310
        %s3312 = scalar_lea.vmem [#allocation7], 1280
        %v3313 = vld [vmem:[%s3312] sm:$0xff]
        %v3314 = vld [vmem:[%s3312 + $0x8] sm:$0xff]
        %v3315 = vld [vmem:[%s3312 + $0x10] sm:$0xff]
        %v3316 = vld [vmem:[%s3312 + $0x18] sm:$0xff]
        %v3317 = vld [vmem:[%s3312 + $0x20] sm:$0xff]
        %v3318 = vld [vmem:[%s3312 + $0x28] sm:$0xff]
        %v3319 = vld [vmem:[%s3312 + $0x30] sm:$0xff]
        %v3320 = vld [vmem:[%s3312 + $0x38] sm:$0xff]
        %v3321 = vld [vmem:[%s3312 + $0x40] sm:$0xff]
        %v3322 = vld [vmem:[%s3312 + $0x48] sm:$0xff]
        %v3323 = vld [vmem:[%s3312 + $0x50] sm:$0xff]
        %v3324 = vld [vmem:[%s3312 + $0x58] sm:$0xff]
        %v3325 = vld [vmem:[%s3312 + $0x60] sm:$0xff]
        %v3326 = vld [vmem:[%s3312 + $0x68] sm:$0xff]
        %v3327 = vld [vmem:[%s3312 + $0x70] sm:$0xff]
        %v3328 = vld [vmem:[%s3312 + $0x78] sm:$0xff]
        %v3345 = vunpack.c.l.b16 %v3313
        %v3346 = vunpack.c.h.b16 %v3313
        %v3347 = vunpack.c.l.b16 %v3314
        %v3348 = vunpack.c.h.b16 %v3314
        %v3349 = vunpack.c.l.b16 %v3315
        %v3350 = vunpack.c.h.b16 %v3315
        %v3351 = vunpack.c.l.b16 %v3316
        %v3352 = vunpack.c.h.b16 %v3316
        %v3353 = vunpack.c.l.b16 %v3317
        %v3354 = vunpack.c.h.b16 %v3317
        %v3355 = vunpack.c.l.b16 %v3318
        %v3356 = vunpack.c.h.b16 %v3318
        %v3357 = vunpack.c.l.b16 %v3319
        %v3358 = vunpack.c.h.b16 %v3319
        %v3359 = vunpack.c.l.b16 %v3320
        %v3360 = vunpack.c.h.b16 %v3320
        %v3361 = vunpack.c.l.b16 %v3321
        %v3362 = vunpack.c.h.b16 %v3321
        %v3363 = vunpack.c.l.b16 %v3322
        %v3364 = vunpack.c.h.b16 %v3322
        %v3365 = vunpack.c.l.b16 %v3323
        %v3366 = vunpack.c.h.b16 %v3323
        %v3367 = vunpack.c.l.b16 %v3324
        %v3368 = vunpack.c.h.b16 %v3324
        %v3369 = vunpack.c.l.b16 %v3325
        %v3370 = vunpack.c.h.b16 %v3325
        %v3371 = vunpack.c.l.b16 %v3326
        %v3372 = vunpack.c.h.b16 %v3326
        %v3373 = vunpack.c.l.b16 %v3327
        %v3374 = vunpack.c.h.b16 %v3327
        %v3375 = vunpack.c.l.b16 %v3328
        %v3376 = vunpack.c.h.b16 %v3328
        %v3377 = vpack.c.b16 %v3347, %v3345
        %v3378 = vpack.c.b16 %v3348, %v3346
        %v3379 = vpack.c.b16 %v3351, %v3349
        %v3380 = vpack.c.b16 %v3352, %v3350
        %v3381 = vpack.c.b16 %v3355, %v3353
        %v3382 = vpack.c.b16 %v3356, %v3354
        %v3383 = vpack.c.b16 %v3359, %v3357
        %v3384 = vpack.c.b16 %v3360, %v3358
        %v3385 = vpack.c.b16 %v3363, %v3361
        %v3386 = vpack.c.b16 %v3364, %v3362
        %v3387 = vpack.c.b16 %v3367, %v3365
        %v3388 = vpack.c.b16 %v3368, %v3366
        %v3389 = vpack.c.b16 %v3371, %v3369
        %v3390 = vpack.c.b16 %v3372, %v3370
        %v3391 = vpack.c.b16 %v3375, %v3373
        %v3392 = vpack.c.b16 %v3376, %v3374
        %3409 = vmatpush.bf16.msra.mxu0 %v3391
        %3410 = vmatpush.bf16.msra.mxu0 %v3389
        %3411 = vmatpush.bf16.msra.mxu0 %v3387
        %3412 = vmatpush.bf16.msra.mxu0 %v3385
        %3413 = vmatpush.bf16.msra.mxu0 %v3383
        %3414 = vmatpush.bf16.msra.mxu0 %v3381
        %3415 = vmatpush.bf16.msra.mxu0 %v3379
        %3416 = vmatpush.bf16.msra.mxu0 %v3377
        %3417 = vmatmul.bf16.gmra.mxu0 %v3311
        %v3418 = vpop.f32.mrf.mxu0
        %v3419 = vadd.f32 0.0, %v3418
        %v3420 = vpop.f32.mrf.mxu0
        %3421 = vdwg.mxu0
        %3422 = vmatpush.bf16.msra.mxu0 %v3392
        %3423 = vmatpush.bf16.msra.mxu0 %v3390
        %3424 = vmatpush.bf16.msra.mxu0 %v3388
        %3425 = vmatpush.bf16.msra.mxu0 %v3386
        %3426 = vmatpush.bf16.msra.mxu0 %v3384
        %3427 = vmatpush.bf16.msra.mxu0 %v3382
        %3428 = vmatpush.bf16.msra.mxu0 %v3380
        %3429 = vmatpush.bf16.msra.mxu0 %v3378
        %3430 = vmatmul.bf16.gmra.mxu0 %v3311
        %v3431 = vpop.f32.mrf.mxu0
        %v3432 = vadd.f32 0.0, %v3431
        %v3433 = vpop.f32.mrf.mxu0
        %3434 = vdwg.mxu0
        %v3435 = vadd.f32 %v3307, %v3419
        %v3436 = vadd.f32 %v3308, %v3432
        %s3437 = scalar_lea.vmem [#allocation4], 11
        %v3438 = vld [vmem:[%s3437] ss:$2 sm:$0xf]
        %v3439 = vpack.c.bf16 %v3438, %v3438
        %s3440 = scalar_lea.vmem [#allocation7], 1408
        %v3441 = vld [vmem:[%s3440] sm:$0xff]
        %v3442 = vld [vmem:[%s3440 + $0x8] sm:$0xff]
        %v3443 = vld [vmem:[%s3440 + $0x10] sm:$0xff]
        %v3444 = vld [vmem:[%s3440 + $0x18] sm:$0xff]
        %v3445 = vld [vmem:[%s3440 + $0x20] sm:$0xff]
        %v3446 = vld [vmem:[%s3440 + $0x28] sm:$0xff]
        %v3447 = vld [vmem:[%s3440 + $0x30] sm:$0xff]
        %v3448 = vld [vmem:[%s3440 + $0x38] sm:$0xff]
        %v3449 = vld [vmem:[%s3440 + $0x40] sm:$0xff]
        %v3450 = vld [vmem:[%s3440 + $0x48] sm:$0xff]
        %v3451 = vld [vmem:[%s3440 + $0x50] sm:$0xff]
        %v3452 = vld [vmem:[%s3440 + $0x58] sm:$0xff]
        %v3453 = vld [vmem:[%s3440 + $0x60] sm:$0xff]
        %v3454 = vld [vmem:[%s3440 + $0x68] sm:$0xff]
        %v3455 = vld [vmem:[%s3440 + $0x70] sm:$0xff]
        %v3456 = vld [vmem:[%s3440 + $0x78] sm:$0xff]
        %v3473 = vunpack.c.l.b16 %v3441
        %v3474 = vunpack.c.h.b16 %v3441
        %v3475 = vunpack.c.l.b16 %v3442
        %v3476 = vunpack.c.h.b16 %v3442
        %v3477 = vunpack.c.l.b16 %v3443
        %v3478 = vunpack.c.h.b16 %v3443
        %v3479 = vunpack.c.l.b16 %v3444
        %v3480 = vunpack.c.h.b16 %v3444
        %v3481 = vunpack.c.l.b16 %v3445
        %v3482 = vunpack.c.h.b16 %v3445
        %v3483 = vunpack.c.l.b16 %v3446
        %v3484 = vunpack.c.h.b16 %v3446
        %v3485 = vunpack.c.l.b16 %v3447
        %v3486 = vunpack.c.h.b16 %v3447
        %v3487 = vunpack.c.l.b16 %v3448
        %v3488 = vunpack.c.h.b16 %v3448
        %v3489 = vunpack.c.l.b16 %v3449
        %v3490 = vunpack.c.h.b16 %v3449
        %v3491 = vunpack.c.l.b16 %v3450
        %v3492 = vunpack.c.h.b16 %v3450
        %v3493 = vunpack.c.l.b16 %v3451
        %v3494 = vunpack.c.h.b16 %v3451
        %v3495 = vunpack.c.l.b16 %v3452
        %v3496 = vunpack.c.h.b16 %v3452
        %v3497 = vunpack.c.l.b16 %v3453
        %v3498 = vunpack.c.h.b16 %v3453
        %v3499 = vunpack.c.l.b16 %v3454
        %v3500 = vunpack.c.h.b16 %v3454
        %v3501 = vunpack.c.l.b16 %v3455
        %v3502 = vunpack.c.h.b16 %v3455
        %v3503 = vunpack.c.l.b16 %v3456
        %v3504 = vunpack.c.h.b16 %v3456
        %v3505 = vpack.c.b16 %v3475, %v3473
        %v3506 = vpack.c.b16 %v3476, %v3474
        %v3507 = vpack.c.b16 %v3479, %v3477
        %v3508 = vpack.c.b16 %v3480, %v3478
        %v3509 = vpack.c.b16 %v3483, %v3481
        %v3510 = vpack.c.b16 %v3484, %v3482
        %v3511 = vpack.c.b16 %v3487, %v3485
        %v3512 = vpack.c.b16 %v3488, %v3486
        %v3513 = vpack.c.b16 %v3491, %v3489
        %v3514 = vpack.c.b16 %v3492, %v3490
        %v3515 = vpack.c.b16 %v3495, %v3493
        %v3516 = vpack.c.b16 %v3496, %v3494
        %v3517 = vpack.c.b16 %v3499, %v3497
        %v3518 = vpack.c.b16 %v3500, %v3498
        %v3519 = vpack.c.b16 %v3503, %v3501
        %v3520 = vpack.c.b16 %v3504, %v3502
        %3537 = vmatpush.bf16.msra.mxu0 %v3519
        %3538 = vmatpush.bf16.msra.mxu0 %v3517
        %3539 = vmatpush.bf16.msra.mxu0 %v3515
        %3540 = vmatpush.bf16.msra.mxu0 %v3513
        %3541 = vmatpush.bf16.msra.mxu0 %v3511
        %3542 = vmatpush.bf16.msra.mxu0 %v3509
        %3543 = vmatpush.bf16.msra.mxu0 %v3507
        %3544 = vmatpush.bf16.msra.mxu0 %v3505
        %3545 = vmatmul.bf16.gmra.mxu0 %v3439
        %v3546 = vpop.f32.mrf.mxu0
        %v3547 = vadd.f32 0.0, %v3546
        %v3548 = vpop.f32.mrf.mxu0
        %3549 = vdwg.mxu0
        %3550 = vmatpush.bf16.msra.mxu0 %v3520
        %3551 = vmatpush.bf16.msra.mxu0 %v3518
        %3552 = vmatpush.bf16.msra.mxu0 %v3516
        %3553 = vmatpush.bf16.msra.mxu0 %v3514
        %3554 = vmatpush.bf16.msra.mxu0 %v3512
        %3555 = vmatpush.bf16.msra.mxu0 %v3510
        %3556 = vmatpush.bf16.msra.mxu0 %v3508
        %3557 = vmatpush.bf16.msra.mxu0 %v3506
        %3558 = vmatmul.bf16.gmra.mxu0 %v3439
        %v3559 = vpop.f32.mrf.mxu0
        %v3560 = vadd.f32 0.0, %v3559
        %v3561 = vpop.f32.mrf.mxu0
        %3562 = vdwg.mxu0
        %v3563 = vadd.f32 %v3435, %v3547
        %v3564 = vadd.f32 %v3436, %v3560
        %s3565 = scalar_lea.vmem [#allocation4], 12
        %v3566 = vld [vmem:[%s3565] ss:$2 sm:$0xf]
        %v3567 = vpack.c.bf16 %v3566, %v3566
        %s3568 = scalar_lea.vmem [#allocation7], 1536
        %v3569 = vld [vmem:[%s3568] sm:$0xff]
        %v3570 = vld [vmem:[%s3568 + $0x8] sm:$0xff]
        %v3571 = vld [vmem:[%s3568 + $0x10] sm:$0xff]
        %v3572 = vld [vmem:[%s3568 + $0x18] sm:$0xff]
        %v3573 = vld [vmem:[%s3568 + $0x20] sm:$0xff]
        %v3574 = vld [vmem:[%s3568 + $0x28] sm:$0xff]
        %v3575 = vld [vmem:[%s3568 + $0x30] sm:$0xff]
        %v3576 = vld [vmem:[%s3568 + $0x38] sm:$0xff]
        %v3577 = vld [vmem:[%s3568 + $0x40] sm:$0xff]
        %v3578 = vld [vmem:[%s3568 + $0x48] sm:$0xff]
        %v3579 = vld [vmem:[%s3568 + $0x50] sm:$0xff]
        %v3580 = vld [vmem:[%s3568 + $0x58] sm:$0xff]
        %v3581 = vld [vmem:[%s3568 + $0x60] sm:$0xff]
        %v3582 = vld [vmem:[%s3568 + $0x68] sm:$0xff]
        %v3583 = vld [vmem:[%s3568 + $0x70] sm:$0xff]
        %v3584 = vld [vmem:[%s3568 + $0x78] sm:$0xff]
        %v3601 = vunpack.c.l.b16 %v3569
        %v3602 = vunpack.c.h.b16 %v3569
        %v3603 = vunpack.c.l.b16 %v3570
        %v3604 = vunpack.c.h.b16 %v3570
        %v3605 = vunpack.c.l.b16 %v3571
        %v3606 = vunpack.c.h.b16 %v3571
        %v3607 = vunpack.c.l.b16 %v3572
        %v3608 = vunpack.c.h.b16 %v3572
        %v3609 = vunpack.c.l.b16 %v3573
        %v3610 = vunpack.c.h.b16 %v3573
        %v3611 = vunpack.c.l.b16 %v3574
        %v3612 = vunpack.c.h.b16 %v3574
        %v3613 = vunpack.c.l.b16 %v3575
        %v3614 = vunpack.c.h.b16 %v3575
        %v3615 = vunpack.c.l.b16 %v3576
        %v3616 = vunpack.c.h.b16 %v3576
        %v3617 = vunpack.c.l.b16 %v3577
        %v3618 = vunpack.c.h.b16 %v3577
        %v3619 = vunpack.c.l.b16 %v3578
        %v3620 = vunpack.c.h.b16 %v3578
        %v3621 = vunpack.c.l.b16 %v3579
        %v3622 = vunpack.c.h.b16 %v3579
        %v3623 = vunpack.c.l.b16 %v3580
        %v3624 = vunpack.c.h.b16 %v3580
        %v3625 = vunpack.c.l.b16 %v3581
        %v3626 = vunpack.c.h.b16 %v3581
        %v3627 = vunpack.c.l.b16 %v3582
        %v3628 = vunpack.c.h.b16 %v3582
        %v3629 = vunpack.c.l.b16 %v3583
        %v3630 = vunpack.c.h.b16 %v3583
        %v3631 = vunpack.c.l.b16 %v3584
        %v3632 = vunpack.c.h.b16 %v3584
        %v3633 = vpack.c.b16 %v3603, %v3601
        %v3634 = vpack.c.b16 %v3604, %v3602
        %v3635 = vpack.c.b16 %v3607, %v3605
        %v3636 = vpack.c.b16 %v3608, %v3606
        %v3637 = vpack.c.b16 %v3611, %v3609
        %v3638 = vpack.c.b16 %v3612, %v3610
        %v3639 = vpack.c.b16 %v3615, %v3613
        %v3640 = vpack.c.b16 %v3616, %v3614
        %v3641 = vpack.c.b16 %v3619, %v3617
        %v3642 = vpack.c.b16 %v3620, %v3618
        %v3643 = vpack.c.b16 %v3623, %v3621
        %v3644 = vpack.c.b16 %v3624, %v3622
        %v3645 = vpack.c.b16 %v3627, %v3625
        %v3646 = vpack.c.b16 %v3628, %v3626
        %v3647 = vpack.c.b16 %v3631, %v3629
        %v3648 = vpack.c.b16 %v3632, %v3630
        %3665 = vmatpush.bf16.msra.mxu0 %v3647
        %3666 = vmatpush.bf16.msra.mxu0 %v3645
        %3667 = vmatpush.bf16.msra.mxu0 %v3643
        %3668 = vmatpush.bf16.msra.mxu0 %v3641
        %3669 = vmatpush.bf16.msra.mxu0 %v3639
        %3670 = vmatpush.bf16.msra.mxu0 %v3637
        %3671 = vmatpush.bf16.msra.mxu0 %v3635
        %3672 = vmatpush.bf16.msra.mxu0 %v3633
        %3673 = vmatmul.bf16.gmra.mxu0 %v3567
        %v3674 = vpop.f32.mrf.mxu0
        %v3675 = vadd.f32 0.0, %v3674
        %v3676 = vpop.f32.mrf.mxu0
        %3677 = vdwg.mxu0
        %3678 = vmatpush.bf16.msra.mxu0 %v3648
        %3679 = vmatpush.bf16.msra.mxu0 %v3646
        %3680 = vmatpush.bf16.msra.mxu0 %v3644
        %3681 = vmatpush.bf16.msra.mxu0 %v3642
        %3682 = vmatpush.bf16.msra.mxu0 %v3640
        %3683 = vmatpush.bf16.msra.mxu0 %v3638
        %3684 = vmatpush.bf16.msra.mxu0 %v3636
        %3685 = vmatpush.bf16.msra.mxu0 %v3634
        %3686 = vmatmul.bf16.gmra.mxu0 %v3567
        %v3687 = vpop.f32.mrf.mxu0
        %v3688 = vadd.f32 0.0, %v3687
        %v3689 = vpop.f32.mrf.mxu0
        %3690 = vdwg.mxu0
        %v3691 = vadd.f32 %v3563, %v3675
        %v3692 = vadd.f32 %v3564, %v3688
        %s3693 = scalar_lea.vmem [#allocation4], 13
        %v3694 = vld [vmem:[%s3693] ss:$2 sm:$0xf]
        %v3695 = vpack.c.bf16 %v3694, %v3694
        %s3696 = scalar_lea.vmem [#allocation7], 1664
        %v3697 = vld [vmem:[%s3696] sm:$0xff]
        %v3698 = vld [vmem:[%s3696 + $0x8] sm:$0xff]
        %v3699 = vld [vmem:[%s3696 + $0x10] sm:$0xff]
        %v3700 = vld [vmem:[%s3696 + $0x18] sm:$0xff]
        %v3701 = vld [vmem:[%s3696 + $0x20] sm:$0xff]
        %v3702 = vld [vmem:[%s3696 + $0x28] sm:$0xff]
        %v3703 = vld [vmem:[%s3696 + $0x30] sm:$0xff]
        %v3704 = vld [vmem:[%s3696 + $0x38] sm:$0xff]
        %v3705 = vld [vmem:[%s3696 + $0x40] sm:$0xff]
        %v3706 = vld [vmem:[%s3696 + $0x48] sm:$0xff]
        %v3707 = vld [vmem:[%s3696 + $0x50] sm:$0xff]
        %v3708 = vld [vmem:[%s3696 + $0x58] sm:$0xff]
        %v3709 = vld [vmem:[%s3696 + $0x60] sm:$0xff]
        %v3710 = vld [vmem:[%s3696 + $0x68] sm:$0xff]
        %v3711 = vld [vmem:[%s3696 + $0x70] sm:$0xff]
        %v3712 = vld [vmem:[%s3696 + $0x78] sm:$0xff]
        %v3729 = vunpack.c.l.b16 %v3697
        %v3730 = vunpack.c.h.b16 %v3697
        %v3731 = vunpack.c.l.b16 %v3698
        %v3732 = vunpack.c.h.b16 %v3698
        %v3733 = vunpack.c.l.b16 %v3699
        %v3734 = vunpack.c.h.b16 %v3699
        %v3735 = vunpack.c.l.b16 %v3700
        %v3736 = vunpack.c.h.b16 %v3700
        %v3737 = vunpack.c.l.b16 %v3701
        %v3738 = vunpack.c.h.b16 %v3701
        %v3739 = vunpack.c.l.b16 %v3702
        %v3740 = vunpack.c.h.b16 %v3702
        %v3741 = vunpack.c.l.b16 %v3703
        %v3742 = vunpack.c.h.b16 %v3703
        %v3743 = vunpack.c.l.b16 %v3704
        %v3744 = vunpack.c.h.b16 %v3704
        %v3745 = vunpack.c.l.b16 %v3705
        %v3746 = vunpack.c.h.b16 %v3705
        %v3747 = vunpack.c.l.b16 %v3706
        %v3748 = vunpack.c.h.b16 %v3706
        %v3749 = vunpack.c.l.b16 %v3707
        %v3750 = vunpack.c.h.b16 %v3707
        %v3751 = vunpack.c.l.b16 %v3708
        %v3752 = vunpack.c.h.b16 %v3708
        %v3753 = vunpack.c.l.b16 %v3709
        %v3754 = vunpack.c.h.b16 %v3709
        %v3755 = vunpack.c.l.b16 %v3710
        %v3756 = vunpack.c.h.b16 %v3710
        %v3757 = vunpack.c.l.b16 %v3711
        %v3758 = vunpack.c.h.b16 %v3711
        %v3759 = vunpack.c.l.b16 %v3712
        %v3760 = vunpack.c.h.b16 %v3712
        %v3761 = vpack.c.b16 %v3731, %v3729
        %v3762 = vpack.c.b16 %v3732, %v3730
        %v3763 = vpack.c.b16 %v3735, %v3733
        %v3764 = vpack.c.b16 %v3736, %v3734
        %v3765 = vpack.c.b16 %v3739, %v3737
        %v3766 = vpack.c.b16 %v3740, %v3738
        %v3767 = vpack.c.b16 %v3743, %v3741
        %v3768 = vpack.c.b16 %v3744, %v3742
        %v3769 = vpack.c.b16 %v3747, %v3745
        %v3770 = vpack.c.b16 %v3748, %v3746
        %v3771 = vpack.c.b16 %v3751, %v3749
        %v3772 = vpack.c.b16 %v3752, %v3750
        %v3773 = vpack.c.b16 %v3755, %v3753
        %v3774 = vpack.c.b16 %v3756, %v3754
        %v3775 = vpack.c.b16 %v3759, %v3757
        %v3776 = vpack.c.b16 %v3760, %v3758
        %3793 = vmatpush.bf16.msra.mxu0 %v3775
        %3794 = vmatpush.bf16.msra.mxu0 %v3773
        %3795 = vmatpush.bf16.msra.mxu0 %v3771
        %3796 = vmatpush.bf16.msra.mxu0 %v3769
        %3797 = vmatpush.bf16.msra.mxu0 %v3767
        %3798 = vmatpush.bf16.msra.mxu0 %v3765
        %3799 = vmatpush.bf16.msra.mxu0 %v3763
        %3800 = vmatpush.bf16.msra.mxu0 %v3761
        %3801 = vmatmul.bf16.gmra.mxu0 %v3695
        %v3802 = vpop.f32.mrf.mxu0
        %v3803 = vadd.f32 0.0, %v3802
        %v3804 = vpop.f32.mrf.mxu0
        %3805 = vdwg.mxu0
        %3806 = vmatpush.bf16.msra.mxu0 %v3776
        %3807 = vmatpush.bf16.msra.mxu0 %v3774
        %3808 = vmatpush.bf16.msra.mxu0 %v3772
        %3809 = vmatpush.bf16.msra.mxu0 %v3770
        %3810 = vmatpush.bf16.msra.mxu0 %v3768
        %3811 = vmatpush.bf16.msra.mxu0 %v3766
        %3812 = vmatpush.bf16.msra.mxu0 %v3764
        %3813 = vmatpush.bf16.msra.mxu0 %v3762
        %3814 = vmatmul.bf16.gmra.mxu0 %v3695
        %v3815 = vpop.f32.mrf.mxu0
        %v3816 = vadd.f32 0.0, %v3815
        %v3817 = vpop.f32.mrf.mxu0
        %3818 = vdwg.mxu0
        %v3819 = vadd.f32 %v3691, %v3803
        %v3820 = vadd.f32 %v3692, %v3816
        %s3821 = scalar_lea.vmem [#allocation4], 14
        %v3822 = vld [vmem:[%s3821] ss:$2 sm:$0xf]
        %v3823 = vpack.c.bf16 %v3822, %v3822
        %s3824 = scalar_lea.vmem [#allocation7], 1792
        %v3825 = vld [vmem:[%s3824] sm:$0xff]
        %v3826 = vld [vmem:[%s3824 + $0x8] sm:$0xff]
        %v3827 = vld [vmem:[%s3824 + $0x10] sm:$0xff]
        %v3828 = vld [vmem:[%s3824 + $0x18] sm:$0xff]
        %v3829 = vld [vmem:[%s3824 + $0x20] sm:$0xff]
        %v3830 = vld [vmem:[%s3824 + $0x28] sm:$0xff]
        %v3831 = vld [vmem:[%s3824 + $0x30] sm:$0xff]
        %v3832 = vld [vmem:[%s3824 + $0x38] sm:$0xff]
        %v3833 = vld [vmem:[%s3824 + $0x40] sm:$0xff]
        %v3834 = vld [vmem:[%s3824 + $0x48] sm:$0xff]
        %v3835 = vld [vmem:[%s3824 + $0x50] sm:$0xff]
        %v3836 = vld [vmem:[%s3824 + $0x58] sm:$0xff]
        %v3837 = vld [vmem:[%s3824 + $0x60] sm:$0xff]
        %v3838 = vld [vmem:[%s3824 + $0x68] sm:$0xff]
        %v3839 = vld [vmem:[%s3824 + $0x70] sm:$0xff]
        %v3840 = vld [vmem:[%s3824 + $0x78] sm:$0xff]
        %v3857 = vunpack.c.l.b16 %v3825
        %v3858 = vunpack.c.h.b16 %v3825
        %v3859 = vunpack.c.l.b16 %v3826
        %v3860 = vunpack.c.h.b16 %v3826
        %v3861 = vunpack.c.l.b16 %v3827
        %v3862 = vunpack.c.h.b16 %v3827
        %v3863 = vunpack.c.l.b16 %v3828
        %v3864 = vunpack.c.h.b16 %v3828
        %v3865 = vunpack.c.l.b16 %v3829
        %v3866 = vunpack.c.h.b16 %v3829
        %v3867 = vunpack.c.l.b16 %v3830
        %v3868 = vunpack.c.h.b16 %v3830
        %v3869 = vunpack.c.l.b16 %v3831
        %v3870 = vunpack.c.h.b16 %v3831
        %v3871 = vunpack.c.l.b16 %v3832
        %v3872 = vunpack.c.h.b16 %v3832
        %v3873 = vunpack.c.l.b16 %v3833
        %v3874 = vunpack.c.h.b16 %v3833
        %v3875 = vunpack.c.l.b16 %v3834
        %v3876 = vunpack.c.h.b16 %v3834
        %v3877 = vunpack.c.l.b16 %v3835
        %v3878 = vunpack.c.h.b16 %v3835
        %v3879 = vunpack.c.l.b16 %v3836
        %v3880 = vunpack.c.h.b16 %v3836
        %v3881 = vunpack.c.l.b16 %v3837
        %v3882 = vunpack.c.h.b16 %v3837
        %v3883 = vunpack.c.l.b16 %v3838
        %v3884 = vunpack.c.h.b16 %v3838
        %v3885 = vunpack.c.l.b16 %v3839
        %v3886 = vunpack.c.h.b16 %v3839
        %v3887 = vunpack.c.l.b16 %v3840
        %v3888 = vunpack.c.h.b16 %v3840
        %v3889 = vpack.c.b16 %v3859, %v3857
        %v3890 = vpack.c.b16 %v3860, %v3858
        %v3891 = vpack.c.b16 %v3863, %v3861
        %v3892 = vpack.c.b16 %v3864, %v3862
        %v3893 = vpack.c.b16 %v3867, %v3865
        %v3894 = vpack.c.b16 %v3868, %v3866
        %v3895 = vpack.c.b16 %v3871, %v3869
        %v3896 = vpack.c.b16 %v3872, %v3870
        %v3897 = vpack.c.b16 %v3875, %v3873
        %v3898 = vpack.c.b16 %v3876, %v3874
        %v3899 = vpack.c.b16 %v3879, %v3877
        %v3900 = vpack.c.b16 %v3880, %v3878
        %v3901 = vpack.c.b16 %v3883, %v3881
        %v3902 = vpack.c.b16 %v3884, %v3882
        %v3903 = vpack.c.b16 %v3887, %v3885
        %v3904 = vpack.c.b16 %v3888, %v3886
        %3921 = vmatpush.bf16.msra.mxu0 %v3903
        %3922 = vmatpush.bf16.msra.mxu0 %v3901
        %3923 = vmatpush.bf16.msra.mxu0 %v3899
        %3924 = vmatpush.bf16.msra.mxu0 %v3897
        %3925 = vmatpush.bf16.msra.mxu0 %v3895
        %3926 = vmatpush.bf16.msra.mxu0 %v3893
        %3927 = vmatpush.bf16.msra.mxu0 %v3891
        %3928 = vmatpush.bf16.msra.mxu0 %v3889
        %3929 = vmatmul.bf16.gmra.mxu0 %v3823
        %v3930 = vpop.f32.mrf.mxu0
        %v3931 = vadd.f32 0.0, %v3930
        %v3932 = vpop.f32.mrf.mxu0
        %3933 = vdwg.mxu0
        %3934 = vmatpush.bf16.msra.mxu0 %v3904
        %3935 = vmatpush.bf16.msra.mxu0 %v3902
        %3936 = vmatpush.bf16.msra.mxu0 %v3900
        %3937 = vmatpush.bf16.msra.mxu0 %v3898
        %3938 = vmatpush.bf16.msra.mxu0 %v3896
        %3939 = vmatpush.bf16.msra.mxu0 %v3894
        %3940 = vmatpush.bf16.msra.mxu0 %v3892
        %3941 = vmatpush.bf16.msra.mxu0 %v3890
        %3942 = vmatmul.bf16.gmra.mxu0 %v3823
        %v3943 = vpop.f32.mrf.mxu0
        %v3944 = vadd.f32 0.0, %v3943
        %v3945 = vpop.f32.mrf.mxu0
        %3946 = vdwg.mxu0
        %v3947 = vadd.f32 %v3819, %v3931
        %v3948 = vadd.f32 %v3820, %v3944
        %v3949 = vld [vmem:[%s10] sm:$0x3]
        %v3951 = vperm.slane %v3949, 0
        %v3952 = vperm.slane %v3949, 1
        %v3955 = vadd.f32 %v3947, %v3951
        %v3956 = vadd.f32 %v3948, %v3952
        %v3957 = vmax.f32 %v3955, 0.0
        %v3958 = vmax.f32 %v3956, 0.0
        %v3961 = vrot.slane %v3957, 4
        %v3962 = vrot.slane %v3958, 4
        %3965 = vst [vmem:[#allocation5] sm:$0xf0] %v3961
        %3966 = vst [vmem:[#allocation5 + $0x8] sm:$0xf0] %v3962
        %v3967 = vld [vmem:[#allocation5] sm:$0xf]
        %v3968 = vld [vmem:[#allocation5 + $0x8] sm:$0xf]
        %v3969 = vpack.c.bf16 %v3967, %v3967
        %v3970 = vpack.c.bf16 %v3968, %v3968
        %v3971 = vld [vmem:[%s11] sm:$0xf]
        %v3972 = vld [vmem:[%s11 + $0x4] sm:$0xf]
        %v3973 = vld [vmem:[%s11 + $0x8] sm:$0xf]
        %v3974 = vld [vmem:[%s11 + $0xc] sm:$0xf]
        %v3975 = vld [vmem:[%s11 + $0x10] sm:$0xf]
        %v3976 = vld [vmem:[%s11 + $0x14] sm:$0xf]
        %v3977 = vld [vmem:[%s11 + $0x18] sm:$0xf]
        %v3978 = vld [vmem:[%s11 + $0x1c] sm:$0xf]
        %v3979 = vld [vmem:[%s11 + $0x20] sm:$0xf]
        %v3980 = vld [vmem:[%s11 + $0x24] sm:$0xf]
        %v3981 = vld [vmem:[%s11 + $0x28] sm:$0xf]
        %v3982 = vld [vmem:[%s11 + $0x2c] sm:$0xf]
        %v3983 = vld [vmem:[%s11 + $0x30] sm:$0xf]
        %v3984 = vld [vmem:[%s11 + $0x34] sm:$0xf]
        %v3985 = vld [vmem:[%s11 + $0x38] sm:$0xf]
        %v3986 = vld [vmem:[%s11 + $0x3c] sm:$0xf]
        %v3987 = vld [vmem:[%s11 + $0x40] sm:$0xf]
        %v3988 = vld [vmem:[%s11 + $0x44] sm:$0xf]
        %v3989 = vld [vmem:[%s11 + $0x48] sm:$0xf]
        %v3990 = vld [vmem:[%s11 + $0x4c] sm:$0xf]
        %v3991 = vld [vmem:[%s11 + $0x50] sm:$0xf]
        %v3992 = vld [vmem:[%s11 + $0x54] sm:$0xf]
        %v3993 = vld [vmem:[%s11 + $0x58] sm:$0xf]
        %v3994 = vld [vmem:[%s11 + $0x5c] sm:$0xf]
        %v3995 = vld [vmem:[%s11 + $0x60] sm:$0xf]
        %v3996 = vld [vmem:[%s11 + $0x64] sm:$0xf]
        %v3997 = vld [vmem:[%s11 + $0x68] sm:$0xf]
        %v3998 = vld [vmem:[%s11 + $0x6c] sm:$0xf]
        %v3999 = vld [vmem:[%s11 + $0x70] sm:$0xf]
        %v4000 = vld [vmem:[%s11 + $0x74] sm:$0xf]
        %v4001 = vld [vmem:[%s11 + $0x78] sm:$0xf]
        %v4002 = vld [vmem:[%s11 + $0x7c] sm:$0xf]
        %v4003 = vld [vmem:[#allocation5] sm:$0x1e]
        %v4004 = vld [vmem:[#allocation5 + $0x8] sm:$0x1e]
        %v4005 = vpack.c.bf16 %v4003, %v4003
        %v4006 = vpack.c.bf16 %v4004, %v4004
        %s4007 = scalar_lea.vmem %s11, 128
        %v4008 = vld [vmem:[%s4007] sm:$0xf]
        %v4009 = vld [vmem:[%s4007 + $0x4] sm:$0xf]
        %v4010 = vld [vmem:[%s4007 + $0x8] sm:$0xf]
        %v4011 = vld [vmem:[%s4007 + $0xc] sm:$0xf]
        %v4012 = vld [vmem:[%s4007 + $0x10] sm:$0xf]
        %v4013 = vld [vmem:[%s4007 + $0x14] sm:$0xf]
        %v4014 = vld [vmem:[%s4007 + $0x18] sm:$0xf]
        %v4015 = vld [vmem:[%s4007 + $0x1c] sm:$0xf]
        %v4016 = vld [vmem:[%s4007 + $0x20] sm:$0xf]
        %v4017 = vld [vmem:[%s4007 + $0x24] sm:$0xf]
        %v4018 = vld [vmem:[%s4007 + $0x28] sm:$0xf]
        %v4019 = vld [vmem:[%s4007 + $0x2c] sm:$0xf]
        %v4020 = vld [vmem:[%s4007 + $0x30] sm:$0xf]
        %v4021 = vld [vmem:[%s4007 + $0x34] sm:$0xf]
        %v4022 = vld [vmem:[%s4007 + $0x38] sm:$0xf]
        %v4023 = vld [vmem:[%s4007 + $0x3c] sm:$0xf]
        %v4024 = vld [vmem:[%s4007 + $0x40] sm:$0xf]
        %v4025 = vld [vmem:[%s4007 + $0x44] sm:$0xf]
        %v4026 = vld [vmem:[%s4007 + $0x48] sm:$0xf]
        %v4027 = vld [vmem:[%s4007 + $0x4c] sm:$0xf]
        %v4028 = vld [vmem:[%s4007 + $0x50] sm:$0xf]
        %v4029 = vld [vmem:[%s4007 + $0x54] sm:$0xf]
        %v4030 = vld [vmem:[%s4007 + $0x58] sm:$0xf]
        %v4031 = vld [vmem:[%s4007 + $0x5c] sm:$0xf]
        %v4032 = vld [vmem:[%s4007 + $0x60] sm:$0xf]
        %v4033 = vld [vmem:[%s4007 + $0x64] sm:$0xf]
        %v4034 = vld [vmem:[%s4007 + $0x68] sm:$0xf]
        %v4035 = vld [vmem:[%s4007 + $0x6c] sm:$0xf]
        %v4036 = vld [vmem:[%s4007 + $0x70] sm:$0xf]
        %v4037 = vld [vmem:[%s4007 + $0x74] sm:$0xf]
        %v4038 = vld [vmem:[%s4007 + $0x78] sm:$0xf]
        %v4039 = vld [vmem:[%s4007 + $0x7c] sm:$0xf]
        %v4041 = vshrl.u32 %v4005, 16
        %v4043 = vshll.u32 %v4005, 16
        %v4045 = vrot.slane %v4043, 1
        %v4046 = vor.u32 %v4041, %v4045
        %v4048 = vshrl.u32 %v4006, 16
        %v4050 = vshll.u32 %v4006, 16
        %v4052 = vrot.slane %v4050, 1
        %v4053 = vor.u32 %v4048, %v4052
        %v4088 = vunpack.c.l.b16 %v4008
        %v4089 = vunpack.c.l.b16 %v4009
        %v4090 = vunpack.c.l.b16 %v4010
        %v4091 = vunpack.c.l.b16 %v4011
        %v4092 = vunpack.c.l.b16 %v4012
        %v4093 = vunpack.c.l.b16 %v4013
        %v4094 = vunpack.c.l.b16 %v4014
        %v4095 = vunpack.c.l.b16 %v4015
        %v4096 = vunpack.c.l.b16 %v4016
        %v4097 = vunpack.c.l.b16 %v4017
        %v4098 = vunpack.c.l.b16 %v4018
        %v4099 = vunpack.c.l.b16 %v4019
        %v4100 = vunpack.c.l.b16 %v4020
        %v4101 = vunpack.c.l.b16 %v4021
        %v4102 = vunpack.c.l.b16 %v4022
        %v4103 = vunpack.c.l.b16 %v4023
        %v4104 = vunpack.c.l.b16 %v4024
        %v4105 = vunpack.c.l.b16 %v4025
        %v4106 = vunpack.c.l.b16 %v4026
        %v4107 = vunpack.c.l.b16 %v4027
        %v4108 = vunpack.c.l.b16 %v4028
        %v4109 = vunpack.c.l.b16 %v4029
        %v4110 = vunpack.c.l.b16 %v4030
        %v4111 = vunpack.c.l.b16 %v4031
        %v4112 = vunpack.c.l.b16 %v4032
        %v4113 = vunpack.c.l.b16 %v4033
        %v4114 = vunpack.c.l.b16 %v4034
        %v4115 = vunpack.c.l.b16 %v4035
        %v4116 = vunpack.c.l.b16 %v4036
        %v4117 = vunpack.c.l.b16 %v4037
        %v4118 = vunpack.c.l.b16 %v4038
        %v4119 = vunpack.c.l.b16 %v4039
        %v4120 = vpack.c.b16 %v4089, %v4088
        %v4121 = vpack.c.b16 %v4091, %v4090
        %v4122 = vpack.c.b16 %v4093, %v4092
        %v4123 = vpack.c.b16 %v4095, %v4094
        %v4124 = vpack.c.b16 %v4097, %v4096
        %v4125 = vpack.c.b16 %v4099, %v4098
        %v4126 = vpack.c.b16 %v4101, %v4100
        %v4127 = vpack.c.b16 %v4103, %v4102
        %v4128 = vpack.c.b16 %v4105, %v4104
        %v4129 = vpack.c.b16 %v4107, %v4106
        %v4130 = vpack.c.b16 %v4109, %v4108
        %v4131 = vpack.c.b16 %v4111, %v4110
        %v4132 = vpack.c.b16 %v4113, %v4112
        %v4133 = vpack.c.b16 %v4115, %v4114
        %v4134 = vpack.c.b16 %v4117, %v4116
        %v4135 = vpack.c.b16 %v4119, %v4118
        %4152 = vmatpush.bf16.msra.mxu0 %v4127
        %4153 = vmatpush.bf16.msra.mxu0 %v4126
        %4154 = vmatpush.bf16.msra.mxu0 %v4125
        %4155 = vmatpush.bf16.msra.mxu0 %v4124
        %4156 = vmatpush.bf16.msra.mxu0 %v4123
        %4157 = vmatpush.bf16.msra.mxu0 %v4122
        %4158 = vmatpush.bf16.msra.mxu0 %v4121
        %4159 = vmatpush.bf16.msra.mxu0 %v4120
        %4160 = vmatmul.bf16.gmra.mxu0 %v4046
        %v4161 = vpop.f32.mrf.mxu0
        %v4162 = vadd.f32 0.0, %v4161
        %v4163 = vpop.f32.mrf.mxu0
        %4164 = vdwg.mxu0
        %4165 = vmatpush.bf16.msra.mxu0 %v4135
        %4166 = vmatpush.bf16.msra.mxu0 %v4134
        %4167 = vmatpush.bf16.msra.mxu0 %v4133
        %4168 = vmatpush.bf16.msra.mxu0 %v4132
        %4169 = vmatpush.bf16.msra.mxu0 %v4131
        %4170 = vmatpush.bf16.msra.mxu0 %v4130
        %4171 = vmatpush.bf16.msra.mxu0 %v4129
        %4172 = vmatpush.bf16.msra.mxu0 %v4128
        %4173 = vmatmul.bf16.gmra.mxu0 %v4053
        %v4174 = vpop.f32.mrf.mxu0
        %v4175 = vadd.f32 %v4162, %v4174
        %v4176 = vpop.f32.mrf.mxu0
        %4177 = vdwg.mxu0
        %v4210 = vunpack.c.l.b16 %v3971
        %v4211 = vunpack.c.l.b16 %v3972
        %v4212 = vunpack.c.l.b16 %v3973
        %v4213 = vunpack.c.l.b16 %v3974
        %v4214 = vunpack.c.l.b16 %v3975
        %v4215 = vunpack.c.l.b16 %v3976
        %v4216 = vunpack.c.l.b16 %v3977
        %v4217 = vunpack.c.l.b16 %v3978
        %v4218 = vunpack.c.l.b16 %v3979
        %v4219 = vunpack.c.l.b16 %v3980
        %v4220 = vunpack.c.l.b16 %v3981
        %v4221 = vunpack.c.l.b16 %v3982
        %v4222 = vunpack.c.l.b16 %v3983
        %v4223 = vunpack.c.l.b16 %v3984
        %v4224 = vunpack.c.l.b16 %v3985
        %v4225 = vunpack.c.l.b16 %v3986
        %v4226 = vunpack.c.l.b16 %v3987
        %v4227 = vunpack.c.l.b16 %v3988
        %v4228 = vunpack.c.l.b16 %v3989
        %v4229 = vunpack.c.l.b16 %v3990
        %v4230 = vunpack.c.l.b16 %v3991
        %v4231 = vunpack.c.l.b16 %v3992
        %v4232 = vunpack.c.l.b16 %v3993
        %v4233 = vunpack.c.l.b16 %v3994
        %v4234 = vunpack.c.l.b16 %v3995
        %v4235 = vunpack.c.l.b16 %v3996
        %v4236 = vunpack.c.l.b16 %v3997
        %v4237 = vunpack.c.l.b16 %v3998
        %v4238 = vunpack.c.l.b16 %v3999
        %v4239 = vunpack.c.l.b16 %v4000
        %v4240 = vunpack.c.l.b16 %v4001
        %v4241 = vunpack.c.l.b16 %v4002
        %v4242 = vpack.c.b16 %v4211, %v4210
        %v4243 = vpack.c.b16 %v4213, %v4212
        %v4244 = vpack.c.b16 %v4215, %v4214
        %v4245 = vpack.c.b16 %v4217, %v4216
        %v4246 = vpack.c.b16 %v4219, %v4218
        %v4247 = vpack.c.b16 %v4221, %v4220
        %v4248 = vpack.c.b16 %v4223, %v4222
        %v4249 = vpack.c.b16 %v4225, %v4224
        %v4250 = vpack.c.b16 %v4227, %v4226
        %v4251 = vpack.c.b16 %v4229, %v4228
        %v4252 = vpack.c.b16 %v4231, %v4230
        %v4253 = vpack.c.b16 %v4233, %v4232
        %v4254 = vpack.c.b16 %v4235, %v4234
        %v4255 = vpack.c.b16 %v4237, %v4236
        %v4256 = vpack.c.b16 %v4239, %v4238
        %v4257 = vpack.c.b16 %v4241, %v4240
        %4274 = vmatpush.bf16.msra.mxu0 %v4249
        %4275 = vmatpush.bf16.msra.mxu0 %v4248
        %4276 = vmatpush.bf16.msra.mxu0 %v4247
        %4277 = vmatpush.bf16.msra.mxu0 %v4246
        %4278 = vmatpush.bf16.msra.mxu0 %v4245
        %4279 = vmatpush.bf16.msra.mxu0 %v4244
        %4280 = vmatpush.bf16.msra.mxu0 %v4243
        %4281 = vmatpush.bf16.msra.mxu0 %v4242
        %4282 = vmatmul.bf16.gmra.mxu0 %v3969
        %v4283 = vpop.f32.mrf.mxu0
        %v4284 = vadd.f32 %v4175, %v4283
        %v4285 = vpop.f32.mrf.mxu0
        %4286 = vdwg.mxu0
        %4287 = vmatpush.bf16.msra.mxu0 %v4257
        %4288 = vmatpush.bf16.msra.mxu0 %v4256
        %4289 = vmatpush.bf16.msra.mxu0 %v4255
        %4290 = vmatpush.bf16.msra.mxu0 %v4254
        %4291 = vmatpush.bf16.msra.mxu0 %v4253
        %4292 = vmatpush.bf16.msra.mxu0 %v4252
        %4293 = vmatpush.bf16.msra.mxu0 %v4251
        %4294 = vmatpush.bf16.msra.mxu0 %v4250
        %4295 = vmatmul.bf16.gmra.mxu0 %v3970
        %v4296 = vpop.f32.mrf.mxu0
        %v4297 = vadd.f32 %v4284, %v4296
        %v4298 = vpop.f32.mrf.mxu0
        %4299 = vdwg.mxu0
        %v4300 = vld [vmem:[#allocation5] sm:$0x3c]
        %v4301 = vld [vmem:[#allocation5 + $0x8] sm:$0x3c]
        %v4302 = vpack.c.bf16 %v4300, %v4300
        %v4303 = vpack.c.bf16 %v4301, %v4301
        %s4304 = scalar_lea.vmem %s11, 256
        %v4305 = vld [vmem:[%s4304] sm:$0xf]
        %v4306 = vld [vmem:[%s4304 + $0x4] sm:$0xf]
        %v4307 = vld [vmem:[%s4304 + $0x8] sm:$0xf]
        %v4308 = vld [vmem:[%s4304 + $0xc] sm:$0xf]
        %v4309 = vld [vmem:[%s4304 + $0x10] sm:$0xf]
        %v4310 = vld [vmem:[%s4304 + $0x14] sm:$0xf]
        %v4311 = vld [vmem:[%s4304 + $0x18] sm:$0xf]
        %v4312 = vld [vmem:[%s4304 + $0x1c] sm:$0xf]
        %v4313 = vld [vmem:[%s4304 + $0x20] sm:$0xf]
        %v4314 = vld [vmem:[%s4304 + $0x24] sm:$0xf]
        %v4315 = vld [vmem:[%s4304 + $0x28] sm:$0xf]
        %v4316 = vld [vmem:[%s4304 + $0x2c] sm:$0xf]
        %v4317 = vld [vmem:[%s4304 + $0x30] sm:$0xf]
        %v4318 = vld [vmem:[%s4304 + $0x34] sm:$0xf]
        %v4319 = vld [vmem:[%s4304 + $0x38] sm:$0xf]
        %v4320 = vld [vmem:[%s4304 + $0x3c] sm:$0xf]
        %v4321 = vld [vmem:[%s4304 + $0x40] sm:$0xf]
        %v4322 = vld [vmem:[%s4304 + $0x44] sm:$0xf]
        %v4323 = vld [vmem:[%s4304 + $0x48] sm:$0xf]
        %v4324 = vld [vmem:[%s4304 + $0x4c] sm:$0xf]
        %v4325 = vld [vmem:[%s4304 + $0x50] sm:$0xf]
        %v4326 = vld [vmem:[%s4304 + $0x54] sm:$0xf]
        %v4327 = vld [vmem:[%s4304 + $0x58] sm:$0xf]
        %v4328 = vld [vmem:[%s4304 + $0x5c] sm:$0xf]
        %v4329 = vld [vmem:[%s4304 + $0x60] sm:$0xf]
        %v4330 = vld [vmem:[%s4304 + $0x64] sm:$0xf]
        %v4331 = vld [vmem:[%s4304 + $0x68] sm:$0xf]
        %v4332 = vld [vmem:[%s4304 + $0x6c] sm:$0xf]
        %v4333 = vld [vmem:[%s4304 + $0x70] sm:$0xf]
        %v4334 = vld [vmem:[%s4304 + $0x74] sm:$0xf]
        %v4335 = vld [vmem:[%s4304 + $0x78] sm:$0xf]
        %v4336 = vld [vmem:[%s4304 + $0x7c] sm:$0xf]
        %v4339 = vrot.slane %v4302, 1
        %v4340 = vrot.slane %v4303, 1
        %v4375 = vunpack.c.l.b16 %v4305
        %v4376 = vunpack.c.l.b16 %v4306
        %v4377 = vunpack.c.l.b16 %v4307
        %v4378 = vunpack.c.l.b16 %v4308
        %v4379 = vunpack.c.l.b16 %v4309
        %v4380 = vunpack.c.l.b16 %v4310
        %v4381 = vunpack.c.l.b16 %v4311
        %v4382 = vunpack.c.l.b16 %v4312
        %v4383 = vunpack.c.l.b16 %v4313
        %v4384 = vunpack.c.l.b16 %v4314
        %v4385 = vunpack.c.l.b16 %v4315
        %v4386 = vunpack.c.l.b16 %v4316
        %v4387 = vunpack.c.l.b16 %v4317
        %v4388 = vunpack.c.l.b16 %v4318
        %v4389 = vunpack.c.l.b16 %v4319
        %v4390 = vunpack.c.l.b16 %v4320
        %v4391 = vunpack.c.l.b16 %v4321
        %v4392 = vunpack.c.l.b16 %v4322
        %v4393 = vunpack.c.l.b16 %v4323
        %v4394 = vunpack.c.l.b16 %v4324
        %v4395 = vunpack.c.l.b16 %v4325
        %v4396 = vunpack.c.l.b16 %v4326
        %v4397 = vunpack.c.l.b16 %v4327
        %v4398 = vunpack.c.l.b16 %v4328
        %v4399 = vunpack.c.l.b16 %v4329
        %v4400 = vunpack.c.l.b16 %v4330
        %v4401 = vunpack.c.l.b16 %v4331
        %v4402 = vunpack.c.l.b16 %v4332
        %v4403 = vunpack.c.l.b16 %v4333
        %v4404 = vunpack.c.l.b16 %v4334
        %v4405 = vunpack.c.l.b16 %v4335
        %v4406 = vunpack.c.l.b16 %v4336
        %v4407 = vpack.c.b16 %v4376, %v4375
        %v4408 = vpack.c.b16 %v4378, %v4377
        %v4409 = vpack.c.b16 %v4380, %v4379
        %v4410 = vpack.c.b16 %v4382, %v4381
        %v4411 = vpack.c.b16 %v4384, %v4383
        %v4412 = vpack.c.b16 %v4386, %v4385
        %v4413 = vpack.c.b16 %v4388, %v4387
        %v4414 = vpack.c.b16 %v4390, %v4389
        %v4415 = vpack.c.b16 %v4392, %v4391
        %v4416 = vpack.c.b16 %v4394, %v4393
        %v4417 = vpack.c.b16 %v4396, %v4395
        %v4418 = vpack.c.b16 %v4398, %v4397
        %v4419 = vpack.c.b16 %v4400, %v4399
        %v4420 = vpack.c.b16 %v4402, %v4401
        %v4421 = vpack.c.b16 %v4404, %v4403
        %v4422 = vpack.c.b16 %v4406, %v4405
        %4439 = vmatpush.bf16.msra.mxu0 %v4414
        %4440 = vmatpush.bf16.msra.mxu0 %v4413
        %4441 = vmatpush.bf16.msra.mxu0 %v4412
        %4442 = vmatpush.bf16.msra.mxu0 %v4411
        %4443 = vmatpush.bf16.msra.mxu0 %v4410
        %4444 = vmatpush.bf16.msra.mxu0 %v4409
        %4445 = vmatpush.bf16.msra.mxu0 %v4408
        %4446 = vmatpush.bf16.msra.mxu0 %v4407
        %4447 = vmatmul.bf16.gmra.mxu0 %v4339
        %v4448 = vpop.f32.mrf.mxu0
        %v4449 = vadd.f32 0.0, %v4448
        %v4450 = vpop.f32.mrf.mxu0
        %4451 = vdwg.mxu0
        %4452 = vmatpush.bf16.msra.mxu0 %v4422
        %4453 = vmatpush.bf16.msra.mxu0 %v4421
        %4454 = vmatpush.bf16.msra.mxu0 %v4420
        %4455 = vmatpush.bf16.msra.mxu0 %v4419
        %4456 = vmatpush.bf16.msra.mxu0 %v4418
        %4457 = vmatpush.bf16.msra.mxu0 %v4417
        %4458 = vmatpush.bf16.msra.mxu0 %v4416
        %4459 = vmatpush.bf16.msra.mxu0 %v4415
        %4460 = vmatmul.bf16.gmra.mxu0 %v4340
        %v4461 = vpop.f32.mrf.mxu0
        %v4462 = vadd.f32 %v4449, %v4461
        %v4463 = vpop.f32.mrf.mxu0
        %4464 = vdwg.mxu0
        %v4465 = vadd.f32 %v4297, %v4462
        %v4466 = vld [vmem:[#allocation5] sm:$0x78]
        %v4467 = vld [vmem:[#allocation5 + $0x8] sm:$0x78]
        %v4468 = vpack.c.bf16 %v4466, %v4466
        %v4469 = vpack.c.bf16 %v4467, %v4467
        %s4470 = scalar_lea.vmem %s11, 384
        %v4471 = vld [vmem:[%s4470] sm:$0xf]
        %v4472 = vld [vmem:[%s4470 + $0x4] sm:$0xf]
        %v4473 = vld [vmem:[%s4470 + $0x8] sm:$0xf]
        %v4474 = vld [vmem:[%s4470 + $0xc] sm:$0xf]
        %v4475 = vld [vmem:[%s4470 + $0x10] sm:$0xf]
        %v4476 = vld [vmem:[%s4470 + $0x14] sm:$0xf]
        %v4477 = vld [vmem:[%s4470 + $0x18] sm:$0xf]
        %v4478 = vld [vmem:[%s4470 + $0x1c] sm:$0xf]
        %v4479 = vld [vmem:[%s4470 + $0x20] sm:$0xf]
        %v4480 = vld [vmem:[%s4470 + $0x24] sm:$0xf]
        %v4481 = vld [vmem:[%s4470 + $0x28] sm:$0xf]
        %v4482 = vld [vmem:[%s4470 + $0x2c] sm:$0xf]
        %v4483 = vld [vmem:[%s4470 + $0x30] sm:$0xf]
        %v4484 = vld [vmem:[%s4470 + $0x34] sm:$0xf]
        %v4485 = vld [vmem:[%s4470 + $0x38] sm:$0xf]
        %v4486 = vld [vmem:[%s4470 + $0x3c] sm:$0xf]
        %v4487 = vld [vmem:[%s4470 + $0x40] sm:$0xf]
        %v4488 = vld [vmem:[%s4470 + $0x44] sm:$0xf]
        %v4489 = vld [vmem:[%s4470 + $0x48] sm:$0xf]
        %v4490 = vld [vmem:[%s4470 + $0x4c] sm:$0xf]
        %v4491 = vld [vmem:[%s4470 + $0x50] sm:$0xf]
        %v4492 = vld [vmem:[%s4470 + $0x54] sm:$0xf]
        %v4493 = vld [vmem:[%s4470 + $0x58] sm:$0xf]
        %v4494 = vld [vmem:[%s4470 + $0x5c] sm:$0xf]
        %v4495 = vld [vmem:[%s4470 + $0x60] sm:$0xf]
        %v4496 = vld [vmem:[%s4470 + $0x64] sm:$0xf]
        %v4497 = vld [vmem:[%s4470 + $0x68] sm:$0xf]
        %v4498 = vld [vmem:[%s4470 + $0x6c] sm:$0xf]
        %v4499 = vld [vmem:[%s4470 + $0x70] sm:$0xf]
        %v4500 = vld [vmem:[%s4470 + $0x74] sm:$0xf]
        %v4501 = vld [vmem:[%s4470 + $0x78] sm:$0xf]
        %v4502 = vld [vmem:[%s4470 + $0x7c] sm:$0xf]
        %v4504 = vshrl.u32 %v4468, 16
        %v4506 = vrot.slane %v4504, 1
        %v4507 = vshll.u32 %v4468, 16
        %v4509 = vrot.slane %v4507, 2
        %v4510 = vor.u32 %v4506, %v4509
        %v4512 = vshrl.u32 %v4469, 16
        %v4514 = vrot.slane %v4512, 1
        %v4515 = vshll.u32 %v4469, 16
        %v4517 = vrot.slane %v4515, 2
        %v4518 = vor.u32 %v4514, %v4517
        %v4553 = vunpack.c.l.b16 %v4471
        %v4554 = vunpack.c.l.b16 %v4472
        %v4555 = vunpack.c.l.b16 %v4473
        %v4556 = vunpack.c.l.b16 %v4474
        %v4557 = vunpack.c.l.b16 %v4475
        %v4558 = vunpack.c.l.b16 %v4476
        %v4559 = vunpack.c.l.b16 %v4477
        %v4560 = vunpack.c.l.b16 %v4478
        %v4561 = vunpack.c.l.b16 %v4479
        %v4562 = vunpack.c.l.b16 %v4480
        %v4563 = vunpack.c.l.b16 %v4481
        %v4564 = vunpack.c.l.b16 %v4482
        %v4565 = vunpack.c.l.b16 %v4483
        %v4566 = vunpack.c.l.b16 %v4484
        %v4567 = vunpack.c.l.b16 %v4485
        %v4568 = vunpack.c.l.b16 %v4486
        %v4569 = vunpack.c.l.b16 %v4487
        %v4570 = vunpack.c.l.b16 %v4488
        %v4571 = vunpack.c.l.b16 %v4489
        %v4572 = vunpack.c.l.b16 %v4490
        %v4573 = vunpack.c.l.b16 %v4491
        %v4574 = vunpack.c.l.b16 %v4492
        %v4575 = vunpack.c.l.b16 %v4493
        %v4576 = vunpack.c.l.b16 %v4494
        %v4577 = vunpack.c.l.b16 %v4495
        %v4578 = vunpack.c.l.b16 %v4496
        %v4579 = vunpack.c.l.b16 %v4497
        %v4580 = vunpack.c.l.b16 %v4498
        %v4581 = vunpack.c.l.b16 %v4499
        %v4582 = vunpack.c.l.b16 %v4500
        %v4583 = vunpack.c.l.b16 %v4501
        %v4584 = vunpack.c.l.b16 %v4502
        %v4585 = vpack.c.b16 %v4554, %v4553
        %v4586 = vpack.c.b16 %v4556, %v4555
        %v4587 = vpack.c.b16 %v4558, %v4557
        %v4588 = vpack.c.b16 %v4560, %v4559
        %v4589 = vpack.c.b16 %v4562, %v4561
        %v4590 = vpack.c.b16 %v4564, %v4563
        %v4591 = vpack.c.b16 %v4566, %v4565
        %v4592 = vpack.c.b16 %v4568, %v4567
        %v4593 = vpack.c.b16 %v4570, %v4569
        %v4594 = vpack.c.b16 %v4572, %v4571
        %v4595 = vpack.c.b16 %v4574, %v4573
        %v4596 = vpack.c.b16 %v4576, %v4575
        %v4597 = vpack.c.b16 %v4578, %v4577
        %v4598 = vpack.c.b16 %v4580, %v4579
        %v4599 = vpack.c.b16 %v4582, %v4581
        %v4600 = vpack.c.b16 %v4584, %v4583
        %4617 = vmatpush.bf16.msra.mxu0 %v4592
        %4618 = vmatpush.bf16.msra.mxu0 %v4591
        %4619 = vmatpush.bf16.msra.mxu0 %v4590
        %4620 = vmatpush.bf16.msra.mxu0 %v4589
        %4621 = vmatpush.bf16.msra.mxu0 %v4588
        %4622 = vmatpush.bf16.msra.mxu0 %v4587
        %4623 = vmatpush.bf16.msra.mxu0 %v4586
        %4624 = vmatpush.bf16.msra.mxu0 %v4585
        %4625 = vmatmul.bf16.gmra.mxu0 %v4510
        %v4626 = vpop.f32.mrf.mxu0
        %v4627 = vadd.f32 0.0, %v4626
        %v4628 = vpop.f32.mrf.mxu0
        %4629 = vdwg.mxu0
        %4630 = vmatpush.bf16.msra.mxu0 %v4600
        %4631 = vmatpush.bf16.msra.mxu0 %v4599
        %4632 = vmatpush.bf16.msra.mxu0 %v4598
        %4633 = vmatpush.bf16.msra.mxu0 %v4597
        %4634 = vmatpush.bf16.msra.mxu0 %v4596
        %4635 = vmatpush.bf16.msra.mxu0 %v4595
        %4636 = vmatpush.bf16.msra.mxu0 %v4594
        %4637 = vmatpush.bf16.msra.mxu0 %v4593
        %4638 = vmatmul.bf16.gmra.mxu0 %v4518
        %v4639 = vpop.f32.mrf.mxu0
        %v4640 = vadd.f32 %v4627, %v4639
        %v4641 = vpop.f32.mrf.mxu0
        %4642 = vdwg.mxu0
        %v4643 = vadd.f32 %v4465, %v4640
        %v4644 = vld [vmem:[#allocation5] sm:$0xf0]
        %v4645 = vld [vmem:[#allocation5 + $0x8] sm:$0xf0]
        %v4646 = vpack.c.bf16 %v4644, %v4644
        %v4647 = vpack.c.bf16 %v4645, %v4645
        %s4648 = scalar_lea.vmem %s11, 512
        %v4649 = vld [vmem:[%s4648] sm:$0xf]
        %v4650 = vld [vmem:[%s4648 + $0x4] sm:$0xf]
        %v4651 = vld [vmem:[%s4648 + $0x8] sm:$0xf]
        %v4652 = vld [vmem:[%s4648 + $0xc] sm:$0xf]
        %v4653 = vld [vmem:[%s4648 + $0x10] sm:$0xf]
        %v4654 = vld [vmem:[%s4648 + $0x14] sm:$0xf]
        %v4655 = vld [vmem:[%s4648 + $0x18] sm:$0xf]
        %v4656 = vld [vmem:[%s4648 + $0x1c] sm:$0xf]
        %v4657 = vld [vmem:[%s4648 + $0x20] sm:$0xf]
        %v4658 = vld [vmem:[%s4648 + $0x24] sm:$0xf]
        %v4659 = vld [vmem:[%s4648 + $0x28] sm:$0xf]
        %v4660 = vld [vmem:[%s4648 + $0x2c] sm:$0xf]
        %v4661 = vld [vmem:[%s4648 + $0x30] sm:$0xf]
        %v4662 = vld [vmem:[%s4648 + $0x34] sm:$0xf]
        %v4663 = vld [vmem:[%s4648 + $0x38] sm:$0xf]
        %v4664 = vld [vmem:[%s4648 + $0x3c] sm:$0xf]
        %v4665 = vld [vmem:[%s4648 + $0x40] sm:$0xf]
        %v4666 = vld [vmem:[%s4648 + $0x44] sm:$0xf]
        %v4667 = vld [vmem:[%s4648 + $0x48] sm:$0xf]
        %v4668 = vld [vmem:[%s4648 + $0x4c] sm:$0xf]
        %v4669 = vld [vmem:[%s4648 + $0x50] sm:$0xf]
        %v4670 = vld [vmem:[%s4648 + $0x54] sm:$0xf]
        %v4671 = vld [vmem:[%s4648 + $0x58] sm:$0xf]
        %v4672 = vld [vmem:[%s4648 + $0x5c] sm:$0xf]
        %v4673 = vld [vmem:[%s4648 + $0x60] sm:$0xf]
        %v4674 = vld [vmem:[%s4648 + $0x64] sm:$0xf]
        %v4675 = vld [vmem:[%s4648 + $0x68] sm:$0xf]
        %v4676 = vld [vmem:[%s4648 + $0x6c] sm:$0xf]
        %v4677 = vld [vmem:[%s4648 + $0x70] sm:$0xf]
        %v4678 = vld [vmem:[%s4648 + $0x74] sm:$0xf]
        %v4679 = vld [vmem:[%s4648 + $0x78] sm:$0xf]
        %v4680 = vld [vmem:[%s4648 + $0x7c] sm:$0xf]
        %v4683 = vrot.slane %v4646, 2
        %v4684 = vrot.slane %v4647, 2
        %v4719 = vunpack.c.l.b16 %v4649
        %v4720 = vunpack.c.l.b16 %v4650
        %v4721 = vunpack.c.l.b16 %v4651
        %v4722 = vunpack.c.l.b16 %v4652
        %v4723 = vunpack.c.l.b16 %v4653
        %v4724 = vunpack.c.l.b16 %v4654
        %v4725 = vunpack.c.l.b16 %v4655
        %v4726 = vunpack.c.l.b16 %v4656
        %v4727 = vunpack.c.l.b16 %v4657
        %v4728 = vunpack.c.l.b16 %v4658
        %v4729 = vunpack.c.l.b16 %v4659
        %v4730 = vunpack.c.l.b16 %v4660
        %v4731 = vunpack.c.l.b16 %v4661
        %v4732 = vunpack.c.l.b16 %v4662
        %v4733 = vunpack.c.l.b16 %v4663
        %v4734 = vunpack.c.l.b16 %v4664
        %v4735 = vunpack.c.l.b16 %v4665
        %v4736 = vunpack.c.l.b16 %v4666
        %v4737 = vunpack.c.l.b16 %v4667
        %v4738 = vunpack.c.l.b16 %v4668
        %v4739 = vunpack.c.l.b16 %v4669
        %v4740 = vunpack.c.l.b16 %v4670
        %v4741 = vunpack.c.l.b16 %v4671
        %v4742 = vunpack.c.l.b16 %v4672
        %v4743 = vunpack.c.l.b16 %v4673
        %v4744 = vunpack.c.l.b16 %v4674
        %v4745 = vunpack.c.l.b16 %v4675
        %v4746 = vunpack.c.l.b16 %v4676
        %v4747 = vunpack.c.l.b16 %v4677
        %v4748 = vunpack.c.l.b16 %v4678
        %v4749 = vunpack.c.l.b16 %v4679
        %v4750 = vunpack.c.l.b16 %v4680
        %v4751 = vpack.c.b16 %v4720, %v4719
        %v4752 = vpack.c.b16 %v4722, %v4721
        %v4753 = vpack.c.b16 %v4724, %v4723
        %v4754 = vpack.c.b16 %v4726, %v4725
        %v4755 = vpack.c.b16 %v4728, %v4727
        %v4756 = vpack.c.b16 %v4730, %v4729
        %v4757 = vpack.c.b16 %v4732, %v4731
        %v4758 = vpack.c.b16 %v4734, %v4733
        %v4759 = vpack.c.b16 %v4736, %v4735
        %v4760 = vpack.c.b16 %v4738, %v4737
        %v4761 = vpack.c.b16 %v4740, %v4739
        %v4762 = vpack.c.b16 %v4742, %v4741
        %v4763 = vpack.c.b16 %v4744, %v4743
        %v4764 = vpack.c.b16 %v4746, %v4745
        %v4765 = vpack.c.b16 %v4748, %v4747
        %v4766 = vpack.c.b16 %v4750, %v4749
        %4783 = vmatpush.bf16.msra.mxu0 %v4758
        %4784 = vmatpush.bf16.msra.mxu0 %v4757
        %4785 = vmatpush.bf16.msra.mxu0 %v4756
        %4786 = vmatpush.bf16.msra.mxu0 %v4755
        %4787 = vmatpush.bf16.msra.mxu0 %v4754
        %4788 = vmatpush.bf16.msra.mxu0 %v4753
        %4789 = vmatpush.bf16.msra.mxu0 %v4752
        %4790 = vmatpush.bf16.msra.mxu0 %v4751
        %4791 = vmatmul.bf16.gmra.mxu0 %v4683
        %v4792 = vpop.f32.mrf.mxu0
        %v4793 = vadd.f32 0.0, %v4792
        %v4794 = vpop.f32.mrf.mxu0
        %4795 = vdwg.mxu0
        %4796 = vmatpush.bf16.msra.mxu0 %v4766
        %4797 = vmatpush.bf16.msra.mxu0 %v4765
        %4798 = vmatpush.bf16.msra.mxu0 %v4764
        %4799 = vmatpush.bf16.msra.mxu0 %v4763
        %4800 = vmatpush.bf16.msra.mxu0 %v4762
        %4801 = vmatpush.bf16.msra.mxu0 %v4761
        %4802 = vmatpush.bf16.msra.mxu0 %v4760
        %4803 = vmatpush.bf16.msra.mxu0 %v4759
        %4804 = vmatmul.bf16.gmra.mxu0 %v4684
        %v4805 = vpop.f32.mrf.mxu0
        %v4806 = vadd.f32 %v4793, %v4805
        %v4807 = vpop.f32.mrf.mxu0
        %4808 = vdwg.mxu0
        %v4809 = vadd.f32 %v4643, %v4806
        %v4810 = vld [vmem:[#allocation5] sm:$0xe0]
        %v4811 = vld [vmem:[#allocation5 + $0x8] sm:$0xe0]
        %v4812 = vld [vmem:[#allocation5 + $0x10] sm:$0x1]
        %v4813 = vld [vmem:[#allocation5 + $0x18] sm:$0x1]
        %v4814 = vpack.c.bf16 %v4812, %v4810
        %v4815 = vpack.c.bf16 %v4813, %v4811
        %s4816 = scalar_lea.vmem %s11, 640
        %v4817 = vld [vmem:[%s4816] sm:$0xf]
        %v4818 = vld [vmem:[%s4816 + $0x4] sm:$0xf]
        %v4819 = vld [vmem:[%s4816 + $0x8] sm:$0xf]
        %v4820 = vld [vmem:[%s4816 + $0xc] sm:$0xf]
        %v4821 = vld [vmem:[%s4816 + $0x10] sm:$0xf]
        %v4822 = vld [vmem:[%s4816 + $0x14] sm:$0xf]
        %v4823 = vld [vmem:[%s4816 + $0x18] sm:$0xf]
        %v4824 = vld [vmem:[%s4816 + $0x1c] sm:$0xf]
        %v4825 = vld [vmem:[%s4816 + $0x20] sm:$0xf]
        %v4826 = vld [vmem:[%s4816 + $0x24] sm:$0xf]
        %v4827 = vld [vmem:[%s4816 + $0x28] sm:$0xf]
        %v4828 = vld [vmem:[%s4816 + $0x2c] sm:$0xf]
        %v4829 = vld [vmem:[%s4816 + $0x30] sm:$0xf]
        %v4830 = vld [vmem:[%s4816 + $0x34] sm:$0xf]
        %v4831 = vld [vmem:[%s4816 + $0x38] sm:$0xf]
        %v4832 = vld [vmem:[%s4816 + $0x3c] sm:$0xf]
        %v4833 = vld [vmem:[%s4816 + $0x40] sm:$0xf]
        %v4834 = vld [vmem:[%s4816 + $0x44] sm:$0xf]
        %v4835 = vld [vmem:[%s4816 + $0x48] sm:$0xf]
        %v4836 = vld [vmem:[%s4816 + $0x4c] sm:$0xf]
        %v4837 = vld [vmem:[%s4816 + $0x50] sm:$0xf]
        %v4838 = vld [vmem:[%s4816 + $0x54] sm:$0xf]
        %v4839 = vld [vmem:[%s4816 + $0x58] sm:$0xf]
        %v4840 = vld [vmem:[%s4816 + $0x5c] sm:$0xf]
        %v4841 = vld [vmem:[%s4816 + $0x60] sm:$0xf]
        %v4842 = vld [vmem:[%s4816 + $0x64] sm:$0xf]
        %v4843 = vld [vmem:[%s4816 + $0x68] sm:$0xf]
        %v4844 = vld [vmem:[%s4816 + $0x6c] sm:$0xf]
        %v4845 = vld [vmem:[%s4816 + $0x70] sm:$0xf]
        %v4846 = vld [vmem:[%s4816 + $0x74] sm:$0xf]
        %v4847 = vld [vmem:[%s4816 + $0x78] sm:$0xf]
        %v4848 = vld [vmem:[%s4816 + $0x7c] sm:$0xf]
        %v4850 = vshrl.u32 %v4814, 16
        %v4852 = vrot.slane %v4850, 2
        %v4853 = vshll.u32 %v4814, 16
        %v4855 = vrot.slane %v4853, 3
        %v4856 = vor.u32 %v4852, %v4855
        %v4858 = vshrl.u32 %v4815, 16
        %v4860 = vrot.slane %v4858, 2
        %v4861 = vshll.u32 %v4815, 16
        %v4863 = vrot.slane %v4861, 3
        %v4864 = vor.u32 %v4860, %v4863
        %v4899 = vunpack.c.l.b16 %v4817
        %v4900 = vunpack.c.l.b16 %v4818
        %v4901 = vunpack.c.l.b16 %v4819
        %v4902 = vunpack.c.l.b16 %v4820
        %v4903 = vunpack.c.l.b16 %v4821
        %v4904 = vunpack.c.l.b16 %v4822
        %v4905 = vunpack.c.l.b16 %v4823
        %v4906 = vunpack.c.l.b16 %v4824
        %v4907 = vunpack.c.l.b16 %v4825
        %v4908 = vunpack.c.l.b16 %v4826
        %v4909 = vunpack.c.l.b16 %v4827
        %v4910 = vunpack.c.l.b16 %v4828
        %v4911 = vunpack.c.l.b16 %v4829
        %v4912 = vunpack.c.l.b16 %v4830
        %v4913 = vunpack.c.l.b16 %v4831
        %v4914 = vunpack.c.l.b16 %v4832
        %v4915 = vunpack.c.l.b16 %v4833
        %v4916 = vunpack.c.l.b16 %v4834
        %v4917 = vunpack.c.l.b16 %v4835
        %v4918 = vunpack.c.l.b16 %v4836
        %v4919 = vunpack.c.l.b16 %v4837
        %v4920 = vunpack.c.l.b16 %v4838
        %v4921 = vunpack.c.l.b16 %v4839
        %v4922 = vunpack.c.l.b16 %v4840
        %v4923 = vunpack.c.l.b16 %v4841
        %v4924 = vunpack.c.l.b16 %v4842
        %v4925 = vunpack.c.l.b16 %v4843
        %v4926 = vunpack.c.l.b16 %v4844
        %v4927 = vunpack.c.l.b16 %v4845
        %v4928 = vunpack.c.l.b16 %v4846
        %v4929 = vunpack.c.l.b16 %v4847
        %v4930 = vunpack.c.l.b16 %v4848
        %v4931 = vpack.c.b16 %v4900, %v4899
        %v4932 = vpack.c.b16 %v4902, %v4901
        %v4933 = vpack.c.b16 %v4904, %v4903
        %v4934 = vpack.c.b16 %v4906, %v4905
        %v4935 = vpack.c.b16 %v4908, %v4907
        %v4936 = vpack.c.b16 %v4910, %v4909
        %v4937 = vpack.c.b16 %v4912, %v4911
        %v4938 = vpack.c.b16 %v4914, %v4913
        %v4939 = vpack.c.b16 %v4916, %v4915
        %v4940 = vpack.c.b16 %v4918, %v4917
        %v4941 = vpack.c.b16 %v4920, %v4919
        %v4942 = vpack.c.b16 %v4922, %v4921
        %v4943 = vpack.c.b16 %v4924, %v4923
        %v4944 = vpack.c.b16 %v4926, %v4925
        %v4945 = vpack.c.b16 %v4928, %v4927
        %v4946 = vpack.c.b16 %v4930, %v4929
        %4963 = vmatpush.bf16.msra.mxu0 %v4938
        %4964 = vmatpush.bf16.msra.mxu0 %v4937
        %4965 = vmatpush.bf16.msra.mxu0 %v4936
        %4966 = vmatpush.bf16.msra.mxu0 %v4935
        %4967 = vmatpush.bf16.msra.mxu0 %v4934
        %4968 = vmatpush.bf16.msra.mxu0 %v4933
        %4969 = vmatpush.bf16.msra.mxu0 %v4932
        %4970 = vmatpush.bf16.msra.mxu0 %v4931
        %4971 = vmatmul.bf16.gmra.mxu0 %v4856
        %v4972 = vpop.f32.mrf.mxu0
        %v4973 = vadd.f32 0.0, %v4972
        %v4974 = vpop.f32.mrf.mxu0
        %4975 = vdwg.mxu0
        %4976 = vmatpush.bf16.msra.mxu0 %v4946
        %4977 = vmatpush.bf16.msra.mxu0 %v4945
        %4978 = vmatpush.bf16.msra.mxu0 %v4944
        %4979 = vmatpush.bf16.msra.mxu0 %v4943
        %4980 = vmatpush.bf16.msra.mxu0 %v4942
        %4981 = vmatpush.bf16.msra.mxu0 %v4941
        %4982 = vmatpush.bf16.msra.mxu0 %v4940
        %4983 = vmatpush.bf16.msra.mxu0 %v4939
        %4984 = vmatmul.bf16.gmra.mxu0 %v4864
        %v4985 = vpop.f32.mrf.mxu0
        %v4986 = vadd.f32 %v4973, %v4985
        %v4987 = vpop.f32.mrf.mxu0
        %4988 = vdwg.mxu0
        %v4989 = vadd.f32 %v4809, %v4986
        %v4990 = vld [vmem:[#allocation5] sm:$0xc0]
        %v4991 = vld [vmem:[#allocation5 + $0x8] sm:$0xc0]
        %v4992 = vld [vmem:[#allocation5 + $0x10] sm:$0x3]
        %v4993 = vld [vmem:[#allocation5 + $0x18] sm:$0x3]
        %v4994 = vpack.c.bf16 %v4992, %v4990
        %v4995 = vpack.c.bf16 %v4993, %v4991
        %s4996 = scalar_lea.vmem %s11, 768
        %v4997 = vld [vmem:[%s4996] sm:$0xf]
        %v4998 = vld [vmem:[%s4996 + $0x4] sm:$0xf]
        %v4999 = vld [vmem:[%s4996 + $0x8] sm:$0xf]
        %v5000 = vld [vmem:[%s4996 + $0xc] sm:$0xf]
        %v5001 = vld [vmem:[%s4996 + $0x10] sm:$0xf]
        %v5002 = vld [vmem:[%s4996 + $0x14] sm:$0xf]
        %v5003 = vld [vmem:[%s4996 + $0x18] sm:$0xf]
        %v5004 = vld [vmem:[%s4996 + $0x1c] sm:$0xf]
        %v5005 = vld [vmem:[%s4996 + $0x20] sm:$0xf]
        %v5006 = vld [vmem:[%s4996 + $0x24] sm:$0xf]
        %v5007 = vld [vmem:[%s4996 + $0x28] sm:$0xf]
        %v5008 = vld [vmem:[%s4996 + $0x2c] sm:$0xf]
        %v5009 = vld [vmem:[%s4996 + $0x30] sm:$0xf]
        %v5010 = vld [vmem:[%s4996 + $0x34] sm:$0xf]
        %v5011 = vld [vmem:[%s4996 + $0x38] sm:$0xf]
        %v5012 = vld [vmem:[%s4996 + $0x3c] sm:$0xf]
        %v5013 = vld [vmem:[%s4996 + $0x40] sm:$0xf]
        %v5014 = vld [vmem:[%s4996 + $0x44] sm:$0xf]
        %v5015 = vld [vmem:[%s4996 + $0x48] sm:$0xf]
        %v5016 = vld [vmem:[%s4996 + $0x4c] sm:$0xf]
        %v5017 = vld [vmem:[%s4996 + $0x50] sm:$0xf]
        %v5018 = vld [vmem:[%s4996 + $0x54] sm:$0xf]
        %v5019 = vld [vmem:[%s4996 + $0x58] sm:$0xf]
        %v5020 = vld [vmem:[%s4996 + $0x5c] sm:$0xf]
        %v5021 = vld [vmem:[%s4996 + $0x60] sm:$0xf]
        %v5022 = vld [vmem:[%s4996 + $0x64] sm:$0xf]
        %v5023 = vld [vmem:[%s4996 + $0x68] sm:$0xf]
        %v5024 = vld [vmem:[%s4996 + $0x6c] sm:$0xf]
        %v5025 = vld [vmem:[%s4996 + $0x70] sm:$0xf]
        %v5026 = vld [vmem:[%s4996 + $0x74] sm:$0xf]
        %v5027 = vld [vmem:[%s4996 + $0x78] sm:$0xf]
        %v5028 = vld [vmem:[%s4996 + $0x7c] sm:$0xf]
        %v5031 = vrot.slane %v4994, 3
        %v5032 = vrot.slane %v4995, 3
        %v5067 = vunpack.c.l.b16 %v4997
        %v5068 = vunpack.c.l.b16 %v4998
        %v5069 = vunpack.c.l.b16 %v4999
        %v5070 = vunpack.c.l.b16 %v5000
        %v5071 = vunpack.c.l.b16 %v5001
        %v5072 = vunpack.c.l.b16 %v5002
        %v5073 = vunpack.c.l.b16 %v5003
        %v5074 = vunpack.c.l.b16 %v5004
        %v5075 = vunpack.c.l.b16 %v5005
        %v5076 = vunpack.c.l.b16 %v5006
        %v5077 = vunpack.c.l.b16 %v5007
        %v5078 = vunpack.c.l.b16 %v5008
        %v5079 = vunpack.c.l.b16 %v5009
        %v5080 = vunpack.c.l.b16 %v5010
        %v5081 = vunpack.c.l.b16 %v5011
        %v5082 = vunpack.c.l.b16 %v5012
        %v5083 = vunpack.c.l.b16 %v5013
        %v5084 = vunpack.c.l.b16 %v5014
        %v5085 = vunpack.c.l.b16 %v5015
        %v5086 = vunpack.c.l.b16 %v5016
        %v5087 = vunpack.c.l.b16 %v5017
        %v5088 = vunpack.c.l.b16 %v5018
        %v5089 = vunpack.c.l.b16 %v5019
        %v5090 = vunpack.c.l.b16 %v5020
        %v5091 = vunpack.c.l.b16 %v5021
        %v5092 = vunpack.c.l.b16 %v5022
        %v5093 = vunpack.c.l.b16 %v5023
        %v5094 = vunpack.c.l.b16 %v5024
        %v5095 = vunpack.c.l.b16 %v5025
        %v5096 = vunpack.c.l.b16 %v5026
        %v5097 = vunpack.c.l.b16 %v5027
        %v5098 = vunpack.c.l.b16 %v5028
        %v5099 = vpack.c.b16 %v5068, %v5067
        %v5100 = vpack.c.b16 %v5070, %v5069
        %v5101 = vpack.c.b16 %v5072, %v5071
        %v5102 = vpack.c.b16 %v5074, %v5073
        %v5103 = vpack.c.b16 %v5076, %v5075
        %v5104 = vpack.c.b16 %v5078, %v5077
        %v5105 = vpack.c.b16 %v5080, %v5079
        %v5106 = vpack.c.b16 %v5082, %v5081
        %v5107 = vpack.c.b16 %v5084, %v5083
        %v5108 = vpack.c.b16 %v5086, %v5085
        %v5109 = vpack.c.b16 %v5088, %v5087
        %v5110 = vpack.c.b16 %v5090, %v5089
        %v5111 = vpack.c.b16 %v5092, %v5091
        %v5112 = vpack.c.b16 %v5094, %v5093
        %v5113 = vpack.c.b16 %v5096, %v5095
        %v5114 = vpack.c.b16 %v5098, %v5097
        %5131 = vmatpush.bf16.msra.mxu0 %v5106
        %5132 = vmatpush.bf16.msra.mxu0 %v5105
        %5133 = vmatpush.bf16.msra.mxu0 %v5104
        %5134 = vmatpush.bf16.msra.mxu0 %v5103
        %5135 = vmatpush.bf16.msra.mxu0 %v5102
        %5136 = vmatpush.bf16.msra.mxu0 %v5101
        %5137 = vmatpush.bf16.msra.mxu0 %v5100
        %5138 = vmatpush.bf16.msra.mxu0 %v5099
        %5139 = vmatmul.bf16.gmra.mxu0 %v5031
        %v5140 = vpop.f32.mrf.mxu0
        %v5141 = vadd.f32 0.0, %v5140
        %v5142 = vpop.f32.mrf.mxu0
        %5143 = vdwg.mxu0
        %5144 = vmatpush.bf16.msra.mxu0 %v5114
        %5145 = vmatpush.bf16.msra.mxu0 %v5113
        %5146 = vmatpush.bf16.msra.mxu0 %v5112
        %5147 = vmatpush.bf16.msra.mxu0 %v5111
        %5148 = vmatpush.bf16.msra.mxu0 %v5110
        %5149 = vmatpush.bf16.msra.mxu0 %v5109
        %5150 = vmatpush.bf16.msra.mxu0 %v5108
        %5151 = vmatpush.bf16.msra.mxu0 %v5107
        %5152 = vmatmul.bf16.gmra.mxu0 %v5032
        %v5153 = vpop.f32.mrf.mxu0
        %v5154 = vadd.f32 %v5141, %v5153
        %v5155 = vpop.f32.mrf.mxu0
        %5156 = vdwg.mxu0
        %v5157 = vadd.f32 %v4989, %v5154
        %v5158 = vld [vmem:[#allocation5] sm:$0x80]
        %v5159 = vld [vmem:[#allocation5 + $0x8] sm:$0x80]
        %v5160 = vld [vmem:[#allocation5 + $0x10] sm:$0x7]
        %v5161 = vld [vmem:[#allocation5 + $0x18] sm:$0x7]
        %v5162 = vpack.c.bf16 %v5160, %v5158
        %v5163 = vpack.c.bf16 %v5161, %v5159
        %s5164 = scalar_lea.vmem %s11, 896
        %v5165 = vld [vmem:[%s5164] sm:$0xf]
        %v5166 = vld [vmem:[%s5164 + $0x4] sm:$0xf]
        %v5167 = vld [vmem:[%s5164 + $0x8] sm:$0xf]
        %v5168 = vld [vmem:[%s5164 + $0xc] sm:$0xf]
        %v5169 = vld [vmem:[%s5164 + $0x10] sm:$0xf]
        %v5170 = vld [vmem:[%s5164 + $0x14] sm:$0xf]
        %v5171 = vld [vmem:[%s5164 + $0x18] sm:$0xf]
        %v5172 = vld [vmem:[%s5164 + $0x1c] sm:$0xf]
        %v5173 = vld [vmem:[%s5164 + $0x20] sm:$0xf]
        %v5174 = vld [vmem:[%s5164 + $0x24] sm:$0xf]
        %v5175 = vld [vmem:[%s5164 + $0x28] sm:$0xf]
        %v5176 = vld [vmem:[%s5164 + $0x2c] sm:$0xf]
        %v5177 = vld [vmem:[%s5164 + $0x30] sm:$0xf]
        %v5178 = vld [vmem:[%s5164 + $0x34] sm:$0xf]
        %v5179 = vld [vmem:[%s5164 + $0x38] sm:$0xf]
        %v5180 = vld [vmem:[%s5164 + $0x3c] sm:$0xf]
        %v5181 = vld [vmem:[%s5164 + $0x40] sm:$0xf]
        %v5182 = vld [vmem:[%s5164 + $0x44] sm:$0xf]
        %v5183 = vld [vmem:[%s5164 + $0x48] sm:$0xf]
        %v5184 = vld [vmem:[%s5164 + $0x4c] sm:$0xf]
        %v5185 = vld [vmem:[%s5164 + $0x50] sm:$0xf]
        %v5186 = vld [vmem:[%s5164 + $0x54] sm:$0xf]
        %v5187 = vld [vmem:[%s5164 + $0x58] sm:$0xf]
        %v5188 = vld [vmem:[%s5164 + $0x5c] sm:$0xf]
        %v5189 = vld [vmem:[%s5164 + $0x60] sm:$0xf]
        %v5190 = vld [vmem:[%s5164 + $0x64] sm:$0xf]
        %v5191 = vld [vmem:[%s5164 + $0x68] sm:$0xf]
        %v5192 = vld [vmem:[%s5164 + $0x6c] sm:$0xf]
        %v5193 = vld [vmem:[%s5164 + $0x70] sm:$0xf]
        %v5194 = vld [vmem:[%s5164 + $0x74] sm:$0xf]
        %v5195 = vld [vmem:[%s5164 + $0x78] sm:$0xf]
        %v5196 = vld [vmem:[%s5164 + $0x7c] sm:$0xf]
        %v5198 = vshrl.u32 %v5162, 16
        %v5200 = vrot.slane %v5198, 3
        %v5201 = vshll.u32 %v5162, 16
        %v5203 = vrot.slane %v5201, 4
        %v5204 = vor.u32 %v5200, %v5203
        %v5206 = vshrl.u32 %v5163, 16
        %v5208 = vrot.slane %v5206, 3
        %v5209 = vshll.u32 %v5163, 16
        %v5211 = vrot.slane %v5209, 4
        %v5212 = vor.u32 %v5208, %v5211
        %v5247 = vunpack.c.l.b16 %v5165
        %v5248 = vunpack.c.l.b16 %v5166
        %v5249 = vunpack.c.l.b16 %v5167
        %v5250 = vunpack.c.l.b16 %v5168
        %v5251 = vunpack.c.l.b16 %v5169
        %v5252 = vunpack.c.l.b16 %v5170
        %v5253 = vunpack.c.l.b16 %v5171
        %v5254 = vunpack.c.l.b16 %v5172
        %v5255 = vunpack.c.l.b16 %v5173
        %v5256 = vunpack.c.l.b16 %v5174
        %v5257 = vunpack.c.l.b16 %v5175
        %v5258 = vunpack.c.l.b16 %v5176
        %v5259 = vunpack.c.l.b16 %v5177
        %v5260 = vunpack.c.l.b16 %v5178
        %v5261 = vunpack.c.l.b16 %v5179
        %v5262 = vunpack.c.l.b16 %v5180
        %v5263 = vunpack.c.l.b16 %v5181
        %v5264 = vunpack.c.l.b16 %v5182
        %v5265 = vunpack.c.l.b16 %v5183
        %v5266 = vunpack.c.l.b16 %v5184
        %v5267 = vunpack.c.l.b16 %v5185
        %v5268 = vunpack.c.l.b16 %v5186
        %v5269 = vunpack.c.l.b16 %v5187
        %v5270 = vunpack.c.l.b16 %v5188
        %v5271 = vunpack.c.l.b16 %v5189
        %v5272 = vunpack.c.l.b16 %v5190
        %v5273 = vunpack.c.l.b16 %v5191
        %v5274 = vunpack.c.l.b16 %v5192
        %v5275 = vunpack.c.l.b16 %v5193
        %v5276 = vunpack.c.l.b16 %v5194
        %v5277 = vunpack.c.l.b16 %v5195
        %v5278 = vunpack.c.l.b16 %v5196
        %v5279 = vpack.c.b16 %v5248, %v5247
        %v5280 = vpack.c.b16 %v5250, %v5249
        %v5281 = vpack.c.b16 %v5252, %v5251
        %v5282 = vpack.c.b16 %v5254, %v5253
        %v5283 = vpack.c.b16 %v5256, %v5255
        %v5284 = vpack.c.b16 %v5258, %v5257
        %v5285 = vpack.c.b16 %v5260, %v5259
        %v5286 = vpack.c.b16 %v5262, %v5261
        %v5287 = vpack.c.b16 %v5264, %v5263
        %v5288 = vpack.c.b16 %v5266, %v5265
        %v5289 = vpack.c.b16 %v5268, %v5267
        %v5290 = vpack.c.b16 %v5270, %v5269
        %v5291 = vpack.c.b16 %v5272, %v5271
        %v5292 = vpack.c.b16 %v5274, %v5273
        %v5293 = vpack.c.b16 %v5276, %v5275
        %v5294 = vpack.c.b16 %v5278, %v5277
        %5311 = vmatpush.bf16.msra.mxu0 %v5286
        %5312 = vmatpush.bf16.msra.mxu0 %v5285
        %5313 = vmatpush.bf16.msra.mxu0 %v5284
        %5314 = vmatpush.bf16.msra.mxu0 %v5283
        %5315 = vmatpush.bf16.msra.mxu0 %v5282
        %5316 = vmatpush.bf16.msra.mxu0 %v5281
        %5317 = vmatpush.bf16.msra.mxu0 %v5280
        %5318 = vmatpush.bf16.msra.mxu0 %v5279
        %5319 = vmatmul.bf16.gmra.mxu0 %v5204
        %v5320 = vpop.f32.mrf.mxu0
        %v5321 = vadd.f32 0.0, %v5320
        %v5322 = vpop.f32.mrf.mxu0
        %5323 = vdwg.mxu0
        %5324 = vmatpush.bf16.msra.mxu0 %v5294
        %5325 = vmatpush.bf16.msra.mxu0 %v5293
        %5326 = vmatpush.bf16.msra.mxu0 %v5292
        %5327 = vmatpush.bf16.msra.mxu0 %v5291
        %5328 = vmatpush.bf16.msra.mxu0 %v5290
        %5329 = vmatpush.bf16.msra.mxu0 %v5289
        %5330 = vmatpush.bf16.msra.mxu0 %v5288
        %5331 = vmatpush.bf16.msra.mxu0 %v5287
        %5332 = vmatmul.bf16.gmra.mxu0 %v5212
        %v5333 = vpop.f32.mrf.mxu0
        %v5334 = vadd.f32 %v5321, %v5333
        %v5335 = vpop.f32.mrf.mxu0
        %5336 = vdwg.mxu0
        %v5337 = vadd.f32 %v5157, %v5334
        %v5338 = vld [vmem:[#allocation5 + $0x10] sm:$0xf]
        %v5339 = vld [vmem:[#allocation5 + $0x18] sm:$0xf]
        %v5340 = vpack.c.bf16 %v5338, %v5338
        %v5341 = vpack.c.bf16 %v5339, %v5339
        %s5342 = scalar_lea.vmem %s11, 1024
        %v5343 = vld [vmem:[%s5342] sm:$0xf]
        %v5344 = vld [vmem:[%s5342 + $0x4] sm:$0xf]
        %v5345 = vld [vmem:[%s5342 + $0x8] sm:$0xf]
        %v5346 = vld [vmem:[%s5342 + $0xc] sm:$0xf]
        %v5347 = vld [vmem:[%s5342 + $0x10] sm:$0xf]
        %v5348 = vld [vmem:[%s5342 + $0x14] sm:$0xf]
        %v5349 = vld [vmem:[%s5342 + $0x18] sm:$0xf]
        %v5350 = vld [vmem:[%s5342 + $0x1c] sm:$0xf]
        %v5351 = vld [vmem:[%s5342 + $0x20] sm:$0xf]
        %v5352 = vld [vmem:[%s5342 + $0x24] sm:$0xf]
        %v5353 = vld [vmem:[%s5342 + $0x28] sm:$0xf]
        %v5354 = vld [vmem:[%s5342 + $0x2c] sm:$0xf]
        %v5355 = vld [vmem:[%s5342 + $0x30] sm:$0xf]
        %v5356 = vld [vmem:[%s5342 + $0x34] sm:$0xf]
        %v5357 = vld [vmem:[%s5342 + $0x38] sm:$0xf]
        %v5358 = vld [vmem:[%s5342 + $0x3c] sm:$0xf]
        %v5359 = vld [vmem:[%s5342 + $0x40] sm:$0xf]
        %v5360 = vld [vmem:[%s5342 + $0x44] sm:$0xf]
        %v5361 = vld [vmem:[%s5342 + $0x48] sm:$0xf]
        %v5362 = vld [vmem:[%s5342 + $0x4c] sm:$0xf]
        %v5363 = vld [vmem:[%s5342 + $0x50] sm:$0xf]
        %v5364 = vld [vmem:[%s5342 + $0x54] sm:$0xf]
        %v5365 = vld [vmem:[%s5342 + $0x58] sm:$0xf]
        %v5366 = vld [vmem:[%s5342 + $0x5c] sm:$0xf]
        %v5367 = vld [vmem:[%s5342 + $0x60] sm:$0xf]
        %v5368 = vld [vmem:[%s5342 + $0x64] sm:$0xf]
        %v5369 = vld [vmem:[%s5342 + $0x68] sm:$0xf]
        %v5370 = vld [vmem:[%s5342 + $0x6c] sm:$0xf]
        %v5371 = vld [vmem:[%s5342 + $0x70] sm:$0xf]
        %v5372 = vld [vmem:[%s5342 + $0x74] sm:$0xf]
        %v5373 = vld [vmem:[%s5342 + $0x78] sm:$0xf]
        %v5374 = vld [vmem:[%s5342 + $0x7c] sm:$0xf]
        %v5407 = vunpack.c.l.b16 %v5343
        %v5408 = vunpack.c.l.b16 %v5344
        %v5409 = vunpack.c.l.b16 %v5345
        %v5410 = vunpack.c.l.b16 %v5346
        %v5411 = vunpack.c.l.b16 %v5347
        %v5412 = vunpack.c.l.b16 %v5348
        %v5413 = vunpack.c.l.b16 %v5349
        %v5414 = vunpack.c.l.b16 %v5350
        %v5415 = vunpack.c.l.b16 %v5351
        %v5416 = vunpack.c.l.b16 %v5352
        %v5417 = vunpack.c.l.b16 %v5353
        %v5418 = vunpack.c.l.b16 %v5354
        %v5419 = vunpack.c.l.b16 %v5355
        %v5420 = vunpack.c.l.b16 %v5356
        %v5421 = vunpack.c.l.b16 %v5357
        %v5422 = vunpack.c.l.b16 %v5358
        %v5423 = vunpack.c.l.b16 %v5359
        %v5424 = vunpack.c.l.b16 %v5360
        %v5425 = vunpack.c.l.b16 %v5361
        %v5426 = vunpack.c.l.b16 %v5362
        %v5427 = vunpack.c.l.b16 %v5363
        %v5428 = vunpack.c.l.b16 %v5364
        %v5429 = vunpack.c.l.b16 %v5365
        %v5430 = vunpack.c.l.b16 %v5366
        %v5431 = vunpack.c.l.b16 %v5367
        %v5432 = vunpack.c.l.b16 %v5368
        %v5433 = vunpack.c.l.b16 %v5369
        %v5434 = vunpack.c.l.b16 %v5370
        %v5435 = vunpack.c.l.b16 %v5371
        %v5436 = vunpack.c.l.b16 %v5372
        %v5437 = vunpack.c.l.b16 %v5373
        %v5438 = vunpack.c.l.b16 %v5374
        %v5439 = vpack.c.b16 %v5408, %v5407
        %v5440 = vpack.c.b16 %v5410, %v5409
        %v5441 = vpack.c.b16 %v5412, %v5411
        %v5442 = vpack.c.b16 %v5414, %v5413
        %v5443 = vpack.c.b16 %v5416, %v5415
        %v5444 = vpack.c.b16 %v5418, %v5417
        %v5445 = vpack.c.b16 %v5420, %v5419
        %v5446 = vpack.c.b16 %v5422, %v5421
        %v5447 = vpack.c.b16 %v5424, %v5423
        %v5448 = vpack.c.b16 %v5426, %v5425
        %v5449 = vpack.c.b16 %v5428, %v5427
        %v5450 = vpack.c.b16 %v5430, %v5429
        %v5451 = vpack.c.b16 %v5432, %v5431
        %v5452 = vpack.c.b16 %v5434, %v5433
        %v5453 = vpack.c.b16 %v5436, %v5435
        %v5454 = vpack.c.b16 %v5438, %v5437
        %5471 = vmatpush.bf16.msra.mxu0 %v5446
        %5472 = vmatpush.bf16.msra.mxu0 %v5445
        %5473 = vmatpush.bf16.msra.mxu0 %v5444
        %5474 = vmatpush.bf16.msra.mxu0 %v5443
        %5475 = vmatpush.bf16.msra.mxu0 %v5442
        %5476 = vmatpush.bf16.msra.mxu0 %v5441
        %5477 = vmatpush.bf16.msra.mxu0 %v5440
        %5478 = vmatpush.bf16.msra.mxu0 %v5439
        %5479 = vmatmul.bf16.gmra.mxu0 %v5340
        %v5480 = vpop.f32.mrf.mxu0
        %v5481 = vadd.f32 0.0, %v5480
        %v5482 = vpop.f32.mrf.mxu0
        %5483 = vdwg.mxu0
        %5484 = vmatpush.bf16.msra.mxu0 %v5454
        %5485 = vmatpush.bf16.msra.mxu0 %v5453
        %5486 = vmatpush.bf16.msra.mxu0 %v5452
        %5487 = vmatpush.bf16.msra.mxu0 %v5451
        %5488 = vmatpush.bf16.msra.mxu0 %v5450
        %5489 = vmatpush.bf16.msra.mxu0 %v5449
        %5490 = vmatpush.bf16.msra.mxu0 %v5448
        %5491 = vmatpush.bf16.msra.mxu0 %v5447
        %5492 = vmatmul.bf16.gmra.mxu0 %v5341
        %v5493 = vpop.f32.mrf.mxu0
        %v5494 = vadd.f32 %v5481, %v5493
        %v5495 = vpop.f32.mrf.mxu0
        %5496 = vdwg.mxu0
        %v5497 = vadd.f32 %v5337, %v5494
        %v5498 = vld [vmem:[%s12] sm:$0x1]
        %v5500 = vperm.slane %v5498, 0
        %v5502 = vadd.f32 %v5497, %v5500
        %v5503 = vmax.f32 %v5502, 0.0
        %5504 = vst [vmem:[#allocation6 + $0x4] sm:$0xf] %v5503
        %v5505 = vld [vmem:[#allocation6] sm:$0xf]
        %v5506 = vpack.c.bf16 %v5505, %v5505
        %v5507 = vld [vmem:[%s13] sm:$0xf]
        %v5508 = vld [vmem:[%s13 + $0x4] sm:$0xf]
        %v5509 = vld [vmem:[%s13 + $0x8] sm:$0xf]
        %v5510 = vld [vmem:[%s13 + $0xc] sm:$0xf]
        %v5511 = vld [vmem:[%s13 + $0x10] sm:$0xf]
        %v5512 = vld [vmem:[%s13 + $0x14] sm:$0xf]
        %v5513 = vld [vmem:[%s13 + $0x18] sm:$0xf]
        %v5514 = vld [vmem:[%s13 + $0x1c] sm:$0xf]
        %v5515 = vld [vmem:[%s13 + $0x20] sm:$0xf]
        %v5516 = vld [vmem:[%s13 + $0x24] sm:$0xf]
        %v5517 = vld [vmem:[%s13 + $0x28] sm:$0xf]
        %v5518 = vld [vmem:[%s13 + $0x2c] sm:$0xf]
        %v5519 = vld [vmem:[%s13 + $0x30] sm:$0xf]
        %v5520 = vld [vmem:[%s13 + $0x34] sm:$0xf]
        %v5521 = vld [vmem:[%s13 + $0x38] sm:$0xf]
        %v5522 = vld [vmem:[%s13 + $0x3c] sm:$0xf]
        %v5523 = vld [vmem:[#allocation6 + $0x1] sm:$0xf]
        %v5524 = vpack.c.bf16 %v5523, %v5523
        %s5525 = scalar_lea.vmem %s13, 64
        %v5526 = vld [vmem:[%s5525] sm:$0xf]
        %v5527 = vld [vmem:[%s5525 + $0x4] sm:$0xf]
        %v5528 = vld [vmem:[%s5525 + $0x8] sm:$0xf]
        %v5529 = vld [vmem:[%s5525 + $0xc] sm:$0xf]
        %v5530 = vld [vmem:[%s5525 + $0x10] sm:$0xf]
        %v5531 = vld [vmem:[%s5525 + $0x14] sm:$0xf]
        %v5532 = vld [vmem:[%s5525 + $0x18] sm:$0xf]
        %v5533 = vld [vmem:[%s5525 + $0x1c] sm:$0xf]
        %v5534 = vld [vmem:[%s5525 + $0x20] sm:$0xf]
        %v5535 = vld [vmem:[%s5525 + $0x24] sm:$0xf]
        %v5536 = vld [vmem:[%s5525 + $0x28] sm:$0xf]
        %v5537 = vld [vmem:[%s5525 + $0x2c] sm:$0xf]
        %v5538 = vld [vmem:[%s5525 + $0x30] sm:$0xf]
        %v5539 = vld [vmem:[%s5525 + $0x34] sm:$0xf]
        %v5540 = vld [vmem:[%s5525 + $0x38] sm:$0xf]
        %v5541 = vld [vmem:[%s5525 + $0x3c] sm:$0xf]
        %v5558 = vunpack.c.l.b16 %v5526
        %v5559 = vunpack.c.l.b16 %v5527
        %v5560 = vunpack.c.l.b16 %v5528
        %v5561 = vunpack.c.l.b16 %v5529
        %v5562 = vunpack.c.l.b16 %v5530
        %v5563 = vunpack.c.l.b16 %v5531
        %v5564 = vunpack.c.l.b16 %v5532
        %v5565 = vunpack.c.l.b16 %v5533
        %v5566 = vunpack.c.l.b16 %v5534
        %v5567 = vunpack.c.l.b16 %v5535
        %v5568 = vunpack.c.l.b16 %v5536
        %v5569 = vunpack.c.l.b16 %v5537
        %v5570 = vunpack.c.l.b16 %v5538
        %v5571 = vunpack.c.l.b16 %v5539
        %v5572 = vunpack.c.l.b16 %v5540
        %v5573 = vunpack.c.l.b16 %v5541
        %v5574 = vpack.c.b16 %v5559, %v5558
        %v5575 = vpack.c.b16 %v5561, %v5560
        %v5576 = vpack.c.b16 %v5563, %v5562
        %v5577 = vpack.c.b16 %v5565, %v5564
        %v5578 = vpack.c.b16 %v5567, %v5566
        %v5579 = vpack.c.b16 %v5569, %v5568
        %v5580 = vpack.c.b16 %v5571, %v5570
        %v5581 = vpack.c.b16 %v5573, %v5572
        %5590 = vmatpush.bf16.msra.mxu0 %v5581
        %5591 = vmatpush.bf16.msra.mxu0 %v5580
        %5592 = vmatpush.bf16.msra.mxu0 %v5579
        %5593 = vmatpush.bf16.msra.mxu0 %v5578
        %5594 = vmatpush.bf16.msra.mxu0 %v5577
        %5595 = vmatpush.bf16.msra.mxu0 %v5576
        %5596 = vmatpush.bf16.msra.mxu0 %v5575
        %5597 = vmatpush.bf16.msra.mxu0 %v5574
        %5598 = vmatmul.bf16.gmra.mxu0 %v5524
        %v5599 = vpop.f32.mrf.mxu0
        %v5600 = vadd.f32 0.0, %v5599
        %v5601 = vpop.f32.mrf.mxu0
        %5602 = vdwg.mxu0
        %v5619 = vunpack.c.l.b16 %v5507
        %v5620 = vunpack.c.l.b16 %v5508
        %v5621 = vunpack.c.l.b16 %v5509
        %v5622 = vunpack.c.l.b16 %v5510
        %v5623 = vunpack.c.l.b16 %v5511
        %v5624 = vunpack.c.l.b16 %v5512
        %v5625 = vunpack.c.l.b16 %v5513
        %v5626 = vunpack.c.l.b16 %v5514
        %v5627 = vunpack.c.l.b16 %v5515
        %v5628 = vunpack.c.l.b16 %v5516
        %v5629 = vunpack.c.l.b16 %v5517
        %v5630 = vunpack.c.l.b16 %v5518
        %v5631 = vunpack.c.l.b16 %v5519
        %v5632 = vunpack.c.l.b16 %v5520
        %v5633 = vunpack.c.l.b16 %v5521
        %v5634 = vunpack.c.l.b16 %v5522
        %v5635 = vpack.c.b16 %v5620, %v5619
        %v5636 = vpack.c.b16 %v5622, %v5621
        %v5637 = vpack.c.b16 %v5624, %v5623
        %v5638 = vpack.c.b16 %v5626, %v5625
        %v5639 = vpack.c.b16 %v5628, %v5627
        %v5640 = vpack.c.b16 %v5630, %v5629
        %v5641 = vpack.c.b16 %v5632, %v5631
        %v5642 = vpack.c.b16 %v5634, %v5633
        %5651 = vmatpush.bf16.msra.mxu0 %v5642
        %5652 = vmatpush.bf16.msra.mxu0 %v5641
        %5653 = vmatpush.bf16.msra.mxu0 %v5640
        %5654 = vmatpush.bf16.msra.mxu0 %v5639
        %5655 = vmatpush.bf16.msra.mxu0 %v5638
        %5656 = vmatpush.bf16.msra.mxu0 %v5637
        %5657 = vmatpush.bf16.msra.mxu0 %v5636
        %5658 = vmatpush.bf16.msra.mxu0 %v5635
        %5659 = vmatmul.bf16.gmra.mxu0 %v5506
        %v5660 = vpop.f32.mrf.mxu0
        %v5661 = vadd.f32 %v5600, %v5660
        %v5662 = vpop.f32.mrf.mxu0
        %5663 = vdwg.mxu0
        %v5664 = vld [vmem:[#allocation6 + $0x2] sm:$0xf]
        %v5665 = vpack.c.bf16 %v5664, %v5664
        %s5666 = scalar_lea.vmem %s13, 128
        %v5667 = vld [vmem:[%s5666] sm:$0xf]
        %v5668 = vld [vmem:[%s5666 + $0x4] sm:$0xf]
        %v5669 = vld [vmem:[%s5666 + $0x8] sm:$0xf]
        %v5670 = vld [vmem:[%s5666 + $0xc] sm:$0xf]
        %v5671 = vld [vmem:[%s5666 + $0x10] sm:$0xf]
        %v5672 = vld [vmem:[%s5666 + $0x14] sm:$0xf]
        %v5673 = vld [vmem:[%s5666 + $0x18] sm:$0xf]
        %v5674 = vld [vmem:[%s5666 + $0x1c] sm:$0xf]
        %v5675 = vld [vmem:[%s5666 + $0x20] sm:$0xf]
        %v5676 = vld [vmem:[%s5666 + $0x24] sm:$0xf]
        %v5677 = vld [vmem:[%s5666 + $0x28] sm:$0xf]
        %v5678 = vld [vmem:[%s5666 + $0x2c] sm:$0xf]
        %v5679 = vld [vmem:[%s5666 + $0x30] sm:$0xf]
        %v5680 = vld [vmem:[%s5666 + $0x34] sm:$0xf]
        %v5681 = vld [vmem:[%s5666 + $0x38] sm:$0xf]
        %v5682 = vld [vmem:[%s5666 + $0x3c] sm:$0xf]
        %v5699 = vunpack.c.l.b16 %v5667
        %v5700 = vunpack.c.l.b16 %v5668
        %v5701 = vunpack.c.l.b16 %v5669
        %v5702 = vunpack.c.l.b16 %v5670
        %v5703 = vunpack.c.l.b16 %v5671
        %v5704 = vunpack.c.l.b16 %v5672
        %v5705 = vunpack.c.l.b16 %v5673
        %v5706 = vunpack.c.l.b16 %v5674
        %v5707 = vunpack.c.l.b16 %v5675
        %v5708 = vunpack.c.l.b16 %v5676
        %v5709 = vunpack.c.l.b16 %v5677
        %v5710 = vunpack.c.l.b16 %v5678
        %v5711 = vunpack.c.l.b16 %v5679
        %v5712 = vunpack.c.l.b16 %v5680
        %v5713 = vunpack.c.l.b16 %v5681
        %v5714 = vunpack.c.l.b16 %v5682
        %v5715 = vpack.c.b16 %v5700, %v5699
        %v5716 = vpack.c.b16 %v5702, %v5701
        %v5717 = vpack.c.b16 %v5704, %v5703
        %v5718 = vpack.c.b16 %v5706, %v5705
        %v5719 = vpack.c.b16 %v5708, %v5707
        %v5720 = vpack.c.b16 %v5710, %v5709
        %v5721 = vpack.c.b16 %v5712, %v5711
        %v5722 = vpack.c.b16 %v5714, %v5713
        %5731 = vmatpush.bf16.msra.mxu0 %v5722
        %5732 = vmatpush.bf16.msra.mxu0 %v5721
        %5733 = vmatpush.bf16.msra.mxu0 %v5720
        %5734 = vmatpush.bf16.msra.mxu0 %v5719
        %5735 = vmatpush.bf16.msra.mxu0 %v5718
        %5736 = vmatpush.bf16.msra.mxu0 %v5717
        %5737 = vmatpush.bf16.msra.mxu0 %v5716
        %5738 = vmatpush.bf16.msra.mxu0 %v5715
        %5739 = vmatmul.bf16.gmra.mxu0 %v5665
        %v5740 = vpop.f32.mrf.mxu0
        %v5741 = vadd.f32 0.0, %v5740
        %v5742 = vpop.f32.mrf.mxu0
        %5743 = vdwg.mxu0
        %v5744 = vadd.f32 %v5661, %v5741
        %v5745 = vld [vmem:[#allocation6 + $0x3] sm:$0xf]
        %v5746 = vpack.c.bf16 %v5745, %v5745
        %s5747 = scalar_lea.vmem %s13, 192
        %v5748 = vld [vmem:[%s5747] sm:$0xf]
        %v5749 = vld [vmem:[%s5747 + $0x4] sm:$0xf]
        %v5750 = vld [vmem:[%s5747 + $0x8] sm:$0xf]
        %v5751 = vld [vmem:[%s5747 + $0xc] sm:$0xf]
        %v5752 = vld [vmem:[%s5747 + $0x10] sm:$0xf]
        %v5753 = vld [vmem:[%s5747 + $0x14] sm:$0xf]
        %v5754 = vld [vmem:[%s5747 + $0x18] sm:$0xf]
        %v5755 = vld [vmem:[%s5747 + $0x1c] sm:$0xf]
        %v5756 = vld [vmem:[%s5747 + $0x20] sm:$0xf]
        %v5757 = vld [vmem:[%s5747 + $0x24] sm:$0xf]
        %v5758 = vld [vmem:[%s5747 + $0x28] sm:$0xf]
        %v5759 = vld [vmem:[%s5747 + $0x2c] sm:$0xf]
        %v5760 = vld [vmem:[%s5747 + $0x30] sm:$0xf]
        %v5761 = vld [vmem:[%s5747 + $0x34] sm:$0xf]
        %v5762 = vld [vmem:[%s5747 + $0x38] sm:$0xf]
        %v5763 = vld [vmem:[%s5747 + $0x3c] sm:$0xf]
        %v5780 = vunpack.c.l.b16 %v5748
        %v5781 = vunpack.c.l.b16 %v5749
        %v5782 = vunpack.c.l.b16 %v5750
        %v5783 = vunpack.c.l.b16 %v5751
        %v5784 = vunpack.c.l.b16 %v5752
        %v5785 = vunpack.c.l.b16 %v5753
        %v5786 = vunpack.c.l.b16 %v5754
        %v5787 = vunpack.c.l.b16 %v5755
        %v5788 = vunpack.c.l.b16 %v5756
        %v5789 = vunpack.c.l.b16 %v5757
        %v5790 = vunpack.c.l.b16 %v5758
        %v5791 = vunpack.c.l.b16 %v5759
        %v5792 = vunpack.c.l.b16 %v5760
        %v5793 = vunpack.c.l.b16 %v5761
        %v5794 = vunpack.c.l.b16 %v5762
        %v5795 = vunpack.c.l.b16 %v5763
        %v5796 = vpack.c.b16 %v5781, %v5780
        %v5797 = vpack.c.b16 %v5783, %v5782
        %v5798 = vpack.c.b16 %v5785, %v5784
        %v5799 = vpack.c.b16 %v5787, %v5786
        %v5800 = vpack.c.b16 %v5789, %v5788
        %v5801 = vpack.c.b16 %v5791, %v5790
        %v5802 = vpack.c.b16 %v5793, %v5792
        %v5803 = vpack.c.b16 %v5795, %v5794
        %5812 = vmatpush.bf16.msra.mxu0 %v5803
        %5813 = vmatpush.bf16.msra.mxu0 %v5802
        %5814 = vmatpush.bf16.msra.mxu0 %v5801
        %5815 = vmatpush.bf16.msra.mxu0 %v5800
        %5816 = vmatpush.bf16.msra.mxu0 %v5799
        %5817 = vmatpush.bf16.msra.mxu0 %v5798
        %5818 = vmatpush.bf16.msra.mxu0 %v5797
        %5819 = vmatpush.bf16.msra.mxu0 %v5796
        %5820 = vmatmul.bf16.gmra.mxu0 %v5746
        %v5821 = vpop.f32.mrf.mxu0
        %v5822 = vadd.f32 0.0, %v5821
        %v5823 = vpop.f32.mrf.mxu0
        %5824 = vdwg.mxu0
        %v5825 = vadd.f32 %v5744, %v5822
        %v5826 = vld [vmem:[#allocation6 + $0x4] sm:$0xf]
        %v5827 = vpack.c.bf16 %v5826, %v5826
        %s5828 = scalar_lea.vmem %s13, 256
        %v5829 = vld [vmem:[%s5828] sm:$0xf]
        %v5830 = vld [vmem:[%s5828 + $0x4] sm:$0xf]
        %v5831 = vld [vmem:[%s5828 + $0x8] sm:$0xf]
        %v5832 = vld [vmem:[%s5828 + $0xc] sm:$0xf]
        %v5833 = vld [vmem:[%s5828 + $0x10] sm:$0xf]
        %v5834 = vld [vmem:[%s5828 + $0x14] sm:$0xf]
        %v5835 = vld [vmem:[%s5828 + $0x18] sm:$0xf]
        %v5836 = vld [vmem:[%s5828 + $0x1c] sm:$0xf]
        %v5837 = vld [vmem:[%s5828 + $0x20] sm:$0xf]
        %v5838 = vld [vmem:[%s5828 + $0x24] sm:$0xf]
        %v5839 = vld [vmem:[%s5828 + $0x28] sm:$0xf]
        %v5840 = vld [vmem:[%s5828 + $0x2c] sm:$0xf]
        %v5841 = vld [vmem:[%s5828 + $0x30] sm:$0xf]
        %v5842 = vld [vmem:[%s5828 + $0x34] sm:$0xf]
        %v5843 = vld [vmem:[%s5828 + $0x38] sm:$0xf]
        %v5844 = vld [vmem:[%s5828 + $0x3c] sm:$0xf]
        %v5861 = vunpack.c.l.b16 %v5829
        %v5862 = vunpack.c.l.b16 %v5830
        %v5863 = vunpack.c.l.b16 %v5831
        %v5864 = vunpack.c.l.b16 %v5832
        %v5865 = vunpack.c.l.b16 %v5833
        %v5866 = vunpack.c.l.b16 %v5834
        %v5867 = vunpack.c.l.b16 %v5835
        %v5868 = vunpack.c.l.b16 %v5836
        %v5869 = vunpack.c.l.b16 %v5837
        %v5870 = vunpack.c.l.b16 %v5838
        %v5871 = vunpack.c.l.b16 %v5839
        %v5872 = vunpack.c.l.b16 %v5840
        %v5873 = vunpack.c.l.b16 %v5841
        %v5874 = vunpack.c.l.b16 %v5842
        %v5875 = vunpack.c.l.b16 %v5843
        %v5876 = vunpack.c.l.b16 %v5844
        %v5877 = vpack.c.b16 %v5862, %v5861
        %v5878 = vpack.c.b16 %v5864, %v5863
        %v5879 = vpack.c.b16 %v5866, %v5865
        %v5880 = vpack.c.b16 %v5868, %v5867
        %v5881 = vpack.c.b16 %v5870, %v5869
        %v5882 = vpack.c.b16 %v5872, %v5871
        %v5883 = vpack.c.b16 %v5874, %v5873
        %v5884 = vpack.c.b16 %v5876, %v5875
        %5893 = vmatpush.bf16.msra.mxu0 %v5884
        %5894 = vmatpush.bf16.msra.mxu0 %v5883
        %5895 = vmatpush.bf16.msra.mxu0 %v5882
        %5896 = vmatpush.bf16.msra.mxu0 %v5881
        %5897 = vmatpush.bf16.msra.mxu0 %v5880
        %5898 = vmatpush.bf16.msra.mxu0 %v5879
        %5899 = vmatpush.bf16.msra.mxu0 %v5878
        %5900 = vmatpush.bf16.msra.mxu0 %v5877
        %5901 = vmatmul.bf16.gmra.mxu0 %v5827
        %v5902 = vpop.f32.mrf.mxu0
        %v5903 = vadd.f32 0.0, %v5902
        %v5904 = vpop.f32.mrf.mxu0
        %5905 = vdwg.mxu0
        %v5906 = vadd.f32 %v5825, %v5903
        %v5907 = vld [vmem:[#allocation6 + $0x5] sm:$0xf]
        %v5908 = vpack.c.bf16 %v5907, %v5907
        %s5909 = scalar_lea.vmem %s13, 320
        %v5910 = vld [vmem:[%s5909] sm:$0xf]
        %v5911 = vld [vmem:[%s5909 + $0x4] sm:$0xf]
        %v5912 = vld [vmem:[%s5909 + $0x8] sm:$0xf]
        %v5913 = vld [vmem:[%s5909 + $0xc] sm:$0xf]
        %v5914 = vld [vmem:[%s5909 + $0x10] sm:$0xf]
        %v5915 = vld [vmem:[%s5909 + $0x14] sm:$0xf]
        %v5916 = vld [vmem:[%s5909 + $0x18] sm:$0xf]
        %v5917 = vld [vmem:[%s5909 + $0x1c] sm:$0xf]
        %v5918 = vld [vmem:[%s5909 + $0x20] sm:$0xf]
        %v5919 = vld [vmem:[%s5909 + $0x24] sm:$0xf]
        %v5920 = vld [vmem:[%s5909 + $0x28] sm:$0xf]
        %v5921 = vld [vmem:[%s5909 + $0x2c] sm:$0xf]
        %v5922 = vld [vmem:[%s5909 + $0x30] sm:$0xf]
        %v5923 = vld [vmem:[%s5909 + $0x34] sm:$0xf]
        %v5924 = vld [vmem:[%s5909 + $0x38] sm:$0xf]
        %v5925 = vld [vmem:[%s5909 + $0x3c] sm:$0xf]
        %v5942 = vunpack.c.l.b16 %v5910
        %v5943 = vunpack.c.l.b16 %v5911
        %v5944 = vunpack.c.l.b16 %v5912
        %v5945 = vunpack.c.l.b16 %v5913
        %v5946 = vunpack.c.l.b16 %v5914
        %v5947 = vunpack.c.l.b16 %v5915
        %v5948 = vunpack.c.l.b16 %v5916
        %v5949 = vunpack.c.l.b16 %v5917
        %v5950 = vunpack.c.l.b16 %v5918
        %v5951 = vunpack.c.l.b16 %v5919
        %v5952 = vunpack.c.l.b16 %v5920
        %v5953 = vunpack.c.l.b16 %v5921
        %v5954 = vunpack.c.l.b16 %v5922
        %v5955 = vunpack.c.l.b16 %v5923
        %v5956 = vunpack.c.l.b16 %v5924
        %v5957 = vunpack.c.l.b16 %v5925
        %v5958 = vpack.c.b16 %v5943, %v5942
        %v5959 = vpack.c.b16 %v5945, %v5944
        %v5960 = vpack.c.b16 %v5947, %v5946
        %v5961 = vpack.c.b16 %v5949, %v5948
        %v5962 = vpack.c.b16 %v5951, %v5950
        %v5963 = vpack.c.b16 %v5953, %v5952
        %v5964 = vpack.c.b16 %v5955, %v5954
        %v5965 = vpack.c.b16 %v5957, %v5956
        %5974 = vmatpush.bf16.msra.mxu0 %v5965
        %5975 = vmatpush.bf16.msra.mxu0 %v5964
        %5976 = vmatpush.bf16.msra.mxu0 %v5963
        %5977 = vmatpush.bf16.msra.mxu0 %v5962
        %5978 = vmatpush.bf16.msra.mxu0 %v5961
        %5979 = vmatpush.bf16.msra.mxu0 %v5960
        %5980 = vmatpush.bf16.msra.mxu0 %v5959
        %5981 = vmatpush.bf16.msra.mxu0 %v5958
        %5982 = vmatmul.bf16.gmra.mxu0 %v5908
        %v5983 = vpop.f32.mrf.mxu0
        %v5984 = vadd.f32 0.0, %v5983
        %v5985 = vpop.f32.mrf.mxu0
        %5986 = vdwg.mxu0
        %v5987 = vadd.f32 %v5906, %v5984
        %v5988 = vld [vmem:[#allocation6 + $0x6] sm:$0xf]
        %v5989 = vpack.c.bf16 %v5988, %v5988
        %s5990 = scalar_lea.vmem %s13, 384
        %v5991 = vld [vmem:[%s5990] sm:$0xf]
        %v5992 = vld [vmem:[%s5990 + $0x4] sm:$0xf]
        %v5993 = vld [vmem:[%s5990 + $0x8] sm:$0xf]
        %v5994 = vld [vmem:[%s5990 + $0xc] sm:$0xf]
        %v5995 = vld [vmem:[%s5990 + $0x10] sm:$0xf]
        %v5996 = vld [vmem:[%s5990 + $0x14] sm:$0xf]
        %v5997 = vld [vmem:[%s5990 + $0x18] sm:$0xf]
        %v5998 = vld [vmem:[%s5990 + $0x1c] sm:$0xf]
        %v5999 = vld [vmem:[%s5990 + $0x20] sm:$0xf]
        %v6000 = vld [vmem:[%s5990 + $0x24] sm:$0xf]
        %v6001 = vld [vmem:[%s5990 + $0x28] sm:$0xf]
        %v6002 = vld [vmem:[%s5990 + $0x2c] sm:$0xf]
        %v6003 = vld [vmem:[%s5990 + $0x30] sm:$0xf]
        %v6004 = vld [vmem:[%s5990 + $0x34] sm:$0xf]
        %v6005 = vld [vmem:[%s5990 + $0x38] sm:$0xf]
        %v6006 = vld [vmem:[%s5990 + $0x3c] sm:$0xf]
        %v6023 = vunpack.c.l.b16 %v5991
        %v6024 = vunpack.c.l.b16 %v5992
        %v6025 = vunpack.c.l.b16 %v5993
        %v6026 = vunpack.c.l.b16 %v5994
        %v6027 = vunpack.c.l.b16 %v5995
        %v6028 = vunpack.c.l.b16 %v5996
        %v6029 = vunpack.c.l.b16 %v5997
        %v6030 = vunpack.c.l.b16 %v5998
        %v6031 = vunpack.c.l.b16 %v5999
        %v6032 = vunpack.c.l.b16 %v6000
        %v6033 = vunpack.c.l.b16 %v6001
        %v6034 = vunpack.c.l.b16 %v6002
        %v6035 = vunpack.c.l.b16 %v6003
        %v6036 = vunpack.c.l.b16 %v6004
        %v6037 = vunpack.c.l.b16 %v6005
        %v6038 = vunpack.c.l.b16 %v6006
        %v6039 = vpack.c.b16 %v6024, %v6023
        %v6040 = vpack.c.b16 %v6026, %v6025
        %v6041 = vpack.c.b16 %v6028, %v6027
        %v6042 = vpack.c.b16 %v6030, %v6029
        %v6043 = vpack.c.b16 %v6032, %v6031
        %v6044 = vpack.c.b16 %v6034, %v6033
        %v6045 = vpack.c.b16 %v6036, %v6035
        %v6046 = vpack.c.b16 %v6038, %v6037
        %6055 = vmatpush.bf16.msra.mxu0 %v6046
        %6056 = vmatpush.bf16.msra.mxu0 %v6045
        %6057 = vmatpush.bf16.msra.mxu0 %v6044
        %6058 = vmatpush.bf16.msra.mxu0 %v6043
        %6059 = vmatpush.bf16.msra.mxu0 %v6042
        %6060 = vmatpush.bf16.msra.mxu0 %v6041
        %6061 = vmatpush.bf16.msra.mxu0 %v6040
        %6062 = vmatpush.bf16.msra.mxu0 %v6039
        %6063 = vmatmul.bf16.gmra.mxu0 %v5989
        %v6064 = vpop.f32.mrf.mxu0
        %v6065 = vadd.f32 0.0, %v6064
        %v6066 = vpop.f32.mrf.mxu0
        %6067 = vdwg.mxu0
        %v6068 = vadd.f32 %v5987, %v6065
        %v6069 = vld [vmem:[#allocation6 + $0x7] sm:$0xf]
        %v6070 = vpack.c.bf16 %v6069, %v6069
        %s6071 = scalar_lea.vmem %s13, 448
        %v6072 = vld [vmem:[%s6071] sm:$0xf]
        %v6073 = vld [vmem:[%s6071 + $0x4] sm:$0xf]
        %v6074 = vld [vmem:[%s6071 + $0x8] sm:$0xf]
        %v6075 = vld [vmem:[%s6071 + $0xc] sm:$0xf]
        %v6076 = vld [vmem:[%s6071 + $0x10] sm:$0xf]
        %v6077 = vld [vmem:[%s6071 + $0x14] sm:$0xf]
        %v6078 = vld [vmem:[%s6071 + $0x18] sm:$0xf]
        %v6079 = vld [vmem:[%s6071 + $0x1c] sm:$0xf]
        %v6080 = vld [vmem:[%s6071 + $0x20] sm:$0xf]
        %v6081 = vld [vmem:[%s6071 + $0x24] sm:$0xf]
        %v6082 = vld [vmem:[%s6071 + $0x28] sm:$0xf]
        %v6083 = vld [vmem:[%s6071 + $0x2c] sm:$0xf]
        %v6084 = vld [vmem:[%s6071 + $0x30] sm:$0xf]
        %v6085 = vld [vmem:[%s6071 + $0x34] sm:$0xf]
        %v6086 = vld [vmem:[%s6071 + $0x38] sm:$0xf]
        %v6087 = vld [vmem:[%s6071 + $0x3c] sm:$0xf]
        %v6104 = vunpack.c.l.b16 %v6072
        %v6105 = vunpack.c.l.b16 %v6073
        %v6106 = vunpack.c.l.b16 %v6074
        %v6107 = vunpack.c.l.b16 %v6075
        %v6108 = vunpack.c.l.b16 %v6076
        %v6109 = vunpack.c.l.b16 %v6077
        %v6110 = vunpack.c.l.b16 %v6078
        %v6111 = vunpack.c.l.b16 %v6079
        %v6112 = vunpack.c.l.b16 %v6080
        %v6113 = vunpack.c.l.b16 %v6081
        %v6114 = vunpack.c.l.b16 %v6082
        %v6115 = vunpack.c.l.b16 %v6083
        %v6116 = vunpack.c.l.b16 %v6084
        %v6117 = vunpack.c.l.b16 %v6085
        %v6118 = vunpack.c.l.b16 %v6086
        %v6119 = vunpack.c.l.b16 %v6087
        %v6120 = vpack.c.b16 %v6105, %v6104
        %v6121 = vpack.c.b16 %v6107, %v6106
        %v6122 = vpack.c.b16 %v6109, %v6108
        %v6123 = vpack.c.b16 %v6111, %v6110
        %v6124 = vpack.c.b16 %v6113, %v6112
        %v6125 = vpack.c.b16 %v6115, %v6114
        %v6126 = vpack.c.b16 %v6117, %v6116
        %v6127 = vpack.c.b16 %v6119, %v6118
        %6136 = vmatpush.bf16.msra.mxu0 %v6127
        %6137 = vmatpush.bf16.msra.mxu0 %v6126
        %6138 = vmatpush.bf16.msra.mxu0 %v6125
        %6139 = vmatpush.bf16.msra.mxu0 %v6124
        %6140 = vmatpush.bf16.msra.mxu0 %v6123
        %6141 = vmatpush.bf16.msra.mxu0 %v6122
        %6142 = vmatpush.bf16.msra.mxu0 %v6121
        %6143 = vmatpush.bf16.msra.mxu0 %v6120
        %6144 = vmatmul.bf16.gmra.mxu0 %v6070
        %v6145 = vpop.f32.mrf.mxu0
        %v6146 = vadd.f32 0.0, %v6145
        %v6147 = vpop.f32.mrf.mxu0
        %6148 = vdwg.mxu0
        %v6149 = vadd.f32 %v6068, %v6146
        %v6150 = vld [vmem:[#allocation6 + $0x8] sm:$0xf]
        %v6151 = vpack.c.bf16 %v6150, %v6150
        %s6152 = scalar_lea.vmem %s13, 512
        %v6153 = vld [vmem:[%s6152] sm:$0xf]
        %v6154 = vld [vmem:[%s6152 + $0x4] sm:$0xf]
        %v6155 = vld [vmem:[%s6152 + $0x8] sm:$0xf]
        %v6156 = vld [vmem:[%s6152 + $0xc] sm:$0xf]
        %v6157 = vld [vmem:[%s6152 + $0x10] sm:$0xf]
        %v6158 = vld [vmem:[%s6152 + $0x14] sm:$0xf]
        %v6159 = vld [vmem:[%s6152 + $0x18] sm:$0xf]
        %v6160 = vld [vmem:[%s6152 + $0x1c] sm:$0xf]
        %v6161 = vld [vmem:[%s6152 + $0x20] sm:$0xf]
        %v6162 = vld [vmem:[%s6152 + $0x24] sm:$0xf]
        %v6163 = vld [vmem:[%s6152 + $0x28] sm:$0xf]
        %v6164 = vld [vmem:[%s6152 + $0x2c] sm:$0xf]
        %v6165 = vld [vmem:[%s6152 + $0x30] sm:$0xf]
        %v6166 = vld [vmem:[%s6152 + $0x34] sm:$0xf]
        %v6167 = vld [vmem:[%s6152 + $0x38] sm:$0xf]
        %v6168 = vld [vmem:[%s6152 + $0x3c] sm:$0xf]
        %v6185 = vunpack.c.l.b16 %v6153
        %v6186 = vunpack.c.l.b16 %v6154
        %v6187 = vunpack.c.l.b16 %v6155
        %v6188 = vunpack.c.l.b16 %v6156
        %v6189 = vunpack.c.l.b16 %v6157
        %v6190 = vunpack.c.l.b16 %v6158
        %v6191 = vunpack.c.l.b16 %v6159
        %v6192 = vunpack.c.l.b16 %v6160
        %v6193 = vunpack.c.l.b16 %v6161
        %v6194 = vunpack.c.l.b16 %v6162
        %v6195 = vunpack.c.l.b16 %v6163
        %v6196 = vunpack.c.l.b16 %v6164
        %v6197 = vunpack.c.l.b16 %v6165
        %v6198 = vunpack.c.l.b16 %v6166
        %v6199 = vunpack.c.l.b16 %v6167
        %v6200 = vunpack.c.l.b16 %v6168
        %v6201 = vpack.c.b16 %v6186, %v6185
        %v6202 = vpack.c.b16 %v6188, %v6187
        %v6203 = vpack.c.b16 %v6190, %v6189
        %v6204 = vpack.c.b16 %v6192, %v6191
        %v6205 = vpack.c.b16 %v6194, %v6193
        %v6206 = vpack.c.b16 %v6196, %v6195
        %v6207 = vpack.c.b16 %v6198, %v6197
        %v6208 = vpack.c.b16 %v6200, %v6199
        %6217 = vmatpush.bf16.msra.mxu0 %v6208
        %6218 = vmatpush.bf16.msra.mxu0 %v6207
        %6219 = vmatpush.bf16.msra.mxu0 %v6206
        %6220 = vmatpush.bf16.msra.mxu0 %v6205
        %6221 = vmatpush.bf16.msra.mxu0 %v6204
        %6222 = vmatpush.bf16.msra.mxu0 %v6203
        %6223 = vmatpush.bf16.msra.mxu0 %v6202
        %6224 = vmatpush.bf16.msra.mxu0 %v6201
        %6225 = vmatmul.bf16.gmra.mxu0 %v6151
        %v6226 = vpop.f32.mrf.mxu0
        %v6227 = vadd.f32 0.0, %v6226
        %v6228 = vpop.f32.mrf.mxu0
        %6229 = vdwg.mxu0
        %v6230 = vadd.f32 %v6149, %v6227
        %v6231 = vld [vmem:[%s14] sm:$0x1]
        %v6233 = vperm.slane %v6231, 0
        %v6235 = vadd.f32 %v6230, %v6233
        %v6236 = vmax.f32 %v6235, 0.0
        %vm6237 = vcmask 519168
        %v6238 = vsel %vm6237, %v6236, 0.0
        %v6239 = vrot.slane %v6238, 4
        %v6240 = vadd.f32 %v6238, %v6239
        %v6241 = vrot.slane %v6240, 2
        %v6242 = vadd.f32 %v6240, %v6241
        %v6243 = vrot.slane %v6242, 1
        %v6244 = vadd.f32 %v6242, %v6243
        %v6245 = vrcp.pop 4.0
        %v6246 = vmul.f32 4.0, %v6245
        %v6247 = vsub.f32 1.0, %v6246
        %v6248 = vmul.f32 %v6245, %v6247
        %v6249 = vadd.f32 %v6245, %v6248
        %vm6250 = vweird.f32 %v6245
        %v6251 = vsel %vm6250, %v6245, %v6249
        %v6252 = vmul.f32 %v6244, %v6251
        %v6253 = vpack.c.bf16 %v6252, %v6252
        %v6254 = vld [vmem:[%s15] sm:$0xf]
        %v6255 = vld [vmem:[%s15 + $0x4] sm:$0xf]
        %v6256 = vld [vmem:[%s15 + $0x8] sm:$0xf]
        %v6257 = vld [vmem:[%s15 + $0xc] sm:$0xf]
        %v6258 = vld [vmem:[%s15 + $0x10] sm:$0xf]
        %v6259 = vld [vmem:[%s15 + $0x14] sm:$0xf]
        %v6260 = vld [vmem:[%s15 + $0x18] sm:$0xf]
        %v6261 = vld [vmem:[%s15 + $0x1c] sm:$0xf]
        %v6262 = vld [vmem:[%s16] sm:$0x1]
        %v6271 = vunpack.c.l.b16 %v6254
        %v6272 = vunpack.c.l.b16 %v6255
        %v6273 = vunpack.c.l.b16 %v6256
        %v6274 = vunpack.c.l.b16 %v6257
        %v6275 = vunpack.c.l.b16 %v6258
        %v6276 = vunpack.c.l.b16 %v6259
        %v6277 = vunpack.c.l.b16 %v6260
        %v6278 = vunpack.c.l.b16 %v6261
        %v6279 = vpack.c.b16 %v6272, %v6271
        %v6280 = vpack.c.b16 %v6274, %v6273
        %v6281 = vpack.c.b16 %v6276, %v6275
        %v6282 = vpack.c.b16 %v6278, %v6277
        %v6288 = vsel %vm626, %v6253, 0
        %6290 = vmatpush.bf16.msra.mxu0 0
        %6291 = vmatpush.bf16.msra.mxu0 0
        %6292 = vmatpush.bf16.msra.mxu0 0
        %6293 = vmatpush.bf16.msra.mxu0 0
        %6294 = vmatpush.bf16.msra.mxu0 %v6282
        %6295 = vmatpush.bf16.msra.mxu0 %v6281
        %6296 = vmatpush.bf16.msra.mxu0 %v6280
        %6297 = vmatpush.bf16.msra.mxu0 %v6279
        %6298 = vmatmul.bf16.gmra.mxu0 %v6288
        %v6299 = vpop.f32.mrf.mxu0
        %v6300 = vadd.f32 %v6262, %v6299
        %v6301 = vpop.f32.mrf.mxu0
        %6302 = vdwg.mxu0
        %v6303 = vmax.f32 %v6300, 0.0
        %v6304 = vpack.c.bf16 %v6303, %v6303
        %v6305 = vld [vmem:[%s17] sm:$0xf]
        %v6306 = vld [vmem:[%s17 + $0x4] sm:$0xf]
        %v6307 = vld [vmem:[%s18] sm:$0x1]
        %v6310 = vunpack.c.l.b16 %v6305
        %v6311 = vunpack.c.l.b16 %v6306
        %v6312 = vpack.c.b16 %v6311, %v6310
        %v6315 = vsel %vm620, %v6304, 0
        %6317 = vmatpush.bf16.msra.mxu0 0
        %6318 = vmatpush.bf16.msra.mxu0 0
        %6319 = vmatpush.bf16.msra.mxu0 0
        %6320 = vmatpush.bf16.msra.mxu0 0
        %6321 = vmatpush.bf16.msra.mxu0 0
        %6322 = vmatpush.bf16.msra.mxu0 0
        %6323 = vmatpush.bf16.msra.mxu0 0
        %6324 = vmatpush.bf16.msra.mxu0 %v6312
        %6325 = vmatmul.bf16.gmra.mxu0 %v6315
        %v6326 = vpop.f32.mrf.mxu0
        %v6327 = vadd.f32 %v6307, %v6326
        %v6328 = vpop.f32.mrf.mxu0
        %6329 = vdwg.mxu0
        %6330 = vst [vmem:[%s611] sm:$0x1] %v6327
        %s6331 = sand.u32 %s446, 1
        %s6332 = scalar_lea.sflag [#allocation9], %s6331
        %s6333 = sand.u32 %s446, 1
        %s6334 = scalar_lea.vmem [#allocation10], %s6333
        // Predicated region
        $region101: #{cnn_forward.1} parent=95 // pred_check
          %p6335 = pneg %p456
        $region102: #{cnn_forward.1} parent=95 // pred_check_branch
          %6337 = sbr.rel (%p6335) target = $region104
        $region103: #{cnn_forward.1} parent=95 // pred_region
          %6339 = vsyncadd %s6332, 0
          %s6340 = scalar_lea.hbm %s19, %s34
          %s6342 = sshll.u32 %s6334, 4
          %s6343 = int_to_ptr.vmem [resolvable:$true] %s6342
          %s6344 = sshll.u32 %s6340, 4
          %s6345 = int_to_ptr.hbm [resolvable:$true] %s6344
          %6347 = dma.vmem_to_hbm [thread:$0]  %s6343, 16, %s6345, %s6332
        $region104: #{cnn_forward.1} parent=95 // pred_fallthru
          _
      $region96: #{cnn_forward.1} parent=5 // pred_fallthru
        _
      %p6348 = scmp.le.s32.totalorder 2, %s29
      // Predicated region
      $region105: #{cnn_forward.1} parent=5 // pred_check
        %p6349 = pneg %p6348
      $region106: #{cnn_forward.1} parent=5 // pred_check_branch
        %6351 = sbr.rel (%p6349) target = $region108
      $region107: #{cnn_forward.1} parent=5 // pred_region
        %s6352 = ssub.s32 %s29, 2
        // Predicated region
        $region109: #{cnn_forward.1} parent=107 // pred_check
          %p6353 = pneg %p462
        $region110: #{cnn_forward.1} parent=107 // pred_check_branch
          %6355 = sbr.rel (%p6353) target = $region112
        $region111: #{cnn_forward.1} parent=107 // pred_region
          %s6356 = sand.u32 %s447, 1
          %s6357 = scalar_lea.sflag [#allocation9], %s6356
          %s6358 = sand.u32 %s447, 1
          %s6359 = scalar_lea.vmem [#allocation10], %s6358
          %6361 = dma.done %s6357, 16
        $region112: #{cnn_forward.1} parent=107 // pred_fallthru
          _
      $region108: #{cnn_forward.1} parent=5 // pred_fallthru
        _
    $region6: #{cnn_forward.1} parent=1 // loop_footer
      %s33 = sadd.s32 1, %s29
    $region7: #{cnn_forward.1} parent=1 // loop_footer_branch
      %28 = sbr.rel target = $region3
    $region8: #{cnn_forward.1} parent=1 // loop_exit
      _
    %6362 = vsyncpa [#allocation8], 1
    %s6363 = scalar_lea.sflag [#allocation8], 1
    %6364 = vsyncpa %s6363, 1
    %6365 = vsyncpa [#allocation9], 1
    %s6366 = scalar_lea.sflag [#allocation9], 1
    %6367 = vsyncpa %s6366, 1

</llo_original>
